<compile_context>
chip_gen: v7x
topology: tpu7x:2x2x1
jax: 0.10.0
libtpu: 0.0.40
codegen_flags: <defaults>
</compile_context>

<pallas_src>
import functools
import math

import numpy as np

import jax
import jax.numpy as jnp
from jax.experimental import pallas as pl
from jax.experimental.pallas import tpu as pltpu

KEY_CHANNELS = 128
NUM_CHANNELS = 576
PSP_SIZES = (1, 3, 6, 8)
S_REAL = sum(s * s for s in PSP_SIZES)   # 110 PSP bins
S_PAD = 128                              # padded (lane-dense) PSP length; extra bins masked

_VMEM_LIMIT = 64 * 1024 * 1024           # <= physical VMEM on all gens (v7x: 64 MiB)

# additive softmax bias: 0 for real PSP bins, -1e30 for zero-padded bins
_PSP_MASK_BIAS = np.where(np.arange(S_PAD) < S_REAL, 0.0, -1e30).astype(np.float32)[None, :]


def _round_up(x, m):
    return (x + m - 1) // m * m


# ----------------------------------------------------------------------------
# Pallas kernels
# ----------------------------------------------------------------------------
def _matmul_bn_relu_kernel(x_ref, w_ref, s_ref, b_ref, o_ref):
    # Weight-resident pointwise conv: x:(tm,Cin) bf16, w:(Cin,Cout) bf16, s/b:(1,Cout) f32.
    y = jnp.dot(x_ref[...], w_ref[...], preferred_element_type=jnp.float32)
    y = y * s_ref[...] + b_ref[...]
    o_ref[...] = jnp.maximum(y, 0.0).astype(o_ref.dtype)


def _matmul_bn_relu_split_kernel(x_ref, w_ref, s_ref, b_ref, o1_ref, o2_ref, *, n1):
    # Same as above, but the (tm, Cout) result is stored as two lane-dense outputs
    # [:, :n1] and [:, n1:] (n1 is a multiple of 128 -> aligned lane slices).
    y = jnp.dot(x_ref[...], w_ref[...], preferred_element_type=jnp.float32)
    y = jnp.maximum(y * s_ref[...] + b_ref[...], 0.0)
    o1_ref[...] = y[:, :n1].astype(o1_ref.dtype)
    o2_ref[...] = y[:, n1:].astype(o2_ref.dtype)


def _ghost_psp_kernel(prim_ref, dw_w_ref, dw_s_ref, dw_b_ref, pmat_ref,
                      key_ref, val_ref, acc_ref, *, kc_init, vc_init):
    # Fused: depthwise 3x3 + BN + ReLU (ghost "cheap" op) -> key/val channel concat ->
    #        PSP adaptive pooling (MXU matmul against a precomputed pooling matrix).
    # prim:(1,H,W,C) bf16, dw_w:(9,C) f32 taps (dy,dx row-major), dw_s/b:(1,C) f32,
    # pmat:(S_PAD,L) bf16, outputs key:(1,S_PAD,2*kc_init), val:(1,S_PAD,2*vc_init),
    # acc_ref:(H,W,C) f32 scratch.
    x = prim_ref[0]                                   # (H, W, C) bf16
    H, W, C = x.shape
    w_all = dw_w_ref[...]                             # (9, C) f32

    # Depthwise 3x3 with zero-padded borders: 9 sliced multiply-accumulates into the f32
    # scratch -- no shifted full-block copies are materialized.
    acc_ref[...] = jnp.zeros_like(acc_ref)
    for dy in (-1, 0, 1):
        for dx in (-1, 0, 1):
            dh0, dh1 = max(0, -dy), H - max(0, dy)
            dw0, dw1 = max(0, -dx), W - max(0, dx)
            if dh1 <= dh0 or dw1 <= dw0:
                continue
            sh0, sh1 = dh0 + dy, dh1 + dy
            sw0, sw1 = dw0 + dx, dw1 + dx
            wt = w_all[(dy + 1) * 3 + (dx + 1)][None, None, :]
            acc_ref[dh0:dh1, dw0:dw1, :] += x[sh0:sh1, sw0:sw1, :] * wt

    cheap = jnp.maximum(
        acc_ref[...] * dw_s_ref[0][None, None, :] + dw_b_ref[0][None, None, :],
        0.0).astype(jnp.bfloat16)                     # (H, W, C)

    # PSP pooling: pooled = P @ feat for both the primary and the cheap feature maps.
    pmat = pmat_ref[...]                              # (S_PAD, L) bf16
    pooled_p = jnp.dot(pmat, x.reshape(H * W, C),
                       preferred_element_type=jnp.float32)       # (S_PAD, C) f32
    pooled_c = jnp.dot(pmat, cheap.reshape(H * W, C),
                       preferred_element_type=jnp.float32)

    # GhostModule channel order: [primary | cheap] truncated to out_channels.
    key_ref[0] = jnp.concatenate(
        [pooled_p[:, :kc_init], pooled_c[:, :kc_init]],
        axis=-1).astype(key_ref.dtype)
    val_ref[0] = jnp.concatenate(
        [pooled_p[:, kc_init:kc_init + vc_init],
         pooled_c[:, kc_init:kc_init + vc_init]],
        axis=-1).astype(val_ref.dtype)


def _cap_attn_out_kernel(q_ref, k_ref, v_ref, x_ref, bias_ref, wout_ref, s_ref, b_ref, o_ref):
    # Attention core + residual + fused conv_out (576->128 + BN + ReLU) epilogue.
    # q:(1,tl,Kc) bf16, k:(1,S_PAD,Kc) bf16, v:(1,S_PAD,C) bf16, x:(1,tl,C) bf16 residual,
    # bias:(1,S_PAD) f32 additive PSP-pad mask, wout:(C,Co) bf16, s/b:(1,Co) f32.
    q = q_ref[0]
    k = k_ref[0]
    v = v_ref[0]
    # key_channels**-0.5 scale already folded into the query conv's BN scale/bias
    # (valid because the folded scale is positive: relu(a*y) == a*relu(y) for a > 0).
    sim = jax.lax.dot_general(q, k, (((1,), (1,)), ((), ())),
                              preferred_element_type=jnp.float32)      # (tl, S_PAD)
    sim = sim + bias_ref[...]                          # mask zero-padded PSP bins
    sim = sim - jnp.max(sim, axis=-1, keepdims=True)
    prob = jnp.exp(sim)
    prob = prob * pl.reciprocal(jnp.sum(prob, axis=-1, keepdims=True), approx=True)
    ctx = jnp.dot(prob.astype(jnp.bfloat16), v, preferred_element_type=jnp.float32)
    y = x_ref[0].astype(jnp.float32) + ctx             # residual, f32
    # fused conv_out: relu(((x + ctx) @ W_out) * s + b)
    z = jnp.dot(y.astype(jnp.bfloat16), wout_ref[...], preferred_element_type=jnp.float32)
    z = z * s_ref[...] + b_ref[...]
    o_ref[0] = jnp.maximum(z, 0.0).astype(o_ref.dtype)


# ----------------------------------------------------------------------------
# Pallas wrappers
# ----------------------------------------------------------------------------
def conv1x1_bn_relu(x, w, scale, bias, *, out_dtype=jnp.bfloat16, tm_max=512):
    """Pointwise conv + folded-BN + ReLU.  x: (..., Cin), w: (Cin, Cout). Weight VMEM-resident."""
    lead = x.shape[:-1]
    cin, cout = w.shape
    xf = x.reshape(-1, cin).astype(jnp.bfloat16)
    M = xf.shape[0]
    tm = min(tm_max, _round_up(M, 8))
    Mp = _round_up(M, tm)
    if Mp != M:
        xf = jnp.pad(xf, ((0, Mp - M), (0, 0)))

    out = pl.pallas_call(
        _matmul_bn_relu_kernel,
        grid=(Mp // tm,),
        in_specs=[
            pl.BlockSpec((tm, cin), lambda m: (m, 0)),
            pl.BlockSpec((cin, cout), lambda m: (0, 0)),   # resident weight
            pl.BlockSpec((1, cout), lambda m: (0, 0)),
            pl.BlockSpec((1, cout), lambda m: (0, 0)),
        ],
        out_specs=pl.BlockSpec((tm, cout), lambda m: (m, 0)),
        out_shape=jax.ShapeDtypeStruct((Mp, cout), out_dtype),
        compiler_params=pltpu.CompilerParams(
            dimension_semantics=("parallel",),
            vmem_limit_bytes=_VMEM_LIMIT),
    )(xf, w.astype(jnp.bfloat16),
      scale.reshape(1, cout).astype(jnp.float32),
      bias.reshape(1, cout).astype(jnp.float32))
    if Mp != M:
        out = out[:M]
    return out.reshape(*lead, cout)


def conv1x1_bn_relu_split(x, w, scale, bias, n1, *, out_dtype=jnp.bfloat16, tm_max=512):
    """Same as conv1x1_bn_relu, but emits two lane-dense outputs ([..., :n1], [..., n1:])."""
    lead = x.shape[:-1]
    cin, cout = w.shape
    n2 = cout - n1
    xf = x.reshape(-1, cin).astype(jnp.bfloat16)
    M = xf.shape[0]
    tm = min(tm_max, _round_up(M, 8))
    Mp = _round_up(M, tm)
    if Mp != M:
        xf = jnp.pad(xf, ((0, Mp - M), (0, 0)))

    o1, o2 = pl.pallas_call(
        functools.partial(_matmul_bn_relu_split_kernel, n1=n1),
        grid=(Mp // tm,),
        in_specs=[
            pl.BlockSpec((tm, cin), lambda m: (m, 0)),
            pl.BlockSpec((cin, cout), lambda m: (0, 0)),   # resident weight
            pl.BlockSpec((1, cout), lambda m: (0, 0)),
            pl.BlockSpec((1, cout), lambda m: (0, 0)),
        ],
        out_specs=[
            pl.BlockSpec((tm, n1), lambda m: (m, 0)),
            pl.BlockSpec((tm, n2), lambda m: (m, 0)),
        ],
        out_shape=(jax.ShapeDtypeStruct((Mp, n1), out_dtype),
                   jax.ShapeDtypeStruct((Mp, n2), out_dtype)),
        compiler_params=pltpu.CompilerParams(
            dimension_semantics=("parallel",),
            vmem_limit_bytes=_VMEM_LIMIT),
    )(xf, w.astype(jnp.bfloat16),
      scale.reshape(1, cout).astype(jnp.float32),
      bias.reshape(1, cout).astype(jnp.float32))
    if Mp != M:
        o1, o2 = o1[:M], o2[:M]
    return o1.reshape(*lead, n1), o2.reshape(*lead, n2)


def ghost_cheap_psp(prim, dw_w, dw_s, dw_b, pool_mat, kc_init, vc_init):
    """Fused depthwise-3x3 + key/val concat + PSP pooling.
    prim: (B,H,W,C) [primary-key | primary-val | pad]; returns key_p (B,S_PAD,2*kc_init),
    val_p (B,S_PAD,2*vc_init)."""
    B, H, W, C = prim.shape
    Sp, L = pool_mat.shape
    return pl.pallas_call(
        functools.partial(_ghost_psp_kernel, kc_init=kc_init, vc_init=vc_init),
        grid=(B,),
        in_specs=[
            pl.BlockSpec((1, H, W, C), lambda b: (b, 0, 0, 0)),
            pl.BlockSpec((9, C), lambda b: (0, 0)),
            pl.BlockSpec((1, C), lambda b: (0, 0)),
            pl.BlockSpec((1, C), lambda b: (0, 0)),
            pl.BlockSpec((Sp, L), lambda b: (0, 0)),
        ],
        out_specs=[
            pl.BlockSpec((1, Sp, 2 * kc_init), lambda b: (b, 0, 0)),
            pl.BlockSpec((1, Sp, 2 * vc_init), lambda b: (b, 0, 0)),
        ],
        out_shape=(jax.ShapeDtypeStruct((B, Sp, 2 * kc_init), jnp.bfloat16),
                   jax.ShapeDtypeStruct((B, Sp, 2 * vc_init), jnp.bfloat16)),
        scratch_shapes=[pltpu.VMEM((H, W, C), jnp.float32)],
        compiler_params=pltpu.CompilerParams(
            dimension_semantics=("parallel",),
            vmem_limit_bytes=_VMEM_LIMIT),
    )(prim.astype(jnp.bfloat16), dw_w.astype(jnp.float32),
      dw_s.reshape(1, C).astype(jnp.float32), dw_b.reshape(1, C).astype(jnp.float32),
      pool_mat)


def cap_attention_conv_out(q, key_p, val_p, x_flat, bias_row, w_out, s_out, b_out,
                           *, tl_max=1024):
    """softmax(q k^T) v + residual, fused with conv_out.
    q:(B,L,Kc), key:(B,S_PAD,Kc), value:(B,S_PAD,C), x:(B,L,C) -> (B,L,Co) f32."""
    B, L, Kc = q.shape
    Sp = key_p.shape[1]
    C = val_p.shape[2]
    Co = w_out.shape[1]
    tl = min(tl_max, _round_up(L, 8))
    Lp = _round_up(L, tl)
    if Lp != L:
        q = jnp.pad(q, ((0, 0), (0, Lp - L), (0, 0)))
        x_flat = jnp.pad(x_flat, ((0, 0), (0, Lp - L), (0, 0)))
    out = pl.pallas_call(
        _cap_attn_out_kernel,
        grid=(B, Lp // tl),
        in_specs=[
            pl.BlockSpec((1, tl, Kc), lambda b, l: (b, l, 0)),
            pl.BlockSpec((1, Sp, Kc), lambda b, l: (b, 0, 0)),
            pl.BlockSpec((1, Sp, C), lambda b, l: (b, 0, 0)),
            pl.BlockSpec((1, tl, C), lambda b, l: (b, l, 0)),
            pl.BlockSpec((1, Sp), lambda b, l: (0, 0)),
            pl.BlockSpec((C, Co), lambda b, l: (0, 0)),     # resident conv_out weight
            pl.BlockSpec((1, Co), lambda b, l: (0, 0)),
            pl.BlockSpec((1, Co), lambda b, l: (0, 0)),
        ],
        out_specs=pl.BlockSpec((1, tl, Co), lambda b, l: (b, l, 0)),
        out_shape=jax.ShapeDtypeStruct((B, Lp, Co), jnp.float32),
        compiler_params=pltpu.CompilerParams(
            dimension_semantics=("parallel", "parallel"),
            vmem_limit_bytes=_VMEM_LIMIT),
    )(q.astype(jnp.bfloat16), key_p.astype(jnp.bfloat16), val_p.astype(jnp.bfloat16),
      x_flat.astype(jnp.bfloat16), bias_row.astype(jnp.float32),
      w_out.astype(jnp.bfloat16),
      s_out.reshape(1, Co).astype(jnp.float32), b_out.reshape(1, Co).astype(jnp.float32))
    if Lp != L:
        out = out[:, :L]
    return out


# ----------------------------------------------------------------------------
# PSP pooling matrix (exact adaptive_avg_pool2d bin semantics), built once per (H, W)
# ----------------------------------------------------------------------------
@functools.lru_cache(maxsize=None)
def _psp_pool_matrix_np(H, W):
    L = H * W
    rows = []
    for s in PSP_SIZES:
        for i in range(s):
            h0 = (i * H) // s
            h1 = -(-((i + 1) * H) // s)
            for j in range(s):
                w0 = (j * W) // s
                w1 = -(-((j + 1) * W) // s)
                m = np.zeros((H, W), np.float32)
                m[h0:h1, w0:w1] = 1.0 / ((h1 - h0) * (w1 - w0))
                rows.append(m.reshape(L))
    mat = np.stack(rows, axis=0)                       # (110, L)
    mat = np.pad(mat, ((0, S_PAD - mat.shape[0]), (0, 0)))
    return mat


def _psp_pool_matrix(H, W):
    return jnp.asarray(_psp_pool_matrix_np(H, W), jnp.bfloat16)


# ----------------------------------------------------------------------------
# Module composition
# ----------------------------------------------------------------------------
def cap_attention_and_conv_out(feat, p):
    """CAPAttentionModule (+ identity LocalAttention) + conv_out on NHWC feat (B,H,W,576)."""
    B, H, W, C = feat.shape
    L = H * W
    kg, vg = p["key_ghost"], p["val_ghost"]
    kc_init = kg["pw"].shape[1]                         # 64
    vc_init = vg["pw"].shape[1]                         # 288
    pad = 512 - (KEY_CHANNELS + kc_init + vc_init)      # 32 -> lane-dense 512-wide matmul

    # --- fused query / key-ghost-primary / value-ghost-primary 1x1 conv (feat read once),
    #     emitted as two lane-dense outputs: query (128ch) and prim (384ch). ---
    qk_scale = KEY_CHANNELS ** -0.5                     # softmax scale folded into query BN
    fused_w = jnp.concatenate(
        [p["q_w"], kg["pw"], vg["pw"], jnp.zeros((C, pad), jnp.float32)], axis=1)
    fused_s = jnp.concatenate(
        [p["q_s"] * qk_scale, kg["ps"], vg["ps"], jnp.ones((pad,), jnp.float32)])
    fused_b = jnp.concatenate(
        [p["q_b"] * qk_scale, kg["pb"], vg["pb"], jnp.zeros((pad,), jnp.float32)])
    query, prim = conv1x1_bn_relu_split(feat, fused_w, fused_s, fused_b, KEY_CHANNELS)
    # query: (B,H,W,128);  prim: (B,H,W,384) = [prim_key 64 | prim_val 288 | 0x32]

    # --- fused ghost cheap depthwise 3x3 + key/val concat + PSP pooling (no HBM roundtrip) ---
    dw_w = jnp.concatenate([kg["dw"], vg["dw"], jnp.zeros((9, pad), jnp.float32)], axis=1)
    dw_s = jnp.concatenate([kg["ds"], vg["ds"], jnp.ones((pad,), jnp.float32)])
    dw_b = jnp.concatenate([kg["db"], vg["db"], jnp.zeros((pad,), jnp.float32)])
    pool_mat = _psp_pool_matrix(H, W)                   # (128, L)
    key_p, val_p = ghost_cheap_psp(prim, dw_w, dw_s, dw_b, pool_mat, kc_init, vc_init)
    # key_p: (B,128,128), val_p: (B,128,576)

    # --- attention + residual + fused conv_out (576 -> 128) ---
    # TODO(synk): LocalAttentionModule definition is not provided in the reference code; identity.
    bias_row = jnp.asarray(_PSP_MASK_BIAS)              # (1, S_PAD) additive pad mask
    out = cap_attention_conv_out(query.reshape(B, L, KEY_CHANNELS), key_p, val_p,
                                 feat.reshape(B, L, C), bias_row,
                                 p["out_w"], p["out_s"], p["out_b"])   # (B,L,128) f32
    return out.reshape(B, H, W, -1)


def context_branch_forward(x_nchw, params):
    """ContextBranch forward. Input x: (B, 3, H, W) NCHW; output: (B, 128, H//32, W//32)."""
    B, Cin, H, W = x_nchw.shape
    Hs, Ws = H // 32, W // 32

    # --- backbone stand-in: single fused transpose (NCHW -> stride-32 space-to-depth NHWC
    #     patches, channel order (c, dy, dx)) + Pallas 1x1 projection to 576 ch ---
    # TODO(synk): MobileNetV3-small backbone is not defined in the reference code.
    patches = jnp.transpose(x_nchw.reshape(B, Cin, Hs, 32, Ws, 32),
                            (0, 2, 4, 1, 3, 5)).reshape(B, Hs, Ws, Cin * 32 * 32)
    feat = conv1x1_bn_relu(patches, params["backbone_w"], params["backbone_s"],
                           params["backbone_b"])                        # (B,Hs,Ws,576) bf16

    # --- cab (CAPAttentionModule + identity LocalAttention) + fused conv_out ---
    out = cap_attention_and_conv_out(feat, params)                      # (B,Hs,Ws,128) f32
    return jnp.transpose(out, (0, 3, 1, 2))                             # back to NCHW


# ----------------------------------------------------------------------------
# Deterministic synthetic parameter initialization
# ----------------------------------------------------------------------------
def _dense(key, cin, cout, std=0.05):
    return std * jax.random.normal(key, (cin, cout), jnp.float32)


def _bn(key, c):
    k1, k2 = jax.random.split(key)
    scale = 1.0 + 0.1 * jax.random.normal(k1, (c,), jnp.float32)
    bias = 0.05 * jax.random.normal(k2, (c,), jnp.float32)
    return scale, bias


def _ghost_params(key, in_c, out_c, ratio=2):
    init_c = math.ceil(out_c / ratio)
    k = jax.random.split(key, 4)
    ps, pb = _bn(k[1], init_c)
    ds, db = _bn(k[3], init_c)
    return {
        "pw": _dense(k[0], in_c, init_c),
        "ps": ps, "pb": pb,
        "dw": 0.05 * jax.random.normal(k[2], (9, init_c), jnp.float32),
        "ds": ds, "db": db,
    }


def init_params(key):
    ks = jax.random.split(key, 8)
    bs, bb = _bn(ks[1], NUM_CHANNELS)
    qs, qb = _bn(ks[3], KEY_CHANNELS)
    os_, ob = _bn(ks[7], 128)
    return {
        "backbone_w": _dense(ks[0], 32 * 32 * 3, NUM_CHANNELS, std=0.02),
        "backbone_s": bs, "backbone_b": bb,
        "q_w": _dense(ks[2], NUM_CHANNELS, KEY_CHANNELS),
        "q_s": qs, "q_b": qb,
        "key_ghost": _ghost_params(ks[4], NUM_CHANNELS, KEY_CHANNELS),
        "val_ghost": _ghost_params(ks[5], NUM_CHANNELS, NUM_CHANNELS),
        "out_w": _dense(ks[6], NUM_CHANNELS, 128),
        "out_s": os_, "out_b": ob,
    }


# ----------------------------------------------------------------------------
if __name__ == "__main__":
    root = jax.random.PRNGKey(0)
    kx, kp = jax.random.split(root)
    x = jax.random.normal(kx, (2, 3, 64, 64), jnp.float32)
    params = init_params(kp)
    fwd = jax.jit(context_branch_forward)
    out = fwd(x, params)
    out = jax.block_until_ready(out)
    assert out.shape == (2, 128, 2, 2), out.shape
    assert bool(jnp.all(jnp.isfinite(out)))
    print("KERNEL_OK")
</pallas_src>

<mosaic_0001>
module attributes {stable_mosaic.version = 11 : i64} {
  func.func @_matmul_bn_relu_kernel(%arg0: i32, %arg1: memref<8x3072xbf16, #tpu.memory_space<vmem>>, %arg2: memref<3072x576xbf16, #tpu.memory_space<vmem>>, %arg3: memref<1x576xf32, #tpu.memory_space<vmem>>, %arg4: memref<1x576xf32, #tpu.memory_space<vmem>>, %arg5: memref<8x576xbf16, #tpu.memory_space<vmem>>) attributes {dimension_semantics = [#tpu.dimension_semantics<parallel>], iteration_bounds = array<i64: 1>, scalar_prefetch = 0 : i64, scratch_operands = 0 : i64, tpu.core_type = #tpu.core_type<tc>, window_params = [{transform_indices = @transform_0, window_bounds = array<i64: 8, 3072>}, {pipeline_mode = #tpu.pipeline_mode<synchronous>, transform_indices = @transform_1, window_bounds = array<i64: 3072, 576>}, {pipeline_mode = #tpu.pipeline_mode<synchronous>, transform_indices = @transform_2, window_bounds = array<i64: 1, 576>}, {pipeline_mode = #tpu.pipeline_mode<synchronous>, transform_indices = @transform_3, window_bounds = array<i64: 1, 576>}, {transform_indices = @transform_4, window_bounds = array<i64: 8, 576>}]} {
    %c0 = arith.constant 0 : index
    %c0_0 = arith.constant 0 : index
    %0 = vector.load %arg1[%c0, %c0_0] : memref<8x3072xbf16, #tpu.memory_space<vmem>>, vector<8x3072xbf16>
    %c0_1 = arith.constant 0 : index
    %c0_2 = arith.constant 0 : index
    %1 = vector.load %arg2[%c0_1, %c0_2] : memref<3072x576xbf16, #tpu.memory_space<vmem>>, vector<3072x576xbf16>
    %cst = arith.constant dense<0.000000e+00> : vector<8x576xf32>
    %2 = tpu.matmul %0, %1, %cst {dimension_numbers = #tpu.dot_dimension_numbers<[1], [0], [0], [1], [0, 0, 1, 1], [], []>} : vector<8x3072xbf16>, vector<3072x576xbf16>, vector<8x576xf32> -> vector<8x576xf32>
    %c0_3 = arith.constant 0 : index
    %c0_4 = arith.constant 0 : index
    %3 = vector.load %arg3[%c0_3, %c0_4] : memref<1x576xf32, #tpu.memory_space<vmem>>, vector<1x576xf32>
    %4 = vector.broadcast %3 : vector<1x576xf32> to vector<8x576xf32>
    %5 = arith.mulf %2, %4 : vector<8x576xf32>
    %c0_5 = arith.constant 0 : index
    %c0_6 = arith.constant 0 : index
    %6 = vector.load %arg4[%c0_5, %c0_6] : memref<1x576xf32, #tpu.memory_space<vmem>>, vector<1x576xf32>
    %7 = vector.broadcast %6 : vector<1x576xf32> to vector<8x576xf32>
    %8 = arith.addf %5, %7 : vector<8x576xf32>
    %cst_7 = arith.constant 0.000000e+00 : f32
    %9 = vector.broadcast %cst_7 : f32 to vector<8x576xf32>
    %10 = arith.maximumf %8, %9 : vector<8x576xf32>
    %11 = arith.truncf %10 : vector<8x576xf32> to vector<8x576xbf16>
    %c0_8 = arith.constant 0 : index
    %c0_9 = arith.constant 0 : index
    %12 = vector.load %arg5[%c0_8, %c0_9] : memref<8x576xbf16, #tpu.memory_space<vmem>>, vector<8x576xbf16>
    tpu.vector_store %arg5[%c0_8, %c0_9], %11 {strides = array<i32>} : memref<8x576xbf16, #tpu.memory_space<vmem>>, vector<8x576xbf16>,
    return
  }
  func.func @transform_0(%arg0: i32) -> (i32, i32) {
    %c0_i32 = arith.constant 0 : i32
    %c0_i32_0 = arith.constant 0 : i32
    return %arg0, %c0_i32 : i32, i32
  }
  func.func @transform_1(%arg0: i32) -> (i32, i32) {
    %c0_i32 = arith.constant 0 : i32
    %c0_i32_0 = arith.constant 0 : i32
    %c0_i32_1 = arith.constant 0 : i32
    return %c0_i32, %c0_i32_0 : i32, i32
  }
  func.func @transform_2(%arg0: i32) -> (i32, i32) {
    %c0_i32 = arith.constant 0 : i32
    %c0_i32_0 = arith.constant 0 : i32
    %c0_i32_1 = arith.constant 0 : i32
    return %c0_i32, %c0_i32_0 : i32, i32
  }
  func.func @transform_3(%arg0: i32) -> (i32, i32) {
    %c0_i32 = arith.constant 0 : i32
    %c0_i32_0 = arith.constant 0 : i32
    %c0_i32_1 = arith.constant 0 : i32
    return %c0_i32, %c0_i32_0 : i32, i32
  }
  func.func @transform_4(%arg0: i32) -> (i32, i32) {
    %c0_i32 = arith.constant 0 : i32
    %c0_i32_0 = arith.constant 0 : i32
    return %arg0, %c0_i32 : i32, i32
  }
}

module attributes {stable_mosaic.version = 11 : i64} {
  func.func @_matmul_bn_relu_split_kernel(%arg0: i32, %arg1: memref<8x576xbf16, #tpu.memory_space<vmem>>, %arg2: memref<576x512xbf16, #tpu.memory_space<vmem>>, %arg3: memref<1x512xf32, #tpu.memory_space<vmem>>, %arg4: memref<1x512xf32, #tpu.memory_space<vmem>>, %arg5: memref<8x128xbf16, #tpu.memory_space<vmem>>, %arg6: memref<8x384xbf16, #tpu.memory_space<vmem>>) attributes {dimension_semantics = [#tpu.dimension_semantics<parallel>], iteration_bounds = array<i64: 1>, scalar_prefetch = 0 : i64, scratch_operands = 0 : i64, tpu.core_type = #tpu.core_type<tc>, window_params = [{transform_indices = @transform_0, window_bounds = array<i64: 8, 576>}, {pipeline_mode = #tpu.pipeline_mode<synchronous>, transform_indices = @transform_1, window_bounds = array<i64: 576, 512>}, {pipeline_mode = #tpu.pipeline_mode<synchronous>, transform_indices = @transform_2, window_bounds = array<i64: 1, 512>}, {pipeline_mode = #tpu.pipeline_mode<synchronous>, transform_indices = @transform_3, window_bounds = array<i64: 1, 512>}, {transform_indices = @transform_4, window_bounds = array<i64: 8, 128>}, {transform_indices = @transform_5, window_bounds = array<i64: 8, 384>}]} {
    %c0 = arith.constant 0 : index
    %c0_0 = arith.constant 0 : index
    %0 = vector.load %arg1[%c0, %c0_0] : memref<8x576xbf16, #tpu.memory_space<vmem>>, vector<8x576xbf16>
    %c0_1 = arith.constant 0 : index
    %c0_2 = arith.constant 0 : index
    %1 = vector.load %arg2[%c0_1, %c0_2] : memref<576x512xbf16, #tpu.memory_space<vmem>>, vector<576x512xbf16>
    %cst = arith.constant dense<0.000000e+00> : vector<8x512xf32>
    %2 = tpu.matmul %0, %1, %cst {dimension_numbers = #tpu.dot_dimension_numbers<[1], [0], [0], [1], [0, 0, 1, 1], [], []>} : vector<8x576xbf16>, vector<576x512xbf16>, vector<8x512xf32> -> vector<8x512xf32>
    %c0_3 = arith.constant 0 : index
    %c0_4 = arith.constant 0 : index
    %3 = vector.load %arg3[%c0_3, %c0_4] : memref<1x512xf32, #tpu.memory_space<vmem>>, vector<1x512xf32>
    %4 = vector.broadcast %3 : vector<1x512xf32> to vector<8x512xf32>
    %5 = arith.mulf %2, %4 : vector<8x512xf32>
    %c0_5 = arith.constant 0 : index
    %c0_6 = arith.constant 0 : index
    %6 = vector.load %arg4[%c0_5, %c0_6] : memref<1x512xf32, #tpu.memory_space<vmem>>, vector<1x512xf32>
    %7 = vector.broadcast %6 : vector<1x512xf32> to vector<8x512xf32>
    %8 = arith.addf %5, %7 : vector<8x512xf32>
    %cst_7 = arith.constant 0.000000e+00 : f32
    %9 = vector.broadcast %cst_7 : f32 to vector<8x512xf32>
    %10 = arith.maximumf %8, %9 : vector<8x512xf32>
    %11 = vector.extract_strided_slice %10 {offsets = [0, 0], sizes = [8, 128], strides = [1, 1]} : vector<8x512xf32> to vector<8x128xf32>
    %12 = arith.truncf %11 : vector<8x128xf32> to vector<8x128xbf16>
    %c0_8 = arith.constant 0 : index
    %c0_9 = arith.constant 0 : index
    %13 = vector.load %arg5[%c0_8, %c0_9] : memref<8x128xbf16, #tpu.memory_space<vmem>>, vector<8x128xbf16>
    tpu.vector_store %arg5[%c0_8, %c0_9], %12 {strides = array<i32>} : memref<8x128xbf16, #tpu.memory_space<vmem>>, vector<8x128xbf16>,
    %14 = vector.extract_strided_slice %10 {offsets = [0, 128], sizes = [8, 384], strides = [1, 1]} : vector<8x512xf32> to vector<8x384xf32>
    %15 = arith.truncf %14 : vector<8x384xf32> to vector<8x384xbf16>
    %c0_10 = arith.constant 0 : index
    %c0_11 = arith.constant 0 : index
    %16 = vector.load %arg6[%c0_10, %c0_11] : memref<8x384xbf16, #tpu.memory_space<vmem>>, vector<8x384xbf16>
    tpu.vector_store %arg6[%c0_10, %c0_11], %15 {strides = array<i32>} : memref<8x384xbf16, #tpu.memory_space<vmem>>, vector<8x384xbf16>,
    return
  }
  func.func @transform_0(%arg0: i32) -> (i32, i32) {
    %c0_i32 = arith.constant 0 : i32
    %c0_i32_0 = arith.constant 0 : i32
    return %arg0, %c0_i32 : i32, i32
  }
  func.func @transform_1(%arg0: i32) -> (i32, i32) {
    %c0_i32 = arith.constant 0 : i32
    %c0_i32_0 = arith.constant 0 : i32
    %c0_i32_1 = arith.constant 0 : i32
    return %c0_i32, %c0_i32_0 : i32, i32
  }
  func.func @transform_2(%arg0: i32) -> (i32, i32) {
    %c0_i32 = arith.constant 0 : i32
    %c0_i32_0 = arith.constant 0 : i32
    %c0_i32_1 = arith.constant 0 : i32
    return %c0_i32, %c0_i32_0 : i32, i32
  }
  func.func @transform_3(%arg0: i32) -> (i32, i32) {
    %c0_i32 = arith.constant 0 : i32
    %c0_i32_0 = arith.constant 0 : i32
    %c0_i32_1 = arith.constant 0 : i32
    return %c0_i32, %c0_i32_0 : i32, i32
  }
  func.func @transform_4(%arg0: i32) -> (i32, i32) {
    %c0_i32 = arith.constant 0 : i32
    %c0_i32_0 = arith.constant 0 : i32
    return %arg0, %c0_i32 : i32, i32
  }
  func.func @transform_5(%arg0: i32) -> (i32, i32) {
    %c0_i32 = arith.constant 0 : i32
    %c0_i32_0 = arith.constant 0 : i32
    return %arg0, %c0_i32 : i32, i32
  }
}

module attributes {stable_mosaic.version = 11 : i64} {
  func.func @_ghost_psp_kernel(%arg0: i32, %arg1: memref<1x2x2x384xbf16, #tpu.memory_space<vmem>>, %arg2: memref<9x384xf32, #tpu.memory_space<vmem>>, %arg3: memref<1x384xf32, #tpu.memory_space<vmem>>, %arg4: memref<1x384xf32, #tpu.memory_space<vmem>>, %arg5: memref<128x4xbf16, #tpu.memory_space<vmem>>, %arg6: memref<1x128x128xbf16, #tpu.memory_space<vmem>>, %arg7: memref<1x128x576xbf16, #tpu.memory_space<vmem>>, %arg8: memref<2x2x384xf32, #tpu.memory_space<vmem>>) attributes {dimension_semantics = [#tpu.dimension_semantics<parallel>], iteration_bounds = array<i64: 2>, scalar_prefetch = 0 : i64, scratch_operands = 1 : i64, tpu.core_type = #tpu.core_type<tc>, window_params = [{transform_indices = @transform_0, window_bounds = array<i64: 1, 2, 2, 384>}, {pipeline_mode = #tpu.pipeline_mode<synchronous>, transform_indices = @transform_1, window_bounds = array<i64: 9, 384>}, {pipeline_mode = #tpu.pipeline_mode<synchronous>, transform_indices = @transform_2, window_bounds = array<i64: 1, 384>}, {pipeline_mode = #tpu.pipeline_mode<synchronous>, transform_indices = @transform_3, window_bounds = array<i64: 1, 384>}, {pipeline_mode = #tpu.pipeline_mode<synchronous>, transform_indices = @transform_4, window_bounds = array<i64: 128, 4>}, {transform_indices = @transform_5, window_bounds = array<i64: 1, 128, 128>}, {transform_indices = @transform_6, window_bounds = array<i64: 1, 128, 576>}]} {
    %c0 = arith.constant 0 : index
    %c0_0 = arith.constant 0 : index
    %c0_1 = arith.constant 0 : index
    %c0_2 = arith.constant 0 : index
    %0 = vector.load %arg1[%c0, %c0_0, %c0_1, %c0_2] : memref<1x2x2x384xbf16, #tpu.memory_space<vmem>>, vector<1x2x2x384xbf16>
    %1 = vector.shape_cast %0 : vector<1x2x2x384xbf16> to vector<2x2x384xbf16>
    %c0_3 = arith.constant 0 : index
    %c0_4 = arith.constant 0 : index
    %2 = vector.load %arg2[%c0_3, %c0_4] : memref<9x384xf32, #tpu.memory_space<vmem>>, vector<9x384xf32>
    %cst = arith.constant 0.000000e+00 : f32
    %3 = vector.broadcast %cst : f32 to vector<2x2x384xf32>
    %c0_5 = arith.constant 0 : index
    %c0_6 = arith.constant 0 : index
    %c0_7 = arith.constant 0 : index
    %4 = vector.load %arg8[%c0_5, %c0_6, %c0_7] : memref<2x2x384xf32, #tpu.memory_space<vmem>>, vector<2x2x384xf32>
    tpu.vector_store %arg8[%c0_5, %c0_6, %c0_7], %3 {strides = array<i32>} : memref<2x2x384xf32, #tpu.memory_space<vmem>>, vector<2x2x384xf32>,
    %5 = vector.extract_strided_slice %2 {offsets = [0, 0], sizes = [1, 384], strides = [1, 1]} : vector<9x384xf32> to vector<1x384xf32>
    %6 = vector.shape_cast %5 : vector<1x384xf32> to vector<384xf32>
    %7 = vector.shape_cast %6 : vector<384xf32> to vector<1x1x384xf32>
    %c1 = arith.constant 1 : index
    %c1_8 = arith.constant 1 : index
    %c0_9 = arith.constant 0 : index
    %8 = vector.load %arg8[%c1, %c1_8, %c0_9] : memref<2x2x384xf32, #tpu.memory_space<vmem>>, vector<1x1x384xf32>
    %9 = vector.extract_strided_slice %1 {offsets = [0, 0, 0], sizes = [1, 1, 384], strides = [1, 1, 1]} : vector<2x2x384xbf16> to vector<1x1x384xbf16>
    %10 = arith.extf %9 : vector<1x1x384xbf16> to vector<1x1x384xf32>
    %11 = arith.mulf %10, %7 : vector<1x1x384xf32>
    %12 = arith.addf %8, %11 : vector<1x1x384xf32>
    %c1_10 = arith.constant 1 : index
    %c1_11 = arith.constant 1 : index
    %c0_12 = arith.constant 0 : index
    %13 = vector.load %arg8[%c1_10, %c1_11, %c0_12] : memref<2x2x384xf32, #tpu.memory_space<vmem>>, vector<1x1x384xf32>
    tpu.vector_store %arg8[%c1_10, %c1_11, %c0_12], %12 {strides = array<i32>} : memref<2x2x384xf32, #tpu.memory_space<vmem>>, vector<1x1x384xf32>,
    %14 = vector.extract_strided_slice %2 {offsets = [1, 0], sizes = [1, 384], strides = [1, 1]} : vector<9x384xf32> to vector<1x384xf32>
    %15 = vector.shape_cast %14 : vector<1x384xf32> to vector<384xf32>
    %16 = vector.shape_cast %15 : vector<384xf32> to vector<1x1x384xf32>
    %c1_13 = arith.constant 1 : index
    %c0_14 = arith.constant 0 : index
    %c0_15 = arith.constant 0 : index
    %17 = vector.load %arg8[%c1_13, %c0_14, %c0_15] : memref<2x2x384xf32, #tpu.memory_space<vmem>>, vector<1x2x384xf32>
    %18 = vector.extract_strided_slice %1 {offsets = [0, 0, 0], sizes = [1, 2, 384], strides = [1, 1, 1]} : vector<2x2x384xbf16> to vector<1x2x384xbf16>
    %19 = arith.extf %18 : vector<1x2x384xbf16> to vector<1x2x384xf32>
    %20 = vector.broadcast %16 : vector<1x1x384xf32> to vector<1x2x384xf32>
    %21 = arith.mulf %19, %20 : vector<1x2x384xf32>
    %22 = arith.addf %17, %21 : vector<1x2x384xf32>
    %c1_16 = arith.constant 1 : index
    %c0_17 = arith.constant 0 : index
    %c0_18 = arith.constant 0 : index
    %23 = vector.load %arg8[%c1_16, %c0_17, %c0_18] : memref<2x2x384xf32, #tpu.memory_space<vmem>>, vector<1x2x384xf32>
    tpu.vector_store %arg8[%c1_16, %c0_17, %c0_18], %22 {strides = array<i32>} : memref<2x2x384xf32, #tpu.memory_space<vmem>>, vector<1x2x384xf32>,
    %24 = vector.extract_strided_slice %2 {offsets = [2, 0], sizes = [1, 384], strides = [1, 1]} : vector<9x384xf32> to vector<1x384xf32>
    %25 = vector.shape_cast %24 : vector<1x384xf32> to vector<384xf32>
    %26 = vector.shape_cast %25 : vector<384xf32> to vector<1x1x384xf32>
    %c1_19 = arith.constant 1 : index
    %c0_20 = arith.constant 0 : index
    %c0_21 = arith.constant 0 : index
    %27 = vector.load %arg8[%c1_19, %c0_20, %c0_21] : memref<2x2x384xf32, #tpu.memory_space<vmem>>, vector<1x1x384xf32>
    %28 = vector.extract_strided_slice %1 {offsets = [0, 1, 0], sizes = [1, 1, 384], strides = [1, 1, 1]} : vector<2x2x384xbf16> to vector<1x1x384xbf16>
    %29 = arith.extf %28 : vector<1x1x384xbf16> to vector<1x1x384xf32>
    %30 = arith.mulf %29, %26 : vector<1x1x384xf32>
    %31 = arith.addf %27, %30 : vector<1x1x384xf32>
    %c1_22 = arith.constant 1 : index
    %c0_23 = arith.constant 0 : index
    %c0_24 = arith.constant 0 : index
    %32 = vector.load %arg8[%c1_22, %c0_23, %c0_24] : memref<2x2x384xf32, #tpu.memory_space<vmem>>, vector<1x1x384xf32>
    tpu.vector_store %arg8[%c1_22, %c0_23, %c0_24], %31 {strides = array<i32>} : memref<2x2x384xf32, #tpu.memory_space<vmem>>, vector<1x1x384xf32>,
    %33 = vector.extract_strided_slice %2 {offsets = [3, 0], sizes = [1, 384], strides = [1, 1]} : vector<9x384xf32> to vector<1x384xf32>
    %34 = vector.shape_cast %33 : vector<1x384xf32> to vector<384xf32>
    %35 = vector.shape_cast %34 : vector<384xf32> to vector<1x1x384xf32>
    %c0_25 = arith.constant 0 : index
    %c1_26 = arith.constant 1 : index
    %c0_27 = arith.constant 0 : index
    %36 = vector.load %arg8[%c0_25, %c1_26, %c0_27] : memref<2x2x384xf32, #tpu.memory_space<vmem>>, vector<2x1x384xf32>
    %37 = vector.extract_strided_slice %1 {offsets = [0, 0, 0], sizes = [2, 1, 384], strides = [1, 1, 1]} : vector<2x2x384xbf16> to vector<2x1x384xbf16>
    %38 = arith.extf %37 : vector<2x1x384xbf16> to vector<2x1x384xf32>
    %39 = vector.broadcast %35 : vector<1x1x384xf32> to vector<2x1x384xf32>
    %40 = arith.mulf %38, %39 : vector<2x1x384xf32>
    %41 = arith.addf %36, %40 : vector<2x1x384xf32>
    %c0_28 = arith.constant 0 : index
    %c1_29 = arith.constant 1 : index
    %c0_30 = arith.constant 0 : index
    %42 = vector.load %arg8[%c0_28, %c1_29, %c0_30] : memref<2x2x384xf32, #tpu.memory_space<vmem>>, vector<2x1x384xf32>
    tpu.vector_store %arg8[%c0_28, %c1_29, %c0_30], %41 {strides = array<i32>} : memref<2x2x384xf32, #tpu.memory_space<vmem>>, vector<2x1x384xf32>,
    %43 = vector.extract_strided_slice %2 {offsets = [4, 0], sizes = [1, 384], strides = [1, 1]} : vector<9x384xf32> to vector<1x384xf32>
    %44 = vector.shape_cast %43 : vector<1x384xf32> to vector<384xf32>
    %45 = vector.shape_cast %44 : vector<384xf32> to vector<1x1x384xf32>
    %c0_31 = arith.constant 0 : index
    %c0_32 = arith.constant 0 : index
    %c0_33 = arith.constant 0 : index
    %46 = vector.load %arg8[%c0_31, %c0_32, %c0_33] : memref<2x2x384xf32, #tpu.memory_space<vmem>>, vector<2x2x384xf32>
    %47 = arith.extf %1 : vector<2x2x384xbf16> to vector<2x2x384xf32>
    %48 = vector.broadcast %45 : vector<1x1x384xf32> to vector<2x2x384xf32>
    %49 = arith.mulf %47, %48 : vector<2x2x384xf32>
    %50 = arith.addf %46, %49 : vector<2x2x384xf32>
    %c0_34 = arith.constant 0 : index
    %c0_35 = arith.constant 0 : index
    %c0_36 = arith.constant 0 : index
    %51 = vector.load %arg8[%c0_34, %c0_35, %c0_36] : memref<2x2x384xf32, #tpu.memory_space<vmem>>, vector<2x2x384xf32>
    tpu.vector_store %arg8[%c0_34, %c0_35, %c0_36], %50 {strides = array<i32>} : memref<2x2x384xf32, #tpu.memory_space<vmem>>, vector<2x2x384xf32>,
    %52 = vector.extract_strided_slice %2 {offsets = [5, 0], sizes = [1, 384], strides = [1, 1]} : vector<9x384xf32> to vector<1x384xf32>
    %53 = vector.shape_cast %52 : vector<1x384xf32> to vector<384xf32>
    %54 = vector.shape_cast %53 : vector<384xf32> to vector<1x1x384xf32>
    %c0_37 = arith.constant 0 : index
    %c0_38 = arith.constant 0 : index
    %c0_39 = arith.constant 0 : index
    %55 = vector.load %arg8[%c0_37, %c0_38, %c0_39] : memref<2x2x384xf32, #tpu.memory_space<vmem>>, vector<2x1x384xf32>
    %56 = vector.extract_strided_slice %1 {offsets = [0, 1, 0], sizes = [2, 1, 384], strides = [1, 1, 1]} : vector<2x2x384xbf16> to vector<2x1x384xbf16>
    %57 = arith.extf %56 : vector<2x1x384xbf16> to vector<2x1x384xf32>
    %58 = vector.broadcast %54 : vector<1x1x384xf32> to vector<2x1x384xf32>
    %59 = arith.mulf %57, %58 : vector<2x1x384xf32>
    %60 = arith.addf %55, %59 : vector<2x1x384xf32>
    %c0_40 = arith.constant 0 : index
    %c0_41 = arith.constant 0 : index
    %c0_42 = arith.constant 0 : index
    %61 = vector.load %arg8[%c0_40, %c0_41, %c0_42] : memref<2x2x384xf32, #tpu.memory_space<vmem>>, vector<2x1x384xf32>
    tpu.vector_store %arg8[%c0_40, %c0_41, %c0_42], %60 {strides = array<i32>} : memref<2x2x384xf32, #tpu.memory_space<vmem>>, vector<2x1x384xf32>,
    %62 = vector.extract_strided_slice %2 {offsets = [6, 0], sizes = [1, 384], strides = [1, 1]} : vector<9x384xf32> to vector<1x384xf32>
    %63 = vector.shape_cast %62 : vector<1x384xf32> to vector<384xf32>
    %64 = vector.shape_cast %63 : vector<384xf32> to vector<1x1x384xf32>
    %c0_43 = arith.constant 0 : index
    %c1_44 = arith.constant 1 : index
    %c0_45 = arith.constant 0 : index
    %65 = vector.load %arg8[%c0_43, %c1_44, %c0_45] : memref<2x2x384xf32, #tpu.memory_space<vmem>>, vector<1x1x384xf32>
    %66 = vector.extract_strided_slice %1 {offsets = [1, 0, 0], sizes = [1, 1, 384], strides = [1, 1, 1]} : vector<2x2x384xbf16> to vector<1x1x384xbf16>
    %67 = arith.extf %66 : vector<1x1x384xbf16> to vector<1x1x384xf32>
    %68 = arith.mulf %67, %64 : vector<1x1x384xf32>
    %69 = arith.addf %65, %68 : vector<1x1x384xf32>
    %c0_46 = arith.constant 0 : index
    %c1_47 = arith.constant 1 : index
    %c0_48 = arith.constant 0 : index
    %70 = vector.load %arg8[%c0_46, %c1_47, %c0_48] : memref<2x2x384xf32, #tpu.memory_space<vmem>>, vector<1x1x384xf32>
    tpu.vector_store %arg8[%c0_46, %c1_47, %c0_48], %69 {strides = array<i32>} : memref<2x2x384xf32, #tpu.memory_space<vmem>>, vector<1x1x384xf32>,
    %71 = vector.extract_strided_slice %2 {offsets = [7, 0], sizes = [1, 384], strides = [1, 1]} : vector<9x384xf32> to vector<1x384xf32>
    %72 = vector.shape_cast %71 : vector<1x384xf32> to vector<384xf32>
    %73 = vector.shape_cast %72 : vector<384xf32> to vector<1x1x384xf32>
    %c0_49 = arith.constant 0 : index
    %c0_50 = arith.constant 0 : index
    %c0_51 = arith.constant 0 : index
    %74 = vector.load %arg8[%c0_49, %c0_50, %c0_51] : memref<2x2x384xf32, #tpu.memory_space<vmem>>, vector<1x2x384xf32>
    %75 = vector.extract_strided_slice %1 {offsets = [1, 0, 0], sizes = [1, 2, 384], strides = [1, 1, 1]} : vector<2x2x384xbf16> to vector<1x2x384xbf16>
    %76 = arith.extf %75 : vector<1x2x384xbf16> to vector<1x2x384xf32>
    %77 = vector.broadcast %73 : vector<1x1x384xf32> to vector<1x2x384xf32>
    %78 = arith.mulf %76, %77 : vector<1x2x384xf32>
    %79 = arith.addf %74, %78 : vector<1x2x384xf32>
    %c0_52 = arith.constant 0 : index
    %c0_53 = arith.constant 0 : index
    %c0_54 = arith.constant 0 : index
    %80 = vector.load %arg8[%c0_52, %c0_53, %c0_54] : memref<2x2x384xf32, #tpu.memory_space<vmem>>, vector<1x2x384xf32>
    tpu.vector_store %arg8[%c0_52, %c0_53, %c0_54], %79 {strides = array<i32>} : memref<2x2x384xf32, #tpu.memory_space<vmem>>, vector<1x2x384xf32>,
    %81 = vector.extract_strided_slice %2 {offsets = [8, 0], sizes = [1, 384], strides = [1, 1]} : vector<9x384xf32> to vector<1x384xf32>
    %82 = vector.shape_cast %81 : vector<1x384xf32> to vector<384xf32>
    %83 = vector.shape_cast %82 : vector<384xf32> to vector<1x1x384xf32>
    %c0_55 = arith.constant 0 : index
    %c0_56 = arith.constant 0 : index
    %c0_57 = arith.constant 0 : index
    %84 = vector.load %arg8[%c0_55, %c0_56, %c0_57] : memref<2x2x384xf32, #tpu.memory_space<vmem>>, vector<1x1x384xf32>
    %85 = vector.extract_strided_slice %1 {offsets = [1, 1, 0], sizes = [1, 1, 384], strides = [1, 1, 1]} : vector<2x2x384xbf16> to vector<1x1x384xbf16>
    %86 = arith.extf %85 : vector<1x1x384xbf16> to vector<1x1x384xf32>
    %87 = arith.mulf %86, %83 : vector<1x1x384xf32>
    %88 = arith.addf %84, %87 : vector<1x1x384xf32>
    %c0_58 = arith.constant 0 : index
    %c0_59 = arith.constant 0 : index
    %c0_60 = arith.constant 0 : index
    %89 = vector.load %arg8[%c0_58, %c0_59, %c0_60] : memref<2x2x384xf32, #tpu.memory_space<vmem>>, vector<1x1x384xf32>
    tpu.vector_store %arg8[%c0_58, %c0_59, %c0_60], %88 {strides = array<i32>} : memref<2x2x384xf32, #tpu.memory_space<vmem>>, vector<1x1x384xf32>,
    %c0_61 = arith.constant 0 : index
    %c0_62 = arith.constant 0 : index
    %c0_63 = arith.constant 0 : index
    %90 = vector.load %arg8[%c0_61, %c0_62, %c0_63] : memref<2x2x384xf32, #tpu.memory_space<vmem>>, vector<2x2x384xf32>
    %c0_64 = arith.constant 0 : index
    %c0_65 = arith.constant 0 : index
    %91 = vector.load %arg3[%c0_64, %c0_65] : memref<1x384xf32, #tpu.memory_space<vmem>>, vector<1x384xf32>
    %92 = vector.shape_cast %91 : vector<1x384xf32> to vector<384xf32>
    %93 = vector.shape_cast %92 : vector<384xf32> to vector<1x1x384xf32>
    %94 = vector.broadcast %93 : vector<1x1x384xf32> to vector<2x2x384xf32>
    %95 = arith.mulf %90, %94 : vector<2x2x384xf32>
    %c0_66 = arith.constant 0 : index
    %c0_67 = arith.constant 0 : index
    %96 = vector.load %arg4[%c0_66, %c0_67] : memref<1x384xf32, #tpu.memory_space<vmem>>, vector<1x384xf32>
    %97 = vector.shape_cast %96 : vector<1x384xf32> to vector<384xf32>
    %98 = vector.shape_cast %97 : vector<384xf32> to vector<1x1x384xf32>
    %99 = vector.broadcast %98 : vector<1x1x384xf32> to vector<2x2x384xf32>
    %100 = arith.addf %95, %99 : vector<2x2x384xf32>
    %cst_68 = arith.constant 0.000000e+00 : f32
    %101 = vector.broadcast %cst_68 : f32 to vector<2x2x384xf32>
    %102 = arith.maximumf %100, %101 : vector<2x2x384xf32>
    %103 = arith.truncf %102 : vector<2x2x384xf32> to vector<2x2x384xbf16>
    %c0_69 = arith.constant 0 : index
    %c0_70 = arith.constant 0 : index
    %104 = vector.load %arg5[%c0_69, %c0_70] : memref<128x4xbf16, #tpu.memory_space<vmem>>, vector<128x4xbf16>
    %105 = vector.shape_cast %1 : vector<2x2x384xbf16> to vector<4x384xbf16>
    %cst_71 = arith.constant dense<0.000000e+00> : vector<128x384xf32>
    %106 = tpu.matmul %104, %105, %cst_71 {dimension_numbers = #tpu.dot_dimension_numbers<[1], [0], [0], [1], [0, 0, 1, 1], [], []>} : vector<128x4xbf16>, vector<4x384xbf16>, vector<128x384xf32> -> vector<128x384xf32>
    %107 = vector.shape_cast %103 : vector<2x2x384xbf16> to vector<4x384xbf16>
    %cst_72 = arith.constant dense<0.000000e+00> : vector<128x384xf32>
    %108 = tpu.matmul %104, %107, %cst_72 {dimension_numbers = #tpu.dot_dimension_numbers<[1], [0], [0], [1], [0, 0, 1, 1], [], []>} : vector<128x4xbf16>, vector<4x384xbf16>, vector<128x384xf32> -> vector<128x384xf32>
    %109 = vector.extract_strided_slice %106 {offsets = [0, 0], sizes = [128, 64], strides = [1, 1]} : vector<128x384xf32> to vector<128x64xf32>
    %110 = vector.extract_strided_slice %108 {offsets = [0, 0], sizes = [128, 64], strides = [1, 1]} : vector<128x384xf32> to vector<128x64xf32>
    %111 = tpu.concatenate %109, %110 in 1 : vector<128x64xf32>, vector<128x64xf32> -> vector<128x128xf32>
    %112 = arith.truncf %111 : vector<128x128xf32> to vector<128x128xbf16>
    %c0_73 = arith.constant 0 : index
    %c0_74 = arith.constant 0 : index
    %c0_75 = arith.constant 0 : index
    %113 = vector.load %arg6[%c0_73, %c0_74, %c0_75] : memref<1x128x128xbf16, #tpu.memory_space<vmem>>, vector<1x128x128xbf16>
    %114 = vector.shape_cast %113 : vector<1x128x128xbf16> to vector<128x128xbf16>
    %115 = vector.shape_cast %112 : vector<128x128xbf16> to vector<1x128x128xbf16>
    tpu.vector_store %arg6[%c0_73, %c0_74, %c0_75], %115 {strides = array<i32>} : memref<1x128x128xbf16, #tpu.memory_space<vmem>>, vector<1x128x128xbf16>,
    %116 = vector.extract_strided_slice %106 {offsets = [0, 64], sizes = [128, 288], strides = [1, 1]} : vector<128x384xf32> to vector<128x288xf32>
    %117 = vector.extract_strided_slice %108 {offsets = [0, 64], sizes = [128, 288], strides = [1, 1]} : vector<128x384xf32> to vector<128x288xf32>
    %118 = tpu.concatenate %116, %117 in 1 : vector<128x288xf32>, vector<128x288xf32> -> vector<128x576xf32>
    %119 = arith.truncf %118 : vector<128x576xf32> to vector<128x576xbf16>
    %c0_76 = arith.constant 0 : index
    %c0_77 = arith.constant 0 : index
    %c0_78 = arith.constant 0 : index
    %120 = vector.load %arg7[%c0_76, %c0_77, %c0_78] : memref<1x128x576xbf16, #tpu.memory_space<vmem>>, vector<1x128x576xbf16>
    %121 = vector.shape_cast %120 : vector<1x128x576xbf16> to vector<128x576xbf16>
    %122 = vector.shape_cast %119 : vector<128x576xbf16> to vector<1x128x576xbf16>
    tpu.vector_store %arg7[%c0_76, %c0_77, %c0_78], %122 {strides = array<i32>} : memref<1x128x576xbf16, #tpu.memory_space<vmem>>, vector<1x128x576xbf16>,
    return
  }
  func.func @transform_0(%arg0: i32) -> (i32, i32, i32, i32) {
    %c0_i32 = arith.constant 0 : i32
    %c0_i32_0 = arith.constant 0 : i32
    %c0_i32_1 = arith.constant 0 : i32
    %c0_i32_2 = arith.constant 0 : i32
    return %arg0, %c0_i32, %c0_i32_0, %c0_i32_1 : i32, i32, i32, i32
  }
  func.func @transform_1(%arg0: i32) -> (i32, i32) {
    %c0_i32 = arith.constant 0 : i32
    %c0_i32_0 = arith.constant 0 : i32
    %c0_i32_1 = arith.constant 0 : i32
    return %c0_i32, %c0_i32_0 : i32, i32
  }
  func.func @transform_2(%arg0: i32) -> (i32, i32) {
    %c0_i32 = arith.constant 0 : i32
    %c0_i32_0 = arith.constant 0 : i32
    %c0_i32_1 = arith.constant 0 : i32
    return %c0_i32, %c0_i32_0 : i32, i32
  }
  func.func @transform_3(%arg0: i32) -> (i32, i32) {
    %c0_i32 = arith.constant 0 : i32
    %c0_i32_0 = arith.constant 0 : i32
    %c0_i32_1 = arith.constant 0 : i32
    return %c0_i32, %c0_i32_0 : i32, i32
  }
  func.func @transform_4(%arg0: i32) -> (i32, i32) {
    %c0_i32 = arith.constant 0 : i32
    %c0_i32_0 = arith.constant 0 : i32
    %c0_i32_1 = arith.constant 0 : i32
    return %c0_i32, %c0_i32_0 : i32, i32
  }
  func.func @transform_5(%arg0: i32) -> (i32, i32, i32) {
    %c0_i32 = arith.constant 0 : i32
    %c0_i32_0 = arith.constant 0 : i32
    %c0_i32_1 = arith.constant 0 : i32
    return %arg0, %c0_i32, %c0_i32_0 : i32, i32, i32
  }
  func.func @transform_6(%arg0: i32) -> (i32, i32, i32) {
    %c0_i32 = arith.constant 0 : i32
    %c0_i32_0 = arith.constant 0 : i32
    %c0_i32_1 = arith.constant 0 : i32
    return %arg0, %c0_i32, %c0_i32_0 : i32, i32, i32
  }
}

module attributes {stable_mosaic.version = 11 : i64} {
  func.func @_cap_attn_out_kernel(%arg0: i32, %arg1: i32, %arg2: memref<1x8x128xbf16, #tpu.memory_space<vmem>>, %arg3: memref<1x128x128xbf16, #tpu.memory_space<vmem>>, %arg4: memref<1x128x576xbf16, #tpu.memory_space<vmem>>, %arg5: memref<1x8x576xbf16, #tpu.memory_space<vmem>>, %arg6: memref<1x128xf32, #tpu.memory_space<vmem>>, %arg7: memref<576x128xbf16, #tpu.memory_space<vmem>>, %arg8: memref<1x128xf32, #tpu.memory_space<vmem>>, %arg9: memref<1x128xf32, #tpu.memory_space<vmem>>, %arg10: memref<1x8x128xf32, #tpu.memory_space<vmem>>) attributes {dimension_semantics = [#tpu.dimension_semantics<parallel>, #tpu.dimension_semantics<parallel>], iteration_bounds = array<i64: 2, 1>, scalar_prefetch = 0 : i64, scratch_operands = 0 : i64, tpu.core_type = #tpu.core_type<tc>, window_params = [{transform_indices = @transform_0, window_bounds = array<i64: 1, 8, 128>}, {transform_indices = @transform_1, window_bounds = array<i64: 1, 128, 128>}, {transform_indices = @transform_2, window_bounds = array<i64: 1, 128, 576>}, {transform_indices = @transform_3, window_bounds = array<i64: 1, 8, 576>}, {pipeline_mode = #tpu.pipeline_mode<synchronous>, transform_indices = @transform_4, window_bounds = array<i64: 1, 128>}, {pipeline_mode = #tpu.pipeline_mode<synchronous>, transform_indices = @transform_5, window_bounds = array<i64: 576, 128>}, {pipeline_mode = #tpu.pipeline_mode<synchronous>, transform_indices = @transform_6, window_bounds = array<i64: 1, 128>}, {pipeline_mode = #tpu.pipeline_mode<synchronous>, transform_indices = @transform_7, window_bounds = array<i64: 1, 128>}, {transform_indices = @transform_8, window_bounds = array<i64: 1, 8, 128>}]} {
    %c0 = arith.constant 0 : index
    %c0_0 = arith.constant 0 : index
    %c0_1 = arith.constant 0 : index
    %0 = vector.load %arg2[%c0, %c0_0, %c0_1] : memref<1x8x128xbf16, #tpu.memory_space<vmem>>, vector<1x8x128xbf16>
    %1 = vector.shape_cast %0 : vector<1x8x128xbf16> to vector<8x128xbf16>
    %c0_2 = arith.constant 0 : index
    %c0_3 = arith.constant 0 : index
    %c0_4 = arith.constant 0 : index
    %2 = vector.load %arg3[%c0_2, %c0_3, %c0_4] : memref<1x128x128xbf16, #tpu.memory_space<vmem>>, vector<1x128x128xbf16>
    %3 = vector.shape_cast %2 : vector<1x128x128xbf16> to vector<128x128xbf16>
    %c0_5 = arith.constant 0 : index
    %c0_6 = arith.constant 0 : index
    %c0_7 = arith.constant 0 : index
    %4 = vector.load %arg4[%c0_5, %c0_6, %c0_7] : memref<1x128x576xbf16, #tpu.memory_space<vmem>>, vector<1x128x576xbf16>
    %5 = vector.shape_cast %4 : vector<1x128x576xbf16> to vector<128x576xbf16>
    %cst = arith.constant dense<0.000000e+00> : vector<8x128xf32>
    %6 = tpu.matmul %1, %3, %cst {dimension_numbers = #tpu.dot_dimension_numbers<[1], [1], [0], [0], [0, 0, 1, 0], [], []>} : vector<8x128xbf16>, vector<128x128xbf16>, vector<8x128xf32> -> vector<8x128xf32>
    %c0_8 = arith.constant 0 : index
    %c0_9 = arith.constant 0 : index
    %7 = vector.load %arg6[%c0_8, %c0_9] : memref<1x128xf32, #tpu.memory_space<vmem>>, vector<1x128xf32>
    %8 = vector.broadcast %7 : vector<1x128xf32> to vector<8x128xf32>
    %9 = arith.addf %6, %8 : vector<8x128xf32>
    %cst_10 = arith.constant dense<0xFF800000> : vector<8xf32>
    %10 = vector.multi_reduction <maximumf>, %9, %cst_10 [1] : vector<8x128xf32> to vector<8xf32>
    %11 = vector.shape_cast %10 : vector<8xf32> to vector<8x1xf32>
    %12 = vector.broadcast %11 : vector<8x1xf32> to vector<8x128xf32>
    %13 = arith.subf %9, %12 : vector<8x128xf32>
    %14 = math.exp %13 : vector<8x128xf32>
    %cst_11 = arith.constant dense<0.000000e+00> : vector<8xf32>
    %15 = vector.multi_reduction <add>, %14, %cst_11 [1] : vector<8x128xf32> to vector<8xf32>
    %16 = vector.shape_cast %15 : vector<8xf32> to vector<8x1xf32>
    %17 = tpu.reciprocal %16 {approx = true} : vector<8x1xf32> -> vector<8x1xf32>
    %18 = vector.broadcast %17 : vector<8x1xf32> to vector<8x128xf32>
    %19 = arith.mulf %14, %18 : vector<8x128xf32>
    %20 = arith.truncf %19 : vector<8x128xf32> to vector<8x128xbf16>
    %cst_12 = arith.constant dense<0.000000e+00> : vector<8x576xf32>
    %21 = tpu.matmul %20, %5, %cst_12 {dimension_numbers = #tpu.dot_dimension_numbers<[1], [0], [0], [1], [0, 0, 1, 1], [], []>} : vector<8x128xbf16>, vector<128x576xbf16>, vector<8x576xf32> -> vector<8x576xf32>
    %c0_13 = arith.constant 0 : index
    %c0_14 = arith.constant 0 : index
    %c0_15 = arith.constant 0 : index
    %22 = vector.load %arg5[%c0_13, %c0_14, %c0_15] : memref<1x8x576xbf16, #tpu.memory_space<vmem>>, vector<1x8x576xbf16>
    %23 = vector.shape_cast %22 : vector<1x8x576xbf16> to vector<8x576xbf16>
    %24 = arith.extf %23 : vector<8x576xbf16> to vector<8x576xf32>
    %25 = arith.addf %24, %21 : vector<8x576xf32>
    %26 = arith.truncf %25 : vector<8x576xf32> to vector<8x576xbf16>
    %c0_16 = arith.constant 0 : index
    %c0_17 = arith.constant 0 : index
    %27 = vector.load %arg7[%c0_16, %c0_17] : memref<576x128xbf16, #tpu.memory_space<vmem>>, vector<576x128xbf16>
    %cst_18 = arith.constant dense<0.000000e+00> : vector<8x128xf32>
    %28 = tpu.matmul %26, %27, %cst_18 {dimension_numbers = #tpu.dot_dimension_numbers<[1], [0], [0], [1], [0, 0, 1, 1], [], []>} : vector<8x576xbf16>, vector<576x128xbf16>, vector<8x128xf32> -> vector<8x128xf32>
    %c0_19 = arith.constant 0 : index
    %c0_20 = arith.constant 0 : index
    %29 = vector.load %arg8[%c0_19, %c0_20] : memref<1x128xf32, #tpu.memory_space<vmem>>, vector<1x128xf32>
    %30 = vector.broadcast %29 : vector<1x128xf32> to vector<8x128xf32>
    %31 = arith.mulf %28, %30 : vector<8x128xf32>
    %c0_21 = arith.constant 0 : index
    %c0_22 = arith.constant 0 : index
    %32 = vector.load %arg9[%c0_21, %c0_22] : memref<1x128xf32, #tpu.memory_space<vmem>>, vector<1x128xf32>
    %33 = vector.broadcast %32 : vector<1x128xf32> to vector<8x128xf32>
    %34 = arith.addf %31, %33 : vector<8x128xf32>
    %cst_23 = arith.constant 0.000000e+00 : f32
    %35 = vector.broadcast %cst_23 : f32 to vector<8x128xf32>
    %36 = arith.maximumf %34, %35 : vector<8x128xf32>
    %c0_24 = arith.constant 0 : index
    %c0_25 = arith.constant 0 : index
    %c0_26 = arith.constant 0 : index
    %37 = vector.load %arg10[%c0_24, %c0_25, %c0_26] : memref<1x8x128xf32, #tpu.memory_space<vmem>>, vector<1x8x128xf32>
    %38 = vector.shape_cast %37 : vector<1x8x128xf32> to vector<8x128xf32>
    %39 = vector.shape_cast %36 : vector<8x128xf32> to vector<1x8x128xf32>
    tpu.vector_store %arg10[%c0_24, %c0_25, %c0_26], %39 {strides = array<i32>} : memref<1x8x128xf32, #tpu.memory_space<vmem>>, vector<1x8x128xf32>,
    return
  }
  func.func @transform_0(%arg0: i32, %arg1: i32) -> (i32, i32, i32) {
    %c0_i32 = arith.constant 0 : i32
    %c0_i32_0 = arith.constant 0 : i32
    return %arg0, %arg1, %c0_i32 : i32, i32, i32
  }
  func.func @transform_1(%arg0: i32, %arg1: i32) -> (i32, i32, i32) {
    %c0_i32 = arith.constant 0 : i32
    %c0_i32_0 = arith.constant 0 : i32
    %c0_i32_1 = arith.constant 0 : i32
    return %arg0, %c0_i32, %c0_i32_0 : i32, i32, i32
  }
  func.func @transform_2(%arg0: i32, %arg1: i32) -> (i32, i32, i32) {
    %c0_i32 = arith.constant 0 : i32
    %c0_i32_0 = arith.constant 0 : i32
    %c0_i32_1 = arith.constant 0 : i32
    return %arg0, %c0_i32, %c0_i32_0 : i32, i32, i32
  }
  func.func @transform_3(%arg0: i32, %arg1: i32) -> (i32, i32, i32) {
    %c0_i32 = arith.constant 0 : i32
    %c0_i32_0 = arith.constant 0 : i32
    return %arg0, %arg1, %c0_i32 : i32, i32, i32
  }
  func.func @transform_4(%arg0: i32, %arg1: i32) -> (i32, i32) {
    %c0_i32 = arith.constant 0 : i32
    %c0_i32_0 = arith.constant 0 : i32
    %c0_i32_1 = arith.constant 0 : i32
    return %c0_i32, %c0_i32_0 : i32, i32
  }
  func.func @transform_5(%arg0: i32, %arg1: i32) -> (i32, i32) {
    %c0_i32 = arith.constant 0 : i32
    %c0_i32_0 = arith.constant 0 : i32
    %c0_i32_1 = arith.constant 0 : i32
    return %c0_i32, %c0_i32_0 : i32, i32
  }
  func.func @transform_6(%arg0: i32, %arg1: i32) -> (i32, i32) {
    %c0_i32 = arith.constant 0 : i32
    %c0_i32_0 = arith.constant 0 : i32
    %c0_i32_1 = arith.constant 0 : i32
    return %c0_i32, %c0_i32_0 : i32, i32
  }
  func.func @transform_7(%arg0: i32, %arg1: i32) -> (i32, i32) {
    %c0_i32 = arith.constant 0 : i32
    %c0_i32_0 = arith.constant 0 : i32
    %c0_i32_1 = arith.constant 0 : i32
    return %c0_i32, %c0_i32_0 : i32, i32
  }
  func.func @transform_8(%arg0: i32, %arg1: i32) -> (i32, i32, i32) {
    %c0_i32 = arith.constant 0 : i32
    %c0_i32_0 = arith.constant 0 : i32
    return %arg0, %arg1, %c0_i32 : i32, i32, i32
  }
}

</mosaic_0001>

<llo_original>
// kernel: context_branch_forward.5
$region0: #{context_branch_forward.5}
  #allocation0 [shape = 'u32[]', space=smem, size = 0x4, offset = 0x4, fixed_abs, tag = 'smem constant byte address 0x4 - core index']
  #allocation1 [shape = 'u32[144,128]{1,0:T(1,128)}', space=vmem, size = 0x12000, scoped, tag = 'internal scratch']
  %s0 = inlined_call_operand.hbm [shape: bf16[8,576], index: 0, kind: input, shape index: {}]
  %s1 = inlined_call_operand.hbm [shape: bf16[576,512], index: 1, kind: input, shape index: {}]
  %s2 = inlined_call_operand.hbm [shape: f32[1,512], index: 2, kind: input, shape index: {}]
  %s3 = inlined_call_operand.hbm [shape: f32[1,512], index: 3, kind: input, shape index: {}]
  %s4 = inlined_call_operand.hbm [shape: bf16[8,128], index: 4, kind: output, shape index: {0}]
  %s5 = inlined_call_operand.hbm [shape: bf16[8,384], index: 5, kind: output, shape index: {1}]
  %6 = xla_tuple %s4, %s5
  %s7 = sld [smem:[#allocation0]]
  $region50: #{context_branch_forward.5} parent=0
    _
  %s9 = ssub.s32 1, %s7
  %s10 = scalar_select 0, %s9, %s7
  $region1: #{context_branch_forward.5} parent=0
    #allocation2 [shape = 'u8[10240]{0}', space=vmem, size = 0x2800, scoped, tag = 'input window, operand 0, single buffered']
    #allocation3 [shape = 's32[1]{0}', space=sflag, size = 0x4, scoped, tag = 'scoped memory for context_branch_forward.5']
    #allocation4 [shape = 's32[1]{0}', space=sflag, size = 0x4, scoped, tag = 'scoped memory for context_branch_forward.5']
    #allocation5 [shape = 'u8[589824]{0}', space=vmem, size = 0x90000, scoped, tag = 'input window, operand 1, single buffered']
    #allocation6 [shape = 's32[1]{0}', space=sflag, size = 0x4, scoped, tag = 'scoped memory for context_branch_forward.5']
    #allocation7 [shape = 'u8[2048]{0}', space=vmem, size = 0x800, scoped, tag = 'input window, operand 2, single buffered']
    #allocation8 [shape = 'u8[2048]{0}', space=vmem, size = 0x800, scoped, tag = 'input window, operand 3, single buffered']
    #allocation9 [shape = 's32[1]{0}', space=sflag, size = 0x4, scoped, tag = 'scoped memory for context_branch_forward.5']
    #allocation10 [shape = 'u8[2048]{0}', space=vmem, size = 0x800, scoped, tag = 'output window, operand 0, single buffered']
    #allocation11 [shape = 'u8[6144]{0}', space=vmem, size = 0x1800, scoped, tag = 'output window, operand 1, single buffered']
    #allocation12 [shape = 's32[1]{0}', space=sflag, size = 0x4, scoped, tag = 'scoped memory for context_branch_forward.5']
    %11 = vsyncpa [#allocation3], 0
    %12 = vsyncpa [#allocation6], 0
    %13 = vsyncpa [#allocation9], 0
    %14 = vsyncpa [#allocation4], 0
    %15 = vsyncpa [#allocation12], 0
    // Predicated region
    $region2: #{context_branch_forward.5} parent=1 // pred_check
      _
    $region3: #{context_branch_forward.5} parent=1 // pred_check_branch
      %17 = sbr.rel (0) target = $region5
    $region4: #{context_branch_forward.5} parent=1 // pred_region
      %s19 = ssub.s32 320, 320
      %20 = vsyncadd [#allocation3], %s19
      %s22 = sshll.u32 [#allocation2], 4
      %s23 = int_to_ptr.vmem [resolvable:$true] %s22
      %25 = dma.hbm_to_vmem [thread:$0]  %s0, 320, %s23, [#allocation3]
    $region5: #{context_branch_forward.5} parent=1 // pred_fallthru
      _
    // Predicated region
    $region6: #{context_branch_forward.5} parent=1 // pred_check
      _
    $region7: #{context_branch_forward.5} parent=1 // pred_check_branch
      %27 = sbr.rel (0) target = $region9
    $region8: #{context_branch_forward.5} parent=1 // pred_region
      %s29 = ssub.s32 18432, 18432
      %30 = vsyncadd [#allocation6], %s29
      %s31 = sshll.u32 [#allocation5], 4
      %s32 = int_to_ptr.vmem [resolvable:$true] %s31
      %37 = dma.hbm_to_vmem [thread:$0]  %s1, 18432, %s32, [#allocation6], 256, 256, 16
    $region9: #{context_branch_forward.5} parent=1 // pred_fallthru
      _
    // Predicated region
    $region10: #{context_branch_forward.5} parent=1 // pred_check
      _
    $region11: #{context_branch_forward.5} parent=1 // pred_check_branch
      %39 = sbr.rel (0) target = $region13
    $region12: #{context_branch_forward.5} parent=1 // pred_region
      %s41 = ssub.s32 64, 64
      %42 = vsyncadd [#allocation6], %s41
      %s44 = sshll.u32 [#allocation7], 4
      %s45 = int_to_ptr.vmem [resolvable:$true] %s44
      %47 = dma.hbm_to_vmem [thread:$0]  %s2, 64, %s45, [#allocation6]
    $region13: #{context_branch_forward.5} parent=1 // pred_fallthru
      _
    // Predicated region
    $region14: #{context_branch_forward.5} parent=1 // pred_check
      _
    $region15: #{context_branch_forward.5} parent=1 // pred_check_branch
      %49 = sbr.rel (0) target = $region17
    $region16: #{context_branch_forward.5} parent=1 // pred_region
      %s51 = ssub.s32 64, 64
      %52 = vsyncadd [#allocation9], %s51
      %s54 = sshll.u32 [#allocation8], 4
      %s55 = int_to_ptr.vmem [resolvable:$true] %s54
      %57 = dma.hbm_to_vmem [thread:$0]  %s3, 64, %s55, [#allocation9]
    $region17: #{context_branch_forward.5} parent=1 // pred_fallthru
      _
    // Predicated region
    $region18: #{context_branch_forward.5} parent=1 // pred_check
      _
    $region19: #{context_branch_forward.5} parent=1 // pred_check_branch
      %59 = sbr.rel (0) target = $region21
    $region20: #{context_branch_forward.5} parent=1 // pred_region
      %60 = dma.done [#allocation3], 320
    $region21: #{context_branch_forward.5} parent=1 // pred_fallthru
      _
    // Predicated region
    $region22: #{context_branch_forward.5} parent=1 // pred_check
      _
    $region23: #{context_branch_forward.5} parent=1 // pred_check_branch
      %62 = sbr.rel (0) target = $region25
    $region24: #{context_branch_forward.5} parent=1 // pred_region
      %63 = dma.done [#allocation6], 18432
    $region25: #{context_branch_forward.5} parent=1 // pred_fallthru
      _
    // Predicated region
    $region26: #{context_branch_forward.5} parent=1 // pred_check
      _
    $region27: #{context_branch_forward.5} parent=1 // pred_check_branch
      %65 = sbr.rel (0) target = $region29
    $region28: #{context_branch_forward.5} parent=1 // pred_region
      %66 = dma.done [#allocation6], 64
    $region29: #{context_branch_forward.5} parent=1 // pred_fallthru
      _
    // Predicated region
    $region30: #{context_branch_forward.5} parent=1 // pred_check
      _
    $region31: #{context_branch_forward.5} parent=1 // pred_check_branch
      %68 = sbr.rel (0) target = $region33
    $region32: #{context_branch_forward.5} parent=1 // pred_region
      %69 = dma.done [#allocation9], 64
    $region33: #{context_branch_forward.5} parent=1 // pred_fallthru
      _
    %v71 = vld [vmem:[#allocation2] sm:$0xff]
    %v72 = vld [vmem:[#allocation2 + $0x8] sm:$0xff]
    %v73 = vld [vmem:[#allocation2 + $0x10] sm:$0xf]
    %v74 = vld [vmem:[#allocation5] sm:$0xff]
    %v75 = vld [vmem:[#allocation5 + $0x8] sm:$0xff]
    %v76 = vld [vmem:[#allocation5 + $0x10] sm:$0xff]
    %v77 = vld [vmem:[#allocation5 + $0x18] sm:$0xff]
    %v78 = vld [vmem:[#allocation5 + $0x20] sm:$0xff]
    %v79 = vld [vmem:[#allocation5 + $0x28] sm:$0xff]
    %v80 = vld [vmem:[#allocation5 + $0x30] sm:$0xff]
    %v81 = vld [vmem:[#allocation5 + $0x38] sm:$0xff]
    %v82 = vld [vmem:[#allocation5 + $0x40] sm:$0xff]
    %v83 = vld [vmem:[#allocation5 + $0x48] sm:$0xff]
    %v84 = vld [vmem:[#allocation5 + $0x50] sm:$0xff]
    %v85 = vld [vmem:[#allocation5 + $0x58] sm:$0xff]
    %v86 = vld [vmem:[#allocation5 + $0x60] sm:$0xff]
    %v87 = vld [vmem:[#allocation5 + $0x68] sm:$0xff]
    %v88 = vld [vmem:[#allocation5 + $0x70] sm:$0xff]
    %v89 = vld [vmem:[#allocation5 + $0x78] sm:$0xff]
    %v90 = vld [vmem:[#allocation5 + $0x80] sm:$0xff]
    %v91 = vld [vmem:[#allocation5 + $0x88] sm:$0xff]
    %v92 = vld [vmem:[#allocation5 + $0x90] sm:$0xff]
    %v93 = vld [vmem:[#allocation5 + $0x98] sm:$0xff]
    %v94 = vld [vmem:[#allocation5 + $0xa0] sm:$0xff]
    %v95 = vld [vmem:[#allocation5 + $0xa8] sm:$0xff]
    %v96 = vld [vmem:[#allocation5 + $0xb0] sm:$0xff]
    %v97 = vld [vmem:[#allocation5 + $0xb8] sm:$0xff]
    %v98 = vld [vmem:[#allocation5 + $0xc0] sm:$0xff]
    %v99 = vld [vmem:[#allocation5 + $0xc8] sm:$0xff]
    %v100 = vld [vmem:[#allocation5 + $0xd0] sm:$0xff]
    %v101 = vld [vmem:[#allocation5 + $0xd8] sm:$0xff]
    %v102 = vld [vmem:[#allocation5 + $0xe0] sm:$0xff]
    %v103 = vld [vmem:[#allocation5 + $0xe8] sm:$0xff]
    %v104 = vld [vmem:[#allocation5 + $0xf0] sm:$0xff]
    %v105 = vld [vmem:[#allocation5 + $0xf8] sm:$0xff]
    %v106 = vld [vmem:[#allocation5 + $0x100] sm:$0xff]
    %v107 = vld [vmem:[#allocation5 + $0x108] sm:$0xff]
    %v108 = vld [vmem:[#allocation5 + $0x110] sm:$0xff]
    %v109 = vld [vmem:[#allocation5 + $0x118] sm:$0xff]
    %v110 = vld [vmem:[#allocation5 + $0x120] sm:$0xff]
    %v111 = vld [vmem:[#allocation5 + $0x128] sm:$0xff]
    %v112 = vld [vmem:[#allocation5 + $0x130] sm:$0xff]
    %v113 = vld [vmem:[#allocation5 + $0x138] sm:$0xff]
    %v114 = vld [vmem:[#allocation5 + $0x140] sm:$0xff]
    %v115 = vld [vmem:[#allocation5 + $0x148] sm:$0xff]
    %v116 = vld [vmem:[#allocation5 + $0x150] sm:$0xff]
    %v117 = vld [vmem:[#allocation5 + $0x158] sm:$0xff]
    %v118 = vld [vmem:[#allocation5 + $0x160] sm:$0xff]
    %v119 = vld [vmem:[#allocation5 + $0x168] sm:$0xff]
    %v120 = vld [vmem:[#allocation5 + $0x170] sm:$0xff]
    %v121 = vld [vmem:[#allocation5 + $0x178] sm:$0xff]
    %v122 = vld [vmem:[#allocation5 + $0x180] sm:$0xff]
    %v123 = vld [vmem:[#allocation5 + $0x188] sm:$0xff]
    %v124 = vld [vmem:[#allocation5 + $0x190] sm:$0xff]
    %v125 = vld [vmem:[#allocation5 + $0x198] sm:$0xff]
    %v126 = vld [vmem:[#allocation5 + $0x1a0] sm:$0xff]
    %v127 = vld [vmem:[#allocation5 + $0x1a8] sm:$0xff]
    %v128 = vld [vmem:[#allocation5 + $0x1b0] sm:$0xff]
    %v129 = vld [vmem:[#allocation5 + $0x1b8] sm:$0xff]
    %v130 = vld [vmem:[#allocation5 + $0x1c0] sm:$0xff]
    %v131 = vld [vmem:[#allocation5 + $0x1c8] sm:$0xff]
    %v132 = vld [vmem:[#allocation5 + $0x1d0] sm:$0xff]
    %v133 = vld [vmem:[#allocation5 + $0x1d8] sm:$0xff]
    %v134 = vld [vmem:[#allocation5 + $0x1e0] sm:$0xff]
    %v135 = vld [vmem:[#allocation5 + $0x1e8] sm:$0xff]
    %v136 = vld [vmem:[#allocation5 + $0x1f0] sm:$0xff]
    %v137 = vld [vmem:[#allocation5 + $0x1f8] sm:$0xff]
    %v138 = vld [vmem:[#allocation5 + $0x200] sm:$0xff]
    %v139 = vld [vmem:[#allocation5 + $0x208] sm:$0xff]
    %v140 = vld [vmem:[#allocation5 + $0x210] sm:$0xff]
    %v141 = vld [vmem:[#allocation5 + $0x218] sm:$0xff]
    %v142 = vld [vmem:[#allocation5 + $0x220] sm:$0xff]
    %v143 = vld [vmem:[#allocation5 + $0x228] sm:$0xff]
    %v144 = vld [vmem:[#allocation5 + $0x230] sm:$0xff]
    %v145 = vld [vmem:[#allocation5 + $0x238] sm:$0xff]
    %v146 = vld [vmem:[#allocation5 + $0x240] sm:$0xff]
    %v147 = vld [vmem:[#allocation5 + $0x248] sm:$0xff]
    %v148 = vld [vmem:[#allocation5 + $0x250] sm:$0xff]
    %v149 = vld [vmem:[#allocation5 + $0x258] sm:$0xff]
    %v150 = vld [vmem:[#allocation5 + $0x260] sm:$0xff]
    %v151 = vld [vmem:[#allocation5 + $0x268] sm:$0xff]
    %v152 = vld [vmem:[#allocation5 + $0x270] sm:$0xff]
    %v153 = vld [vmem:[#allocation5 + $0x278] sm:$0xff]
    %v154 = vld [vmem:[#allocation5 + $0x280] sm:$0xff]
    %v155 = vld [vmem:[#allocation5 + $0x288] sm:$0xff]
    %v156 = vld [vmem:[#allocation5 + $0x290] sm:$0xff]
    %v157 = vld [vmem:[#allocation5 + $0x298] sm:$0xff]
    %v158 = vld [vmem:[#allocation5 + $0x2a0] sm:$0xff]
    %v159 = vld [vmem:[#allocation5 + $0x2a8] sm:$0xff]
    %v160 = vld [vmem:[#allocation5 + $0x2b0] sm:$0xff]
    %v161 = vld [vmem:[#allocation5 + $0x2b8] sm:$0xff]
    %v162 = vld [vmem:[#allocation5 + $0x2c0] sm:$0xff]
    %v163 = vld [vmem:[#allocation5 + $0x2c8] sm:$0xff]
    %v164 = vld [vmem:[#allocation5 + $0x2d0] sm:$0xff]
    %v165 = vld [vmem:[#allocation5 + $0x2d8] sm:$0xff]
    %v166 = vld [vmem:[#allocation5 + $0x2e0] sm:$0xff]
    %v167 = vld [vmem:[#allocation5 + $0x2e8] sm:$0xff]
    %v168 = vld [vmem:[#allocation5 + $0x2f0] sm:$0xff]
    %v169 = vld [vmem:[#allocation5 + $0x2f8] sm:$0xff]
    %v170 = vld [vmem:[#allocation5 + $0x300] sm:$0xff]
    %v171 = vld [vmem:[#allocation5 + $0x308] sm:$0xff]
    %v172 = vld [vmem:[#allocation5 + $0x310] sm:$0xff]
    %v173 = vld [vmem:[#allocation5 + $0x318] sm:$0xff]
    %v174 = vld [vmem:[#allocation5 + $0x320] sm:$0xff]
    %v175 = vld [vmem:[#allocation5 + $0x328] sm:$0xff]
    %v176 = vld [vmem:[#allocation5 + $0x330] sm:$0xff]
    %v177 = vld [vmem:[#allocation5 + $0x338] sm:$0xff]
    %v178 = vld [vmem:[#allocation5 + $0x340] sm:$0xff]
    %v179 = vld [vmem:[#allocation5 + $0x348] sm:$0xff]
    %v180 = vld [vmem:[#allocation5 + $0x350] sm:$0xff]
    %v181 = vld [vmem:[#allocation5 + $0x358] sm:$0xff]
    %v182 = vld [vmem:[#allocation5 + $0x360] sm:$0xff]
    %v183 = vld [vmem:[#allocation5 + $0x368] sm:$0xff]
    %v184 = vld [vmem:[#allocation5 + $0x370] sm:$0xff]
    %v185 = vld [vmem:[#allocation5 + $0x378] sm:$0xff]
    %v186 = vld [vmem:[#allocation5 + $0x380] sm:$0xff]
    %v187 = vld [vmem:[#allocation5 + $0x388] sm:$0xff]
    %v188 = vld [vmem:[#allocation5 + $0x390] sm:$0xff]
    %v189 = vld [vmem:[#allocation5 + $0x398] sm:$0xff]
    %v190 = vld [vmem:[#allocation5 + $0x3a0] sm:$0xff]
    %v191 = vld [vmem:[#allocation5 + $0x3a8] sm:$0xff]
    %v192 = vld [vmem:[#allocation5 + $0x3b0] sm:$0xff]
    %v193 = vld [vmem:[#allocation5 + $0x3b8] sm:$0xff]
    %v194 = vld [vmem:[#allocation5 + $0x3c0] sm:$0xff]
    %v195 = vld [vmem:[#allocation5 + $0x3c8] sm:$0xff]
    %v196 = vld [vmem:[#allocation5 + $0x3d0] sm:$0xff]
    %v197 = vld [vmem:[#allocation5 + $0x3d8] sm:$0xff]
    %v198 = vld [vmem:[#allocation5 + $0x3e0] sm:$0xff]
    %v199 = vld [vmem:[#allocation5 + $0x3e8] sm:$0xff]
    %v200 = vld [vmem:[#allocation5 + $0x3f0] sm:$0xff]
    %v201 = vld [vmem:[#allocation5 + $0x3f8] sm:$0xff]
    %v202 = vld [vmem:[#allocation5 + $0x400] sm:$0xff]
    %v203 = vld [vmem:[#allocation5 + $0x408] sm:$0xff]
    %v204 = vld [vmem:[#allocation5 + $0x410] sm:$0xff]
    %v205 = vld [vmem:[#allocation5 + $0x418] sm:$0xff]
    %v206 = vld [vmem:[#allocation5 + $0x420] sm:$0xff]
    %v207 = vld [vmem:[#allocation5 + $0x428] sm:$0xff]
    %v208 = vld [vmem:[#allocation5 + $0x430] sm:$0xff]
    %v209 = vld [vmem:[#allocation5 + $0x438] sm:$0xff]
    %v210 = vld [vmem:[#allocation5 + $0x440] sm:$0xff]
    %v211 = vld [vmem:[#allocation5 + $0x448] sm:$0xff]
    %v212 = vld [vmem:[#allocation5 + $0x450] sm:$0xff]
    %v213 = vld [vmem:[#allocation5 + $0x458] sm:$0xff]
    %v214 = vld [vmem:[#allocation5 + $0x460] sm:$0xff]
    %v215 = vld [vmem:[#allocation5 + $0x468] sm:$0xff]
    %v216 = vld [vmem:[#allocation5 + $0x470] sm:$0xff]
    %v217 = vld [vmem:[#allocation5 + $0x478] sm:$0xff]
    %v221 = vunpack.c.l.b16 %v71
    %v222 = vunpack.c.h.b16 %v71
    %v223 = vunpack.c.l.b16 %v72
    %v224 = vunpack.c.h.b16 %v72
    %v225 = vunpack.c.l.b16 %v73
    %v226 = vpack.c.b16 %v221, %v221
    %v227 = vpack.c.b16 %v222, %v222
    %v228 = vpack.c.b16 %v223, %v223
    %v229 = vpack.c.b16 %v224, %v224
    %v230 = vpack.c.b16 %v225, %v225
    %v379 = vunpack.c.l.b16 %v74
    %v380 = vunpack.c.h.b16 %v74
    %v381 = vunpack.c.l.b16 %v75
    %v382 = vunpack.c.h.b16 %v75
    %v383 = vunpack.c.l.b16 %v76
    %v384 = vunpack.c.h.b16 %v76
    %v385 = vunpack.c.l.b16 %v77
    %v386 = vunpack.c.h.b16 %v77
    %v387 = vunpack.c.l.b16 %v78
    %v388 = vunpack.c.h.b16 %v78
    %v389 = vunpack.c.l.b16 %v79
    %v390 = vunpack.c.h.b16 %v79
    %v391 = vunpack.c.l.b16 %v80
    %v392 = vunpack.c.h.b16 %v80
    %v393 = vunpack.c.l.b16 %v81
    %v394 = vunpack.c.h.b16 %v81
    %v395 = vunpack.c.l.b16 %v82
    %v396 = vunpack.c.h.b16 %v82
    %v397 = vunpack.c.l.b16 %v83
    %v398 = vunpack.c.h.b16 %v83
    %v399 = vunpack.c.l.b16 %v84
    %v400 = vunpack.c.h.b16 %v84
    %v401 = vunpack.c.l.b16 %v85
    %v402 = vunpack.c.h.b16 %v85
    %v403 = vunpack.c.l.b16 %v86
    %v404 = vunpack.c.h.b16 %v86
    %v405 = vunpack.c.l.b16 %v87
    %v406 = vunpack.c.h.b16 %v87
    %v407 = vunpack.c.l.b16 %v88
    %v408 = vunpack.c.h.b16 %v88
    %v409 = vunpack.c.l.b16 %v89
    %v410 = vunpack.c.h.b16 %v89
    %v411 = vunpack.c.l.b16 %v90
    %v412 = vunpack.c.h.b16 %v90
    %v413 = vunpack.c.l.b16 %v91
    %v414 = vunpack.c.h.b16 %v91
    %v415 = vunpack.c.l.b16 %v92
    %v416 = vunpack.c.h.b16 %v92
    %v417 = vunpack.c.l.b16 %v93
    %v418 = vunpack.c.h.b16 %v93
    %v419 = vunpack.c.l.b16 %v94
    %v420 = vunpack.c.h.b16 %v94
    %v421 = vunpack.c.l.b16 %v95
    %v422 = vunpack.c.h.b16 %v95
    %v423 = vunpack.c.l.b16 %v96
    %v424 = vunpack.c.h.b16 %v96
    %v425 = vunpack.c.l.b16 %v97
    %v426 = vunpack.c.h.b16 %v97
    %v427 = vunpack.c.l.b16 %v98
    %v428 = vunpack.c.h.b16 %v98
    %v429 = vunpack.c.l.b16 %v99
    %v430 = vunpack.c.h.b16 %v99
    %v431 = vunpack.c.l.b16 %v100
    %v432 = vunpack.c.h.b16 %v100
    %v433 = vunpack.c.l.b16 %v101
    %v434 = vunpack.c.h.b16 %v101
    %v435 = vunpack.c.l.b16 %v102
    %v436 = vunpack.c.h.b16 %v102
    %v437 = vunpack.c.l.b16 %v103
    %v438 = vunpack.c.h.b16 %v103
    %v439 = vunpack.c.l.b16 %v104
    %v440 = vunpack.c.h.b16 %v104
    %v441 = vunpack.c.l.b16 %v105
    %v442 = vunpack.c.h.b16 %v105
    %v443 = vunpack.c.l.b16 %v106
    %v444 = vunpack.c.h.b16 %v106
    %v445 = vunpack.c.l.b16 %v107
    %v446 = vunpack.c.h.b16 %v107
    %v447 = vunpack.c.l.b16 %v108
    %v448 = vunpack.c.h.b16 %v108
    %v449 = vunpack.c.l.b16 %v109
    %v450 = vunpack.c.h.b16 %v109
    %v451 = vunpack.c.l.b16 %v110
    %v452 = vunpack.c.h.b16 %v110
    %v453 = vunpack.c.l.b16 %v111
    %v454 = vunpack.c.h.b16 %v111
    %v455 = vunpack.c.l.b16 %v112
    %v456 = vunpack.c.h.b16 %v112
    %v457 = vunpack.c.l.b16 %v113
    %v458 = vunpack.c.h.b16 %v113
    %v459 = vunpack.c.l.b16 %v114
    %v460 = vunpack.c.h.b16 %v114
    %v461 = vunpack.c.l.b16 %v115
    %v462 = vunpack.c.h.b16 %v115
    %v463 = vunpack.c.l.b16 %v116
    %v464 = vunpack.c.h.b16 %v116
    %v465 = vunpack.c.l.b16 %v117
    %v466 = vunpack.c.h.b16 %v117
    %v467 = vunpack.c.l.b16 %v118
    %v468 = vunpack.c.h.b16 %v118
    %v469 = vunpack.c.l.b16 %v119
    %v470 = vunpack.c.h.b16 %v119
    %v471 = vunpack.c.l.b16 %v120
    %v472 = vunpack.c.h.b16 %v120
    %v473 = vunpack.c.l.b16 %v121
    %v474 = vunpack.c.h.b16 %v121
    %v475 = vunpack.c.l.b16 %v122
    %v476 = vunpack.c.h.b16 %v122
    %v477 = vunpack.c.l.b16 %v123
    %v478 = vunpack.c.h.b16 %v123
    %v479 = vunpack.c.l.b16 %v124
    %v480 = vunpack.c.h.b16 %v124
    %v481 = vunpack.c.l.b16 %v125
    %v482 = vunpack.c.h.b16 %v125
    %v483 = vunpack.c.l.b16 %v126
    %v484 = vunpack.c.h.b16 %v126
    %v485 = vunpack.c.l.b16 %v127
    %v486 = vunpack.c.h.b16 %v127
    %v487 = vunpack.c.l.b16 %v128
    %v488 = vunpack.c.h.b16 %v128
    %v489 = vunpack.c.l.b16 %v129
    %v490 = vunpack.c.h.b16 %v129
    %v491 = vunpack.c.l.b16 %v130
    %v492 = vunpack.c.h.b16 %v130
    %v493 = vunpack.c.l.b16 %v131
    %v494 = vunpack.c.h.b16 %v131
    %v495 = vunpack.c.l.b16 %v132
    %v496 = vunpack.c.h.b16 %v132
    %v497 = vunpack.c.l.b16 %v133
    %v498 = vunpack.c.h.b16 %v133
    %v499 = vunpack.c.l.b16 %v134
    %v500 = vunpack.c.h.b16 %v134
    %v501 = vunpack.c.l.b16 %v135
    %v502 = vunpack.c.h.b16 %v135
    %v503 = vunpack.c.l.b16 %v136
    %v504 = vunpack.c.h.b16 %v136
    %v505 = vunpack.c.l.b16 %v137
    %v506 = vunpack.c.h.b16 %v137
    %v507 = vunpack.c.l.b16 %v138
    %v508 = vunpack.c.h.b16 %v138
    %v509 = vunpack.c.l.b16 %v139
    %v510 = vunpack.c.h.b16 %v139
    %v511 = vunpack.c.l.b16 %v140
    %v512 = vunpack.c.h.b16 %v140
    %v513 = vunpack.c.l.b16 %v141
    %v514 = vunpack.c.h.b16 %v141
    %v515 = vunpack.c.l.b16 %v142
    %v516 = vunpack.c.h.b16 %v142
    %v517 = vunpack.c.l.b16 %v143
    %v518 = vunpack.c.h.b16 %v143
    %v519 = vunpack.c.l.b16 %v144
    %v520 = vunpack.c.h.b16 %v144
    %v521 = vunpack.c.l.b16 %v145
    %v522 = vunpack.c.h.b16 %v145
    %v523 = vunpack.c.l.b16 %v146
    %v524 = vunpack.c.h.b16 %v146
    %v525 = vunpack.c.l.b16 %v147
    %v526 = vunpack.c.h.b16 %v147
    %v527 = vunpack.c.l.b16 %v148
    %v528 = vunpack.c.h.b16 %v148
    %v529 = vunpack.c.l.b16 %v149
    %v530 = vunpack.c.h.b16 %v149
    %v531 = vunpack.c.l.b16 %v150
    %v532 = vunpack.c.h.b16 %v150
    %v533 = vunpack.c.l.b16 %v151
    %v534 = vunpack.c.h.b16 %v151
    %v535 = vunpack.c.l.b16 %v152
    %v536 = vunpack.c.h.b16 %v152
    %v537 = vunpack.c.l.b16 %v153
    %v538 = vunpack.c.h.b16 %v153
    %v539 = vunpack.c.l.b16 %v154
    %v540 = vunpack.c.h.b16 %v154
    %v541 = vunpack.c.l.b16 %v155
    %v542 = vunpack.c.h.b16 %v155
    %v543 = vunpack.c.l.b16 %v156
    %v544 = vunpack.c.h.b16 %v156
    %v545 = vunpack.c.l.b16 %v157
    %v546 = vunpack.c.h.b16 %v157
    %v547 = vunpack.c.l.b16 %v158
    %v548 = vunpack.c.h.b16 %v158
    %v549 = vunpack.c.l.b16 %v159
    %v550 = vunpack.c.h.b16 %v159
    %v551 = vunpack.c.l.b16 %v160
    %v552 = vunpack.c.h.b16 %v160
    %v553 = vunpack.c.l.b16 %v161
    %v554 = vunpack.c.h.b16 %v161
    %v555 = vunpack.c.l.b16 %v162
    %v556 = vunpack.c.h.b16 %v162
    %v557 = vunpack.c.l.b16 %v163
    %v558 = vunpack.c.h.b16 %v163
    %v559 = vunpack.c.l.b16 %v164
    %v560 = vunpack.c.h.b16 %v164
    %v561 = vunpack.c.l.b16 %v165
    %v562 = vunpack.c.h.b16 %v165
    %v563 = vunpack.c.l.b16 %v166
    %v564 = vunpack.c.h.b16 %v166
    %v565 = vunpack.c.l.b16 %v167
    %v566 = vunpack.c.h.b16 %v167
    %v567 = vunpack.c.l.b16 %v168
    %v568 = vunpack.c.h.b16 %v168
    %v569 = vunpack.c.l.b16 %v169
    %v570 = vunpack.c.h.b16 %v169
    %v571 = vunpack.c.l.b16 %v170
    %v572 = vunpack.c.h.b16 %v170
    %v573 = vunpack.c.l.b16 %v171
    %v574 = vunpack.c.h.b16 %v171
    %v575 = vunpack.c.l.b16 %v172
    %v576 = vunpack.c.h.b16 %v172
    %v577 = vunpack.c.l.b16 %v173
    %v578 = vunpack.c.h.b16 %v173
    %v579 = vunpack.c.l.b16 %v174
    %v580 = vunpack.c.h.b16 %v174
    %v581 = vunpack.c.l.b16 %v175
    %v582 = vunpack.c.h.b16 %v175
    %v583 = vunpack.c.l.b16 %v176
    %v584 = vunpack.c.h.b16 %v176
    %v585 = vunpack.c.l.b16 %v177
    %v586 = vunpack.c.h.b16 %v177
    %v587 = vunpack.c.l.b16 %v178
    %v588 = vunpack.c.h.b16 %v178
    %v589 = vunpack.c.l.b16 %v179
    %v590 = vunpack.c.h.b16 %v179
    %v591 = vunpack.c.l.b16 %v180
    %v592 = vunpack.c.h.b16 %v180
    %v593 = vunpack.c.l.b16 %v181
    %v594 = vunpack.c.h.b16 %v181
    %v595 = vunpack.c.l.b16 %v182
    %v596 = vunpack.c.h.b16 %v182
    %v597 = vunpack.c.l.b16 %v183
    %v598 = vunpack.c.h.b16 %v183
    %v599 = vunpack.c.l.b16 %v184
    %v600 = vunpack.c.h.b16 %v184
    %v601 = vunpack.c.l.b16 %v185
    %v602 = vunpack.c.h.b16 %v185
    %v603 = vunpack.c.l.b16 %v186
    %v604 = vunpack.c.h.b16 %v186
    %v605 = vunpack.c.l.b16 %v187
    %v606 = vunpack.c.h.b16 %v187
    %v607 = vunpack.c.l.b16 %v188
    %v608 = vunpack.c.h.b16 %v188
    %v609 = vunpack.c.l.b16 %v189
    %v610 = vunpack.c.h.b16 %v189
    %v611 = vunpack.c.l.b16 %v190
    %v612 = vunpack.c.h.b16 %v190
    %v613 = vunpack.c.l.b16 %v191
    %v614 = vunpack.c.h.b16 %v191
    %v615 = vunpack.c.l.b16 %v192
    %v616 = vunpack.c.h.b16 %v192
    %v617 = vunpack.c.l.b16 %v193
    %v618 = vunpack.c.h.b16 %v193
    %v619 = vunpack.c.l.b16 %v194
    %v620 = vunpack.c.h.b16 %v194
    %v621 = vunpack.c.l.b16 %v195
    %v622 = vunpack.c.h.b16 %v195
    %v623 = vunpack.c.l.b16 %v196
    %v624 = vunpack.c.h.b16 %v196
    %v625 = vunpack.c.l.b16 %v197
    %v626 = vunpack.c.h.b16 %v197
    %v627 = vunpack.c.l.b16 %v198
    %v628 = vunpack.c.h.b16 %v198
    %v629 = vunpack.c.l.b16 %v199
    %v630 = vunpack.c.h.b16 %v199
    %v631 = vunpack.c.l.b16 %v200
    %v632 = vunpack.c.h.b16 %v200
    %v633 = vunpack.c.l.b16 %v201
    %v634 = vunpack.c.h.b16 %v201
    %v635 = vunpack.c.l.b16 %v202
    %v636 = vunpack.c.h.b16 %v202
    %v637 = vunpack.c.l.b16 %v203
    %v638 = vunpack.c.h.b16 %v203
    %v639 = vunpack.c.l.b16 %v204
    %v640 = vunpack.c.h.b16 %v204
    %v641 = vunpack.c.l.b16 %v205
    %v642 = vunpack.c.h.b16 %v205
    %v643 = vunpack.c.l.b16 %v206
    %v644 = vunpack.c.h.b16 %v206
    %v645 = vunpack.c.l.b16 %v207
    %v646 = vunpack.c.h.b16 %v207
    %v647 = vunpack.c.l.b16 %v208
    %v648 = vunpack.c.h.b16 %v208
    %v649 = vunpack.c.l.b16 %v209
    %v650 = vunpack.c.h.b16 %v209
    %v651 = vunpack.c.l.b16 %v210
    %v652 = vunpack.c.h.b16 %v210
    %v653 = vunpack.c.l.b16 %v211
    %v654 = vunpack.c.h.b16 %v211
    %v655 = vunpack.c.l.b16 %v212
    %v656 = vunpack.c.h.b16 %v212
    %v657 = vunpack.c.l.b16 %v213
    %v658 = vunpack.c.h.b16 %v213
    %v659 = vunpack.c.l.b16 %v214
    %v660 = vunpack.c.h.b16 %v214
    %v661 = vunpack.c.l.b16 %v215
    %v662 = vunpack.c.h.b16 %v215
    %v663 = vunpack.c.l.b16 %v216
    %v664 = vunpack.c.h.b16 %v216
    %v665 = vunpack.c.l.b16 %v217
    %v666 = vunpack.c.h.b16 %v217
    %v667 = vpack.c.b16 %v383, %v379
    %v668 = vpack.c.b16 %v384, %v380
    %v669 = vpack.c.b16 %v385, %v381
    %v670 = vpack.c.b16 %v386, %v382
    %v671 = vpack.c.b16 %v391, %v387
    %v672 = vpack.c.b16 %v392, %v388
    %v673 = vpack.c.b16 %v393, %v389
    %v674 = vpack.c.b16 %v394, %v390
    %v675 = vpack.c.b16 %v399, %v395
    %v676 = vpack.c.b16 %v400, %v396
    %v677 = vpack.c.b16 %v401, %v397
    %v678 = vpack.c.b16 %v402, %v398
    %v679 = vpack.c.b16 %v407, %v403
    %v680 = vpack.c.b16 %v408, %v404
    %v681 = vpack.c.b16 %v409, %v405
    %v682 = vpack.c.b16 %v410, %v406
    %v683 = vpack.c.b16 %v415, %v411
    %v684 = vpack.c.b16 %v416, %v412
    %v685 = vpack.c.b16 %v417, %v413
    %v686 = vpack.c.b16 %v418, %v414
    %v687 = vpack.c.b16 %v423, %v419
    %v688 = vpack.c.b16 %v424, %v420
    %v689 = vpack.c.b16 %v425, %v421
    %v690 = vpack.c.b16 %v426, %v422
    %v691 = vpack.c.b16 %v431, %v427
    %v692 = vpack.c.b16 %v432, %v428
    %v693 = vpack.c.b16 %v433, %v429
    %v694 = vpack.c.b16 %v434, %v430
    %v695 = vpack.c.b16 %v439, %v435
    %v696 = vpack.c.b16 %v440, %v436
    %v697 = vpack.c.b16 %v441, %v437
    %v698 = vpack.c.b16 %v442, %v438
    %v699 = vpack.c.b16 %v447, %v443
    %v700 = vpack.c.b16 %v448, %v444
    %v701 = vpack.c.b16 %v449, %v445
    %v702 = vpack.c.b16 %v450, %v446
    %v703 = vpack.c.b16 %v455, %v451
    %v704 = vpack.c.b16 %v456, %v452
    %v705 = vpack.c.b16 %v457, %v453
    %v706 = vpack.c.b16 %v458, %v454
    %v707 = vpack.c.b16 %v463, %v459
    %v708 = vpack.c.b16 %v464, %v460
    %v709 = vpack.c.b16 %v465, %v461
    %v710 = vpack.c.b16 %v466, %v462
    %v711 = vpack.c.b16 %v471, %v467
    %v712 = vpack.c.b16 %v472, %v468
    %v713 = vpack.c.b16 %v473, %v469
    %v714 = vpack.c.b16 %v474, %v470
    %v715 = vpack.c.b16 %v479, %v475
    %v716 = vpack.c.b16 %v480, %v476
    %v717 = vpack.c.b16 %v481, %v477
    %v718 = vpack.c.b16 %v482, %v478
    %v719 = vpack.c.b16 %v487, %v483
    %v720 = vpack.c.b16 %v488, %v484
    %v721 = vpack.c.b16 %v489, %v485
    %v722 = vpack.c.b16 %v490, %v486
    %v723 = vpack.c.b16 %v495, %v491
    %v724 = vpack.c.b16 %v496, %v492
    %v725 = vpack.c.b16 %v497, %v493
    %v726 = vpack.c.b16 %v498, %v494
    %v727 = vpack.c.b16 %v503, %v499
    %v728 = vpack.c.b16 %v504, %v500
    %v729 = vpack.c.b16 %v505, %v501
    %v730 = vpack.c.b16 %v506, %v502
    %v731 = vpack.c.b16 %v511, %v507
    %v732 = vpack.c.b16 %v512, %v508
    %v733 = vpack.c.b16 %v513, %v509
    %v734 = vpack.c.b16 %v514, %v510
    %v735 = vpack.c.b16 %v519, %v515
    %v736 = vpack.c.b16 %v520, %v516
    %v737 = vpack.c.b16 %v521, %v517
    %v738 = vpack.c.b16 %v522, %v518
    %v739 = vpack.c.b16 %v527, %v523
    %v740 = vpack.c.b16 %v528, %v524
    %v741 = vpack.c.b16 %v529, %v525
    %v742 = vpack.c.b16 %v530, %v526
    %v743 = vpack.c.b16 %v535, %v531
    %v744 = vpack.c.b16 %v536, %v532
    %v745 = vpack.c.b16 %v537, %v533
    %v746 = vpack.c.b16 %v538, %v534
    %v747 = vpack.c.b16 %v543, %v539
    %v748 = vpack.c.b16 %v544, %v540
    %v749 = vpack.c.b16 %v545, %v541
    %v750 = vpack.c.b16 %v546, %v542
    %v751 = vpack.c.b16 %v551, %v547
    %v752 = vpack.c.b16 %v552, %v548
    %v753 = vpack.c.b16 %v553, %v549
    %v754 = vpack.c.b16 %v554, %v550
    %v755 = vpack.c.b16 %v559, %v555
    %v756 = vpack.c.b16 %v560, %v556
    %v757 = vpack.c.b16 %v561, %v557
    %v758 = vpack.c.b16 %v562, %v558
    %v759 = vpack.c.b16 %v567, %v563
    %v760 = vpack.c.b16 %v568, %v564
    %v761 = vpack.c.b16 %v569, %v565
    %v762 = vpack.c.b16 %v570, %v566
    %v763 = vpack.c.b16 %v575, %v571
    %v764 = vpack.c.b16 %v576, %v572
    %v765 = vpack.c.b16 %v577, %v573
    %v766 = vpack.c.b16 %v578, %v574
    %v767 = vpack.c.b16 %v583, %v579
    %v768 = vpack.c.b16 %v584, %v580
    %v769 = vpack.c.b16 %v585, %v581
    %v770 = vpack.c.b16 %v586, %v582
    %v771 = vpack.c.b16 %v591, %v587
    %v772 = vpack.c.b16 %v592, %v588
    %v773 = vpack.c.b16 %v593, %v589
    %v774 = vpack.c.b16 %v594, %v590
    %v775 = vpack.c.b16 %v599, %v595
    %v776 = vpack.c.b16 %v600, %v596
    %v777 = vpack.c.b16 %v601, %v597
    %v778 = vpack.c.b16 %v602, %v598
    %v779 = vpack.c.b16 %v607, %v603
    %v780 = vpack.c.b16 %v608, %v604
    %v781 = vpack.c.b16 %v609, %v605
    %v782 = vpack.c.b16 %v610, %v606
    %v783 = vpack.c.b16 %v615, %v611
    %v784 = vpack.c.b16 %v616, %v612
    %v785 = vpack.c.b16 %v617, %v613
    %v786 = vpack.c.b16 %v618, %v614
    %v787 = vpack.c.b16 %v623, %v619
    %v788 = vpack.c.b16 %v624, %v620
    %v789 = vpack.c.b16 %v625, %v621
    %v790 = vpack.c.b16 %v626, %v622
    %v791 = vpack.c.b16 %v631, %v627
    %v792 = vpack.c.b16 %v632, %v628
    %v793 = vpack.c.b16 %v633, %v629
    %v794 = vpack.c.b16 %v634, %v630
    %v795 = vpack.c.b16 %v639, %v635
    %v796 = vpack.c.b16 %v640, %v636
    %v797 = vpack.c.b16 %v641, %v637
    %v798 = vpack.c.b16 %v642, %v638
    %v799 = vpack.c.b16 %v647, %v643
    %v800 = vpack.c.b16 %v648, %v644
    %v801 = vpack.c.b16 %v649, %v645
    %v802 = vpack.c.b16 %v650, %v646
    %v803 = vpack.c.b16 %v655, %v651
    %v804 = vpack.c.b16 %v656, %v652
    %v805 = vpack.c.b16 %v657, %v653
    %v806 = vpack.c.b16 %v658, %v654
    %v807 = vpack.c.b16 %v663, %v659
    %v808 = vpack.c.b16 %v664, %v660
    %v809 = vpack.c.b16 %v665, %v661
    %v810 = vpack.c.b16 %v666, %v662
    %vm955 = vcmask 523264
    %v957 = vsel %vm955, %v230, 0
    %959 = vmatprep.subr.bf16.mxu0 %v668
    %960 = vmatpush1.bf16.msra.mxu0 %v667
    %961 = vmatprep.subr.bf16.mxu0 %v672
    %962 = vmatpush1.bf16.msra.mxu0 %v671
    %963 = vmatprep.subr.bf16.mxu0 %v676
    %964 = vmatpush1.bf16.msra.mxu0 %v675
    %965 = vmatprep.subr.bf16.mxu0 %v680
    %966 = vmatpush1.bf16.msra.mxu0 %v679
    %967 = vmatprep.subr.bf16.mxu0 %v684
    %968 = vmatpush1.bf16.msra.mxu0 %v683
    %969 = vmatprep.subr.bf16.mxu0 %v688
    %970 = vmatpush1.bf16.msra.mxu0 %v687
    %971 = vmatprep.subr.bf16.mxu0 %v692
    %972 = vmatpush1.bf16.msra.mxu0 %v691
    %973 = vmatprep.subr.bf16.mxu0 %v696
    %974 = vmatpush1.bf16.msra.mxu0 %v695
    %975 = vmatprep.subr.bf16.mxu0 %v700
    %976 = vmatpush1.bf16.msra.mxu0 %v699
    %977 = vmatprep.subr.bf16.mxu0 %v704
    %978 = vmatpush1.bf16.msra.mxu0 %v703
    %979 = vmatprep.subr.bf16.mxu0 %v708
    %980 = vmatpush1.bf16.msra.mxu0 %v707
    %981 = vmatprep.subr.bf16.mxu0 %v712
    %982 = vmatpush1.bf16.msra.mxu0 %v711
    %983 = vmatprep.subr.bf16.mxu0 %v716
    %984 = vmatpush1.bf16.msra.mxu0 %v715
    %985 = vmatprep.subr.bf16.mxu0 %v720
    %986 = vmatpush1.bf16.msra.mxu0 %v719
    %987 = vmatprep.subr.bf16.mxu0 %v724
    %988 = vmatpush1.bf16.msra.mxu0 %v723
    %989 = vmatprep.subr.bf16.mxu0 %v728
    %990 = vmatpush1.bf16.msra.mxu0 %v727
    %991 = vmatprep.mubr.bf16.mxu0 %v227
    %992 = vmatmul.mubr.bf16.gmra.mrb[0].mxu0 %v226
    %v993 = vpop.f32.mrb[0].mxu0
    %v994 = vadd.f32 0.0, %v993
    %v995 = vpop.f32.mrb[0].mxu0
    %v996 = vadd.f32 0.0, %v995
    %v997 = vpop.f32.mrb[0].mxu0
    %v998 = vpop.f32.mrb[0].mxu0
    %999 = vdwg.mxu0
    %1000 = vmatprep.subr.bf16.mxu0 %v732
    %1001 = vmatpush1.bf16.msra.mxu0 %v731
    %1002 = vmatprep.subr.bf16.mxu0 %v736
    %1003 = vmatpush1.bf16.msra.mxu0 %v735
    %1004 = vmatprep.subr.bf16.mxu0 %v740
    %1005 = vmatpush1.bf16.msra.mxu0 %v739
    %1006 = vmatprep.subr.bf16.mxu0 %v744
    %1007 = vmatpush1.bf16.msra.mxu0 %v743
    %1008 = vmatprep.subr.bf16.mxu0 %v748
    %1009 = vmatpush1.bf16.msra.mxu0 %v747
    %1010 = vmatprep.subr.bf16.mxu0 %v752
    %1011 = vmatpush1.bf16.msra.mxu0 %v751
    %1012 = vmatprep.subr.bf16.mxu0 %v756
    %1013 = vmatpush1.bf16.msra.mxu0 %v755
    %1014 = vmatprep.subr.bf16.mxu0 %v760
    %1015 = vmatpush1.bf16.msra.mxu0 %v759
    %1016 = vmatprep.subr.bf16.mxu0 %v764
    %1017 = vmatpush1.bf16.msra.mxu0 %v763
    %1018 = vmatprep.subr.bf16.mxu0 %v768
    %1019 = vmatpush1.bf16.msra.mxu0 %v767
    %1020 = vmatprep.subr.bf16.mxu0 %v772
    %1021 = vmatpush1.bf16.msra.mxu0 %v771
    %1022 = vmatprep.subr.bf16.mxu0 %v776
    %1023 = vmatpush1.bf16.msra.mxu0 %v775
    %1024 = vmatprep.subr.bf16.mxu0 %v780
    %1025 = vmatpush1.bf16.msra.mxu0 %v779
    %1026 = vmatprep.subr.bf16.mxu0 %v784
    %1027 = vmatpush1.bf16.msra.mxu0 %v783
    %1028 = vmatprep.subr.bf16.mxu0 %v788
    %1029 = vmatpush1.bf16.msra.mxu0 %v787
    %1030 = vmatprep.subr.bf16.mxu0 %v792
    %1031 = vmatpush1.bf16.msra.mxu0 %v791
    %1032 = vmatprep.mubr.bf16.mxu0 %v229
    %1033 = vmatmul.mubr.bf16.gmra.mrb[0].mxu0 %v228
    %v1034 = vpop.f32.mrb[0].mxu0
    %v1035 = vadd.f32 %v994, %v1034
    %v1036 = vpop.f32.mrb[0].mxu0
    %v1037 = vadd.f32 %v996, %v1036
    %v1038 = vpop.f32.mrb[0].mxu0
    %v1039 = vpop.f32.mrb[0].mxu0
    %1040 = vdwg.mxu0
    %1041 = vmatprep.subr.bf16.mxu0 %v796
    %1042 = vmatpush1.bf16.msra.mxu0 %v795
    %1043 = vmatprep.subr.bf16.mxu0 %v800
    %1044 = vmatpush1.bf16.msra.mxu0 %v799
    %1045 = vmatprep.subr.bf16.mxu0 %v804
    %1046 = vmatpush1.bf16.msra.mxu0 %v803
    %1047 = vmatprep.subr.bf16.mxu0 %v808
    %1048 = vmatpush1.bf16.msra.mxu0 %v807
    %1049 = vmatprep.subr.bf16.mxu0 0
    %1050 = vmatpush1.bf16.msra.mxu0 0
    %1051 = vmatprep.subr.bf16.mxu0 0
    %1052 = vmatpush1.bf16.msra.mxu0 0
    %1053 = vmatprep.subr.bf16.mxu0 0
    %1054 = vmatpush1.bf16.msra.mxu0 0
    %1055 = vmatprep.subr.bf16.mxu0 0
    %1056 = vmatpush1.bf16.msra.mxu0 0
    %1057 = vmatprep.subr.bf16.mxu0 0
    %1058 = vmatpush1.bf16.msra.mxu0 0
    %1059 = vmatprep.subr.bf16.mxu0 0
    %1060 = vmatpush1.bf16.msra.mxu0 0
    %1061 = vmatprep.subr.bf16.mxu0 0
    %1062 = vmatpush1.bf16.msra.mxu0 0
    %1063 = vmatprep.subr.bf16.mxu0 0
    %1064 = vmatpush1.bf16.msra.mxu0 0
    %1065 = vmatprep.subr.bf16.mxu0 0
    %1066 = vmatpush1.bf16.msra.mxu0 0
    %1067 = vmatprep.subr.bf16.mxu0 0
    %1068 = vmatpush1.bf16.msra.mxu0 0
    %1069 = vmatprep.subr.bf16.mxu0 0
    %1070 = vmatpush1.bf16.msra.mxu0 0
    %1071 = vmatprep.subr.bf16.mxu0 0
    %1072 = vmatpush1.bf16.msra.mxu0 0
    %1073 = vmatprep.mubr.bf16.mxu0 0
    %1074 = vmatmul.mubr.bf16.gmra.mrb[0].mxu0 %v957
    %v1075 = vpop.f32.mrb[0].mxu0
    %v1076 = vadd.f32 %v1035, %v1075
    %v1077 = vpop.f32.mrb[0].mxu0
    %v1078 = vadd.f32 %v1037, %v1077
    %v1079 = vpop.f32.mrb[0].mxu0
    %v1080 = vpop.f32.mrb[0].mxu0
    %1081 = vdwg.mxu0
    %1082 = vmatprep.subr.bf16.mxu0 %v670
    %1083 = vmatpush1.bf16.msra.mxu0 %v669
    %1084 = vmatprep.subr.bf16.mxu0 %v674
    %1085 = vmatpush1.bf16.msra.mxu0 %v673
    %1086 = vmatprep.subr.bf16.mxu0 %v678
    %1087 = vmatpush1.bf16.msra.mxu0 %v677
    %1088 = vmatprep.subr.bf16.mxu0 %v682
    %1089 = vmatpush1.bf16.msra.mxu0 %v681
    %1090 = vmatprep.subr.bf16.mxu0 %v686
    %1091 = vmatpush1.bf16.msra.mxu0 %v685
    %1092 = vmatprep.subr.bf16.mxu0 %v690
    %1093 = vmatpush1.bf16.msra.mxu0 %v689
    %1094 = vmatprep.subr.bf16.mxu0 %v694
    %1095 = vmatpush1.bf16.msra.mxu0 %v693
    %1096 = vmatprep.subr.bf16.mxu0 %v698
    %1097 = vmatpush1.bf16.msra.mxu0 %v697
    %1098 = vmatprep.subr.bf16.mxu0 %v702
    %1099 = vmatpush1.bf16.msra.mxu0 %v701
    %1100 = vmatprep.subr.bf16.mxu0 %v706
    %1101 = vmatpush1.bf16.msra.mxu0 %v705
    %1102 = vmatprep.subr.bf16.mxu0 %v710
    %1103 = vmatpush1.bf16.msra.mxu0 %v709
    %1104 = vmatprep.subr.bf16.mxu0 %v714
    %1105 = vmatpush1.bf16.msra.mxu0 %v713
    %1106 = vmatprep.subr.bf16.mxu0 %v718
    %1107 = vmatpush1.bf16.msra.mxu0 %v717
    %1108 = vmatprep.subr.bf16.mxu0 %v722
    %1109 = vmatpush1.bf16.msra.mxu0 %v721
    %1110 = vmatprep.subr.bf16.mxu0 %v726
    %1111 = vmatpush1.bf16.msra.mxu0 %v725
    %1112 = vmatprep.subr.bf16.mxu0 %v730
    %1113 = vmatpush1.bf16.msra.mxu0 %v729
    %1114 = vmatprep.mubr.bf16.mxu0 %v227
    %1115 = vmatmul.mubr.bf16.gmra.mrb[0].mxu0 %v226
    %v1116 = vpop.f32.mrb[0].mxu0
    %v1117 = vadd.f32 0.0, %v1116
    %v1118 = vpop.f32.mrb[0].mxu0
    %v1119 = vadd.f32 0.0, %v1118
    %v1120 = vpop.f32.mrb[0].mxu0
    %v1121 = vpop.f32.mrb[0].mxu0
    %1122 = vdwg.mxu0
    %1123 = vmatprep.subr.bf16.mxu0 %v734
    %1124 = vmatpush1.bf16.msra.mxu0 %v733
    %1125 = vmatprep.subr.bf16.mxu0 %v738
    %1126 = vmatpush1.bf16.msra.mxu0 %v737
    %1127 = vmatprep.subr.bf16.mxu0 %v742
    %1128 = vmatpush1.bf16.msra.mxu0 %v741
    %1129 = vmatprep.subr.bf16.mxu0 %v746
    %1130 = vmatpush1.bf16.msra.mxu0 %v745
    %1131 = vmatprep.subr.bf16.mxu0 %v750
    %1132 = vmatpush1.bf16.msra.mxu0 %v749
    %1133 = vmatprep.subr.bf16.mxu0 %v754
    %1134 = vmatpush1.bf16.msra.mxu0 %v753
    %1135 = vmatprep.subr.bf16.mxu0 %v758
    %1136 = vmatpush1.bf16.msra.mxu0 %v757
    %1137 = vmatprep.subr.bf16.mxu0 %v762
    %1138 = vmatpush1.bf16.msra.mxu0 %v761
    %1139 = vmatprep.subr.bf16.mxu0 %v766
    %1140 = vmatpush1.bf16.msra.mxu0 %v765
    %1141 = vmatprep.subr.bf16.mxu0 %v770
    %1142 = vmatpush1.bf16.msra.mxu0 %v769
    %1143 = vmatprep.subr.bf16.mxu0 %v774
    %1144 = vmatpush1.bf16.msra.mxu0 %v773
    %1145 = vmatprep.subr.bf16.mxu0 %v778
    %1146 = vmatpush1.bf16.msra.mxu0 %v777
    %1147 = vmatprep.subr.bf16.mxu0 %v782
    %1148 = vmatpush1.bf16.msra.mxu0 %v781
    %1149 = vmatprep.subr.bf16.mxu0 %v786
    %1150 = vmatpush1.bf16.msra.mxu0 %v785
    %1151 = vmatprep.subr.bf16.mxu0 %v790
    %1152 = vmatpush1.bf16.msra.mxu0 %v789
    %1153 = vmatprep.subr.bf16.mxu0 %v794
    %1154 = vmatpush1.bf16.msra.mxu0 %v793
    %1155 = vmatprep.mubr.bf16.mxu0 %v229
    %1156 = vmatmul.mubr.bf16.gmra.mrb[0].mxu0 %v228
    %v1157 = vpop.f32.mrb[0].mxu0
    %v1158 = vadd.f32 %v1117, %v1157
    %v1159 = vpop.f32.mrb[0].mxu0
    %v1160 = vadd.f32 %v1119, %v1159
    %v1161 = vpop.f32.mrb[0].mxu0
    %v1162 = vpop.f32.mrb[0].mxu0
    %1163 = vdwg.mxu0
    %1164 = vmatprep.subr.bf16.mxu0 %v798
    %1165 = vmatpush1.bf16.msra.mxu0 %v797
    %1166 = vmatprep.subr.bf16.mxu0 %v802
    %1167 = vmatpush1.bf16.msra.mxu0 %v801
    %1168 = vmatprep.subr.bf16.mxu0 %v806
    %1169 = vmatpush1.bf16.msra.mxu0 %v805
    %1170 = vmatprep.subr.bf16.mxu0 %v810
    %1171 = vmatpush1.bf16.msra.mxu0 %v809
    %1172 = vmatprep.subr.bf16.mxu0 0
    %1173 = vmatpush1.bf16.msra.mxu0 0
    %1174 = vmatprep.subr.bf16.mxu0 0
    %1175 = vmatpush1.bf16.msra.mxu0 0
    %1176 = vmatprep.subr.bf16.mxu0 0
    %1177 = vmatpush1.bf16.msra.mxu0 0
    %1178 = vmatprep.subr.bf16.mxu0 0
    %1179 = vmatpush1.bf16.msra.mxu0 0
    %1180 = vmatprep.subr.bf16.mxu0 0
    %1181 = vmatpush1.bf16.msra.mxu0 0
    %1182 = vmatprep.subr.bf16.mxu0 0
    %1183 = vmatpush1.bf16.msra.mxu0 0
    %1184 = vmatprep.subr.bf16.mxu0 0
    %1185 = vmatpush1.bf16.msra.mxu0 0
    %1186 = vmatprep.subr.bf16.mxu0 0
    %1187 = vmatpush1.bf16.msra.mxu0 0
    %1188 = vmatprep.subr.bf16.mxu0 0
    %1189 = vmatpush1.bf16.msra.mxu0 0
    %1190 = vmatprep.subr.bf16.mxu0 0
    %1191 = vmatpush1.bf16.msra.mxu0 0
    %1192 = vmatprep.subr.bf16.mxu0 0
    %1193 = vmatpush1.bf16.msra.mxu0 0
    %1194 = vmatprep.subr.bf16.mxu0 0
    %1195 = vmatpush1.bf16.msra.mxu0 0
    %1196 = vmatprep.mubr.bf16.mxu0 0
    %1197 = vmatmul.mubr.bf16.gmra.mrb[0].mxu0 %v957
    %v1198 = vpop.f32.mrb[0].mxu0
    %v1199 = vadd.f32 %v1158, %v1198
    %v1200 = vpop.f32.mrb[0].mxu0
    %v1201 = vadd.f32 %v1160, %v1200
    %v1202 = vpop.f32.mrb[0].mxu0
    %v1203 = vpop.f32.mrb[0].mxu0
    %1204 = vdwg.mxu0
    %v1205 = vld [vmem:[#allocation7] sm:$0xf]
    %v1207 = vlaneseq
    %v1208 = vshrl.u32 %v1207, 7
    %v1209 = vsub.s32 0, %v1208
    %v1210 = vrot.slane %v1205, %v1209
    %v1211 = vlaneseq
    %v1212 = vshrl.u32 %v1211, 7
    %v1213 = vsub.s32 1, %v1212
    %v1214 = vrot.slane %v1205, %v1213
    %v1215 = vlaneseq
    %v1216 = vshrl.u32 %v1215, 7
    %v1217 = vsub.s32 2, %v1216
    %v1218 = vrot.slane %v1205, %v1217
    %v1219 = vlaneseq
    %v1220 = vshrl.u32 %v1219, 7
    %v1221 = vsub.s32 3, %v1220
    %v1222 = vrot.slane %v1205, %v1221
    %v1227 = vmul.f32 %v1076, %v1210
    %v1228 = vmul.f32 %v1078, %v1214
    %v1229 = vmul.f32 %v1199, %v1218
    %v1230 = vmul.f32 %v1201, %v1222
    %v1231 = vld [vmem:[#allocation8] sm:$0xf]
    %v1233 = vlaneseq
    %v1234 = vshrl.u32 %v1233, 7
    %v1235 = vsub.s32 0, %v1234
    %v1236 = vrot.slane %v1231, %v1235
    %v1237 = vlaneseq
    %v1238 = vshrl.u32 %v1237, 7
    %v1239 = vsub.s32 1, %v1238
    %v1240 = vrot.slane %v1231, %v1239
    %v1241 = vlaneseq
    %v1242 = vshrl.u32 %v1241, 7
    %v1243 = vsub.s32 2, %v1242
    %v1244 = vrot.slane %v1231, %v1243
    %v1245 = vlaneseq
    %v1246 = vshrl.u32 %v1245, 7
    %v1247 = vsub.s32 3, %v1246
    %v1248 = vrot.slane %v1231, %v1247
    %v1253 = vadd.f32 %v1227, %v1236
    %v1254 = vadd.f32 %v1228, %v1240
    %v1255 = vadd.f32 %v1229, %v1244
    %v1256 = vadd.f32 %v1230, %v1248
    %v1257 = vmax.f32 %v1253, 0.0
    %v1258 = vmax.f32 %v1254, 0.0
    %v1259 = vmax.f32 %v1255, 0.0
    %v1260 = vmax.f32 %v1256, 0.0
    %v1261 = vpack.c.bf16 %v1257, %v1257
    %1262 = vst [vmem:[#allocation10] sm:$0xf] %v1261
    %v1263 = vpack.c.bf16 %v1258, %v1258
    %v1264 = vpack.c.bf16 %v1259, %v1259
    %v1265 = vpack.c.bf16 %v1260, %v1260
    %v1269 = vunpack.c.l.b16 %v1263
    %v1270 = vunpack.c.l.b16 %v1264
    %v1271 = vunpack.c.l.b16 %v1265
    %v1272 = vpack.c.b16 %v1270, %v1269
    %v1273 = vpack.c.b16 %v1271, %v1271
    %1276 = vst [vmem:[#allocation11] sm:$0xff] %v1272
    %1277 = vst [vmem:[#allocation11 + $0x8] sm:$0xf] %v1273
    // Predicated region
    $region34: #{context_branch_forward.5} parent=1 // pred_check
      _
    $region35: #{context_branch_forward.5} parent=1 // pred_check_branch
      %1279 = sbr.rel (0) target = $region37
    $region36: #{context_branch_forward.5} parent=1 // pred_region
      %s1281 = ssub.s32 64, 64
      %1282 = vsyncadd [#allocation4], %s1281
      %s1284 = sshll.u32 [#allocation10], 4
      %s1285 = int_to_ptr.vmem [resolvable:$true] %s1284
      %1287 = dma.vmem_to_hbm [thread:$0]  %s1285, 64, %s4, [#allocation4]
    $region37: #{context_branch_forward.5} parent=1 // pred_fallthru
      _
    // Predicated region
    $region38: #{context_branch_forward.5} parent=1 // pred_check
      _
    $region39: #{context_branch_forward.5} parent=1 // pred_check_branch
      %1289 = sbr.rel (0) target = $region41
    $region40: #{context_branch_forward.5} parent=1 // pred_region
      %s1291 = ssub.s32 192, 192
      %1292 = vsyncadd [#allocation12], %s1291
      %s1294 = sshll.u32 [#allocation11], 4
      %s1295 = int_to_ptr.vmem [resolvable:$true] %s1294
      %1297 = dma.vmem_to_hbm [thread:$0]  %s1295, 192, %s5, [#allocation12]
    $region41: #{context_branch_forward.5} parent=1 // pred_fallthru
      _
    // Predicated region
    $region42: #{context_branch_forward.5} parent=1 // pred_check
      _
    $region43: #{context_branch_forward.5} parent=1 // pred_check_branch
      %1299 = sbr.rel (0) target = $region45
    $region44: #{context_branch_forward.5} parent=1 // pred_region
      %1300 = dma.done [#allocation4], 64
    $region45: #{context_branch_forward.5} parent=1 // pred_fallthru
      _
    // Predicated region
    $region46: #{context_branch_forward.5} parent=1 // pred_check
      _
    $region47: #{context_branch_forward.5} parent=1 // pred_check_branch
      %1302 = sbr.rel (0) target = $region49
    $region48: #{context_branch_forward.5} parent=1 // pred_region
      %1303 = dma.done [#allocation12], 192
    $region49: #{context_branch_forward.5} parent=1 // pred_fallthru
      _
    %1304 = vsyncpa [#allocation3], 1
    %1305 = vsyncpa [#allocation6], 1
    %1306 = vsyncpa [#allocation9], 1
    %1307 = vsyncpa [#allocation4], 1
    %1308 = vsyncpa [#allocation12], 1

// kernel: context_branch_forward.4
$region0: #{context_branch_forward.4}
  #allocation0 [shape = 'u32[]', space=smem, size = 0x4, offset = 0x4, fixed_abs, tag = 'smem constant byte address 0x4 - core index']
  #allocation1 [shape = 'u32[144,128]{1,0:T(1,128)}', space=vmem, size = 0x12000, scoped, tag = 'internal scratch']
  %s0 = inlined_call_operand.hbm [shape: bf16[8,3072], index: 0, kind: input, shape index: {}]
  %s1 = inlined_call_operand.hbm [shape: bf16[3072,576], index: 1, kind: input, shape index: {}]
  %s2 = inlined_call_operand.hbm [shape: f32[1,576], index: 2, kind: input, shape index: {}]
  %s3 = inlined_call_operand.hbm [shape: f32[1,576], index: 3, kind: input, shape index: {}]
  %s4 = inlined_call_operand.hbm [shape: bf16[8,576], index: 4, kind: output, shape index: {}]
  %s5 = sld [smem:[#allocation0]]
  $region42: #{context_branch_forward.4} parent=0
    _
  %s7 = ssub.s32 1, %s5
  %s8 = scalar_select 0, %s7, %s5
  $region1: #{context_branch_forward.4} parent=0
    #allocation2 [shape = 'u8[49152]{0}', space=vmem, size = 0xc000, scoped, tag = 'input window, operand 0, single buffered']
    #allocation3 [shape = 's32[1]{0}', space=sflag, size = 0x4, scoped, tag = 'scoped memory for context_branch_forward.4']
    #allocation4 [shape = 's32[1]{0}', space=sflag, size = 0x4, scoped, tag = 'scoped memory for context_branch_forward.4']
    #allocation5 [shape = 'u8[3932160]{0}', space=vmem, size = 0x3c0000, scoped, tag = 'input window, operand 1, single buffered']
    #allocation6 [shape = 's32[1]{0}', space=sflag, size = 0x4, scoped, tag = 'scoped memory for context_branch_forward.4']
    #allocation7 [shape = 'u8[2560]{0}', space=vmem, size = 0xc00, scoped, tag = 'input window, operand 2, single buffered']
    #allocation8 [shape = 'u8[2560]{0}', space=vmem, size = 0xc00, scoped, tag = 'input window, operand 3, single buffered']
    #allocation9 [shape = 's32[1]{0}', space=sflag, size = 0x4, scoped, tag = 'scoped memory for context_branch_forward.4']
    #allocation10 [shape = 'u8[10240]{0}', space=vmem, size = 0x2800, scoped, tag = 'output window, operand 0, single buffered']
    %9 = vsyncpa [#allocation3], 0
    %10 = vsyncpa [#allocation6], 0
    %11 = vsyncpa [#allocation9], 0
    %12 = vsyncpa [#allocation4], 0
    // Predicated region
    $region2: #{context_branch_forward.4} parent=1 // pred_check
      _
    $region3: #{context_branch_forward.4} parent=1 // pred_check_branch
      %14 = sbr.rel (0) target = $region5
    $region4: #{context_branch_forward.4} parent=1 // pred_region
      %s16 = ssub.s32 1536, 1536
      %17 = vsyncadd [#allocation3], %s16
      %s19 = sshll.u32 [#allocation2], 4
      %s20 = int_to_ptr.vmem [resolvable:$true] %s19
      %22 = dma.hbm_to_vmem [thread:$0]  %s0, 1536, %s20, [#allocation3]
    $region5: #{context_branch_forward.4} parent=1 // pred_fallthru
      _
    // Predicated region
    $region6: #{context_branch_forward.4} parent=1 // pred_check
      _
    $region7: #{context_branch_forward.4} parent=1 // pred_check_branch
      %24 = sbr.rel (0) target = $region9
    $region8: #{context_branch_forward.4} parent=1 // pred_region
      %s26 = ssub.s32 122880, 122880
      %27 = vsyncadd [#allocation6], %s26
      %s28 = sshll.u32 [#allocation5], 4
      %s29 = int_to_ptr.vmem [resolvable:$true] %s28
      %34 = dma.hbm_to_vmem [thread:$0]  %s1, 122880, %s29, [#allocation6], 320, 320, 20
    $region9: #{context_branch_forward.4} parent=1 // pred_fallthru
      _
    // Predicated region
    $region10: #{context_branch_forward.4} parent=1 // pred_check
      _
    $region11: #{context_branch_forward.4} parent=1 // pred_check_branch
      %36 = sbr.rel (0) target = $region13
    $region12: #{context_branch_forward.4} parent=1 // pred_region
      %s38 = ssub.s32 80, 80
      %39 = vsyncadd [#allocation6], %s38
      %s41 = sshll.u32 [#allocation7], 4
      %s42 = int_to_ptr.vmem [resolvable:$true] %s41
      %44 = dma.hbm_to_vmem [thread:$0]  %s2, 80, %s42, [#allocation6]
    $region13: #{context_branch_forward.4} parent=1 // pred_fallthru
      _
    // Predicated region
    $region14: #{context_branch_forward.4} parent=1 // pred_check
      _
    $region15: #{context_branch_forward.4} parent=1 // pred_check_branch
      %46 = sbr.rel (0) target = $region17
    $region16: #{context_branch_forward.4} parent=1 // pred_region
      %s48 = ssub.s32 80, 80
      %49 = vsyncadd [#allocation9], %s48
      %s51 = sshll.u32 [#allocation8], 4
      %s52 = int_to_ptr.vmem [resolvable:$true] %s51
      %54 = dma.hbm_to_vmem [thread:$0]  %s3, 80, %s52, [#allocation9]
    $region17: #{context_branch_forward.4} parent=1 // pred_fallthru
      _
    // Predicated region
    $region18: #{context_branch_forward.4} parent=1 // pred_check
      _
    $region19: #{context_branch_forward.4} parent=1 // pred_check_branch
      %56 = sbr.rel (0) target = $region21
    $region20: #{context_branch_forward.4} parent=1 // pred_region
      %57 = dma.done [#allocation3], 1536
    $region21: #{context_branch_forward.4} parent=1 // pred_fallthru
      _
    // Predicated region
    $region22: #{context_branch_forward.4} parent=1 // pred_check
      _
    $region23: #{context_branch_forward.4} parent=1 // pred_check_branch
      %59 = sbr.rel (0) target = $region25
    $region24: #{context_branch_forward.4} parent=1 // pred_region
      %60 = dma.done [#allocation6], 122880
    $region25: #{context_branch_forward.4} parent=1 // pred_fallthru
      _
    // Predicated region
    $region26: #{context_branch_forward.4} parent=1 // pred_check
      _
    $region27: #{context_branch_forward.4} parent=1 // pred_check_branch
      %62 = sbr.rel (0) target = $region29
    $region28: #{context_branch_forward.4} parent=1 // pred_region
      %63 = dma.done [#allocation6], 80
    $region29: #{context_branch_forward.4} parent=1 // pred_fallthru
      _
    // Predicated region
    $region30: #{context_branch_forward.4} parent=1 // pred_check
      _
    $region31: #{context_branch_forward.4} parent=1 // pred_check_branch
      %65 = sbr.rel (0) target = $region33
    $region32: #{context_branch_forward.4} parent=1 // pred_region
      %66 = dma.done [#allocation9], 80
    $region33: #{context_branch_forward.4} parent=1 // pred_fallthru
      _
    %v68 = vld [vmem:[#allocation2] sm:$0xff]
    %v69 = vld [vmem:[#allocation2 + $0x8] sm:$0xff]
    %v70 = vld [vmem:[#allocation2 + $0x10] sm:$0xff]
    %v71 = vld [vmem:[#allocation2 + $0x18] sm:$0xff]
    %v72 = vld [vmem:[#allocation2 + $0x20] sm:$0xff]
    %v73 = vld [vmem:[#allocation2 + $0x28] sm:$0xff]
    %v74 = vld [vmem:[#allocation2 + $0x30] sm:$0xff]
    %v75 = vld [vmem:[#allocation2 + $0x38] sm:$0xff]
    %v76 = vld [vmem:[#allocation2 + $0x40] sm:$0xff]
    %v77 = vld [vmem:[#allocation2 + $0x48] sm:$0xff]
    %v78 = vld [vmem:[#allocation2 + $0x50] sm:$0xff]
    %v79 = vld [vmem:[#allocation2 + $0x58] sm:$0xff]
    %v80 = vld [vmem:[#allocation5] sm:$0xff]
    %v81 = vld [vmem:[#allocation5 + $0x8] sm:$0xff]
    %v82 = vld [vmem:[#allocation5 + $0x10] sm:$0xf]
    %v83 = vld [vmem:[#allocation5 + $0x14] sm:$0xff]
    %v84 = vld [vmem:[#allocation5 + $0x1c] sm:$0xff]
    %v85 = vld [vmem:[#allocation5 + $0x24] sm:$0xf]
    %v86 = vld [vmem:[#allocation5 + $0x28] sm:$0xff]
    %v87 = vld [vmem:[#allocation5 + $0x30] sm:$0xff]
    %v88 = vld [vmem:[#allocation5 + $0x38] sm:$0xf]
    %v89 = vld [vmem:[#allocation5 + $0x3c] sm:$0xff]
    %v90 = vld [vmem:[#allocation5 + $0x44] sm:$0xff]
    %v91 = vld [vmem:[#allocation5 + $0x4c] sm:$0xf]
    %v92 = vld [vmem:[#allocation5 + $0x50] sm:$0xff]
    %v93 = vld [vmem:[#allocation5 + $0x58] sm:$0xff]
    %v94 = vld [vmem:[#allocation5 + $0x60] sm:$0xf]
    %v95 = vld [vmem:[#allocation5 + $0x64] sm:$0xff]
    %v96 = vld [vmem:[#allocation5 + $0x6c] sm:$0xff]
    %v97 = vld [vmem:[#allocation5 + $0x74] sm:$0xf]
    %v98 = vld [vmem:[#allocation5 + $0x78] sm:$0xff]
    %v99 = vld [vmem:[#allocation5 + $0x80] sm:$0xff]
    %v100 = vld [vmem:[#allocation5 + $0x88] sm:$0xf]
    %v101 = vld [vmem:[#allocation5 + $0x8c] sm:$0xff]
    %v102 = vld [vmem:[#allocation5 + $0x94] sm:$0xff]
    %v103 = vld [vmem:[#allocation5 + $0x9c] sm:$0xf]
    %v104 = vld [vmem:[#allocation5 + $0xa0] sm:$0xff]
    %v105 = vld [vmem:[#allocation5 + $0xa8] sm:$0xff]
    %v106 = vld [vmem:[#allocation5 + $0xb0] sm:$0xf]
    %v107 = vld [vmem:[#allocation5 + $0xb4] sm:$0xff]
    %v108 = vld [vmem:[#allocation5 + $0xbc] sm:$0xff]
    %v109 = vld [vmem:[#allocation5 + $0xc4] sm:$0xf]
    %v110 = vld [vmem:[#allocation5 + $0xc8] sm:$0xff]
    %v111 = vld [vmem:[#allocation5 + $0xd0] sm:$0xff]
    %v112 = vld [vmem:[#allocation5 + $0xd8] sm:$0xf]
    %v113 = vld [vmem:[#allocation5 + $0xdc] sm:$0xff]
    %v114 = vld [vmem:[#allocation5 + $0xe4] sm:$0xff]
    %v115 = vld [vmem:[#allocation5 + $0xec] sm:$0xf]
    %v116 = vld [vmem:[#allocation5 + $0xf0] sm:$0xff]
    %v117 = vld [vmem:[#allocation5 + $0xf8] sm:$0xff]
    %v118 = vld [vmem:[#allocation5 + $0x100] sm:$0xf]
    %v119 = vld [vmem:[#allocation5 + $0x104] sm:$0xff]
    %v120 = vld [vmem:[#allocation5 + $0x10c] sm:$0xff]
    %v121 = vld [vmem:[#allocation5 + $0x114] sm:$0xf]
    %v122 = vld [vmem:[#allocation5 + $0x118] sm:$0xff]
    %v123 = vld [vmem:[#allocation5 + $0x120] sm:$0xff]
    %v124 = vld [vmem:[#allocation5 + $0x128] sm:$0xf]
    %v125 = vld [vmem:[#allocation5 + $0x12c] sm:$0xff]
    %v126 = vld [vmem:[#allocation5 + $0x134] sm:$0xff]
    %v127 = vld [vmem:[#allocation5 + $0x13c] sm:$0xf]
    %v128 = vld [vmem:[#allocation5 + $0x140] sm:$0xff]
    %v129 = vld [vmem:[#allocation5 + $0x148] sm:$0xff]
    %v130 = vld [vmem:[#allocation5 + $0x150] sm:$0xf]
    %v131 = vld [vmem:[#allocation5 + $0x154] sm:$0xff]
    %v132 = vld [vmem:[#allocation5 + $0x15c] sm:$0xff]
    %v133 = vld [vmem:[#allocation5 + $0x164] sm:$0xf]
    %v134 = vld [vmem:[#allocation5 + $0x168] sm:$0xff]
    %v135 = vld [vmem:[#allocation5 + $0x170] sm:$0xff]
    %v136 = vld [vmem:[#allocation5 + $0x178] sm:$0xf]
    %v137 = vld [vmem:[#allocation5 + $0x17c] sm:$0xff]
    %v138 = vld [vmem:[#allocation5 + $0x184] sm:$0xff]
    %v139 = vld [vmem:[#allocation5 + $0x18c] sm:$0xf]
    %v140 = vld [vmem:[#allocation5 + $0x190] sm:$0xff]
    %v141 = vld [vmem:[#allocation5 + $0x198] sm:$0xff]
    %v142 = vld [vmem:[#allocation5 + $0x1a0] sm:$0xf]
    %v143 = vld [vmem:[#allocation5 + $0x1a4] sm:$0xff]
    %v144 = vld [vmem:[#allocation5 + $0x1ac] sm:$0xff]
    %v145 = vld [vmem:[#allocation5 + $0x1b4] sm:$0xf]
    %v146 = vld [vmem:[#allocation5 + $0x1b8] sm:$0xff]
    %v147 = vld [vmem:[#allocation5 + $0x1c0] sm:$0xff]
    %v148 = vld [vmem:[#allocation5 + $0x1c8] sm:$0xf]
    %v149 = vld [vmem:[#allocation5 + $0x1cc] sm:$0xff]
    %v150 = vld [vmem:[#allocation5 + $0x1d4] sm:$0xff]
    %v151 = vld [vmem:[#allocation5 + $0x1dc] sm:$0xf]
    %v152 = vld [vmem:[#allocation5 + $0x1e0] sm:$0xff]
    %v153 = vld [vmem:[#allocation5 + $0x1e8] sm:$0xff]
    %v154 = vld [vmem:[#allocation5 + $0x1f0] sm:$0xf]
    %v155 = vld [vmem:[#allocation5 + $0x1f4] sm:$0xff]
    %v156 = vld [vmem:[#allocation5 + $0x1fc] sm:$0xff]
    %v157 = vld [vmem:[#allocation5 + $0x204] sm:$0xf]
    %v158 = vld [vmem:[#allocation5 + $0x208] sm:$0xff]
    %v159 = vld [vmem:[#allocation5 + $0x210] sm:$0xff]
    %v160 = vld [vmem:[#allocation5 + $0x218] sm:$0xf]
    %v161 = vld [vmem:[#allocation5 + $0x21c] sm:$0xff]
    %v162 = vld [vmem:[#allocation5 + $0x224] sm:$0xff]
    %v163 = vld [vmem:[#allocation5 + $0x22c] sm:$0xf]
    %v164 = vld [vmem:[#allocation5 + $0x230] sm:$0xff]
    %v165 = vld [vmem:[#allocation5 + $0x238] sm:$0xff]
    %v166 = vld [vmem:[#allocation5 + $0x240] sm:$0xf]
    %v167 = vld [vmem:[#allocation5 + $0x244] sm:$0xff]
    %v168 = vld [vmem:[#allocation5 + $0x24c] sm:$0xff]
    %v169 = vld [vmem:[#allocation5 + $0x254] sm:$0xf]
    %v170 = vld [vmem:[#allocation5 + $0x258] sm:$0xff]
    %v171 = vld [vmem:[#allocation5 + $0x260] sm:$0xff]
    %v172 = vld [vmem:[#allocation5 + $0x268] sm:$0xf]
    %v173 = vld [vmem:[#allocation5 + $0x26c] sm:$0xff]
    %v174 = vld [vmem:[#allocation5 + $0x274] sm:$0xff]
    %v175 = vld [vmem:[#allocation5 + $0x27c] sm:$0xf]
    %v176 = vld [vmem:[#allocation5 + $0x280] sm:$0xff]
    %v177 = vld [vmem:[#allocation5 + $0x288] sm:$0xff]
    %v178 = vld [vmem:[#allocation5 + $0x290] sm:$0xf]
    %v179 = vld [vmem:[#allocation5 + $0x294] sm:$0xff]
    %v180 = vld [vmem:[#allocation5 + $0x29c] sm:$0xff]
    %v181 = vld [vmem:[#allocation5 + $0x2a4] sm:$0xf]
    %v182 = vld [vmem:[#allocation5 + $0x2a8] sm:$0xff]
    %v183 = vld [vmem:[#allocation5 + $0x2b0] sm:$0xff]
    %v184 = vld [vmem:[#allocation5 + $0x2b8] sm:$0xf]
    %v185 = vld [vmem:[#allocation5 + $0x2bc] sm:$0xff]
    %v186 = vld [vmem:[#allocation5 + $0x2c4] sm:$0xff]
    %v187 = vld [vmem:[#allocation5 + $0x2cc] sm:$0xf]
    %v188 = vld [vmem:[#allocation5 + $0x2d0] sm:$0xff]
    %v189 = vld [vmem:[#allocation5 + $0x2d8] sm:$0xff]
    %v190 = vld [vmem:[#allocation5 + $0x2e0] sm:$0xf]
    %v191 = vld [vmem:[#allocation5 + $0x2e4] sm:$0xff]
    %v192 = vld [vmem:[#allocation5 + $0x2ec] sm:$0xff]
    %v193 = vld [vmem:[#allocation5 + $0x2f4] sm:$0xf]
    %v194 = vld [vmem:[#allocation5 + $0x2f8] sm:$0xff]
    %v195 = vld [vmem:[#allocation5 + $0x300] sm:$0xff]
    %v196 = vld [vmem:[#allocation5 + $0x308] sm:$0xf]
    %v197 = vld [vmem:[#allocation5 + $0x30c] sm:$0xff]
    %v198 = vld [vmem:[#allocation5 + $0x314] sm:$0xff]
    %v199 = vld [vmem:[#allocation5 + $0x31c] sm:$0xf]
    %v200 = vld [vmem:[#allocation5 + $0x320] sm:$0xff]
    %v201 = vld [vmem:[#allocation5 + $0x328] sm:$0xff]
    %v202 = vld [vmem:[#allocation5 + $0x330] sm:$0xf]
    %v203 = vld [vmem:[#allocation5 + $0x334] sm:$0xff]
    %v204 = vld [vmem:[#allocation5 + $0x33c] sm:$0xff]
    %v205 = vld [vmem:[#allocation5 + $0x344] sm:$0xf]
    %v206 = vld [vmem:[#allocation5 + $0x348] sm:$0xff]
    %v207 = vld [vmem:[#allocation5 + $0x350] sm:$0xff]
    %v208 = vld [vmem:[#allocation5 + $0x358] sm:$0xf]
    %v209 = vld [vmem:[#allocation5 + $0x35c] sm:$0xff]
    %v210 = vld [vmem:[#allocation5 + $0x364] sm:$0xff]
    %v211 = vld [vmem:[#allocation5 + $0x36c] sm:$0xf]
    %v212 = vld [vmem:[#allocation5 + $0x370] sm:$0xff]
    %v213 = vld [vmem:[#allocation5 + $0x378] sm:$0xff]
    %v214 = vld [vmem:[#allocation5 + $0x380] sm:$0xf]
    %v215 = vld [vmem:[#allocation5 + $0x384] sm:$0xff]
    %v216 = vld [vmem:[#allocation5 + $0x38c] sm:$0xff]
    %v217 = vld [vmem:[#allocation5 + $0x394] sm:$0xf]
    %v218 = vld [vmem:[#allocation5 + $0x398] sm:$0xff]
    %v219 = vld [vmem:[#allocation5 + $0x3a0] sm:$0xff]
    %v220 = vld [vmem:[#allocation5 + $0x3a8] sm:$0xf]
    %v221 = vld [vmem:[#allocation5 + $0x3ac] sm:$0xff]
    %v222 = vld [vmem:[#allocation5 + $0x3b4] sm:$0xff]
    %v223 = vld [vmem:[#allocation5 + $0x3bc] sm:$0xf]
    %v224 = vld [vmem:[#allocation5 + $0x3c0] sm:$0xff]
    %v225 = vld [vmem:[#allocation5 + $0x3c8] sm:$0xff]
    %v226 = vld [vmem:[#allocation5 + $0x3d0] sm:$0xf]
    %v227 = vld [vmem:[#allocation5 + $0x3d4] sm:$0xff]
    %v228 = vld [vmem:[#allocation5 + $0x3dc] sm:$0xff]
    %v229 = vld [vmem:[#allocation5 + $0x3e4] sm:$0xf]
    %v230 = vld [vmem:[#allocation5 + $0x3e8] sm:$0xff]
    %v231 = vld [vmem:[#allocation5 + $0x3f0] sm:$0xff]
    %v232 = vld [vmem:[#allocation5 + $0x3f8] sm:$0xf]
    %v233 = vld [vmem:[#allocation5 + $0x3fc] sm:$0xff]
    %v234 = vld [vmem:[#allocation5 + $0x404] sm:$0xff]
    %v235 = vld [vmem:[#allocation5 + $0x40c] sm:$0xf]
    %v236 = vld [vmem:[#allocation5 + $0x410] sm:$0xff]
    %v237 = vld [vmem:[#allocation5 + $0x418] sm:$0xff]
    %v238 = vld [vmem:[#allocation5 + $0x420] sm:$0xf]
    %v239 = vld [vmem:[#allocation5 + $0x424] sm:$0xff]
    %v240 = vld [vmem:[#allocation5 + $0x42c] sm:$0xff]
    %v241 = vld [vmem:[#allocation5 + $0x434] sm:$0xf]
    %v242 = vld [vmem:[#allocation5 + $0x438] sm:$0xff]
    %v243 = vld [vmem:[#allocation5 + $0x440] sm:$0xff]
    %v244 = vld [vmem:[#allocation5 + $0x448] sm:$0xf]
    %v245 = vld [vmem:[#allocation5 + $0x44c] sm:$0xff]
    %v246 = vld [vmem:[#allocation5 + $0x454] sm:$0xff]
    %v247 = vld [vmem:[#allocation5 + $0x45c] sm:$0xf]
    %v248 = vld [vmem:[#allocation5 + $0x460] sm:$0xff]
    %v249 = vld [vmem:[#allocation5 + $0x468] sm:$0xff]
    %v250 = vld [vmem:[#allocation5 + $0x470] sm:$0xf]
    %v251 = vld [vmem:[#allocation5 + $0x474] sm:$0xff]
    %v252 = vld [vmem:[#allocation5 + $0x47c] sm:$0xff]
    %v253 = vld [vmem:[#allocation5 + $0x484] sm:$0xf]
    %v254 = vld [vmem:[#allocation5 + $0x488] sm:$0xff]
    %v255 = vld [vmem:[#allocation5 + $0x490] sm:$0xff]
    %v256 = vld [vmem:[#allocation5 + $0x498] sm:$0xf]
    %v257 = vld [vmem:[#allocation5 + $0x49c] sm:$0xff]
    %v258 = vld [vmem:[#allocation5 + $0x4a4] sm:$0xff]
    %v259 = vld [vmem:[#allocation5 + $0x4ac] sm:$0xf]
    %v260 = vld [vmem:[#allocation5 + $0x4b0] sm:$0xff]
    %v261 = vld [vmem:[#allocation5 + $0x4b8] sm:$0xff]
    %v262 = vld [vmem:[#allocation5 + $0x4c0] sm:$0xf]
    %v263 = vld [vmem:[#allocation5 + $0x4c4] sm:$0xff]
    %v264 = vld [vmem:[#allocation5 + $0x4cc] sm:$0xff]
    %v265 = vld [vmem:[#allocation5 + $0x4d4] sm:$0xf]
    %v266 = vld [vmem:[#allocation5 + $0x4d8] sm:$0xff]
    %v267 = vld [vmem:[#allocation5 + $0x4e0] sm:$0xff]
    %v268 = vld [vmem:[#allocation5 + $0x4e8] sm:$0xf]
    %v269 = vld [vmem:[#allocation5 + $0x4ec] sm:$0xff]
    %v270 = vld [vmem:[#allocation5 + $0x4f4] sm:$0xff]
    %v271 = vld [vmem:[#allocation5 + $0x4fc] sm:$0xf]
    %v272 = vld [vmem:[#allocation5 + $0x500] sm:$0xff]
    %v273 = vld [vmem:[#allocation5 + $0x508] sm:$0xff]
    %v274 = vld [vmem:[#allocation5 + $0x510] sm:$0xf]
    %v275 = vld [vmem:[#allocation5 + $0x514] sm:$0xff]
    %v276 = vld [vmem:[#allocation5 + $0x51c] sm:$0xff]
    %v277 = vld [vmem:[#allocation5 + $0x524] sm:$0xf]
    %v278 = vld [vmem:[#allocation5 + $0x528] sm:$0xff]
    %v279 = vld [vmem:[#allocation5 + $0x530] sm:$0xff]
    %v280 = vld [vmem:[#allocation5 + $0x538] sm:$0xf]
    %v281 = vld [vmem:[#allocation5 + $0x53c] sm:$0xff]
    %v282 = vld [vmem:[#allocation5 + $0x544] sm:$0xff]
    %v283 = vld [vmem:[#allocation5 + $0x54c] sm:$0xf]
    %v284 = vld [vmem:[#allocation5 + $0x550] sm:$0xff]
    %v285 = vld [vmem:[#allocation5 + $0x558] sm:$0xff]
    %v286 = vld [vmem:[#allocation5 + $0x560] sm:$0xf]
    %v287 = vld [vmem:[#allocation5 + $0x564] sm:$0xff]
    %v288 = vld [vmem:[#allocation5 + $0x56c] sm:$0xff]
    %v289 = vld [vmem:[#allocation5 + $0x574] sm:$0xf]
    %v290 = vld [vmem:[#allocation5 + $0x578] sm:$0xff]
    %v291 = vld [vmem:[#allocation5 + $0x580] sm:$0xff]
    %v292 = vld [vmem:[#allocation5 + $0x588] sm:$0xf]
    %v293 = vld [vmem:[#allocation5 + $0x58c] sm:$0xff]
    %v294 = vld [vmem:[#allocation5 + $0x594] sm:$0xff]
    %v295 = vld [vmem:[#allocation5 + $0x59c] sm:$0xf]
    %v296 = vld [vmem:[#allocation5 + $0x5a0] sm:$0xff]
    %v297 = vld [vmem:[#allocation5 + $0x5a8] sm:$0xff]
    %v298 = vld [vmem:[#allocation5 + $0x5b0] sm:$0xf]
    %v299 = vld [vmem:[#allocation5 + $0x5b4] sm:$0xff]
    %v300 = vld [vmem:[#allocation5 + $0x5bc] sm:$0xff]
    %v301 = vld [vmem:[#allocation5 + $0x5c4] sm:$0xf]
    %v302 = vld [vmem:[#allocation5 + $0x5c8] sm:$0xff]
    %v303 = vld [vmem:[#allocation5 + $0x5d0] sm:$0xff]
    %v304 = vld [vmem:[#allocation5 + $0x5d8] sm:$0xf]
    %v305 = vld [vmem:[#allocation5 + $0x5dc] sm:$0xff]
    %v306 = vld [vmem:[#allocation5 + $0x5e4] sm:$0xff]
    %v307 = vld [vmem:[#allocation5 + $0x5ec] sm:$0xf]
    %v308 = vld [vmem:[#allocation5 + $0x5f0] sm:$0xff]
    %v309 = vld [vmem:[#allocation5 + $0x5f8] sm:$0xff]
    %v310 = vld [vmem:[#allocation5 + $0x600] sm:$0xf]
    %v311 = vld [vmem:[#allocation5 + $0x604] sm:$0xff]
    %v312 = vld [vmem:[#allocation5 + $0x60c] sm:$0xff]
    %v313 = vld [vmem:[#allocation5 + $0x614] sm:$0xf]
    %v314 = vld [vmem:[#allocation5 + $0x618] sm:$0xff]
    %v315 = vld [vmem:[#allocation5 + $0x620] sm:$0xff]
    %v316 = vld [vmem:[#allocation5 + $0x628] sm:$0xf]
    %v317 = vld [vmem:[#allocation5 + $0x62c] sm:$0xff]
    %v318 = vld [vmem:[#allocation5 + $0x634] sm:$0xff]
    %v319 = vld [vmem:[#allocation5 + $0x63c] sm:$0xf]
    %v320 = vld [vmem:[#allocation5 + $0x640] sm:$0xff]
    %v321 = vld [vmem:[#allocation5 + $0x648] sm:$0xff]
    %v322 = vld [vmem:[#allocation5 + $0x650] sm:$0xf]
    %v323 = vld [vmem:[#allocation5 + $0x654] sm:$0xff]
    %v324 = vld [vmem:[#allocation5 + $0x65c] sm:$0xff]
    %v325 = vld [vmem:[#allocation5 + $0x664] sm:$0xf]
    %v326 = vld [vmem:[#allocation5 + $0x668] sm:$0xff]
    %v327 = vld [vmem:[#allocation5 + $0x670] sm:$0xff]
    %v328 = vld [vmem:[#allocation5 + $0x678] sm:$0xf]
    %v329 = vld [vmem:[#allocation5 + $0x67c] sm:$0xff]
    %v330 = vld [vmem:[#allocation5 + $0x684] sm:$0xff]
    %v331 = vld [vmem:[#allocation5 + $0x68c] sm:$0xf]
    %v332 = vld [vmem:[#allocation5 + $0x690] sm:$0xff]
    %v333 = vld [vmem:[#allocation5 + $0x698] sm:$0xff]
    %v334 = vld [vmem:[#allocation5 + $0x6a0] sm:$0xf]
    %v335 = vld [vmem:[#allocation5 + $0x6a4] sm:$0xff]
    %v336 = vld [vmem:[#allocation5 + $0x6ac] sm:$0xff]
    %v337 = vld [vmem:[#allocation5 + $0x6b4] sm:$0xf]
    %v338 = vld [vmem:[#allocation5 + $0x6b8] sm:$0xff]
    %v339 = vld [vmem:[#allocation5 + $0x6c0] sm:$0xff]
    %v340 = vld [vmem:[#allocation5 + $0x6c8] sm:$0xf]
    %v341 = vld [vmem:[#allocation5 + $0x6cc] sm:$0xff]
    %v342 = vld [vmem:[#allocation5 + $0x6d4] sm:$0xff]
    %v343 = vld [vmem:[#allocation5 + $0x6dc] sm:$0xf]
    %v344 = vld [vmem:[#allocation5 + $0x6e0] sm:$0xff]
    %v345 = vld [vmem:[#allocation5 + $0x6e8] sm:$0xff]
    %v346 = vld [vmem:[#allocation5 + $0x6f0] sm:$0xf]
    %v347 = vld [vmem:[#allocation5 + $0x6f4] sm:$0xff]
    %v348 = vld [vmem:[#allocation5 + $0x6fc] sm:$0xff]
    %v349 = vld [vmem:[#allocation5 + $0x704] sm:$0xf]
    %v350 = vld [vmem:[#allocation5 + $0x708] sm:$0xff]
    %v351 = vld [vmem:[#allocation5 + $0x710] sm:$0xff]
    %v352 = vld [vmem:[#allocation5 + $0x718] sm:$0xf]
    %v353 = vld [vmem:[#allocation5 + $0x71c] sm:$0xff]
    %v354 = vld [vmem:[#allocation5 + $0x724] sm:$0xff]
    %v355 = vld [vmem:[#allocation5 + $0x72c] sm:$0xf]
    %v356 = vld [vmem:[#allocation5 + $0x730] sm:$0xff]
    %v357 = vld [vmem:[#allocation5 + $0x738] sm:$0xff]
    %v358 = vld [vmem:[#allocation5 + $0x740] sm:$0xf]
    %v359 = vld [vmem:[#allocation5 + $0x744] sm:$0xff]
    %v360 = vld [vmem:[#allocation5 + $0x74c] sm:$0xff]
    %v361 = vld [vmem:[#allocation5 + $0x754] sm:$0xf]
    %v362 = vld [vmem:[#allocation5 + $0x758] sm:$0xff]
    %v363 = vld [vmem:[#allocation5 + $0x760] sm:$0xff]
    %v364 = vld [vmem:[#allocation5 + $0x768] sm:$0xf]
    %v365 = vld [vmem:[#allocation5 + $0x76c] sm:$0xff]
    %v366 = vld [vmem:[#allocation5 + $0x774] sm:$0xff]
    %v367 = vld [vmem:[#allocation5 + $0x77c] sm:$0xf]
    %v368 = vld [vmem:[#allocation5 + $0x780] sm:$0xff]
    %v369 = vld [vmem:[#allocation5 + $0x788] sm:$0xff]
    %v370 = vld [vmem:[#allocation5 + $0x790] sm:$0xf]
    %v371 = vld [vmem:[#allocation5 + $0x794] sm:$0xff]
    %v372 = vld [vmem:[#allocation5 + $0x79c] sm:$0xff]
    %v373 = vld [vmem:[#allocation5 + $0x7a4] sm:$0xf]
    %v374 = vld [vmem:[#allocation5 + $0x7a8] sm:$0xff]
    %v375 = vld [vmem:[#allocation5 + $0x7b0] sm:$0xff]
    %v376 = vld [vmem:[#allocation5 + $0x7b8] sm:$0xf]
    %v377 = vld [vmem:[#allocation5 + $0x7bc] sm:$0xff]
    %v378 = vld [vmem:[#allocation5 + $0x7c4] sm:$0xff]
    %v379 = vld [vmem:[#allocation5 + $0x7cc] sm:$0xf]
    %v380 = vld [vmem:[#allocation5 + $0x7d0] sm:$0xff]
    %v381 = vld [vmem:[#allocation5 + $0x7d8] sm:$0xff]
    %v382 = vld [vmem:[#allocation5 + $0x7e0] sm:$0xf]
    %v383 = vld [vmem:[#allocation5 + $0x7e4] sm:$0xff]
    %v384 = vld [vmem:[#allocation5 + $0x7ec] sm:$0xff]
    %v385 = vld [vmem:[#allocation5 + $0x7f4] sm:$0xf]
    %v386 = vld [vmem:[#allocation5 + $0x7f8] sm:$0xff]
    %v387 = vld [vmem:[#allocation5 + $0x800] sm:$0xff]
    %v388 = vld [vmem:[#allocation5 + $0x808] sm:$0xf]
    %v389 = vld [vmem:[#allocation5 + $0x80c] sm:$0xff]
    %v390 = vld [vmem:[#allocation5 + $0x814] sm:$0xff]
    %v391 = vld [vmem:[#allocation5 + $0x81c] sm:$0xf]
    %v392 = vld [vmem:[#allocation5 + $0x820] sm:$0xff]
    %v393 = vld [vmem:[#allocation5 + $0x828] sm:$0xff]
    %v394 = vld [vmem:[#allocation5 + $0x830] sm:$0xf]
    %v395 = vld [vmem:[#allocation5 + $0x834] sm:$0xff]
    %v396 = vld [vmem:[#allocation5 + $0x83c] sm:$0xff]
    %v397 = vld [vmem:[#allocation5 + $0x844] sm:$0xf]
    %v398 = vld [vmem:[#allocation5 + $0x848] sm:$0xff]
    %v399 = vld [vmem:[#allocation5 + $0x850] sm:$0xff]
    %v400 = vld [vmem:[#allocation5 + $0x858] sm:$0xf]
    %v401 = vld [vmem:[#allocation5 + $0x85c] sm:$0xff]
    %v402 = vld [vmem:[#allocation5 + $0x864] sm:$0xff]
    %v403 = vld [vmem:[#allocation5 + $0x86c] sm:$0xf]
    %v404 = vld [vmem:[#allocation5 + $0x870] sm:$0xff]
    %v405 = vld [vmem:[#allocation5 + $0x878] sm:$0xff]
    %v406 = vld [vmem:[#allocation5 + $0x880] sm:$0xf]
    %v407 = vld [vmem:[#allocation5 + $0x884] sm:$0xff]
    %v408 = vld [vmem:[#allocation5 + $0x88c] sm:$0xff]
    %v409 = vld [vmem:[#allocation5 + $0x894] sm:$0xf]
    %v410 = vld [vmem:[#allocation5 + $0x898] sm:$0xff]
    %v411 = vld [vmem:[#allocation5 + $0x8a0] sm:$0xff]
    %v412 = vld [vmem:[#allocation5 + $0x8a8] sm:$0xf]
    %v413 = vld [vmem:[#allocation5 + $0x8ac] sm:$0xff]
    %v414 = vld [vmem:[#allocation5 + $0x8b4] sm:$0xff]
    %v415 = vld [vmem:[#allocation5 + $0x8bc] sm:$0xf]
    %v416 = vld [vmem:[#allocation5 + $0x8c0] sm:$0xff]
    %v417 = vld [vmem:[#allocation5 + $0x8c8] sm:$0xff]
    %v418 = vld [vmem:[#allocation5 + $0x8d0] sm:$0xf]
    %v419 = vld [vmem:[#allocation5 + $0x8d4] sm:$0xff]
    %v420 = vld [vmem:[#allocation5 + $0x8dc] sm:$0xff]
    %v421 = vld [vmem:[#allocation5 + $0x8e4] sm:$0xf]
    %v422 = vld [vmem:[#allocation5 + $0x8e8] sm:$0xff]
    %v423 = vld [vmem:[#allocation5 + $0x8f0] sm:$0xff]
    %v424 = vld [vmem:[#allocation5 + $0x8f8] sm:$0xf]
    %v425 = vld [vmem:[#allocation5 + $0x8fc] sm:$0xff]
    %v426 = vld [vmem:[#allocation5 + $0x904] sm:$0xff]
    %v427 = vld [vmem:[#allocation5 + $0x90c] sm:$0xf]
    %v428 = vld [vmem:[#allocation5 + $0x910] sm:$0xff]
    %v429 = vld [vmem:[#allocation5 + $0x918] sm:$0xff]
    %v430 = vld [vmem:[#allocation5 + $0x920] sm:$0xf]
    %v431 = vld [vmem:[#allocation5 + $0x924] sm:$0xff]
    %v432 = vld [vmem:[#allocation5 + $0x92c] sm:$0xff]
    %v433 = vld [vmem:[#allocation5 + $0x934] sm:$0xf]
    %v434 = vld [vmem:[#allocation5 + $0x938] sm:$0xff]
    %v435 = vld [vmem:[#allocation5 + $0x940] sm:$0xff]
    %v436 = vld [vmem:[#allocation5 + $0x948] sm:$0xf]
    %v437 = vld [vmem:[#allocation5 + $0x94c] sm:$0xff]
    %v438 = vld [vmem:[#allocation5 + $0x954] sm:$0xff]
    %v439 = vld [vmem:[#allocation5 + $0x95c] sm:$0xf]
    %v440 = vld [vmem:[#allocation5 + $0x960] sm:$0xff]
    %v441 = vld [vmem:[#allocation5 + $0x968] sm:$0xff]
    %v442 = vld [vmem:[#allocation5 + $0x970] sm:$0xf]
    %v443 = vld [vmem:[#allocation5 + $0x974] sm:$0xff]
    %v444 = vld [vmem:[#allocation5 + $0x97c] sm:$0xff]
    %v445 = vld [vmem:[#allocation5 + $0x984] sm:$0xf]
    %v446 = vld [vmem:[#allocation5 + $0x988] sm:$0xff]
    %v447 = vld [vmem:[#allocation5 + $0x990] sm:$0xff]
    %v448 = vld [vmem:[#allocation5 + $0x998] sm:$0xf]
    %v449 = vld [vmem:[#allocation5 + $0x99c] sm:$0xff]
    %v450 = vld [vmem:[#allocation5 + $0x9a4] sm:$0xff]
    %v451 = vld [vmem:[#allocation5 + $0x9ac] sm:$0xf]
    %v452 = vld [vmem:[#allocation5 + $0x9b0] sm:$0xff]
    %v453 = vld [vmem:[#allocation5 + $0x9b8] sm:$0xff]
    %v454 = vld [vmem:[#allocation5 + $0x9c0] sm:$0xf]
    %v455 = vld [vmem:[#allocation5 + $0x9c4] sm:$0xff]
    %v456 = vld [vmem:[#allocation5 + $0x9cc] sm:$0xff]
    %v457 = vld [vmem:[#allocation5 + $0x9d4] sm:$0xf]
    %v458 = vld [vmem:[#allocation5 + $0x9d8] sm:$0xff]
    %v459 = vld [vmem:[#allocation5 + $0x9e0] sm:$0xff]
    %v460 = vld [vmem:[#allocation5 + $0x9e8] sm:$0xf]
    %v461 = vld [vmem:[#allocation5 + $0x9ec] sm:$0xff]
    %v462 = vld [vmem:[#allocation5 + $0x9f4] sm:$0xff]
    %v463 = vld [vmem:[#allocation5 + $0x9fc] sm:$0xf]
    %v464 = vld [vmem:[#allocation5 + $0xa00] sm:$0xff]
    %v465 = vld [vmem:[#allocation5 + $0xa08] sm:$0xff]
    %v466 = vld [vmem:[#allocation5 + $0xa10] sm:$0xf]
    %v467 = vld [vmem:[#allocation5 + $0xa14] sm:$0xff]
    %v468 = vld [vmem:[#allocation5 + $0xa1c] sm:$0xff]
    %v469 = vld [vmem:[#allocation5 + $0xa24] sm:$0xf]
    %v470 = vld [vmem:[#allocation5 + $0xa28] sm:$0xff]
    %v471 = vld [vmem:[#allocation5 + $0xa30] sm:$0xff]
    %v472 = vld [vmem:[#allocation5 + $0xa38] sm:$0xf]
    %v473 = vld [vmem:[#allocation5 + $0xa3c] sm:$0xff]
    %v474 = vld [vmem:[#allocation5 + $0xa44] sm:$0xff]
    %v475 = vld [vmem:[#allocation5 + $0xa4c] sm:$0xf]
    %v476 = vld [vmem:[#allocation5 + $0xa50] sm:$0xff]
    %v477 = vld [vmem:[#allocation5 + $0xa58] sm:$0xff]
    %v478 = vld [vmem:[#allocation5 + $0xa60] sm:$0xf]
    %v479 = vld [vmem:[#allocation5 + $0xa64] sm:$0xff]
    %v480 = vld [vmem:[#allocation5 + $0xa6c] sm:$0xff]
    %v481 = vld [vmem:[#allocation5 + $0xa74] sm:$0xf]
    %v482 = vld [vmem:[#allocation5 + $0xa78] sm:$0xff]
    %v483 = vld [vmem:[#allocation5 + $0xa80] sm:$0xff]
    %v484 = vld [vmem:[#allocation5 + $0xa88] sm:$0xf]
    %v485 = vld [vmem:[#allocation5 + $0xa8c] sm:$0xff]
    %v486 = vld [vmem:[#allocation5 + $0xa94] sm:$0xff]
    %v487 = vld [vmem:[#allocation5 + $0xa9c] sm:$0xf]
    %v488 = vld [vmem:[#allocation5 + $0xaa0] sm:$0xff]
    %v489 = vld [vmem:[#allocation5 + $0xaa8] sm:$0xff]
    %v490 = vld [vmem:[#allocation5 + $0xab0] sm:$0xf]
    %v491 = vld [vmem:[#allocation5 + $0xab4] sm:$0xff]
    %v492 = vld [vmem:[#allocation5 + $0xabc] sm:$0xff]
    %v493 = vld [vmem:[#allocation5 + $0xac4] sm:$0xf]
    %v494 = vld [vmem:[#allocation5 + $0xac8] sm:$0xff]
    %v495 = vld [vmem:[#allocation5 + $0xad0] sm:$0xff]
    %v496 = vld [vmem:[#allocation5 + $0xad8] sm:$0xf]
    %v497 = vld [vmem:[#allocation5 + $0xadc] sm:$0xff]
    %v498 = vld [vmem:[#allocation5 + $0xae4] sm:$0xff]
    %v499 = vld [vmem:[#allocation5 + $0xaec] sm:$0xf]
    %v500 = vld [vmem:[#allocation5 + $0xaf0] sm:$0xff]
    %v501 = vld [vmem:[#allocation5 + $0xaf8] sm:$0xff]
    %v502 = vld [vmem:[#allocation5 + $0xb00] sm:$0xf]
    %v503 = vld [vmem:[#allocation5 + $0xb04] sm:$0xff]
    %v504 = vld [vmem:[#allocation5 + $0xb0c] sm:$0xff]
    %v505 = vld [vmem:[#allocation5 + $0xb14] sm:$0xf]
    %v506 = vld [vmem:[#allocation5 + $0xb18] sm:$0xff]
    %v507 = vld [vmem:[#allocation5 + $0xb20] sm:$0xff]
    %v508 = vld [vmem:[#allocation5 + $0xb28] sm:$0xf]
    %v509 = vld [vmem:[#allocation5 + $0xb2c] sm:$0xff]
    %v510 = vld [vmem:[#allocation5 + $0xb34] sm:$0xff]
    %v511 = vld [vmem:[#allocation5 + $0xb3c] sm:$0xf]
    %v512 = vld [vmem:[#allocation5 + $0xb40] sm:$0xff]
    %v513 = vld [vmem:[#allocation5 + $0xb48] sm:$0xff]
    %v514 = vld [vmem:[#allocation5 + $0xb50] sm:$0xf]
    %v515 = vld [vmem:[#allocation5 + $0xb54] sm:$0xff]
    %v516 = vld [vmem:[#allocation5 + $0xb5c] sm:$0xff]
    %v517 = vld [vmem:[#allocation5 + $0xb64] sm:$0xf]
    %v518 = vld [vmem:[#allocation5 + $0xb68] sm:$0xff]
    %v519 = vld [vmem:[#allocation5 + $0xb70] sm:$0xff]
    %v520 = vld [vmem:[#allocation5 + $0xb78] sm:$0xf]
    %v521 = vld [vmem:[#allocation5 + $0xb7c] sm:$0xff]
    %v522 = vld [vmem:[#allocation5 + $0xb84] sm:$0xff]
    %v523 = vld [vmem:[#allocation5 + $0xb8c] sm:$0xf]
    %v524 = vld [vmem:[#allocation5 + $0xb90] sm:$0xff]
    %v525 = vld [vmem:[#allocation5 + $0xb98] sm:$0xff]
    %v526 = vld [vmem:[#allocation5 + $0xba0] sm:$0xf]
    %v527 = vld [vmem:[#allocation5 + $0xba4] sm:$0xff]
    %v528 = vld [vmem:[#allocation5 + $0xbac] sm:$0xff]
    %v529 = vld [vmem:[#allocation5 + $0xbb4] sm:$0xf]
    %v530 = vld [vmem:[#allocation5 + $0xbb8] sm:$0xff]
    %v531 = vld [vmem:[#allocation5 + $0xbc0] sm:$0xff]
    %v532 = vld [vmem:[#allocation5 + $0xbc8] sm:$0xf]
    %v533 = vld [vmem:[#allocation5 + $0xbcc] sm:$0xff]
    %v534 = vld [vmem:[#allocation5 + $0xbd4] sm:$0xff]
    %v535 = vld [vmem:[#allocation5 + $0xbdc] sm:$0xf]
    %v536 = vld [vmem:[#allocation5 + $0xbe0] sm:$0xff]
    %v537 = vld [vmem:[#allocation5 + $0xbe8] sm:$0xff]
    %v538 = vld [vmem:[#allocation5 + $0xbf0] sm:$0xf]
    %v539 = vld [vmem:[#allocation5 + $0xbf4] sm:$0xff]
    %v540 = vld [vmem:[#allocation5 + $0xbfc] sm:$0xff]
    %v541 = vld [vmem:[#allocation5 + $0xc04] sm:$0xf]
    %v542 = vld [vmem:[#allocation5 + $0xc08] sm:$0xff]
    %v543 = vld [vmem:[#allocation5 + $0xc10] sm:$0xff]
    %v544 = vld [vmem:[#allocation5 + $0xc18] sm:$0xf]
    %v545 = vld [vmem:[#allocation5 + $0xc1c] sm:$0xff]
    %v546 = vld [vmem:[#allocation5 + $0xc24] sm:$0xff]
    %v547 = vld [vmem:[#allocation5 + $0xc2c] sm:$0xf]
    %v548 = vld [vmem:[#allocation5 + $0xc30] sm:$0xff]
    %v549 = vld [vmem:[#allocation5 + $0xc38] sm:$0xff]
    %v550 = vld [vmem:[#allocation5 + $0xc40] sm:$0xf]
    %v551 = vld [vmem:[#allocation5 + $0xc44] sm:$0xff]
    %v552 = vld [vmem:[#allocation5 + $0xc4c] sm:$0xff]
    %v553 = vld [vmem:[#allocation5 + $0xc54] sm:$0xf]
    %v554 = vld [vmem:[#allocation5 + $0xc58] sm:$0xff]
    %v555 = vld [vmem:[#allocation5 + $0xc60] sm:$0xff]
    %v556 = vld [vmem:[#allocation5 + $0xc68] sm:$0xf]
    %v557 = vld [vmem:[#allocation5 + $0xc6c] sm:$0xff]
    %v558 = vld [vmem:[#allocation5 + $0xc74] sm:$0xff]
    %v559 = vld [vmem:[#allocation5 + $0xc7c] sm:$0xf]
    %v560 = vld [vmem:[#allocation5 + $0xc80] sm:$0xff]
    %v561 = vld [vmem:[#allocation5 + $0xc88] sm:$0xff]
    %v562 = vld [vmem:[#allocation5 + $0xc90] sm:$0xf]
    %v563 = vld [vmem:[#allocation5 + $0xc94] sm:$0xff]
    %v564 = vld [vmem:[#allocation5 + $0xc9c] sm:$0xff]
    %v565 = vld [vmem:[#allocation5 + $0xca4] sm:$0xf]
    %v566 = vld [vmem:[#allocation5 + $0xca8] sm:$0xff]
    %v567 = vld [vmem:[#allocation5 + $0xcb0] sm:$0xff]
    %v568 = vld [vmem:[#allocation5 + $0xcb8] sm:$0xf]
    %v569 = vld [vmem:[#allocation5 + $0xcbc] sm:$0xff]
    %v570 = vld [vmem:[#allocation5 + $0xcc4] sm:$0xff]
    %v571 = vld [vmem:[#allocation5 + $0xccc] sm:$0xf]
    %v572 = vld [vmem:[#allocation5 + $0xcd0] sm:$0xff]
    %v573 = vld [vmem:[#allocation5 + $0xcd8] sm:$0xff]
    %v574 = vld [vmem:[#allocation5 + $0xce0] sm:$0xf]
    %v575 = vld [vmem:[#allocation5 + $0xce4] sm:$0xff]
    %v576 = vld [vmem:[#allocation5 + $0xcec] sm:$0xff]
    %v577 = vld [vmem:[#allocation5 + $0xcf4] sm:$0xf]
    %v578 = vld [vmem:[#allocation5 + $0xcf8] sm:$0xff]
    %v579 = vld [vmem:[#allocation5 + $0xd00] sm:$0xff]
    %v580 = vld [vmem:[#allocation5 + $0xd08] sm:$0xf]
    %v581 = vld [vmem:[#allocation5 + $0xd0c] sm:$0xff]
    %v582 = vld [vmem:[#allocation5 + $0xd14] sm:$0xff]
    %v583 = vld [vmem:[#allocation5 + $0xd1c] sm:$0xf]
    %v584 = vld [vmem:[#allocation5 + $0xd20] sm:$0xff]
    %v585 = vld [vmem:[#allocation5 + $0xd28] sm:$0xff]
    %v586 = vld [vmem:[#allocation5 + $0xd30] sm:$0xf]
    %v587 = vld [vmem:[#allocation5 + $0xd34] sm:$0xff]
    %v588 = vld [vmem:[#allocation5 + $0xd3c] sm:$0xff]
    %v589 = vld [vmem:[#allocation5 + $0xd44] sm:$0xf]
    %v590 = vld [vmem:[#allocation5 + $0xd48] sm:$0xff]
    %v591 = vld [vmem:[#allocation5 + $0xd50] sm:$0xff]
    %v592 = vld [vmem:[#allocation5 + $0xd58] sm:$0xf]
    %v593 = vld [vmem:[#allocation5 + $0xd5c] sm:$0xff]
    %v594 = vld [vmem:[#allocation5 + $0xd64] sm:$0xff]
    %v595 = vld [vmem:[#allocation5 + $0xd6c] sm:$0xf]
    %v596 = vld [vmem:[#allocation5 + $0xd70] sm:$0xff]
    %v597 = vld [vmem:[#allocation5 + $0xd78] sm:$0xff]
    %v598 = vld [vmem:[#allocation5 + $0xd80] sm:$0xf]
    %v599 = vld [vmem:[#allocation5 + $0xd84] sm:$0xff]
    %v600 = vld [vmem:[#allocation5 + $0xd8c] sm:$0xff]
    %v601 = vld [vmem:[#allocation5 + $0xd94] sm:$0xf]
    %v602 = vld [vmem:[#allocation5 + $0xd98] sm:$0xff]
    %v603 = vld [vmem:[#allocation5 + $0xda0] sm:$0xff]
    %v604 = vld [vmem:[#allocation5 + $0xda8] sm:$0xf]
    %v605 = vld [vmem:[#allocation5 + $0xdac] sm:$0xff]
    %v606 = vld [vmem:[#allocation5 + $0xdb4] sm:$0xff]
    %v607 = vld [vmem:[#allocation5 + $0xdbc] sm:$0xf]
    %v608 = vld [vmem:[#allocation5 + $0xdc0] sm:$0xff]
    %v609 = vld [vmem:[#allocation5 + $0xdc8] sm:$0xff]
    %v610 = vld [vmem:[#allocation5 + $0xdd0] sm:$0xf]
    %v611 = vld [vmem:[#allocation5 + $0xdd4] sm:$0xff]
    %v612 = vld [vmem:[#allocation5 + $0xddc] sm:$0xff]
    %v613 = vld [vmem:[#allocation5 + $0xde4] sm:$0xf]
    %v614 = vld [vmem:[#allocation5 + $0xde8] sm:$0xff]
    %v615 = vld [vmem:[#allocation5 + $0xdf0] sm:$0xff]
    %v616 = vld [vmem:[#allocation5 + $0xdf8] sm:$0xf]
    %v617 = vld [vmem:[#allocation5 + $0xdfc] sm:$0xff]
    %v618 = vld [vmem:[#allocation5 + $0xe04] sm:$0xff]
    %v619 = vld [vmem:[#allocation5 + $0xe0c] sm:$0xf]
    %v620 = vld [vmem:[#allocation5 + $0xe10] sm:$0xff]
    %v621 = vld [vmem:[#allocation5 + $0xe18] sm:$0xff]
    %v622 = vld [vmem:[#allocation5 + $0xe20] sm:$0xf]
    %v623 = vld [vmem:[#allocation5 + $0xe24] sm:$0xff]
    %v624 = vld [vmem:[#allocation5 + $0xe2c] sm:$0xff]
    %v625 = vld [vmem:[#allocation5 + $0xe34] sm:$0xf]
    %v626 = vld [vmem:[#allocation5 + $0xe38] sm:$0xff]
    %v627 = vld [vmem:[#allocation5 + $0xe40] sm:$0xff]
    %v628 = vld [vmem:[#allocation5 + $0xe48] sm:$0xf]
    %v629 = vld [vmem:[#allocation5 + $0xe4c] sm:$0xff]
    %v630 = vld [vmem:[#allocation5 + $0xe54] sm:$0xff]
    %v631 = vld [vmem:[#allocation5 + $0xe5c] sm:$0xf]
    %v632 = vld [vmem:[#allocation5 + $0xe60] sm:$0xff]
    %v633 = vld [vmem:[#allocation5 + $0xe68] sm:$0xff]
    %v634 = vld [vmem:[#allocation5 + $0xe70] sm:$0xf]
    %v635 = vld [vmem:[#allocation5 + $0xe74] sm:$0xff]
    %v636 = vld [vmem:[#allocation5 + $0xe7c] sm:$0xff]
    %v637 = vld [vmem:[#allocation5 + $0xe84] sm:$0xf]
    %v638 = vld [vmem:[#allocation5 + $0xe88] sm:$0xff]
    %v639 = vld [vmem:[#allocation5 + $0xe90] sm:$0xff]
    %v640 = vld [vmem:[#allocation5 + $0xe98] sm:$0xf]
    %v641 = vld [vmem:[#allocation5 + $0xe9c] sm:$0xff]
    %v642 = vld [vmem:[#allocation5 + $0xea4] sm:$0xff]
    %v643 = vld [vmem:[#allocation5 + $0xeac] sm:$0xf]
    %v644 = vld [vmem:[#allocation5 + $0xeb0] sm:$0xff]
    %v645 = vld [vmem:[#allocation5 + $0xeb8] sm:$0xff]
    %v646 = vld [vmem:[#allocation5 + $0xec0] sm:$0xf]
    %v647 = vld [vmem:[#allocation5 + $0xec4] sm:$0xff]
    %v648 = vld [vmem:[#allocation5 + $0xecc] sm:$0xff]
    %v649 = vld [vmem:[#allocation5 + $0xed4] sm:$0xf]
    %v650 = vld [vmem:[#allocation5 + $0xed8] sm:$0xff]
    %v651 = vld [vmem:[#allocation5 + $0xee0] sm:$0xff]
    %v652 = vld [vmem:[#allocation5 + $0xee8] sm:$0xf]
    %v653 = vld [vmem:[#allocation5 + $0xeec] sm:$0xff]
    %v654 = vld [vmem:[#allocation5 + $0xef4] sm:$0xff]
    %v655 = vld [vmem:[#allocation5 + $0xefc] sm:$0xf]
    %v656 = vld [vmem:[#allocation5 + $0xf00] sm:$0xff]
    %v657 = vld [vmem:[#allocation5 + $0xf08] sm:$0xff]
    %v658 = vld [vmem:[#allocation5 + $0xf10] sm:$0xf]
    %v659 = vld [vmem:[#allocation5 + $0xf14] sm:$0xff]
    %v660 = vld [vmem:[#allocation5 + $0xf1c] sm:$0xff]
    %v661 = vld [vmem:[#allocation5 + $0xf24] sm:$0xf]
    %v662 = vld [vmem:[#allocation5 + $0xf28] sm:$0xff]
    %v663 = vld [vmem:[#allocation5 + $0xf30] sm:$0xff]
    %v664 = vld [vmem:[#allocation5 + $0xf38] sm:$0xf]
    %v665 = vld [vmem:[#allocation5 + $0xf3c] sm:$0xff]
    %v666 = vld [vmem:[#allocation5 + $0xf44] sm:$0xff]
    %v667 = vld [vmem:[#allocation5 + $0xf4c] sm:$0xf]
    %v668 = vld [vmem:[#allocation5 + $0xf50] sm:$0xff]
    %v669 = vld [vmem:[#allocation5 + $0xf58] sm:$0xff]
    %v670 = vld [vmem:[#allocation5 + $0xf60] sm:$0xf]
    %v671 = vld [vmem:[#allocation5 + $0xf64] sm:$0xff]
    %v672 = vld [vmem:[#allocation5 + $0xf6c] sm:$0xff]
    %v673 = vld [vmem:[#allocation5 + $0xf74] sm:$0xf]
    %v674 = vld [vmem:[#allocation5 + $0xf78] sm:$0xff]
    %v675 = vld [vmem:[#allocation5 + $0xf80] sm:$0xff]
    %v676 = vld [vmem:[#allocation5 + $0xf88] sm:$0xf]
    %v677 = vld [vmem:[#allocation5 + $0xf8c] sm:$0xff]
    %v678 = vld [vmem:[#allocation5 + $0xf94] sm:$0xff]
    %v679 = vld [vmem:[#allocation5 + $0xf9c] sm:$0xf]
    %v680 = vld [vmem:[#allocation5 + $0xfa0] sm:$0xff]
    %v681 = vld [vmem:[#allocation5 + $0xfa8] sm:$0xff]
    %v682 = vld [vmem:[#allocation5 + $0xfb0] sm:$0xf]
    %v683 = vld [vmem:[#allocation5 + $0xfb4] sm:$0xff]
    %v684 = vld [vmem:[#allocation5 + $0xfbc] sm:$0xff]
    %v685 = vld [vmem:[#allocation5 + $0xfc4] sm:$0xf]
    %v686 = vld [vmem:[#allocation5 + $0xfc8] sm:$0xff]
    %v687 = vld [vmem:[#allocation5 + $0xfd0] sm:$0xff]
    %v688 = vld [vmem:[#allocation5 + $0xfd8] sm:$0xf]
    %v689 = vld [vmem:[#allocation5 + $0xfdc] sm:$0xff]
    %v690 = vld [vmem:[#allocation5 + $0xfe4] sm:$0xff]
    %v691 = vld [vmem:[#allocation5 + $0xfec] sm:$0xf]
    %v692 = vld [vmem:[#allocation5 + $0xff0] sm:$0xff]
    %v693 = vld [vmem:[#allocation5 + $0xff8] sm:$0xff]
    %v694 = vld [vmem:[#allocation5 + $0x1000] sm:$0xf]
    %v695 = vld [vmem:[#allocation5 + $0x1004] sm:$0xff]
    %v696 = vld [vmem:[#allocation5 + $0x100c] sm:$0xff]
    %v697 = vld [vmem:[#allocation5 + $0x1014] sm:$0xf]
    %v698 = vld [vmem:[#allocation5 + $0x1018] sm:$0xff]
    %v699 = vld [vmem:[#allocation5 + $0x1020] sm:$0xff]
    %v700 = vld [vmem:[#allocation5 + $0x1028] sm:$0xf]
    %v701 = vld [vmem:[#allocation5 + $0x102c] sm:$0xff]
    %v702 = vld [vmem:[#allocation5 + $0x1034] sm:$0xff]
    %v703 = vld [vmem:[#allocation5 + $0x103c] sm:$0xf]
    %v704 = vld [vmem:[#allocation5 + $0x1040] sm:$0xff]
    %v705 = vld [vmem:[#allocation5 + $0x1048] sm:$0xff]
    %v706 = vld [vmem:[#allocation5 + $0x1050] sm:$0xf]
    %v707 = vld [vmem:[#allocation5 + $0x1054] sm:$0xff]
    %v708 = vld [vmem:[#allocation5 + $0x105c] sm:$0xff]
    %v709 = vld [vmem:[#allocation5 + $0x1064] sm:$0xf]
    %v710 = vld [vmem:[#allocation5 + $0x1068] sm:$0xff]
    %v711 = vld [vmem:[#allocation5 + $0x1070] sm:$0xff]
    %v712 = vld [vmem:[#allocation5 + $0x1078] sm:$0xf]
    %v713 = vld [vmem:[#allocation5 + $0x107c] sm:$0xff]
    %v714 = vld [vmem:[#allocation5 + $0x1084] sm:$0xff]
    %v715 = vld [vmem:[#allocation5 + $0x108c] sm:$0xf]
    %v716 = vld [vmem:[#allocation5 + $0x1090] sm:$0xff]
    %v717 = vld [vmem:[#allocation5 + $0x1098] sm:$0xff]
    %v718 = vld [vmem:[#allocation5 + $0x10a0] sm:$0xf]
    %v719 = vld [vmem:[#allocation5 + $0x10a4] sm:$0xff]
    %v720 = vld [vmem:[#allocation5 + $0x10ac] sm:$0xff]
    %v721 = vld [vmem:[#allocation5 + $0x10b4] sm:$0xf]
    %v722 = vld [vmem:[#allocation5 + $0x10b8] sm:$0xff]
    %v723 = vld [vmem:[#allocation5 + $0x10c0] sm:$0xff]
    %v724 = vld [vmem:[#allocation5 + $0x10c8] sm:$0xf]
    %v725 = vld [vmem:[#allocation5 + $0x10cc] sm:$0xff]
    %v726 = vld [vmem:[#allocation5 + $0x10d4] sm:$0xff]
    %v727 = vld [vmem:[#allocation5 + $0x10dc] sm:$0xf]
    %v728 = vld [vmem:[#allocation5 + $0x10e0] sm:$0xff]
    %v729 = vld [vmem:[#allocation5 + $0x10e8] sm:$0xff]
    %v730 = vld [vmem:[#allocation5 + $0x10f0] sm:$0xf]
    %v731 = vld [vmem:[#allocation5 + $0x10f4] sm:$0xff]
    %v732 = vld [vmem:[#allocation5 + $0x10fc] sm:$0xff]
    %v733 = vld [vmem:[#allocation5 + $0x1104] sm:$0xf]
    %v734 = vld [vmem:[#allocation5 + $0x1108] sm:$0xff]
    %v735 = vld [vmem:[#allocation5 + $0x1110] sm:$0xff]
    %v736 = vld [vmem:[#allocation5 + $0x1118] sm:$0xf]
    %v737 = vld [vmem:[#allocation5 + $0x111c] sm:$0xff]
    %v738 = vld [vmem:[#allocation5 + $0x1124] sm:$0xff]
    %v739 = vld [vmem:[#allocation5 + $0x112c] sm:$0xf]
    %v740 = vld [vmem:[#allocation5 + $0x1130] sm:$0xff]
    %v741 = vld [vmem:[#allocation5 + $0x1138] sm:$0xff]
    %v742 = vld [vmem:[#allocation5 + $0x1140] sm:$0xf]
    %v743 = vld [vmem:[#allocation5 + $0x1144] sm:$0xff]
    %v744 = vld [vmem:[#allocation5 + $0x114c] sm:$0xff]
    %v745 = vld [vmem:[#allocation5 + $0x1154] sm:$0xf]
    %v746 = vld [vmem:[#allocation5 + $0x1158] sm:$0xff]
    %v747 = vld [vmem:[#allocation5 + $0x1160] sm:$0xff]
    %v748 = vld [vmem:[#allocation5 + $0x1168] sm:$0xf]
    %v749 = vld [vmem:[#allocation5 + $0x116c] sm:$0xff]
    %v750 = vld [vmem:[#allocation5 + $0x1174] sm:$0xff]
    %v751 = vld [vmem:[#allocation5 + $0x117c] sm:$0xf]
    %v752 = vld [vmem:[#allocation5 + $0x1180] sm:$0xff]
    %v753 = vld [vmem:[#allocation5 + $0x1188] sm:$0xff]
    %v754 = vld [vmem:[#allocation5 + $0x1190] sm:$0xf]
    %v755 = vld [vmem:[#allocation5 + $0x1194] sm:$0xff]
    %v756 = vld [vmem:[#allocation5 + $0x119c] sm:$0xff]
    %v757 = vld [vmem:[#allocation5 + $0x11a4] sm:$0xf]
    %v758 = vld [vmem:[#allocation5 + $0x11a8] sm:$0xff]
    %v759 = vld [vmem:[#allocation5 + $0x11b0] sm:$0xff]
    %v760 = vld [vmem:[#allocation5 + $0x11b8] sm:$0xf]
    %v761 = vld [vmem:[#allocation5 + $0x11bc] sm:$0xff]
    %v762 = vld [vmem:[#allocation5 + $0x11c4] sm:$0xff]
    %v763 = vld [vmem:[#allocation5 + $0x11cc] sm:$0xf]
    %v764 = vld [vmem:[#allocation5 + $0x11d0] sm:$0xff]
    %v765 = vld [vmem:[#allocation5 + $0x11d8] sm:$0xff]
    %v766 = vld [vmem:[#allocation5 + $0x11e0] sm:$0xf]
    %v767 = vld [vmem:[#allocation5 + $0x11e4] sm:$0xff]
    %v768 = vld [vmem:[#allocation5 + $0x11ec] sm:$0xff]
    %v769 = vld [vmem:[#allocation5 + $0x11f4] sm:$0xf]
    %v770 = vld [vmem:[#allocation5 + $0x11f8] sm:$0xff]
    %v771 = vld [vmem:[#allocation5 + $0x1200] sm:$0xff]
    %v772 = vld [vmem:[#allocation5 + $0x1208] sm:$0xf]
    %v773 = vld [vmem:[#allocation5 + $0x120c] sm:$0xff]
    %v774 = vld [vmem:[#allocation5 + $0x1214] sm:$0xff]
    %v775 = vld [vmem:[#allocation5 + $0x121c] sm:$0xf]
    %v776 = vld [vmem:[#allocation5 + $0x1220] sm:$0xff]
    %v777 = vld [vmem:[#allocation5 + $0x1228] sm:$0xff]
    %v778 = vld [vmem:[#allocation5 + $0x1230] sm:$0xf]
    %v779 = vld [vmem:[#allocation5 + $0x1234] sm:$0xff]
    %v780 = vld [vmem:[#allocation5 + $0x123c] sm:$0xff]
    %v781 = vld [vmem:[#allocation5 + $0x1244] sm:$0xf]
    %v782 = vld [vmem:[#allocation5 + $0x1248] sm:$0xff]
    %v783 = vld [vmem:[#allocation5 + $0x1250] sm:$0xff]
    %v784 = vld [vmem:[#allocation5 + $0x1258] sm:$0xf]
    %v785 = vld [vmem:[#allocation5 + $0x125c] sm:$0xff]
    %v786 = vld [vmem:[#allocation5 + $0x1264] sm:$0xff]
    %v787 = vld [vmem:[#allocation5 + $0x126c] sm:$0xf]
    %v788 = vld [vmem:[#allocation5 + $0x1270] sm:$0xff]
    %v789 = vld [vmem:[#allocation5 + $0x1278] sm:$0xff]
    %v790 = vld [vmem:[#allocation5 + $0x1280] sm:$0xf]
    %v791 = vld [vmem:[#allocation5 + $0x1284] sm:$0xff]
    %v792 = vld [vmem:[#allocation5 + $0x128c] sm:$0xff]
    %v793 = vld [vmem:[#allocation5 + $0x1294] sm:$0xf]
    %v794 = vld [vmem:[#allocation5 + $0x1298] sm:$0xff]
    %v795 = vld [vmem:[#allocation5 + $0x12a0] sm:$0xff]
    %v796 = vld [vmem:[#allocation5 + $0x12a8] sm:$0xf]
    %v797 = vld [vmem:[#allocation5 + $0x12ac] sm:$0xff]
    %v798 = vld [vmem:[#allocation5 + $0x12b4] sm:$0xff]
    %v799 = vld [vmem:[#allocation5 + $0x12bc] sm:$0xf]
    %v800 = vld [vmem:[#allocation5 + $0x12c0] sm:$0xff]
    %v801 = vld [vmem:[#allocation5 + $0x12c8] sm:$0xff]
    %v802 = vld [vmem:[#allocation5 + $0x12d0] sm:$0xf]
    %v803 = vld [vmem:[#allocation5 + $0x12d4] sm:$0xff]
    %v804 = vld [vmem:[#allocation5 + $0x12dc] sm:$0xff]
    %v805 = vld [vmem:[#allocation5 + $0x12e4] sm:$0xf]
    %v806 = vld [vmem:[#allocation5 + $0x12e8] sm:$0xff]
    %v807 = vld [vmem:[#allocation5 + $0x12f0] sm:$0xff]
    %v808 = vld [vmem:[#allocation5 + $0x12f8] sm:$0xf]
    %v809 = vld [vmem:[#allocation5 + $0x12fc] sm:$0xff]
    %v810 = vld [vmem:[#allocation5 + $0x1304] sm:$0xff]
    %v811 = vld [vmem:[#allocation5 + $0x130c] sm:$0xf]
    %v812 = vld [vmem:[#allocation5 + $0x1310] sm:$0xff]
    %v813 = vld [vmem:[#allocation5 + $0x1318] sm:$0xff]
    %v814 = vld [vmem:[#allocation5 + $0x1320] sm:$0xf]
    %v815 = vld [vmem:[#allocation5 + $0x1324] sm:$0xff]
    %v816 = vld [vmem:[#allocation5 + $0x132c] sm:$0xff]
    %v817 = vld [vmem:[#allocation5 + $0x1334] sm:$0xf]
    %v818 = vld [vmem:[#allocation5 + $0x1338] sm:$0xff]
    %v819 = vld [vmem:[#allocation5 + $0x1340] sm:$0xff]
    %v820 = vld [vmem:[#allocation5 + $0x1348] sm:$0xf]
    %v821 = vld [vmem:[#allocation5 + $0x134c] sm:$0xff]
    %v822 = vld [vmem:[#allocation5 + $0x1354] sm:$0xff]
    %v823 = vld [vmem:[#allocation5 + $0x135c] sm:$0xf]
    %v824 = vld [vmem:[#allocation5 + $0x1360] sm:$0xff]
    %v825 = vld [vmem:[#allocation5 + $0x1368] sm:$0xff]
    %v826 = vld [vmem:[#allocation5 + $0x1370] sm:$0xf]
    %v827 = vld [vmem:[#allocation5 + $0x1374] sm:$0xff]
    %v828 = vld [vmem:[#allocation5 + $0x137c] sm:$0xff]
    %v829 = vld [vmem:[#allocation5 + $0x1384] sm:$0xf]
    %v830 = vld [vmem:[#allocation5 + $0x1388] sm:$0xff]
    %v831 = vld [vmem:[#allocation5 + $0x1390] sm:$0xff]
    %v832 = vld [vmem:[#allocation5 + $0x1398] sm:$0xf]
    %v833 = vld [vmem:[#allocation5 + $0x139c] sm:$0xff]
    %v834 = vld [vmem:[#allocation5 + $0x13a4] sm:$0xff]
    %v835 = vld [vmem:[#allocation5 + $0x13ac] sm:$0xf]
    %v836 = vld [vmem:[#allocation5 + $0x13b0] sm:$0xff]
    %v837 = vld [vmem:[#allocation5 + $0x13b8] sm:$0xff]
    %v838 = vld [vmem:[#allocation5 + $0x13c0] sm:$0xf]
    %v839 = vld [vmem:[#allocation5 + $0x13c4] sm:$0xff]
    %v840 = vld [vmem:[#allocation5 + $0x13cc] sm:$0xff]
    %v841 = vld [vmem:[#allocation5 + $0x13d4] sm:$0xf]
    %v842 = vld [vmem:[#allocation5 + $0x13d8] sm:$0xff]
    %v843 = vld [vmem:[#allocation5 + $0x13e0] sm:$0xff]
    %v844 = vld [vmem:[#allocation5 + $0x13e8] sm:$0xf]
    %v845 = vld [vmem:[#allocation5 + $0x13ec] sm:$0xff]
    %v846 = vld [vmem:[#allocation5 + $0x13f4] sm:$0xff]
    %v847 = vld [vmem:[#allocation5 + $0x13fc] sm:$0xf]
    %v848 = vld [vmem:[#allocation5 + $0x1400] sm:$0xff]
    %v849 = vld [vmem:[#allocation5 + $0x1408] sm:$0xff]
    %v850 = vld [vmem:[#allocation5 + $0x1410] sm:$0xf]
    %v851 = vld [vmem:[#allocation5 + $0x1414] sm:$0xff]
    %v852 = vld [vmem:[#allocation5 + $0x141c] sm:$0xff]
    %v853 = vld [vmem:[#allocation5 + $0x1424] sm:$0xf]
    %v854 = vld [vmem:[#allocation5 + $0x1428] sm:$0xff]
    %v855 = vld [vmem:[#allocation5 + $0x1430] sm:$0xff]
    %v856 = vld [vmem:[#allocation5 + $0x1438] sm:$0xf]
    %v857 = vld [vmem:[#allocation5 + $0x143c] sm:$0xff]
    %v858 = vld [vmem:[#allocation5 + $0x1444] sm:$0xff]
    %v859 = vld [vmem:[#allocation5 + $0x144c] sm:$0xf]
    %v860 = vld [vmem:[#allocation5 + $0x1450] sm:$0xff]
    %v861 = vld [vmem:[#allocation5 + $0x1458] sm:$0xff]
    %v862 = vld [vmem:[#allocation5 + $0x1460] sm:$0xf]
    %v863 = vld [vmem:[#allocation5 + $0x1464] sm:$0xff]
    %v864 = vld [vmem:[#allocation5 + $0x146c] sm:$0xff]
    %v865 = vld [vmem:[#allocation5 + $0x1474] sm:$0xf]
    %v866 = vld [vmem:[#allocation5 + $0x1478] sm:$0xff]
    %v867 = vld [vmem:[#allocation5 + $0x1480] sm:$0xff]
    %v868 = vld [vmem:[#allocation5 + $0x1488] sm:$0xf]
    %v869 = vld [vmem:[#allocation5 + $0x148c] sm:$0xff]
    %v870 = vld [vmem:[#allocation5 + $0x1494] sm:$0xff]
    %v871 = vld [vmem:[#allocation5 + $0x149c] sm:$0xf]
    %v872 = vld [vmem:[#allocation5 + $0x14a0] sm:$0xff]
    %v873 = vld [vmem:[#allocation5 + $0x14a8] sm:$0xff]
    %v874 = vld [vmem:[#allocation5 + $0x14b0] sm:$0xf]
    %v875 = vld [vmem:[#allocation5 + $0x14b4] sm:$0xff]
    %v876 = vld [vmem:[#allocation5 + $0x14bc] sm:$0xff]
    %v877 = vld [vmem:[#allocation5 + $0x14c4] sm:$0xf]
    %v878 = vld [vmem:[#allocation5 + $0x14c8] sm:$0xff]
    %v879 = vld [vmem:[#allocation5 + $0x14d0] sm:$0xff]
    %v880 = vld [vmem:[#allocation5 + $0x14d8] sm:$0xf]
    %v881 = vld [vmem:[#allocation5 + $0x14dc] sm:$0xff]
    %v882 = vld [vmem:[#allocation5 + $0x14e4] sm:$0xff]
    %v883 = vld [vmem:[#allocation5 + $0x14ec] sm:$0xf]
    %v884 = vld [vmem:[#allocation5 + $0x14f0] sm:$0xff]
    %v885 = vld [vmem:[#allocation5 + $0x14f8] sm:$0xff]
    %v886 = vld [vmem:[#allocation5 + $0x1500] sm:$0xf]
    %v887 = vld [vmem:[#allocation5 + $0x1504] sm:$0xff]
    %v888 = vld [vmem:[#allocation5 + $0x150c] sm:$0xff]
    %v889 = vld [vmem:[#allocation5 + $0x1514] sm:$0xf]
    %v890 = vld [vmem:[#allocation5 + $0x1518] sm:$0xff]
    %v891 = vld [vmem:[#allocation5 + $0x1520] sm:$0xff]
    %v892 = vld [vmem:[#allocation5 + $0x1528] sm:$0xf]
    %v893 = vld [vmem:[#allocation5 + $0x152c] sm:$0xff]
    %v894 = vld [vmem:[#allocation5 + $0x1534] sm:$0xff]
    %v895 = vld [vmem:[#allocation5 + $0x153c] sm:$0xf]
    %v896 = vld [vmem:[#allocation5 + $0x1540] sm:$0xff]
    %v897 = vld [vmem:[#allocation5 + $0x1548] sm:$0xff]
    %v898 = vld [vmem:[#allocation5 + $0x1550] sm:$0xf]
    %v899 = vld [vmem:[#allocation5 + $0x1554] sm:$0xff]
    %v900 = vld [vmem:[#allocation5 + $0x155c] sm:$0xff]
    %v901 = vld [vmem:[#allocation5 + $0x1564] sm:$0xf]
    %v902 = vld [vmem:[#allocation5 + $0x1568] sm:$0xff]
    %v903 = vld [vmem:[#allocation5 + $0x1570] sm:$0xff]
    %v904 = vld [vmem:[#allocation5 + $0x1578] sm:$0xf]
    %v905 = vld [vmem:[#allocation5 + $0x157c] sm:$0xff]
    %v906 = vld [vmem:[#allocation5 + $0x1584] sm:$0xff]
    %v907 = vld [vmem:[#allocation5 + $0x158c] sm:$0xf]
    %v908 = vld [vmem:[#allocation5 + $0x1590] sm:$0xff]
    %v909 = vld [vmem:[#allocation5 + $0x1598] sm:$0xff]
    %v910 = vld [vmem:[#allocation5 + $0x15a0] sm:$0xf]
    %v911 = vld [vmem:[#allocation5 + $0x15a4] sm:$0xff]
    %v912 = vld [vmem:[#allocation5 + $0x15ac] sm:$0xff]
    %v913 = vld [vmem:[#allocation5 + $0x15b4] sm:$0xf]
    %v914 = vld [vmem:[#allocation5 + $0x15b8] sm:$0xff]
    %v915 = vld [vmem:[#allocation5 + $0x15c0] sm:$0xff]
    %v916 = vld [vmem:[#allocation5 + $0x15c8] sm:$0xf]
    %v917 = vld [vmem:[#allocation5 + $0x15cc] sm:$0xff]
    %v918 = vld [vmem:[#allocation5 + $0x15d4] sm:$0xff]
    %v919 = vld [vmem:[#allocation5 + $0x15dc] sm:$0xf]
    %v920 = vld [vmem:[#allocation5 + $0x15e0] sm:$0xff]
    %v921 = vld [vmem:[#allocation5 + $0x15e8] sm:$0xff]
    %v922 = vld [vmem:[#allocation5 + $0x15f0] sm:$0xf]
    %v923 = vld [vmem:[#allocation5 + $0x15f4] sm:$0xff]
    %v924 = vld [vmem:[#allocation5 + $0x15fc] sm:$0xff]
    %v925 = vld [vmem:[#allocation5 + $0x1604] sm:$0xf]
    %v926 = vld [vmem:[#allocation5 + $0x1608] sm:$0xff]
    %v927 = vld [vmem:[#allocation5 + $0x1610] sm:$0xff]
    %v928 = vld [vmem:[#allocation5 + $0x1618] sm:$0xf]
    %v929 = vld [vmem:[#allocation5 + $0x161c] sm:$0xff]
    %v930 = vld [vmem:[#allocation5 + $0x1624] sm:$0xff]
    %v931 = vld [vmem:[#allocation5 + $0x162c] sm:$0xf]
    %v932 = vld [vmem:[#allocation5 + $0x1630] sm:$0xff]
    %v933 = vld [vmem:[#allocation5 + $0x1638] sm:$0xff]
    %v934 = vld [vmem:[#allocation5 + $0x1640] sm:$0xf]
    %v935 = vld [vmem:[#allocation5 + $0x1644] sm:$0xff]
    %v936 = vld [vmem:[#allocation5 + $0x164c] sm:$0xff]
    %v937 = vld [vmem:[#allocation5 + $0x1654] sm:$0xf]
    %v938 = vld [vmem:[#allocation5 + $0x1658] sm:$0xff]
    %v939 = vld [vmem:[#allocation5 + $0x1660] sm:$0xff]
    %v940 = vld [vmem:[#allocation5 + $0x1668] sm:$0xf]
    %v941 = vld [vmem:[#allocation5 + $0x166c] sm:$0xff]
    %v942 = vld [vmem:[#allocation5 + $0x1674] sm:$0xff]
    %v943 = vld [vmem:[#allocation5 + $0x167c] sm:$0xf]
    %v944 = vld [vmem:[#allocation5 + $0x1680] sm:$0xff]
    %v945 = vld [vmem:[#allocation5 + $0x1688] sm:$0xff]
    %v946 = vld [vmem:[#allocation5 + $0x1690] sm:$0xf]
    %v947 = vld [vmem:[#allocation5 + $0x1694] sm:$0xff]
    %v948 = vld [vmem:[#allocation5 + $0x169c] sm:$0xff]
    %v949 = vld [vmem:[#allocation5 + $0x16a4] sm:$0xf]
    %v950 = vld [vmem:[#allocation5 + $0x16a8] sm:$0xff]
    %v951 = vld [vmem:[#allocation5 + $0x16b0] sm:$0xff]
    %v952 = vld [vmem:[#allocation5 + $0x16b8] sm:$0xf]
    %v953 = vld [vmem:[#allocation5 + $0x16bc] sm:$0xff]
    %v954 = vld [vmem:[#allocation5 + $0x16c4] sm:$0xff]
    %v955 = vld [vmem:[#allocation5 + $0x16cc] sm:$0xf]
    %v956 = vld [vmem:[#allocation5 + $0x16d0] sm:$0xff]
    %v957 = vld [vmem:[#allocation5 + $0x16d8] sm:$0xff]
    %v958 = vld [vmem:[#allocation5 + $0x16e0] sm:$0xf]
    %v959 = vld [vmem:[#allocation5 + $0x16e4] sm:$0xff]
    %v960 = vld [vmem:[#allocation5 + $0x16ec] sm:$0xff]
    %v961 = vld [vmem:[#allocation5 + $0x16f4] sm:$0xf]
    %v962 = vld [vmem:[#allocation5 + $0x16f8] sm:$0xff]
    %v963 = vld [vmem:[#allocation5 + $0x1700] sm:$0xff]
    %v964 = vld [vmem:[#allocation5 + $0x1708] sm:$0xf]
    %v965 = vld [vmem:[#allocation5 + $0x170c] sm:$0xff]
    %v966 = vld [vmem:[#allocation5 + $0x1714] sm:$0xff]
    %v967 = vld [vmem:[#allocation5 + $0x171c] sm:$0xf]
    %v968 = vld [vmem:[#allocation5 + $0x1720] sm:$0xff]
    %v969 = vld [vmem:[#allocation5 + $0x1728] sm:$0xff]
    %v970 = vld [vmem:[#allocation5 + $0x1730] sm:$0xf]
    %v971 = vld [vmem:[#allocation5 + $0x1734] sm:$0xff]
    %v972 = vld [vmem:[#allocation5 + $0x173c] sm:$0xff]
    %v973 = vld [vmem:[#allocation5 + $0x1744] sm:$0xf]
    %v974 = vld [vmem:[#allocation5 + $0x1748] sm:$0xff]
    %v975 = vld [vmem:[#allocation5 + $0x1750] sm:$0xff]
    %v976 = vld [vmem:[#allocation5 + $0x1758] sm:$0xf]
    %v977 = vld [vmem:[#allocation5 + $0x175c] sm:$0xff]
    %v978 = vld [vmem:[#allocation5 + $0x1764] sm:$0xff]
    %v979 = vld [vmem:[#allocation5 + $0x176c] sm:$0xf]
    %v980 = vld [vmem:[#allocation5 + $0x1770] sm:$0xff]
    %v981 = vld [vmem:[#allocation5 + $0x1778] sm:$0xff]
    %v982 = vld [vmem:[#allocation5 + $0x1780] sm:$0xf]
    %v983 = vld [vmem:[#allocation5 + $0x1784] sm:$0xff]
    %v984 = vld [vmem:[#allocation5 + $0x178c] sm:$0xff]
    %v985 = vld [vmem:[#allocation5 + $0x1794] sm:$0xf]
    %v986 = vld [vmem:[#allocation5 + $0x1798] sm:$0xff]
    %v987 = vld [vmem:[#allocation5 + $0x17a0] sm:$0xff]
    %v988 = vld [vmem:[#allocation5 + $0x17a8] sm:$0xf]
    %v989 = vld [vmem:[#allocation5 + $0x17ac] sm:$0xff]
    %v990 = vld [vmem:[#allocation5 + $0x17b4] sm:$0xff]
    %v991 = vld [vmem:[#allocation5 + $0x17bc] sm:$0xf]
    %v992 = vld [vmem:[#allocation5 + $0x17c0] sm:$0xff]
    %v993 = vld [vmem:[#allocation5 + $0x17c8] sm:$0xff]
    %v994 = vld [vmem:[#allocation5 + $0x17d0] sm:$0xf]
    %v995 = vld [vmem:[#allocation5 + $0x17d4] sm:$0xff]
    %v996 = vld [vmem:[#allocation5 + $0x17dc] sm:$0xff]
    %v997 = vld [vmem:[#allocation5 + $0x17e4] sm:$0xf]
    %v998 = vld [vmem:[#allocation5 + $0x17e8] sm:$0xff]
    %v999 = vld [vmem:[#allocation5 + $0x17f0] sm:$0xff]
    %v1000 = vld [vmem:[#allocation5 + $0x17f8] sm:$0xf]
    %v1001 = vld [vmem:[#allocation5 + $0x17fc] sm:$0xff]
    %v1002 = vld [vmem:[#allocation5 + $0x1804] sm:$0xff]
    %v1003 = vld [vmem:[#allocation5 + $0x180c] sm:$0xf]
    %v1004 = vld [vmem:[#allocation5 + $0x1810] sm:$0xff]
    %v1005 = vld [vmem:[#allocation5 + $0x1818] sm:$0xff]
    %v1006 = vld [vmem:[#allocation5 + $0x1820] sm:$0xf]
    %v1007 = vld [vmem:[#allocation5 + $0x1824] sm:$0xff]
    %v1008 = vld [vmem:[#allocation5 + $0x182c] sm:$0xff]
    %v1009 = vld [vmem:[#allocation5 + $0x1834] sm:$0xf]
    %v1010 = vld [vmem:[#allocation5 + $0x1838] sm:$0xff]
    %v1011 = vld [vmem:[#allocation5 + $0x1840] sm:$0xff]
    %v1012 = vld [vmem:[#allocation5 + $0x1848] sm:$0xf]
    %v1013 = vld [vmem:[#allocation5 + $0x184c] sm:$0xff]
    %v1014 = vld [vmem:[#allocation5 + $0x1854] sm:$0xff]
    %v1015 = vld [vmem:[#allocation5 + $0x185c] sm:$0xf]
    %v1016 = vld [vmem:[#allocation5 + $0x1860] sm:$0xff]
    %v1017 = vld [vmem:[#allocation5 + $0x1868] sm:$0xff]
    %v1018 = vld [vmem:[#allocation5 + $0x1870] sm:$0xf]
    %v1019 = vld [vmem:[#allocation5 + $0x1874] sm:$0xff]
    %v1020 = vld [vmem:[#allocation5 + $0x187c] sm:$0xff]
    %v1021 = vld [vmem:[#allocation5 + $0x1884] sm:$0xf]
    %v1022 = vld [vmem:[#allocation5 + $0x1888] sm:$0xff]
    %v1023 = vld [vmem:[#allocation5 + $0x1890] sm:$0xff]
    %v1024 = vld [vmem:[#allocation5 + $0x1898] sm:$0xf]
    %v1025 = vld [vmem:[#allocation5 + $0x189c] sm:$0xff]
    %v1026 = vld [vmem:[#allocation5 + $0x18a4] sm:$0xff]
    %v1027 = vld [vmem:[#allocation5 + $0x18ac] sm:$0xf]
    %v1028 = vld [vmem:[#allocation5 + $0x18b0] sm:$0xff]
    %v1029 = vld [vmem:[#allocation5 + $0x18b8] sm:$0xff]
    %v1030 = vld [vmem:[#allocation5 + $0x18c0] sm:$0xf]
    %v1031 = vld [vmem:[#allocation5 + $0x18c4] sm:$0xff]
    %v1032 = vld [vmem:[#allocation5 + $0x18cc] sm:$0xff]
    %v1033 = vld [vmem:[#allocation5 + $0x18d4] sm:$0xf]
    %v1034 = vld [vmem:[#allocation5 + $0x18d8] sm:$0xff]
    %v1035 = vld [vmem:[#allocation5 + $0x18e0] sm:$0xff]
    %v1036 = vld [vmem:[#allocation5 + $0x18e8] sm:$0xf]
    %v1037 = vld [vmem:[#allocation5 + $0x18ec] sm:$0xff]
    %v1038 = vld [vmem:[#allocation5 + $0x18f4] sm:$0xff]
    %v1039 = vld [vmem:[#allocation5 + $0x18fc] sm:$0xf]
    %v1040 = vld [vmem:[#allocation5 + $0x1900] sm:$0xff]
    %v1041 = vld [vmem:[#allocation5 + $0x1908] sm:$0xff]
    %v1042 = vld [vmem:[#allocation5 + $0x1910] sm:$0xf]
    %v1043 = vld [vmem:[#allocation5 + $0x1914] sm:$0xff]
    %v1044 = vld [vmem:[#allocation5 + $0x191c] sm:$0xff]
    %v1045 = vld [vmem:[#allocation5 + $0x1924] sm:$0xf]
    %v1046 = vld [vmem:[#allocation5 + $0x1928] sm:$0xff]
    %v1047 = vld [vmem:[#allocation5 + $0x1930] sm:$0xff]
    %v1048 = vld [vmem:[#allocation5 + $0x1938] sm:$0xf]
    %v1049 = vld [vmem:[#allocation5 + $0x193c] sm:$0xff]
    %v1050 = vld [vmem:[#allocation5 + $0x1944] sm:$0xff]
    %v1051 = vld [vmem:[#allocation5 + $0x194c] sm:$0xf]
    %v1052 = vld [vmem:[#allocation5 + $0x1950] sm:$0xff]
    %v1053 = vld [vmem:[#allocation5 + $0x1958] sm:$0xff]
    %v1054 = vld [vmem:[#allocation5 + $0x1960] sm:$0xf]
    %v1055 = vld [vmem:[#allocation5 + $0x1964] sm:$0xff]
    %v1056 = vld [vmem:[#allocation5 + $0x196c] sm:$0xff]
    %v1057 = vld [vmem:[#allocation5 + $0x1974] sm:$0xf]
    %v1058 = vld [vmem:[#allocation5 + $0x1978] sm:$0xff]
    %v1059 = vld [vmem:[#allocation5 + $0x1980] sm:$0xff]
    %v1060 = vld [vmem:[#allocation5 + $0x1988] sm:$0xf]
    %v1061 = vld [vmem:[#allocation5 + $0x198c] sm:$0xff]
    %v1062 = vld [vmem:[#allocation5 + $0x1994] sm:$0xff]
    %v1063 = vld [vmem:[#allocation5 + $0x199c] sm:$0xf]
    %v1064 = vld [vmem:[#allocation5 + $0x19a0] sm:$0xff]
    %v1065 = vld [vmem:[#allocation5 + $0x19a8] sm:$0xff]
    %v1066 = vld [vmem:[#allocation5 + $0x19b0] sm:$0xf]
    %v1067 = vld [vmem:[#allocation5 + $0x19b4] sm:$0xff]
    %v1068 = vld [vmem:[#allocation5 + $0x19bc] sm:$0xff]
    %v1069 = vld [vmem:[#allocation5 + $0x19c4] sm:$0xf]
    %v1070 = vld [vmem:[#allocation5 + $0x19c8] sm:$0xff]
    %v1071 = vld [vmem:[#allocation5 + $0x19d0] sm:$0xff]
    %v1072 = vld [vmem:[#allocation5 + $0x19d8] sm:$0xf]
    %v1073 = vld [vmem:[#allocation5 + $0x19dc] sm:$0xff]
    %v1074 = vld [vmem:[#allocation5 + $0x19e4] sm:$0xff]
    %v1075 = vld [vmem:[#allocation5 + $0x19ec] sm:$0xf]
    %v1076 = vld [vmem:[#allocation5 + $0x19f0] sm:$0xff]
    %v1077 = vld [vmem:[#allocation5 + $0x19f8] sm:$0xff]
    %v1078 = vld [vmem:[#allocation5 + $0x1a00] sm:$0xf]
    %v1079 = vld [vmem:[#allocation5 + $0x1a04] sm:$0xff]
    %v1080 = vld [vmem:[#allocation5 + $0x1a0c] sm:$0xff]
    %v1081 = vld [vmem:[#allocation5 + $0x1a14] sm:$0xf]
    %v1082 = vld [vmem:[#allocation5 + $0x1a18] sm:$0xff]
    %v1083 = vld [vmem:[#allocation5 + $0x1a20] sm:$0xff]
    %v1084 = vld [vmem:[#allocation5 + $0x1a28] sm:$0xf]
    %v1085 = vld [vmem:[#allocation5 + $0x1a2c] sm:$0xff]
    %v1086 = vld [vmem:[#allocation5 + $0x1a34] sm:$0xff]
    %v1087 = vld [vmem:[#allocation5 + $0x1a3c] sm:$0xf]
    %v1088 = vld [vmem:[#allocation5 + $0x1a40] sm:$0xff]
    %v1089 = vld [vmem:[#allocation5 + $0x1a48] sm:$0xff]
    %v1090 = vld [vmem:[#allocation5 + $0x1a50] sm:$0xf]
    %v1091 = vld [vmem:[#allocation5 + $0x1a54] sm:$0xff]
    %v1092 = vld [vmem:[#allocation5 + $0x1a5c] sm:$0xff]
    %v1093 = vld [vmem:[#allocation5 + $0x1a64] sm:$0xf]
    %v1094 = vld [vmem:[#allocation5 + $0x1a68] sm:$0xff]
    %v1095 = vld [vmem:[#allocation5 + $0x1a70] sm:$0xff]
    %v1096 = vld [vmem:[#allocation5 + $0x1a78] sm:$0xf]
    %v1097 = vld [vmem:[#allocation5 + $0x1a7c] sm:$0xff]
    %v1098 = vld [vmem:[#allocation5 + $0x1a84] sm:$0xff]
    %v1099 = vld [vmem:[#allocation5 + $0x1a8c] sm:$0xf]
    %v1100 = vld [vmem:[#allocation5 + $0x1a90] sm:$0xff]
    %v1101 = vld [vmem:[#allocation5 + $0x1a98] sm:$0xff]
    %v1102 = vld [vmem:[#allocation5 + $0x1aa0] sm:$0xf]
    %v1103 = vld [vmem:[#allocation5 + $0x1aa4] sm:$0xff]
    %v1104 = vld [vmem:[#allocation5 + $0x1aac] sm:$0xff]
    %v1105 = vld [vmem:[#allocation5 + $0x1ab4] sm:$0xf]
    %v1106 = vld [vmem:[#allocation5 + $0x1ab8] sm:$0xff]
    %v1107 = vld [vmem:[#allocation5 + $0x1ac0] sm:$0xff]
    %v1108 = vld [vmem:[#allocation5 + $0x1ac8] sm:$0xf]
    %v1109 = vld [vmem:[#allocation5 + $0x1acc] sm:$0xff]
    %v1110 = vld [vmem:[#allocation5 + $0x1ad4] sm:$0xff]
    %v1111 = vld [vmem:[#allocation5 + $0x1adc] sm:$0xf]
    %v1112 = vld [vmem:[#allocation5 + $0x1ae0] sm:$0xff]
    %v1113 = vld [vmem:[#allocation5 + $0x1ae8] sm:$0xff]
    %v1114 = vld [vmem:[#allocation5 + $0x1af0] sm:$0xf]
    %v1115 = vld [vmem:[#allocation5 + $0x1af4] sm:$0xff]
    %v1116 = vld [vmem:[#allocation5 + $0x1afc] sm:$0xff]
    %v1117 = vld [vmem:[#allocation5 + $0x1b04] sm:$0xf]
    %v1118 = vld [vmem:[#allocation5 + $0x1b08] sm:$0xff]
    %v1119 = vld [vmem:[#allocation5 + $0x1b10] sm:$0xff]
    %v1120 = vld [vmem:[#allocation5 + $0x1b18] sm:$0xf]
    %v1121 = vld [vmem:[#allocation5 + $0x1b1c] sm:$0xff]
    %v1122 = vld [vmem:[#allocation5 + $0x1b24] sm:$0xff]
    %v1123 = vld [vmem:[#allocation5 + $0x1b2c] sm:$0xf]
    %v1124 = vld [vmem:[#allocation5 + $0x1b30] sm:$0xff]
    %v1125 = vld [vmem:[#allocation5 + $0x1b38] sm:$0xff]
    %v1126 = vld [vmem:[#allocation5 + $0x1b40] sm:$0xf]
    %v1127 = vld [vmem:[#allocation5 + $0x1b44] sm:$0xff]
    %v1128 = vld [vmem:[#allocation5 + $0x1b4c] sm:$0xff]
    %v1129 = vld [vmem:[#allocation5 + $0x1b54] sm:$0xf]
    %v1130 = vld [vmem:[#allocation5 + $0x1b58] sm:$0xff]
    %v1131 = vld [vmem:[#allocation5 + $0x1b60] sm:$0xff]
    %v1132 = vld [vmem:[#allocation5 + $0x1b68] sm:$0xf]
    %v1133 = vld [vmem:[#allocation5 + $0x1b6c] sm:$0xff]
    %v1134 = vld [vmem:[#allocation5 + $0x1b74] sm:$0xff]
    %v1135 = vld [vmem:[#allocation5 + $0x1b7c] sm:$0xf]
    %v1136 = vld [vmem:[#allocation5 + $0x1b80] sm:$0xff]
    %v1137 = vld [vmem:[#allocation5 + $0x1b88] sm:$0xff]
    %v1138 = vld [vmem:[#allocation5 + $0x1b90] sm:$0xf]
    %v1139 = vld [vmem:[#allocation5 + $0x1b94] sm:$0xff]
    %v1140 = vld [vmem:[#allocation5 + $0x1b9c] sm:$0xff]
    %v1141 = vld [vmem:[#allocation5 + $0x1ba4] sm:$0xf]
    %v1142 = vld [vmem:[#allocation5 + $0x1ba8] sm:$0xff]
    %v1143 = vld [vmem:[#allocation5 + $0x1bb0] sm:$0xff]
    %v1144 = vld [vmem:[#allocation5 + $0x1bb8] sm:$0xf]
    %v1145 = vld [vmem:[#allocation5 + $0x1bbc] sm:$0xff]
    %v1146 = vld [vmem:[#allocation5 + $0x1bc4] sm:$0xff]
    %v1147 = vld [vmem:[#allocation5 + $0x1bcc] sm:$0xf]
    %v1148 = vld [vmem:[#allocation5 + $0x1bd0] sm:$0xff]
    %v1149 = vld [vmem:[#allocation5 + $0x1bd8] sm:$0xff]
    %v1150 = vld [vmem:[#allocation5 + $0x1be0] sm:$0xf]
    %v1151 = vld [vmem:[#allocation5 + $0x1be4] sm:$0xff]
    %v1152 = vld [vmem:[#allocation5 + $0x1bec] sm:$0xff]
    %v1153 = vld [vmem:[#allocation5 + $0x1bf4] sm:$0xf]
    %v1154 = vld [vmem:[#allocation5 + $0x1bf8] sm:$0xff]
    %v1155 = vld [vmem:[#allocation5 + $0x1c00] sm:$0xff]
    %v1156 = vld [vmem:[#allocation5 + $0x1c08] sm:$0xf]
    %v1157 = vld [vmem:[#allocation5 + $0x1c0c] sm:$0xff]
    %v1158 = vld [vmem:[#allocation5 + $0x1c14] sm:$0xff]
    %v1159 = vld [vmem:[#allocation5 + $0x1c1c] sm:$0xf]
    %v1160 = vld [vmem:[#allocation5 + $0x1c20] sm:$0xff]
    %v1161 = vld [vmem:[#allocation5 + $0x1c28] sm:$0xff]
    %v1162 = vld [vmem:[#allocation5 + $0x1c30] sm:$0xf]
    %v1163 = vld [vmem:[#allocation5 + $0x1c34] sm:$0xff]
    %v1164 = vld [vmem:[#allocation5 + $0x1c3c] sm:$0xff]
    %v1165 = vld [vmem:[#allocation5 + $0x1c44] sm:$0xf]
    %v1166 = vld [vmem:[#allocation5 + $0x1c48] sm:$0xff]
    %v1167 = vld [vmem:[#allocation5 + $0x1c50] sm:$0xff]
    %v1168 = vld [vmem:[#allocation5 + $0x1c58] sm:$0xf]
    %v1169 = vld [vmem:[#allocation5 + $0x1c5c] sm:$0xff]
    %v1170 = vld [vmem:[#allocation5 + $0x1c64] sm:$0xff]
    %v1171 = vld [vmem:[#allocation5 + $0x1c6c] sm:$0xf]
    %v1172 = vld [vmem:[#allocation5 + $0x1c70] sm:$0xff]
    %v1173 = vld [vmem:[#allocation5 + $0x1c78] sm:$0xff]
    %v1174 = vld [vmem:[#allocation5 + $0x1c80] sm:$0xf]
    %v1175 = vld [vmem:[#allocation5 + $0x1c84] sm:$0xff]
    %v1176 = vld [vmem:[#allocation5 + $0x1c8c] sm:$0xff]
    %v1177 = vld [vmem:[#allocation5 + $0x1c94] sm:$0xf]
    %v1178 = vld [vmem:[#allocation5 + $0x1c98] sm:$0xff]
    %v1179 = vld [vmem:[#allocation5 + $0x1ca0] sm:$0xff]
    %v1180 = vld [vmem:[#allocation5 + $0x1ca8] sm:$0xf]
    %v1181 = vld [vmem:[#allocation5 + $0x1cac] sm:$0xff]
    %v1182 = vld [vmem:[#allocation5 + $0x1cb4] sm:$0xff]
    %v1183 = vld [vmem:[#allocation5 + $0x1cbc] sm:$0xf]
    %v1184 = vld [vmem:[#allocation5 + $0x1cc0] sm:$0xff]
    %v1185 = vld [vmem:[#allocation5 + $0x1cc8] sm:$0xff]
    %v1186 = vld [vmem:[#allocation5 + $0x1cd0] sm:$0xf]
    %v1187 = vld [vmem:[#allocation5 + $0x1cd4] sm:$0xff]
    %v1188 = vld [vmem:[#allocation5 + $0x1cdc] sm:$0xff]
    %v1189 = vld [vmem:[#allocation5 + $0x1ce4] sm:$0xf]
    %v1190 = vld [vmem:[#allocation5 + $0x1ce8] sm:$0xff]
    %v1191 = vld [vmem:[#allocation5 + $0x1cf0] sm:$0xff]
    %v1192 = vld [vmem:[#allocation5 + $0x1cf8] sm:$0xf]
    %v1193 = vld [vmem:[#allocation5 + $0x1cfc] sm:$0xff]
    %v1194 = vld [vmem:[#allocation5 + $0x1d04] sm:$0xff]
    %v1195 = vld [vmem:[#allocation5 + $0x1d0c] sm:$0xf]
    %v1196 = vld [vmem:[#allocation5 + $0x1d10] sm:$0xff]
    %v1197 = vld [vmem:[#allocation5 + $0x1d18] sm:$0xff]
    %v1198 = vld [vmem:[#allocation5 + $0x1d20] sm:$0xf]
    %v1199 = vld [vmem:[#allocation5 + $0x1d24] sm:$0xff]
    %v1200 = vld [vmem:[#allocation5 + $0x1d2c] sm:$0xff]
    %v1201 = vld [vmem:[#allocation5 + $0x1d34] sm:$0xf]
    %v1202 = vld [vmem:[#allocation5 + $0x1d38] sm:$0xff]
    %v1203 = vld [vmem:[#allocation5 + $0x1d40] sm:$0xff]
    %v1204 = vld [vmem:[#allocation5 + $0x1d48] sm:$0xf]
    %v1205 = vld [vmem:[#allocation5 + $0x1d4c] sm:$0xff]
    %v1206 = vld [vmem:[#allocation5 + $0x1d54] sm:$0xff]
    %v1207 = vld [vmem:[#allocation5 + $0x1d5c] sm:$0xf]
    %v1208 = vld [vmem:[#allocation5 + $0x1d60] sm:$0xff]
    %v1209 = vld [vmem:[#allocation5 + $0x1d68] sm:$0xff]
    %v1210 = vld [vmem:[#allocation5 + $0x1d70] sm:$0xf]
    %v1211 = vld [vmem:[#allocation5 + $0x1d74] sm:$0xff]
    %v1212 = vld [vmem:[#allocation5 + $0x1d7c] sm:$0xff]
    %v1213 = vld [vmem:[#allocation5 + $0x1d84] sm:$0xf]
    %v1214 = vld [vmem:[#allocation5 + $0x1d88] sm:$0xff]
    %v1215 = vld [vmem:[#allocation5 + $0x1d90] sm:$0xff]
    %v1216 = vld [vmem:[#allocation5 + $0x1d98] sm:$0xf]
    %v1217 = vld [vmem:[#allocation5 + $0x1d9c] sm:$0xff]
    %v1218 = vld [vmem:[#allocation5 + $0x1da4] sm:$0xff]
    %v1219 = vld [vmem:[#allocation5 + $0x1dac] sm:$0xf]
    %v1220 = vld [vmem:[#allocation5 + $0x1db0] sm:$0xff]
    %v1221 = vld [vmem:[#allocation5 + $0x1db8] sm:$0xff]
    %v1222 = vld [vmem:[#allocation5 + $0x1dc0] sm:$0xf]
    %v1223 = vld [vmem:[#allocation5 + $0x1dc4] sm:$0xff]
    %v1224 = vld [vmem:[#allocation5 + $0x1dcc] sm:$0xff]
    %v1225 = vld [vmem:[#allocation5 + $0x1dd4] sm:$0xf]
    %v1226 = vld [vmem:[#allocation5 + $0x1dd8] sm:$0xff]
    %v1227 = vld [vmem:[#allocation5 + $0x1de0] sm:$0xff]
    %v1228 = vld [vmem:[#allocation5 + $0x1de8] sm:$0xf]
    %v1229 = vld [vmem:[#allocation5 + $0x1dec] sm:$0xff]
    %v1230 = vld [vmem:[#allocation5 + $0x1df4] sm:$0xff]
    %v1231 = vld [vmem:[#allocation5 + $0x1dfc] sm:$0xf]
    %v1244 = vunpack.c.l.b16 %v68
    %v1245 = vunpack.c.h.b16 %v68
    %v1246 = vunpack.c.l.b16 %v69
    %v1247 = vunpack.c.h.b16 %v69
    %v1248 = vunpack.c.l.b16 %v70
    %v1249 = vunpack.c.h.b16 %v70
    %v1250 = vunpack.c.l.b16 %v71
    %v1251 = vunpack.c.h.b16 %v71
    %v1252 = vunpack.c.l.b16 %v72
    %v1253 = vunpack.c.h.b16 %v72
    %v1254 = vunpack.c.l.b16 %v73
    %v1255 = vunpack.c.h.b16 %v73
    %v1256 = vunpack.c.l.b16 %v74
    %v1257 = vunpack.c.h.b16 %v74
    %v1258 = vunpack.c.l.b16 %v75
    %v1259 = vunpack.c.h.b16 %v75
    %v1260 = vunpack.c.l.b16 %v76
    %v1261 = vunpack.c.h.b16 %v76
    %v1262 = vunpack.c.l.b16 %v77
    %v1263 = vunpack.c.h.b16 %v77
    %v1264 = vunpack.c.l.b16 %v78
    %v1265 = vunpack.c.h.b16 %v78
    %v1266 = vunpack.c.l.b16 %v79
    %v1267 = vunpack.c.h.b16 %v79
    %v1268 = vpack.c.b16 %v1244, %v1244
    %v1269 = vpack.c.b16 %v1245, %v1245
    %v1270 = vpack.c.b16 %v1246, %v1246
    %v1271 = vpack.c.b16 %v1247, %v1247
    %v1272 = vpack.c.b16 %v1248, %v1248
    %v1273 = vpack.c.b16 %v1249, %v1249
    %v1274 = vpack.c.b16 %v1250, %v1250
    %v1275 = vpack.c.b16 %v1251, %v1251
    %v1276 = vpack.c.b16 %v1252, %v1252
    %v1277 = vpack.c.b16 %v1253, %v1253
    %v1278 = vpack.c.b16 %v1254, %v1254
    %v1279 = vpack.c.b16 %v1255, %v1255
    %v1280 = vpack.c.b16 %v1256, %v1256
    %v1281 = vpack.c.b16 %v1257, %v1257
    %v1282 = vpack.c.b16 %v1258, %v1258
    %v1283 = vpack.c.b16 %v1259, %v1259
    %v1284 = vpack.c.b16 %v1260, %v1260
    %v1285 = vpack.c.b16 %v1261, %v1261
    %v1286 = vpack.c.b16 %v1262, %v1262
    %v1287 = vpack.c.b16 %v1263, %v1263
    %v1288 = vpack.c.b16 %v1264, %v1264
    %v1289 = vpack.c.b16 %v1265, %v1265
    %v1290 = vpack.c.b16 %v1266, %v1266
    %v1291 = vpack.c.b16 %v1267, %v1267
    %v2468 = vunpack.c.l.b16 %v80
    %v2469 = vunpack.c.h.b16 %v80
    %v2470 = vunpack.c.l.b16 %v81
    %v2471 = vunpack.c.h.b16 %v81
    %v2472 = vunpack.c.l.b16 %v82
    %v2473 = vunpack.c.l.b16 %v83
    %v2474 = vunpack.c.h.b16 %v83
    %v2475 = vunpack.c.l.b16 %v84
    %v2476 = vunpack.c.h.b16 %v84
    %v2477 = vunpack.c.l.b16 %v85
    %v2478 = vunpack.c.l.b16 %v86
    %v2479 = vunpack.c.h.b16 %v86
    %v2480 = vunpack.c.l.b16 %v87
    %v2481 = vunpack.c.h.b16 %v87
    %v2482 = vunpack.c.l.b16 %v88
    %v2483 = vunpack.c.l.b16 %v89
    %v2484 = vunpack.c.h.b16 %v89
    %v2485 = vunpack.c.l.b16 %v90
    %v2486 = vunpack.c.h.b16 %v90
    %v2487 = vunpack.c.l.b16 %v91
    %v2488 = vunpack.c.l.b16 %v92
    %v2489 = vunpack.c.h.b16 %v92
    %v2490 = vunpack.c.l.b16 %v93
    %v2491 = vunpack.c.h.b16 %v93
    %v2492 = vunpack.c.l.b16 %v94
    %v2493 = vunpack.c.l.b16 %v95
    %v2494 = vunpack.c.h.b16 %v95
    %v2495 = vunpack.c.l.b16 %v96
    %v2496 = vunpack.c.h.b16 %v96
    %v2497 = vunpack.c.l.b16 %v97
    %v2498 = vunpack.c.l.b16 %v98
    %v2499 = vunpack.c.h.b16 %v98
    %v2500 = vunpack.c.l.b16 %v99
    %v2501 = vunpack.c.h.b16 %v99
    %v2502 = vunpack.c.l.b16 %v100
    %v2503 = vunpack.c.l.b16 %v101
    %v2504 = vunpack.c.h.b16 %v101
    %v2505 = vunpack.c.l.b16 %v102
    %v2506 = vunpack.c.h.b16 %v102
    %v2507 = vunpack.c.l.b16 %v103
    %v2508 = vunpack.c.l.b16 %v104
    %v2509 = vunpack.c.h.b16 %v104
    %v2510 = vunpack.c.l.b16 %v105
    %v2511 = vunpack.c.h.b16 %v105
    %v2512 = vunpack.c.l.b16 %v106
    %v2513 = vunpack.c.l.b16 %v107
    %v2514 = vunpack.c.h.b16 %v107
    %v2515 = vunpack.c.l.b16 %v108
    %v2516 = vunpack.c.h.b16 %v108
    %v2517 = vunpack.c.l.b16 %v109
    %v2518 = vunpack.c.l.b16 %v110
    %v2519 = vunpack.c.h.b16 %v110
    %v2520 = vunpack.c.l.b16 %v111
    %v2521 = vunpack.c.h.b16 %v111
    %v2522 = vunpack.c.l.b16 %v112
    %v2523 = vunpack.c.l.b16 %v113
    %v2524 = vunpack.c.h.b16 %v113
    %v2525 = vunpack.c.l.b16 %v114
    %v2526 = vunpack.c.h.b16 %v114
    %v2527 = vunpack.c.l.b16 %v115
    %v2528 = vunpack.c.l.b16 %v116
    %v2529 = vunpack.c.h.b16 %v116
    %v2530 = vunpack.c.l.b16 %v117
    %v2531 = vunpack.c.h.b16 %v117
    %v2532 = vunpack.c.l.b16 %v118
    %v2533 = vunpack.c.l.b16 %v119
    %v2534 = vunpack.c.h.b16 %v119
    %v2535 = vunpack.c.l.b16 %v120
    %v2536 = vunpack.c.h.b16 %v120
    %v2537 = vunpack.c.l.b16 %v121
    %v2538 = vunpack.c.l.b16 %v122
    %v2539 = vunpack.c.h.b16 %v122
    %v2540 = vunpack.c.l.b16 %v123
    %v2541 = vunpack.c.h.b16 %v123
    %v2542 = vunpack.c.l.b16 %v124
    %v2543 = vunpack.c.l.b16 %v125
    %v2544 = vunpack.c.h.b16 %v125
    %v2545 = vunpack.c.l.b16 %v126
    %v2546 = vunpack.c.h.b16 %v126
    %v2547 = vunpack.c.l.b16 %v127
    %v2548 = vunpack.c.l.b16 %v128
    %v2549 = vunpack.c.h.b16 %v128
    %v2550 = vunpack.c.l.b16 %v129
    %v2551 = vunpack.c.h.b16 %v129
    %v2552 = vunpack.c.l.b16 %v130
    %v2553 = vunpack.c.l.b16 %v131
    %v2554 = vunpack.c.h.b16 %v131
    %v2555 = vunpack.c.l.b16 %v132
    %v2556 = vunpack.c.h.b16 %v132
    %v2557 = vunpack.c.l.b16 %v133
    %v2558 = vunpack.c.l.b16 %v134
    %v2559 = vunpack.c.h.b16 %v134
    %v2560 = vunpack.c.l.b16 %v135
    %v2561 = vunpack.c.h.b16 %v135
    %v2562 = vunpack.c.l.b16 %v136
    %v2563 = vunpack.c.l.b16 %v137
    %v2564 = vunpack.c.h.b16 %v137
    %v2565 = vunpack.c.l.b16 %v138
    %v2566 = vunpack.c.h.b16 %v138
    %v2567 = vunpack.c.l.b16 %v139
    %v2568 = vunpack.c.l.b16 %v140
    %v2569 = vunpack.c.h.b16 %v140
    %v2570 = vunpack.c.l.b16 %v141
    %v2571 = vunpack.c.h.b16 %v141
    %v2572 = vunpack.c.l.b16 %v142
    %v2573 = vunpack.c.l.b16 %v143
    %v2574 = vunpack.c.h.b16 %v143
    %v2575 = vunpack.c.l.b16 %v144
    %v2576 = vunpack.c.h.b16 %v144
    %v2577 = vunpack.c.l.b16 %v145
    %v2578 = vunpack.c.l.b16 %v146
    %v2579 = vunpack.c.h.b16 %v146
    %v2580 = vunpack.c.l.b16 %v147
    %v2581 = vunpack.c.h.b16 %v147
    %v2582 = vunpack.c.l.b16 %v148
    %v2583 = vunpack.c.l.b16 %v149
    %v2584 = vunpack.c.h.b16 %v149
    %v2585 = vunpack.c.l.b16 %v150
    %v2586 = vunpack.c.h.b16 %v150
    %v2587 = vunpack.c.l.b16 %v151
    %v2588 = vunpack.c.l.b16 %v152
    %v2589 = vunpack.c.h.b16 %v152
    %v2590 = vunpack.c.l.b16 %v153
    %v2591 = vunpack.c.h.b16 %v153
    %v2592 = vunpack.c.l.b16 %v154
    %v2593 = vunpack.c.l.b16 %v155
    %v2594 = vunpack.c.h.b16 %v155
    %v2595 = vunpack.c.l.b16 %v156
    %v2596 = vunpack.c.h.b16 %v156
    %v2597 = vunpack.c.l.b16 %v157
    %v2598 = vunpack.c.l.b16 %v158
    %v2599 = vunpack.c.h.b16 %v158
    %v2600 = vunpack.c.l.b16 %v159
    %v2601 = vunpack.c.h.b16 %v159
    %v2602 = vunpack.c.l.b16 %v160
    %v2603 = vunpack.c.l.b16 %v161
    %v2604 = vunpack.c.h.b16 %v161
    %v2605 = vunpack.c.l.b16 %v162
    %v2606 = vunpack.c.h.b16 %v162
    %v2607 = vunpack.c.l.b16 %v163
    %v2608 = vunpack.c.l.b16 %v164
    %v2609 = vunpack.c.h.b16 %v164
    %v2610 = vunpack.c.l.b16 %v165
    %v2611 = vunpack.c.h.b16 %v165
    %v2612 = vunpack.c.l.b16 %v166
    %v2613 = vunpack.c.l.b16 %v167
    %v2614 = vunpack.c.h.b16 %v167
    %v2615 = vunpack.c.l.b16 %v168
    %v2616 = vunpack.c.h.b16 %v168
    %v2617 = vunpack.c.l.b16 %v169
    %v2618 = vunpack.c.l.b16 %v170
    %v2619 = vunpack.c.h.b16 %v170
    %v2620 = vunpack.c.l.b16 %v171
    %v2621 = vunpack.c.h.b16 %v171
    %v2622 = vunpack.c.l.b16 %v172
    %v2623 = vunpack.c.l.b16 %v173
    %v2624 = vunpack.c.h.b16 %v173
    %v2625 = vunpack.c.l.b16 %v174
    %v2626 = vunpack.c.h.b16 %v174
    %v2627 = vunpack.c.l.b16 %v175
    %v2628 = vunpack.c.l.b16 %v176
    %v2629 = vunpack.c.h.b16 %v176
    %v2630 = vunpack.c.l.b16 %v177
    %v2631 = vunpack.c.h.b16 %v177
    %v2632 = vunpack.c.l.b16 %v178
    %v2633 = vunpack.c.l.b16 %v179
    %v2634 = vunpack.c.h.b16 %v179
    %v2635 = vunpack.c.l.b16 %v180
    %v2636 = vunpack.c.h.b16 %v180
    %v2637 = vunpack.c.l.b16 %v181
    %v2638 = vunpack.c.l.b16 %v182
    %v2639 = vunpack.c.h.b16 %v182
    %v2640 = vunpack.c.l.b16 %v183
    %v2641 = vunpack.c.h.b16 %v183
    %v2642 = vunpack.c.l.b16 %v184
    %v2643 = vunpack.c.l.b16 %v185
    %v2644 = vunpack.c.h.b16 %v185
    %v2645 = vunpack.c.l.b16 %v186
    %v2646 = vunpack.c.h.b16 %v186
    %v2647 = vunpack.c.l.b16 %v187
    %v2648 = vunpack.c.l.b16 %v188
    %v2649 = vunpack.c.h.b16 %v188
    %v2650 = vunpack.c.l.b16 %v189
    %v2651 = vunpack.c.h.b16 %v189
    %v2652 = vunpack.c.l.b16 %v190
    %v2653 = vunpack.c.l.b16 %v191
    %v2654 = vunpack.c.h.b16 %v191
    %v2655 = vunpack.c.l.b16 %v192
    %v2656 = vunpack.c.h.b16 %v192
    %v2657 = vunpack.c.l.b16 %v193
    %v2658 = vunpack.c.l.b16 %v194
    %v2659 = vunpack.c.h.b16 %v194
    %v2660 = vunpack.c.l.b16 %v195
    %v2661 = vunpack.c.h.b16 %v195
    %v2662 = vunpack.c.l.b16 %v196
    %v2663 = vunpack.c.l.b16 %v197
    %v2664 = vunpack.c.h.b16 %v197
    %v2665 = vunpack.c.l.b16 %v198
    %v2666 = vunpack.c.h.b16 %v198
    %v2667 = vunpack.c.l.b16 %v199
    %v2668 = vunpack.c.l.b16 %v200
    %v2669 = vunpack.c.h.b16 %v200
    %v2670 = vunpack.c.l.b16 %v201
    %v2671 = vunpack.c.h.b16 %v201
    %v2672 = vunpack.c.l.b16 %v202
    %v2673 = vunpack.c.l.b16 %v203
    %v2674 = vunpack.c.h.b16 %v203
    %v2675 = vunpack.c.l.b16 %v204
    %v2676 = vunpack.c.h.b16 %v204
    %v2677 = vunpack.c.l.b16 %v205
    %v2678 = vunpack.c.l.b16 %v206
    %v2679 = vunpack.c.h.b16 %v206
    %v2680 = vunpack.c.l.b16 %v207
    %v2681 = vunpack.c.h.b16 %v207
    %v2682 = vunpack.c.l.b16 %v208
    %v2683 = vunpack.c.l.b16 %v209
    %v2684 = vunpack.c.h.b16 %v209
    %v2685 = vunpack.c.l.b16 %v210
    %v2686 = vunpack.c.h.b16 %v210
    %v2687 = vunpack.c.l.b16 %v211
    %v2688 = vunpack.c.l.b16 %v212
    %v2689 = vunpack.c.h.b16 %v212
    %v2690 = vunpack.c.l.b16 %v213
    %v2691 = vunpack.c.h.b16 %v213
    %v2692 = vunpack.c.l.b16 %v214
    %v2693 = vunpack.c.l.b16 %v215
    %v2694 = vunpack.c.h.b16 %v215
    %v2695 = vunpack.c.l.b16 %v216
    %v2696 = vunpack.c.h.b16 %v216
    %v2697 = vunpack.c.l.b16 %v217
    %v2698 = vunpack.c.l.b16 %v218
    %v2699 = vunpack.c.h.b16 %v218
    %v2700 = vunpack.c.l.b16 %v219
    %v2701 = vunpack.c.h.b16 %v219
    %v2702 = vunpack.c.l.b16 %v220
    %v2703 = vunpack.c.l.b16 %v221
    %v2704 = vunpack.c.h.b16 %v221
    %v2705 = vunpack.c.l.b16 %v222
    %v2706 = vunpack.c.h.b16 %v222
    %v2707 = vunpack.c.l.b16 %v223
    %v2708 = vunpack.c.l.b16 %v224
    %v2709 = vunpack.c.h.b16 %v224
    %v2710 = vunpack.c.l.b16 %v225
    %v2711 = vunpack.c.h.b16 %v225
    %v2712 = vunpack.c.l.b16 %v226
    %v2713 = vunpack.c.l.b16 %v227
    %v2714 = vunpack.c.h.b16 %v227
    %v2715 = vunpack.c.l.b16 %v228
    %v2716 = vunpack.c.h.b16 %v228
    %v2717 = vunpack.c.l.b16 %v229
    %v2718 = vunpack.c.l.b16 %v230
    %v2719 = vunpack.c.h.b16 %v230
    %v2720 = vunpack.c.l.b16 %v231
    %v2721 = vunpack.c.h.b16 %v231
    %v2722 = vunpack.c.l.b16 %v232
    %v2723 = vunpack.c.l.b16 %v233
    %v2724 = vunpack.c.h.b16 %v233
    %v2725 = vunpack.c.l.b16 %v234
    %v2726 = vunpack.c.h.b16 %v234
    %v2727 = vunpack.c.l.b16 %v235
    %v2728 = vunpack.c.l.b16 %v236
    %v2729 = vunpack.c.h.b16 %v236
    %v2730 = vunpack.c.l.b16 %v237
    %v2731 = vunpack.c.h.b16 %v237
    %v2732 = vunpack.c.l.b16 %v238
    %v2733 = vunpack.c.l.b16 %v239
    %v2734 = vunpack.c.h.b16 %v239
    %v2735 = vunpack.c.l.b16 %v240
    %v2736 = vunpack.c.h.b16 %v240
    %v2737 = vunpack.c.l.b16 %v241
    %v2738 = vunpack.c.l.b16 %v242
    %v2739 = vunpack.c.h.b16 %v242
    %v2740 = vunpack.c.l.b16 %v243
    %v2741 = vunpack.c.h.b16 %v243
    %v2742 = vunpack.c.l.b16 %v244
    %v2743 = vunpack.c.l.b16 %v245
    %v2744 = vunpack.c.h.b16 %v245
    %v2745 = vunpack.c.l.b16 %v246
    %v2746 = vunpack.c.h.b16 %v246
    %v2747 = vunpack.c.l.b16 %v247
    %v2748 = vunpack.c.l.b16 %v248
    %v2749 = vunpack.c.h.b16 %v248
    %v2750 = vunpack.c.l.b16 %v249
    %v2751 = vunpack.c.h.b16 %v249
    %v2752 = vunpack.c.l.b16 %v250
    %v2753 = vunpack.c.l.b16 %v251
    %v2754 = vunpack.c.h.b16 %v251
    %v2755 = vunpack.c.l.b16 %v252
    %v2756 = vunpack.c.h.b16 %v252
    %v2757 = vunpack.c.l.b16 %v253
    %v2758 = vunpack.c.l.b16 %v254
    %v2759 = vunpack.c.h.b16 %v254
    %v2760 = vunpack.c.l.b16 %v255
    %v2761 = vunpack.c.h.b16 %v255
    %v2762 = vunpack.c.l.b16 %v256
    %v2763 = vunpack.c.l.b16 %v257
    %v2764 = vunpack.c.h.b16 %v257
    %v2765 = vunpack.c.l.b16 %v258
    %v2766 = vunpack.c.h.b16 %v258
    %v2767 = vunpack.c.l.b16 %v259
    %v2768 = vunpack.c.l.b16 %v260
    %v2769 = vunpack.c.h.b16 %v260
    %v2770 = vunpack.c.l.b16 %v261
    %v2771 = vunpack.c.h.b16 %v261
    %v2772 = vunpack.c.l.b16 %v262
    %v2773 = vunpack.c.l.b16 %v263
    %v2774 = vunpack.c.h.b16 %v263
    %v2775 = vunpack.c.l.b16 %v264
    %v2776 = vunpack.c.h.b16 %v264
    %v2777 = vunpack.c.l.b16 %v265
    %v2778 = vunpack.c.l.b16 %v266
    %v2779 = vunpack.c.h.b16 %v266
    %v2780 = vunpack.c.l.b16 %v267
    %v2781 = vunpack.c.h.b16 %v267
    %v2782 = vunpack.c.l.b16 %v268
    %v2783 = vunpack.c.l.b16 %v269
    %v2784 = vunpack.c.h.b16 %v269
    %v2785 = vunpack.c.l.b16 %v270
    %v2786 = vunpack.c.h.b16 %v270
    %v2787 = vunpack.c.l.b16 %v271
    %v2788 = vunpack.c.l.b16 %v272
    %v2789 = vunpack.c.h.b16 %v272
    %v2790 = vunpack.c.l.b16 %v273
    %v2791 = vunpack.c.h.b16 %v273
    %v2792 = vunpack.c.l.b16 %v274
    %v2793 = vunpack.c.l.b16 %v275
    %v2794 = vunpack.c.h.b16 %v275
    %v2795 = vunpack.c.l.b16 %v276
    %v2796 = vunpack.c.h.b16 %v276
    %v2797 = vunpack.c.l.b16 %v277
    %v2798 = vunpack.c.l.b16 %v278
    %v2799 = vunpack.c.h.b16 %v278
    %v2800 = vunpack.c.l.b16 %v279
    %v2801 = vunpack.c.h.b16 %v279
    %v2802 = vunpack.c.l.b16 %v280
    %v2803 = vunpack.c.l.b16 %v281
    %v2804 = vunpack.c.h.b16 %v281
    %v2805 = vunpack.c.l.b16 %v282
    %v2806 = vunpack.c.h.b16 %v282
    %v2807 = vunpack.c.l.b16 %v283
    %v2808 = vunpack.c.l.b16 %v284
    %v2809 = vunpack.c.h.b16 %v284
    %v2810 = vunpack.c.l.b16 %v285
    %v2811 = vunpack.c.h.b16 %v285
    %v2812 = vunpack.c.l.b16 %v286
    %v2813 = vunpack.c.l.b16 %v287
    %v2814 = vunpack.c.h.b16 %v287
    %v2815 = vunpack.c.l.b16 %v288
    %v2816 = vunpack.c.h.b16 %v288
    %v2817 = vunpack.c.l.b16 %v289
    %v2818 = vunpack.c.l.b16 %v290
    %v2819 = vunpack.c.h.b16 %v290
    %v2820 = vunpack.c.l.b16 %v291
    %v2821 = vunpack.c.h.b16 %v291
    %v2822 = vunpack.c.l.b16 %v292
    %v2823 = vunpack.c.l.b16 %v293
    %v2824 = vunpack.c.h.b16 %v293
    %v2825 = vunpack.c.l.b16 %v294
    %v2826 = vunpack.c.h.b16 %v294
    %v2827 = vunpack.c.l.b16 %v295
    %v2828 = vunpack.c.l.b16 %v296
    %v2829 = vunpack.c.h.b16 %v296
    %v2830 = vunpack.c.l.b16 %v297
    %v2831 = vunpack.c.h.b16 %v297
    %v2832 = vunpack.c.l.b16 %v298
    %v2833 = vunpack.c.l.b16 %v299
    %v2834 = vunpack.c.h.b16 %v299
    %v2835 = vunpack.c.l.b16 %v300
    %v2836 = vunpack.c.h.b16 %v300
    %v2837 = vunpack.c.l.b16 %v301
    %v2838 = vunpack.c.l.b16 %v302
    %v2839 = vunpack.c.h.b16 %v302
    %v2840 = vunpack.c.l.b16 %v303
    %v2841 = vunpack.c.h.b16 %v303
    %v2842 = vunpack.c.l.b16 %v304
    %v2843 = vunpack.c.l.b16 %v305
    %v2844 = vunpack.c.h.b16 %v305
    %v2845 = vunpack.c.l.b16 %v306
    %v2846 = vunpack.c.h.b16 %v306
    %v2847 = vunpack.c.l.b16 %v307
    %v2848 = vunpack.c.l.b16 %v308
    %v2849 = vunpack.c.h.b16 %v308
    %v2850 = vunpack.c.l.b16 %v309
    %v2851 = vunpack.c.h.b16 %v309
    %v2852 = vunpack.c.l.b16 %v310
    %v2853 = vunpack.c.l.b16 %v311
    %v2854 = vunpack.c.h.b16 %v311
    %v2855 = vunpack.c.l.b16 %v312
    %v2856 = vunpack.c.h.b16 %v312
    %v2857 = vunpack.c.l.b16 %v313
    %v2858 = vunpack.c.l.b16 %v314
    %v2859 = vunpack.c.h.b16 %v314
    %v2860 = vunpack.c.l.b16 %v315
    %v2861 = vunpack.c.h.b16 %v315
    %v2862 = vunpack.c.l.b16 %v316
    %v2863 = vunpack.c.l.b16 %v317
    %v2864 = vunpack.c.h.b16 %v317
    %v2865 = vunpack.c.l.b16 %v318
    %v2866 = vunpack.c.h.b16 %v318
    %v2867 = vunpack.c.l.b16 %v319
    %v2868 = vunpack.c.l.b16 %v320
    %v2869 = vunpack.c.h.b16 %v320
    %v2870 = vunpack.c.l.b16 %v321
    %v2871 = vunpack.c.h.b16 %v321
    %v2872 = vunpack.c.l.b16 %v322
    %v2873 = vunpack.c.l.b16 %v323
    %v2874 = vunpack.c.h.b16 %v323
    %v2875 = vunpack.c.l.b16 %v324
    %v2876 = vunpack.c.h.b16 %v324
    %v2877 = vunpack.c.l.b16 %v325
    %v2878 = vunpack.c.l.b16 %v326
    %v2879 = vunpack.c.h.b16 %v326
    %v2880 = vunpack.c.l.b16 %v327
    %v2881 = vunpack.c.h.b16 %v327
    %v2882 = vunpack.c.l.b16 %v328
    %v2883 = vunpack.c.l.b16 %v329
    %v2884 = vunpack.c.h.b16 %v329
    %v2885 = vunpack.c.l.b16 %v330
    %v2886 = vunpack.c.h.b16 %v330
    %v2887 = vunpack.c.l.b16 %v331
    %v2888 = vunpack.c.l.b16 %v332
    %v2889 = vunpack.c.h.b16 %v332
    %v2890 = vunpack.c.l.b16 %v333
    %v2891 = vunpack.c.h.b16 %v333
    %v2892 = vunpack.c.l.b16 %v334
    %v2893 = vunpack.c.l.b16 %v335
    %v2894 = vunpack.c.h.b16 %v335
    %v2895 = vunpack.c.l.b16 %v336
    %v2896 = vunpack.c.h.b16 %v336
    %v2897 = vunpack.c.l.b16 %v337
    %v2898 = vunpack.c.l.b16 %v338
    %v2899 = vunpack.c.h.b16 %v338
    %v2900 = vunpack.c.l.b16 %v339
    %v2901 = vunpack.c.h.b16 %v339
    %v2902 = vunpack.c.l.b16 %v340
    %v2903 = vunpack.c.l.b16 %v341
    %v2904 = vunpack.c.h.b16 %v341
    %v2905 = vunpack.c.l.b16 %v342
    %v2906 = vunpack.c.h.b16 %v342
    %v2907 = vunpack.c.l.b16 %v343
    %v2908 = vunpack.c.l.b16 %v344
    %v2909 = vunpack.c.h.b16 %v344
    %v2910 = vunpack.c.l.b16 %v345
    %v2911 = vunpack.c.h.b16 %v345
    %v2912 = vunpack.c.l.b16 %v346
    %v2913 = vunpack.c.l.b16 %v347
    %v2914 = vunpack.c.h.b16 %v347
    %v2915 = vunpack.c.l.b16 %v348
    %v2916 = vunpack.c.h.b16 %v348
    %v2917 = vunpack.c.l.b16 %v349
    %v2918 = vunpack.c.l.b16 %v350
    %v2919 = vunpack.c.h.b16 %v350
    %v2920 = vunpack.c.l.b16 %v351
    %v2921 = vunpack.c.h.b16 %v351
    %v2922 = vunpack.c.l.b16 %v352
    %v2923 = vunpack.c.l.b16 %v353
    %v2924 = vunpack.c.h.b16 %v353
    %v2925 = vunpack.c.l.b16 %v354
    %v2926 = vunpack.c.h.b16 %v354
    %v2927 = vunpack.c.l.b16 %v355
    %v2928 = vunpack.c.l.b16 %v356
    %v2929 = vunpack.c.h.b16 %v356
    %v2930 = vunpack.c.l.b16 %v357
    %v2931 = vunpack.c.h.b16 %v357
    %v2932 = vunpack.c.l.b16 %v358
    %v2933 = vunpack.c.l.b16 %v359
    %v2934 = vunpack.c.h.b16 %v359
    %v2935 = vunpack.c.l.b16 %v360
    %v2936 = vunpack.c.h.b16 %v360
    %v2937 = vunpack.c.l.b16 %v361
    %v2938 = vunpack.c.l.b16 %v362
    %v2939 = vunpack.c.h.b16 %v362
    %v2940 = vunpack.c.l.b16 %v363
    %v2941 = vunpack.c.h.b16 %v363
    %v2942 = vunpack.c.l.b16 %v364
    %v2943 = vunpack.c.l.b16 %v365
    %v2944 = vunpack.c.h.b16 %v365
    %v2945 = vunpack.c.l.b16 %v366
    %v2946 = vunpack.c.h.b16 %v366
    %v2947 = vunpack.c.l.b16 %v367
    %v2948 = vunpack.c.l.b16 %v368
    %v2949 = vunpack.c.h.b16 %v368
    %v2950 = vunpack.c.l.b16 %v369
    %v2951 = vunpack.c.h.b16 %v369
    %v2952 = vunpack.c.l.b16 %v370
    %v2953 = vunpack.c.l.b16 %v371
    %v2954 = vunpack.c.h.b16 %v371
    %v2955 = vunpack.c.l.b16 %v372
    %v2956 = vunpack.c.h.b16 %v372
    %v2957 = vunpack.c.l.b16 %v373
    %v2958 = vunpack.c.l.b16 %v374
    %v2959 = vunpack.c.h.b16 %v374
    %v2960 = vunpack.c.l.b16 %v375
    %v2961 = vunpack.c.h.b16 %v375
    %v2962 = vunpack.c.l.b16 %v376
    %v2963 = vunpack.c.l.b16 %v377
    %v2964 = vunpack.c.h.b16 %v377
    %v2965 = vunpack.c.l.b16 %v378
    %v2966 = vunpack.c.h.b16 %v378
    %v2967 = vunpack.c.l.b16 %v379
    %v2968 = vunpack.c.l.b16 %v380
    %v2969 = vunpack.c.h.b16 %v380
    %v2970 = vunpack.c.l.b16 %v381
    %v2971 = vunpack.c.h.b16 %v381
    %v2972 = vunpack.c.l.b16 %v382
    %v2973 = vunpack.c.l.b16 %v383
    %v2974 = vunpack.c.h.b16 %v383
    %v2975 = vunpack.c.l.b16 %v384
    %v2976 = vunpack.c.h.b16 %v384
    %v2977 = vunpack.c.l.b16 %v385
    %v2978 = vunpack.c.l.b16 %v386
    %v2979 = vunpack.c.h.b16 %v386
    %v2980 = vunpack.c.l.b16 %v387
    %v2981 = vunpack.c.h.b16 %v387
    %v2982 = vunpack.c.l.b16 %v388
    %v2983 = vunpack.c.l.b16 %v389
    %v2984 = vunpack.c.h.b16 %v389
    %v2985 = vunpack.c.l.b16 %v390
    %v2986 = vunpack.c.h.b16 %v390
    %v2987 = vunpack.c.l.b16 %v391
    %v2988 = vunpack.c.l.b16 %v392
    %v2989 = vunpack.c.h.b16 %v392
    %v2990 = vunpack.c.l.b16 %v393
    %v2991 = vunpack.c.h.b16 %v393
    %v2992 = vunpack.c.l.b16 %v394
    %v2993 = vunpack.c.l.b16 %v395
    %v2994 = vunpack.c.h.b16 %v395
    %v2995 = vunpack.c.l.b16 %v396
    %v2996 = vunpack.c.h.b16 %v396
    %v2997 = vunpack.c.l.b16 %v397
    %v2998 = vunpack.c.l.b16 %v398
    %v2999 = vunpack.c.h.b16 %v398
    %v3000 = vunpack.c.l.b16 %v399
    %v3001 = vunpack.c.h.b16 %v399
    %v3002 = vunpack.c.l.b16 %v400
    %v3003 = vunpack.c.l.b16 %v401
    %v3004 = vunpack.c.h.b16 %v401
    %v3005 = vunpack.c.l.b16 %v402
    %v3006 = vunpack.c.h.b16 %v402
    %v3007 = vunpack.c.l.b16 %v403
    %v3008 = vunpack.c.l.b16 %v404
    %v3009 = vunpack.c.h.b16 %v404
    %v3010 = vunpack.c.l.b16 %v405
    %v3011 = vunpack.c.h.b16 %v405
    %v3012 = vunpack.c.l.b16 %v406
    %v3013 = vunpack.c.l.b16 %v407
    %v3014 = vunpack.c.h.b16 %v407
    %v3015 = vunpack.c.l.b16 %v408
    %v3016 = vunpack.c.h.b16 %v408
    %v3017 = vunpack.c.l.b16 %v409
    %v3018 = vunpack.c.l.b16 %v410
    %v3019 = vunpack.c.h.b16 %v410
    %v3020 = vunpack.c.l.b16 %v411
    %v3021 = vunpack.c.h.b16 %v411
    %v3022 = vunpack.c.l.b16 %v412
    %v3023 = vunpack.c.l.b16 %v413
    %v3024 = vunpack.c.h.b16 %v413
    %v3025 = vunpack.c.l.b16 %v414
    %v3026 = vunpack.c.h.b16 %v414
    %v3027 = vunpack.c.l.b16 %v415
    %v3028 = vunpack.c.l.b16 %v416
    %v3029 = vunpack.c.h.b16 %v416
    %v3030 = vunpack.c.l.b16 %v417
    %v3031 = vunpack.c.h.b16 %v417
    %v3032 = vunpack.c.l.b16 %v418
    %v3033 = vunpack.c.l.b16 %v419
    %v3034 = vunpack.c.h.b16 %v419
    %v3035 = vunpack.c.l.b16 %v420
    %v3036 = vunpack.c.h.b16 %v420
    %v3037 = vunpack.c.l.b16 %v421
    %v3038 = vunpack.c.l.b16 %v422
    %v3039 = vunpack.c.h.b16 %v422
    %v3040 = vunpack.c.l.b16 %v423
    %v3041 = vunpack.c.h.b16 %v423
    %v3042 = vunpack.c.l.b16 %v424
    %v3043 = vunpack.c.l.b16 %v425
    %v3044 = vunpack.c.h.b16 %v425
    %v3045 = vunpack.c.l.b16 %v426
    %v3046 = vunpack.c.h.b16 %v426
    %v3047 = vunpack.c.l.b16 %v427
    %v3048 = vunpack.c.l.b16 %v428
    %v3049 = vunpack.c.h.b16 %v428
    %v3050 = vunpack.c.l.b16 %v429
    %v3051 = vunpack.c.h.b16 %v429
    %v3052 = vunpack.c.l.b16 %v430
    %v3053 = vunpack.c.l.b16 %v431
    %v3054 = vunpack.c.h.b16 %v431
    %v3055 = vunpack.c.l.b16 %v432
    %v3056 = vunpack.c.h.b16 %v432
    %v3057 = vunpack.c.l.b16 %v433
    %v3058 = vunpack.c.l.b16 %v434
    %v3059 = vunpack.c.h.b16 %v434
    %v3060 = vunpack.c.l.b16 %v435
    %v3061 = vunpack.c.h.b16 %v435
    %v3062 = vunpack.c.l.b16 %v436
    %v3063 = vunpack.c.l.b16 %v437
    %v3064 = vunpack.c.h.b16 %v437
    %v3065 = vunpack.c.l.b16 %v438
    %v3066 = vunpack.c.h.b16 %v438
    %v3067 = vunpack.c.l.b16 %v439
    %v3068 = vunpack.c.l.b16 %v440
    %v3069 = vunpack.c.h.b16 %v440
    %v3070 = vunpack.c.l.b16 %v441
    %v3071 = vunpack.c.h.b16 %v441
    %v3072 = vunpack.c.l.b16 %v442
    %v3073 = vunpack.c.l.b16 %v443
    %v3074 = vunpack.c.h.b16 %v443
    %v3075 = vunpack.c.l.b16 %v444
    %v3076 = vunpack.c.h.b16 %v444
    %v3077 = vunpack.c.l.b16 %v445
    %v3078 = vunpack.c.l.b16 %v446
    %v3079 = vunpack.c.h.b16 %v446
    %v3080 = vunpack.c.l.b16 %v447
    %v3081 = vunpack.c.h.b16 %v447
    %v3082 = vunpack.c.l.b16 %v448
    %v3083 = vunpack.c.l.b16 %v449
    %v3084 = vunpack.c.h.b16 %v449
    %v3085 = vunpack.c.l.b16 %v450
    %v3086 = vunpack.c.h.b16 %v450
    %v3087 = vunpack.c.l.b16 %v451
    %v3088 = vunpack.c.l.b16 %v452
    %v3089 = vunpack.c.h.b16 %v452
    %v3090 = vunpack.c.l.b16 %v453
    %v3091 = vunpack.c.h.b16 %v453
    %v3092 = vunpack.c.l.b16 %v454
    %v3093 = vunpack.c.l.b16 %v455
    %v3094 = vunpack.c.h.b16 %v455
    %v3095 = vunpack.c.l.b16 %v456
    %v3096 = vunpack.c.h.b16 %v456
    %v3097 = vunpack.c.l.b16 %v457
    %v3098 = vunpack.c.l.b16 %v458
    %v3099 = vunpack.c.h.b16 %v458
    %v3100 = vunpack.c.l.b16 %v459
    %v3101 = vunpack.c.h.b16 %v459
    %v3102 = vunpack.c.l.b16 %v460
    %v3103 = vunpack.c.l.b16 %v461
    %v3104 = vunpack.c.h.b16 %v461
    %v3105 = vunpack.c.l.b16 %v462
    %v3106 = vunpack.c.h.b16 %v462
    %v3107 = vunpack.c.l.b16 %v463
    %v3108 = vunpack.c.l.b16 %v464
    %v3109 = vunpack.c.h.b16 %v464
    %v3110 = vunpack.c.l.b16 %v465
    %v3111 = vunpack.c.h.b16 %v465
    %v3112 = vunpack.c.l.b16 %v466
    %v3113 = vunpack.c.l.b16 %v467
    %v3114 = vunpack.c.h.b16 %v467
    %v3115 = vunpack.c.l.b16 %v468
    %v3116 = vunpack.c.h.b16 %v468
    %v3117 = vunpack.c.l.b16 %v469
    %v3118 = vunpack.c.l.b16 %v470
    %v3119 = vunpack.c.h.b16 %v470
    %v3120 = vunpack.c.l.b16 %v471
    %v3121 = vunpack.c.h.b16 %v471
    %v3122 = vunpack.c.l.b16 %v472
    %v3123 = vunpack.c.l.b16 %v473
    %v3124 = vunpack.c.h.b16 %v473
    %v3125 = vunpack.c.l.b16 %v474
    %v3126 = vunpack.c.h.b16 %v474
    %v3127 = vunpack.c.l.b16 %v475
    %v3128 = vunpack.c.l.b16 %v476
    %v3129 = vunpack.c.h.b16 %v476
    %v3130 = vunpack.c.l.b16 %v477
    %v3131 = vunpack.c.h.b16 %v477
    %v3132 = vunpack.c.l.b16 %v478
    %v3133 = vunpack.c.l.b16 %v479
    %v3134 = vunpack.c.h.b16 %v479
    %v3135 = vunpack.c.l.b16 %v480
    %v3136 = vunpack.c.h.b16 %v480
    %v3137 = vunpack.c.l.b16 %v481
    %v3138 = vunpack.c.l.b16 %v482
    %v3139 = vunpack.c.h.b16 %v482
    %v3140 = vunpack.c.l.b16 %v483
    %v3141 = vunpack.c.h.b16 %v483
    %v3142 = vunpack.c.l.b16 %v484
    %v3143 = vunpack.c.l.b16 %v485
    %v3144 = vunpack.c.h.b16 %v485
    %v3145 = vunpack.c.l.b16 %v486
    %v3146 = vunpack.c.h.b16 %v486
    %v3147 = vunpack.c.l.b16 %v487
    %v3148 = vunpack.c.l.b16 %v488
    %v3149 = vunpack.c.h.b16 %v488
    %v3150 = vunpack.c.l.b16 %v489
    %v3151 = vunpack.c.h.b16 %v489
    %v3152 = vunpack.c.l.b16 %v490
    %v3153 = vunpack.c.l.b16 %v491
    %v3154 = vunpack.c.h.b16 %v491
    %v3155 = vunpack.c.l.b16 %v492
    %v3156 = vunpack.c.h.b16 %v492
    %v3157 = vunpack.c.l.b16 %v493
    %v3158 = vunpack.c.l.b16 %v494
    %v3159 = vunpack.c.h.b16 %v494
    %v3160 = vunpack.c.l.b16 %v495
    %v3161 = vunpack.c.h.b16 %v495
    %v3162 = vunpack.c.l.b16 %v496
    %v3163 = vunpack.c.l.b16 %v497
    %v3164 = vunpack.c.h.b16 %v497
    %v3165 = vunpack.c.l.b16 %v498
    %v3166 = vunpack.c.h.b16 %v498
    %v3167 = vunpack.c.l.b16 %v499
    %v3168 = vunpack.c.l.b16 %v500
    %v3169 = vunpack.c.h.b16 %v500
    %v3170 = vunpack.c.l.b16 %v501
    %v3171 = vunpack.c.h.b16 %v501
    %v3172 = vunpack.c.l.b16 %v502
    %v3173 = vunpack.c.l.b16 %v503
    %v3174 = vunpack.c.h.b16 %v503
    %v3175 = vunpack.c.l.b16 %v504
    %v3176 = vunpack.c.h.b16 %v504
    %v3177 = vunpack.c.l.b16 %v505
    %v3178 = vunpack.c.l.b16 %v506
    %v3179 = vunpack.c.h.b16 %v506
    %v3180 = vunpack.c.l.b16 %v507
    %v3181 = vunpack.c.h.b16 %v507
    %v3182 = vunpack.c.l.b16 %v508
    %v3183 = vunpack.c.l.b16 %v509
    %v3184 = vunpack.c.h.b16 %v509
    %v3185 = vunpack.c.l.b16 %v510
    %v3186 = vunpack.c.h.b16 %v510
    %v3187 = vunpack.c.l.b16 %v511
    %v3188 = vunpack.c.l.b16 %v512
    %v3189 = vunpack.c.h.b16 %v512
    %v3190 = vunpack.c.l.b16 %v513
    %v3191 = vunpack.c.h.b16 %v513
    %v3192 = vunpack.c.l.b16 %v514
    %v3193 = vunpack.c.l.b16 %v515
    %v3194 = vunpack.c.h.b16 %v515
    %v3195 = vunpack.c.l.b16 %v516
    %v3196 = vunpack.c.h.b16 %v516
    %v3197 = vunpack.c.l.b16 %v517
    %v3198 = vunpack.c.l.b16 %v518
    %v3199 = vunpack.c.h.b16 %v518
    %v3200 = vunpack.c.l.b16 %v519
    %v3201 = vunpack.c.h.b16 %v519
    %v3202 = vunpack.c.l.b16 %v520
    %v3203 = vunpack.c.l.b16 %v521
    %v3204 = vunpack.c.h.b16 %v521
    %v3205 = vunpack.c.l.b16 %v522
    %v3206 = vunpack.c.h.b16 %v522
    %v3207 = vunpack.c.l.b16 %v523
    %v3208 = vunpack.c.l.b16 %v524
    %v3209 = vunpack.c.h.b16 %v524
    %v3210 = vunpack.c.l.b16 %v525
    %v3211 = vunpack.c.h.b16 %v525
    %v3212 = vunpack.c.l.b16 %v526
    %v3213 = vunpack.c.l.b16 %v527
    %v3214 = vunpack.c.h.b16 %v527
    %v3215 = vunpack.c.l.b16 %v528
    %v3216 = vunpack.c.h.b16 %v528
    %v3217 = vunpack.c.l.b16 %v529
    %v3218 = vunpack.c.l.b16 %v530
    %v3219 = vunpack.c.h.b16 %v530
    %v3220 = vunpack.c.l.b16 %v531
    %v3221 = vunpack.c.h.b16 %v531
    %v3222 = vunpack.c.l.b16 %v532
    %v3223 = vunpack.c.l.b16 %v533
    %v3224 = vunpack.c.h.b16 %v533
    %v3225 = vunpack.c.l.b16 %v534
    %v3226 = vunpack.c.h.b16 %v534
    %v3227 = vunpack.c.l.b16 %v535
    %v3228 = vunpack.c.l.b16 %v536
    %v3229 = vunpack.c.h.b16 %v536
    %v3230 = vunpack.c.l.b16 %v537
    %v3231 = vunpack.c.h.b16 %v537
    %v3232 = vunpack.c.l.b16 %v538
    %v3233 = vunpack.c.l.b16 %v539
    %v3234 = vunpack.c.h.b16 %v539
    %v3235 = vunpack.c.l.b16 %v540
    %v3236 = vunpack.c.h.b16 %v540
    %v3237 = vunpack.c.l.b16 %v541
    %v3238 = vunpack.c.l.b16 %v542
    %v3239 = vunpack.c.h.b16 %v542
    %v3240 = vunpack.c.l.b16 %v543
    %v3241 = vunpack.c.h.b16 %v543
    %v3242 = vunpack.c.l.b16 %v544
    %v3243 = vunpack.c.l.b16 %v545
    %v3244 = vunpack.c.h.b16 %v545
    %v3245 = vunpack.c.l.b16 %v546
    %v3246 = vunpack.c.h.b16 %v546
    %v3247 = vunpack.c.l.b16 %v547
    %v3248 = vunpack.c.l.b16 %v548
    %v3249 = vunpack.c.h.b16 %v548
    %v3250 = vunpack.c.l.b16 %v549
    %v3251 = vunpack.c.h.b16 %v549
    %v3252 = vunpack.c.l.b16 %v550
    %v3253 = vunpack.c.l.b16 %v551
    %v3254 = vunpack.c.h.b16 %v551
    %v3255 = vunpack.c.l.b16 %v552
    %v3256 = vunpack.c.h.b16 %v552
    %v3257 = vunpack.c.l.b16 %v553
    %v3258 = vunpack.c.l.b16 %v554
    %v3259 = vunpack.c.h.b16 %v554
    %v3260 = vunpack.c.l.b16 %v555
    %v3261 = vunpack.c.h.b16 %v555
    %v3262 = vunpack.c.l.b16 %v556
    %v3263 = vunpack.c.l.b16 %v557
    %v3264 = vunpack.c.h.b16 %v557
    %v3265 = vunpack.c.l.b16 %v558
    %v3266 = vunpack.c.h.b16 %v558
    %v3267 = vunpack.c.l.b16 %v559
    %v3268 = vunpack.c.l.b16 %v560
    %v3269 = vunpack.c.h.b16 %v560
    %v3270 = vunpack.c.l.b16 %v561
    %v3271 = vunpack.c.h.b16 %v561
    %v3272 = vunpack.c.l.b16 %v562
    %v3273 = vunpack.c.l.b16 %v563
    %v3274 = vunpack.c.h.b16 %v563
    %v3275 = vunpack.c.l.b16 %v564
    %v3276 = vunpack.c.h.b16 %v564
    %v3277 = vunpack.c.l.b16 %v565
    %v3278 = vunpack.c.l.b16 %v566
    %v3279 = vunpack.c.h.b16 %v566
    %v3280 = vunpack.c.l.b16 %v567
    %v3281 = vunpack.c.h.b16 %v567
    %v3282 = vunpack.c.l.b16 %v568
    %v3283 = vunpack.c.l.b16 %v569
    %v3284 = vunpack.c.h.b16 %v569
    %v3285 = vunpack.c.l.b16 %v570
    %v3286 = vunpack.c.h.b16 %v570
    %v3287 = vunpack.c.l.b16 %v571
    %v3288 = vunpack.c.l.b16 %v572
    %v3289 = vunpack.c.h.b16 %v572
    %v3290 = vunpack.c.l.b16 %v573
    %v3291 = vunpack.c.h.b16 %v573
    %v3292 = vunpack.c.l.b16 %v574
    %v3293 = vunpack.c.l.b16 %v575
    %v3294 = vunpack.c.h.b16 %v575
    %v3295 = vunpack.c.l.b16 %v576
    %v3296 = vunpack.c.h.b16 %v576
    %v3297 = vunpack.c.l.b16 %v577
    %v3298 = vunpack.c.l.b16 %v578
    %v3299 = vunpack.c.h.b16 %v578
    %v3300 = vunpack.c.l.b16 %v579
    %v3301 = vunpack.c.h.b16 %v579
    %v3302 = vunpack.c.l.b16 %v580
    %v3303 = vunpack.c.l.b16 %v581
    %v3304 = vunpack.c.h.b16 %v581
    %v3305 = vunpack.c.l.b16 %v582
    %v3306 = vunpack.c.h.b16 %v582
    %v3307 = vunpack.c.l.b16 %v583
    %v3308 = vunpack.c.l.b16 %v584
    %v3309 = vunpack.c.h.b16 %v584
    %v3310 = vunpack.c.l.b16 %v585
    %v3311 = vunpack.c.h.b16 %v585
    %v3312 = vunpack.c.l.b16 %v586
    %v3313 = vunpack.c.l.b16 %v587
    %v3314 = vunpack.c.h.b16 %v587
    %v3315 = vunpack.c.l.b16 %v588
    %v3316 = vunpack.c.h.b16 %v588
    %v3317 = vunpack.c.l.b16 %v589
    %v3318 = vunpack.c.l.b16 %v590
    %v3319 = vunpack.c.h.b16 %v590
    %v3320 = vunpack.c.l.b16 %v591
    %v3321 = vunpack.c.h.b16 %v591
    %v3322 = vunpack.c.l.b16 %v592
    %v3323 = vunpack.c.l.b16 %v593
    %v3324 = vunpack.c.h.b16 %v593
    %v3325 = vunpack.c.l.b16 %v594
    %v3326 = vunpack.c.h.b16 %v594
    %v3327 = vunpack.c.l.b16 %v595
    %v3328 = vunpack.c.l.b16 %v596
    %v3329 = vunpack.c.h.b16 %v596
    %v3330 = vunpack.c.l.b16 %v597
    %v3331 = vunpack.c.h.b16 %v597
    %v3332 = vunpack.c.l.b16 %v598
    %v3333 = vunpack.c.l.b16 %v599
    %v3334 = vunpack.c.h.b16 %v599
    %v3335 = vunpack.c.l.b16 %v600
    %v3336 = vunpack.c.h.b16 %v600
    %v3337 = vunpack.c.l.b16 %v601
    %v3338 = vunpack.c.l.b16 %v602
    %v3339 = vunpack.c.h.b16 %v602
    %v3340 = vunpack.c.l.b16 %v603
    %v3341 = vunpack.c.h.b16 %v603
    %v3342 = vunpack.c.l.b16 %v604
    %v3343 = vunpack.c.l.b16 %v605
    %v3344 = vunpack.c.h.b16 %v605
    %v3345 = vunpack.c.l.b16 %v606
    %v3346 = vunpack.c.h.b16 %v606
    %v3347 = vunpack.c.l.b16 %v607
    %v3348 = vunpack.c.l.b16 %v608
    %v3349 = vunpack.c.h.b16 %v608
    %v3350 = vunpack.c.l.b16 %v609
    %v3351 = vunpack.c.h.b16 %v609
    %v3352 = vunpack.c.l.b16 %v610
    %v3353 = vunpack.c.l.b16 %v611
    %v3354 = vunpack.c.h.b16 %v611
    %v3355 = vunpack.c.l.b16 %v612
    %v3356 = vunpack.c.h.b16 %v612
    %v3357 = vunpack.c.l.b16 %v613
    %v3358 = vunpack.c.l.b16 %v614
    %v3359 = vunpack.c.h.b16 %v614
    %v3360 = vunpack.c.l.b16 %v615
    %v3361 = vunpack.c.h.b16 %v615
    %v3362 = vunpack.c.l.b16 %v616
    %v3363 = vunpack.c.l.b16 %v617
    %v3364 = vunpack.c.h.b16 %v617
    %v3365 = vunpack.c.l.b16 %v618
    %v3366 = vunpack.c.h.b16 %v618
    %v3367 = vunpack.c.l.b16 %v619
    %v3368 = vunpack.c.l.b16 %v620
    %v3369 = vunpack.c.h.b16 %v620
    %v3370 = vunpack.c.l.b16 %v621
    %v3371 = vunpack.c.h.b16 %v621
    %v3372 = vunpack.c.l.b16 %v622
    %v3373 = vunpack.c.l.b16 %v623
    %v3374 = vunpack.c.h.b16 %v623
    %v3375 = vunpack.c.l.b16 %v624
    %v3376 = vunpack.c.h.b16 %v624
    %v3377 = vunpack.c.l.b16 %v625
    %v3378 = vunpack.c.l.b16 %v626
    %v3379 = vunpack.c.h.b16 %v626
    %v3380 = vunpack.c.l.b16 %v627
    %v3381 = vunpack.c.h.b16 %v627
    %v3382 = vunpack.c.l.b16 %v628
    %v3383 = vunpack.c.l.b16 %v629
    %v3384 = vunpack.c.h.b16 %v629
    %v3385 = vunpack.c.l.b16 %v630
    %v3386 = vunpack.c.h.b16 %v630
    %v3387 = vunpack.c.l.b16 %v631
    %v3388 = vunpack.c.l.b16 %v632
    %v3389 = vunpack.c.h.b16 %v632
    %v3390 = vunpack.c.l.b16 %v633
    %v3391 = vunpack.c.h.b16 %v633
    %v3392 = vunpack.c.l.b16 %v634
    %v3393 = vunpack.c.l.b16 %v635
    %v3394 = vunpack.c.h.b16 %v635
    %v3395 = vunpack.c.l.b16 %v636
    %v3396 = vunpack.c.h.b16 %v636
    %v3397 = vunpack.c.l.b16 %v637
    %v3398 = vunpack.c.l.b16 %v638
    %v3399 = vunpack.c.h.b16 %v638
    %v3400 = vunpack.c.l.b16 %v639
    %v3401 = vunpack.c.h.b16 %v639
    %v3402 = vunpack.c.l.b16 %v640
    %v3403 = vunpack.c.l.b16 %v641
    %v3404 = vunpack.c.h.b16 %v641
    %v3405 = vunpack.c.l.b16 %v642
    %v3406 = vunpack.c.h.b16 %v642
    %v3407 = vunpack.c.l.b16 %v643
    %v3408 = vunpack.c.l.b16 %v644
    %v3409 = vunpack.c.h.b16 %v644
    %v3410 = vunpack.c.l.b16 %v645
    %v3411 = vunpack.c.h.b16 %v645
    %v3412 = vunpack.c.l.b16 %v646
    %v3413 = vunpack.c.l.b16 %v647
    %v3414 = vunpack.c.h.b16 %v647
    %v3415 = vunpack.c.l.b16 %v648
    %v3416 = vunpack.c.h.b16 %v648
    %v3417 = vunpack.c.l.b16 %v649
    %v3418 = vunpack.c.l.b16 %v650
    %v3419 = vunpack.c.h.b16 %v650
    %v3420 = vunpack.c.l.b16 %v651
    %v3421 = vunpack.c.h.b16 %v651
    %v3422 = vunpack.c.l.b16 %v652
    %v3423 = vunpack.c.l.b16 %v653
    %v3424 = vunpack.c.h.b16 %v653
    %v3425 = vunpack.c.l.b16 %v654
    %v3426 = vunpack.c.h.b16 %v654
    %v3427 = vunpack.c.l.b16 %v655
    %v3428 = vunpack.c.l.b16 %v656
    %v3429 = vunpack.c.h.b16 %v656
    %v3430 = vunpack.c.l.b16 %v657
    %v3431 = vunpack.c.h.b16 %v657
    %v3432 = vunpack.c.l.b16 %v658
    %v3433 = vunpack.c.l.b16 %v659
    %v3434 = vunpack.c.h.b16 %v659
    %v3435 = vunpack.c.l.b16 %v660
    %v3436 = vunpack.c.h.b16 %v660
    %v3437 = vunpack.c.l.b16 %v661
    %v3438 = vunpack.c.l.b16 %v662
    %v3439 = vunpack.c.h.b16 %v662
    %v3440 = vunpack.c.l.b16 %v663
    %v3441 = vunpack.c.h.b16 %v663
    %v3442 = vunpack.c.l.b16 %v664
    %v3443 = vunpack.c.l.b16 %v665
    %v3444 = vunpack.c.h.b16 %v665
    %v3445 = vunpack.c.l.b16 %v666
    %v3446 = vunpack.c.h.b16 %v666
    %v3447 = vunpack.c.l.b16 %v667
    %v3448 = vunpack.c.l.b16 %v668
    %v3449 = vunpack.c.h.b16 %v668
    %v3450 = vunpack.c.l.b16 %v669
    %v3451 = vunpack.c.h.b16 %v669
    %v3452 = vunpack.c.l.b16 %v670
    %v3453 = vunpack.c.l.b16 %v671
    %v3454 = vunpack.c.h.b16 %v671
    %v3455 = vunpack.c.l.b16 %v672
    %v3456 = vunpack.c.h.b16 %v672
    %v3457 = vunpack.c.l.b16 %v673
    %v3458 = vunpack.c.l.b16 %v674
    %v3459 = vunpack.c.h.b16 %v674
    %v3460 = vunpack.c.l.b16 %v675
    %v3461 = vunpack.c.h.b16 %v675
    %v3462 = vunpack.c.l.b16 %v676
    %v3463 = vunpack.c.l.b16 %v677
    %v3464 = vunpack.c.h.b16 %v677
    %v3465 = vunpack.c.l.b16 %v678
    %v3466 = vunpack.c.h.b16 %v678
    %v3467 = vunpack.c.l.b16 %v679
    %v3468 = vunpack.c.l.b16 %v680
    %v3469 = vunpack.c.h.b16 %v680
    %v3470 = vunpack.c.l.b16 %v681
    %v3471 = vunpack.c.h.b16 %v681
    %v3472 = vunpack.c.l.b16 %v682
    %v3473 = vunpack.c.l.b16 %v683
    %v3474 = vunpack.c.h.b16 %v683
    %v3475 = vunpack.c.l.b16 %v684
    %v3476 = vunpack.c.h.b16 %v684
    %v3477 = vunpack.c.l.b16 %v685
    %v3478 = vunpack.c.l.b16 %v686
    %v3479 = vunpack.c.h.b16 %v686
    %v3480 = vunpack.c.l.b16 %v687
    %v3481 = vunpack.c.h.b16 %v687
    %v3482 = vunpack.c.l.b16 %v688
    %v3483 = vunpack.c.l.b16 %v689
    %v3484 = vunpack.c.h.b16 %v689
    %v3485 = vunpack.c.l.b16 %v690
    %v3486 = vunpack.c.h.b16 %v690
    %v3487 = vunpack.c.l.b16 %v691
    %v3488 = vunpack.c.l.b16 %v692
    %v3489 = vunpack.c.h.b16 %v692
    %v3490 = vunpack.c.l.b16 %v693
    %v3491 = vunpack.c.h.b16 %v693
    %v3492 = vunpack.c.l.b16 %v694
    %v3493 = vunpack.c.l.b16 %v695
    %v3494 = vunpack.c.h.b16 %v695
    %v3495 = vunpack.c.l.b16 %v696
    %v3496 = vunpack.c.h.b16 %v696
    %v3497 = vunpack.c.l.b16 %v697
    %v3498 = vunpack.c.l.b16 %v698
    %v3499 = vunpack.c.h.b16 %v698
    %v3500 = vunpack.c.l.b16 %v699
    %v3501 = vunpack.c.h.b16 %v699
    %v3502 = vunpack.c.l.b16 %v700
    %v3503 = vunpack.c.l.b16 %v701
    %v3504 = vunpack.c.h.b16 %v701
    %v3505 = vunpack.c.l.b16 %v702
    %v3506 = vunpack.c.h.b16 %v702
    %v3507 = vunpack.c.l.b16 %v703
    %v3508 = vunpack.c.l.b16 %v704
    %v3509 = vunpack.c.h.b16 %v704
    %v3510 = vunpack.c.l.b16 %v705
    %v3511 = vunpack.c.h.b16 %v705
    %v3512 = vunpack.c.l.b16 %v706
    %v3513 = vunpack.c.l.b16 %v707
    %v3514 = vunpack.c.h.b16 %v707
    %v3515 = vunpack.c.l.b16 %v708
    %v3516 = vunpack.c.h.b16 %v708
    %v3517 = vunpack.c.l.b16 %v709
    %v3518 = vunpack.c.l.b16 %v710
    %v3519 = vunpack.c.h.b16 %v710
    %v3520 = vunpack.c.l.b16 %v711
    %v3521 = vunpack.c.h.b16 %v711
    %v3522 = vunpack.c.l.b16 %v712
    %v3523 = vunpack.c.l.b16 %v713
    %v3524 = vunpack.c.h.b16 %v713
    %v3525 = vunpack.c.l.b16 %v714
    %v3526 = vunpack.c.h.b16 %v714
    %v3527 = vunpack.c.l.b16 %v715
    %v3528 = vunpack.c.l.b16 %v716
    %v3529 = vunpack.c.h.b16 %v716
    %v3530 = vunpack.c.l.b16 %v717
    %v3531 = vunpack.c.h.b16 %v717
    %v3532 = vunpack.c.l.b16 %v718
    %v3533 = vunpack.c.l.b16 %v719
    %v3534 = vunpack.c.h.b16 %v719
    %v3535 = vunpack.c.l.b16 %v720
    %v3536 = vunpack.c.h.b16 %v720
    %v3537 = vunpack.c.l.b16 %v721
    %v3538 = vunpack.c.l.b16 %v722
    %v3539 = vunpack.c.h.b16 %v722
    %v3540 = vunpack.c.l.b16 %v723
    %v3541 = vunpack.c.h.b16 %v723
    %v3542 = vunpack.c.l.b16 %v724
    %v3543 = vunpack.c.l.b16 %v725
    %v3544 = vunpack.c.h.b16 %v725
    %v3545 = vunpack.c.l.b16 %v726
    %v3546 = vunpack.c.h.b16 %v726
    %v3547 = vunpack.c.l.b16 %v727
    %v3548 = vunpack.c.l.b16 %v728
    %v3549 = vunpack.c.h.b16 %v728
    %v3550 = vunpack.c.l.b16 %v729
    %v3551 = vunpack.c.h.b16 %v729
    %v3552 = vunpack.c.l.b16 %v730
    %v3553 = vunpack.c.l.b16 %v731
    %v3554 = vunpack.c.h.b16 %v731
    %v3555 = vunpack.c.l.b16 %v732
    %v3556 = vunpack.c.h.b16 %v732
    %v3557 = vunpack.c.l.b16 %v733
    %v3558 = vunpack.c.l.b16 %v734
    %v3559 = vunpack.c.h.b16 %v734
    %v3560 = vunpack.c.l.b16 %v735
    %v3561 = vunpack.c.h.b16 %v735
    %v3562 = vunpack.c.l.b16 %v736
    %v3563 = vunpack.c.l.b16 %v737
    %v3564 = vunpack.c.h.b16 %v737
    %v3565 = vunpack.c.l.b16 %v738
    %v3566 = vunpack.c.h.b16 %v738
    %v3567 = vunpack.c.l.b16 %v739
    %v3568 = vunpack.c.l.b16 %v740
    %v3569 = vunpack.c.h.b16 %v740
    %v3570 = vunpack.c.l.b16 %v741
    %v3571 = vunpack.c.h.b16 %v741
    %v3572 = vunpack.c.l.b16 %v742
    %v3573 = vunpack.c.l.b16 %v743
    %v3574 = vunpack.c.h.b16 %v743
    %v3575 = vunpack.c.l.b16 %v744
    %v3576 = vunpack.c.h.b16 %v744
    %v3577 = vunpack.c.l.b16 %v745
    %v3578 = vunpack.c.l.b16 %v746
    %v3579 = vunpack.c.h.b16 %v746
    %v3580 = vunpack.c.l.b16 %v747
    %v3581 = vunpack.c.h.b16 %v747
    %v3582 = vunpack.c.l.b16 %v748
    %v3583 = vunpack.c.l.b16 %v749
    %v3584 = vunpack.c.h.b16 %v749
    %v3585 = vunpack.c.l.b16 %v750
    %v3586 = vunpack.c.h.b16 %v750
    %v3587 = vunpack.c.l.b16 %v751
    %v3588 = vunpack.c.l.b16 %v752
    %v3589 = vunpack.c.h.b16 %v752
    %v3590 = vunpack.c.l.b16 %v753
    %v3591 = vunpack.c.h.b16 %v753
    %v3592 = vunpack.c.l.b16 %v754
    %v3593 = vunpack.c.l.b16 %v755
    %v3594 = vunpack.c.h.b16 %v755
    %v3595 = vunpack.c.l.b16 %v756
    %v3596 = vunpack.c.h.b16 %v756
    %v3597 = vunpack.c.l.b16 %v757
    %v3598 = vunpack.c.l.b16 %v758
    %v3599 = vunpack.c.h.b16 %v758
    %v3600 = vunpack.c.l.b16 %v759
    %v3601 = vunpack.c.h.b16 %v759
    %v3602 = vunpack.c.l.b16 %v760
    %v3603 = vunpack.c.l.b16 %v761
    %v3604 = vunpack.c.h.b16 %v761
    %v3605 = vunpack.c.l.b16 %v762
    %v3606 = vunpack.c.h.b16 %v762
    %v3607 = vunpack.c.l.b16 %v763
    %v3608 = vunpack.c.l.b16 %v764
    %v3609 = vunpack.c.h.b16 %v764
    %v3610 = vunpack.c.l.b16 %v765
    %v3611 = vunpack.c.h.b16 %v765
    %v3612 = vunpack.c.l.b16 %v766
    %v3613 = vunpack.c.l.b16 %v767
    %v3614 = vunpack.c.h.b16 %v767
    %v3615 = vunpack.c.l.b16 %v768
    %v3616 = vunpack.c.h.b16 %v768
    %v3617 = vunpack.c.l.b16 %v769
    %v3618 = vunpack.c.l.b16 %v770
    %v3619 = vunpack.c.h.b16 %v770
    %v3620 = vunpack.c.l.b16 %v771
    %v3621 = vunpack.c.h.b16 %v771
    %v3622 = vunpack.c.l.b16 %v772
    %v3623 = vunpack.c.l.b16 %v773
    %v3624 = vunpack.c.h.b16 %v773
    %v3625 = vunpack.c.l.b16 %v774
    %v3626 = vunpack.c.h.b16 %v774
    %v3627 = vunpack.c.l.b16 %v775
    %v3628 = vunpack.c.l.b16 %v776
    %v3629 = vunpack.c.h.b16 %v776
    %v3630 = vunpack.c.l.b16 %v777
    %v3631 = vunpack.c.h.b16 %v777
    %v3632 = vunpack.c.l.b16 %v778
    %v3633 = vunpack.c.l.b16 %v779
    %v3634 = vunpack.c.h.b16 %v779
    %v3635 = vunpack.c.l.b16 %v780
    %v3636 = vunpack.c.h.b16 %v780
    %v3637 = vunpack.c.l.b16 %v781
    %v3638 = vunpack.c.l.b16 %v782
    %v3639 = vunpack.c.h.b16 %v782
    %v3640 = vunpack.c.l.b16 %v783
    %v3641 = vunpack.c.h.b16 %v783
    %v3642 = vunpack.c.l.b16 %v784
    %v3643 = vunpack.c.l.b16 %v785
    %v3644 = vunpack.c.h.b16 %v785
    %v3645 = vunpack.c.l.b16 %v786
    %v3646 = vunpack.c.h.b16 %v786
    %v3647 = vunpack.c.l.b16 %v787
    %v3648 = vunpack.c.l.b16 %v788
    %v3649 = vunpack.c.h.b16 %v788
    %v3650 = vunpack.c.l.b16 %v789
    %v3651 = vunpack.c.h.b16 %v789
    %v3652 = vunpack.c.l.b16 %v790
    %v3653 = vunpack.c.l.b16 %v791
    %v3654 = vunpack.c.h.b16 %v791
    %v3655 = vunpack.c.l.b16 %v792
    %v3656 = vunpack.c.h.b16 %v792
    %v3657 = vunpack.c.l.b16 %v793
    %v3658 = vunpack.c.l.b16 %v794
    %v3659 = vunpack.c.h.b16 %v794
    %v3660 = vunpack.c.l.b16 %v795
    %v3661 = vunpack.c.h.b16 %v795
    %v3662 = vunpack.c.l.b16 %v796
    %v3663 = vunpack.c.l.b16 %v797
    %v3664 = vunpack.c.h.b16 %v797
    %v3665 = vunpack.c.l.b16 %v798
    %v3666 = vunpack.c.h.b16 %v798
    %v3667 = vunpack.c.l.b16 %v799
    %v3668 = vunpack.c.l.b16 %v800
    %v3669 = vunpack.c.h.b16 %v800
    %v3670 = vunpack.c.l.b16 %v801
    %v3671 = vunpack.c.h.b16 %v801
    %v3672 = vunpack.c.l.b16 %v802
    %v3673 = vunpack.c.l.b16 %v803
    %v3674 = vunpack.c.h.b16 %v803
    %v3675 = vunpack.c.l.b16 %v804
    %v3676 = vunpack.c.h.b16 %v804
    %v3677 = vunpack.c.l.b16 %v805
    %v3678 = vunpack.c.l.b16 %v806
    %v3679 = vunpack.c.h.b16 %v806
    %v3680 = vunpack.c.l.b16 %v807
    %v3681 = vunpack.c.h.b16 %v807
    %v3682 = vunpack.c.l.b16 %v808
    %v3683 = vunpack.c.l.b16 %v809
    %v3684 = vunpack.c.h.b16 %v809
    %v3685 = vunpack.c.l.b16 %v810
    %v3686 = vunpack.c.h.b16 %v810
    %v3687 = vunpack.c.l.b16 %v811
    %v3688 = vunpack.c.l.b16 %v812
    %v3689 = vunpack.c.h.b16 %v812
    %v3690 = vunpack.c.l.b16 %v813
    %v3691 = vunpack.c.h.b16 %v813
    %v3692 = vunpack.c.l.b16 %v814
    %v3693 = vunpack.c.l.b16 %v815
    %v3694 = vunpack.c.h.b16 %v815
    %v3695 = vunpack.c.l.b16 %v816
    %v3696 = vunpack.c.h.b16 %v816
    %v3697 = vunpack.c.l.b16 %v817
    %v3698 = vunpack.c.l.b16 %v818
    %v3699 = vunpack.c.h.b16 %v818
    %v3700 = vunpack.c.l.b16 %v819
    %v3701 = vunpack.c.h.b16 %v819
    %v3702 = vunpack.c.l.b16 %v820
    %v3703 = vunpack.c.l.b16 %v821
    %v3704 = vunpack.c.h.b16 %v821
    %v3705 = vunpack.c.l.b16 %v822
    %v3706 = vunpack.c.h.b16 %v822
    %v3707 = vunpack.c.l.b16 %v823
    %v3708 = vunpack.c.l.b16 %v824
    %v3709 = vunpack.c.h.b16 %v824
    %v3710 = vunpack.c.l.b16 %v825
    %v3711 = vunpack.c.h.b16 %v825
    %v3712 = vunpack.c.l.b16 %v826
    %v3713 = vunpack.c.l.b16 %v827
    %v3714 = vunpack.c.h.b16 %v827
    %v3715 = vunpack.c.l.b16 %v828
    %v3716 = vunpack.c.h.b16 %v828
    %v3717 = vunpack.c.l.b16 %v829
    %v3718 = vunpack.c.l.b16 %v830
    %v3719 = vunpack.c.h.b16 %v830
    %v3720 = vunpack.c.l.b16 %v831
    %v3721 = vunpack.c.h.b16 %v831
    %v3722 = vunpack.c.l.b16 %v832
    %v3723 = vunpack.c.l.b16 %v833
    %v3724 = vunpack.c.h.b16 %v833
    %v3725 = vunpack.c.l.b16 %v834
    %v3726 = vunpack.c.h.b16 %v834
    %v3727 = vunpack.c.l.b16 %v835
    %v3728 = vunpack.c.l.b16 %v836
    %v3729 = vunpack.c.h.b16 %v836
    %v3730 = vunpack.c.l.b16 %v837
    %v3731 = vunpack.c.h.b16 %v837
    %v3732 = vunpack.c.l.b16 %v838
    %v3733 = vunpack.c.l.b16 %v839
    %v3734 = vunpack.c.h.b16 %v839
    %v3735 = vunpack.c.l.b16 %v840
    %v3736 = vunpack.c.h.b16 %v840
    %v3737 = vunpack.c.l.b16 %v841
    %v3738 = vunpack.c.l.b16 %v842
    %v3739 = vunpack.c.h.b16 %v842
    %v3740 = vunpack.c.l.b16 %v843
    %v3741 = vunpack.c.h.b16 %v843
    %v3742 = vunpack.c.l.b16 %v844
    %v3743 = vunpack.c.l.b16 %v845
    %v3744 = vunpack.c.h.b16 %v845
    %v3745 = vunpack.c.l.b16 %v846
    %v3746 = vunpack.c.h.b16 %v846
    %v3747 = vunpack.c.l.b16 %v847
    %v3748 = vunpack.c.l.b16 %v848
    %v3749 = vunpack.c.h.b16 %v848
    %v3750 = vunpack.c.l.b16 %v849
    %v3751 = vunpack.c.h.b16 %v849
    %v3752 = vunpack.c.l.b16 %v850
    %v3753 = vunpack.c.l.b16 %v851
    %v3754 = vunpack.c.h.b16 %v851
    %v3755 = vunpack.c.l.b16 %v852
    %v3756 = vunpack.c.h.b16 %v852
    %v3757 = vunpack.c.l.b16 %v853
    %v3758 = vunpack.c.l.b16 %v854
    %v3759 = vunpack.c.h.b16 %v854
    %v3760 = vunpack.c.l.b16 %v855
    %v3761 = vunpack.c.h.b16 %v855
    %v3762 = vunpack.c.l.b16 %v856
    %v3763 = vunpack.c.l.b16 %v857
    %v3764 = vunpack.c.h.b16 %v857
    %v3765 = vunpack.c.l.b16 %v858
    %v3766 = vunpack.c.h.b16 %v858
    %v3767 = vunpack.c.l.b16 %v859
    %v3768 = vunpack.c.l.b16 %v860
    %v3769 = vunpack.c.h.b16 %v860
    %v3770 = vunpack.c.l.b16 %v861
    %v3771 = vunpack.c.h.b16 %v861
    %v3772 = vunpack.c.l.b16 %v862
    %v3773 = vunpack.c.l.b16 %v863
    %v3774 = vunpack.c.h.b16 %v863
    %v3775 = vunpack.c.l.b16 %v864
    %v3776 = vunpack.c.h.b16 %v864
    %v3777 = vunpack.c.l.b16 %v865
    %v3778 = vunpack.c.l.b16 %v866
    %v3779 = vunpack.c.h.b16 %v866
    %v3780 = vunpack.c.l.b16 %v867
    %v3781 = vunpack.c.h.b16 %v867
    %v3782 = vunpack.c.l.b16 %v868
    %v3783 = vunpack.c.l.b16 %v869
    %v3784 = vunpack.c.h.b16 %v869
    %v3785 = vunpack.c.l.b16 %v870
    %v3786 = vunpack.c.h.b16 %v870
    %v3787 = vunpack.c.l.b16 %v871
    %v3788 = vunpack.c.l.b16 %v872
    %v3789 = vunpack.c.h.b16 %v872
    %v3790 = vunpack.c.l.b16 %v873
    %v3791 = vunpack.c.h.b16 %v873
    %v3792 = vunpack.c.l.b16 %v874
    %v3793 = vunpack.c.l.b16 %v875
    %v3794 = vunpack.c.h.b16 %v875
    %v3795 = vunpack.c.l.b16 %v876
    %v3796 = vunpack.c.h.b16 %v876
    %v3797 = vunpack.c.l.b16 %v877
    %v3798 = vunpack.c.l.b16 %v878
    %v3799 = vunpack.c.h.b16 %v878
    %v3800 = vunpack.c.l.b16 %v879
    %v3801 = vunpack.c.h.b16 %v879
    %v3802 = vunpack.c.l.b16 %v880
    %v3803 = vunpack.c.l.b16 %v881
    %v3804 = vunpack.c.h.b16 %v881
    %v3805 = vunpack.c.l.b16 %v882
    %v3806 = vunpack.c.h.b16 %v882
    %v3807 = vunpack.c.l.b16 %v883
    %v3808 = vunpack.c.l.b16 %v884
    %v3809 = vunpack.c.h.b16 %v884
    %v3810 = vunpack.c.l.b16 %v885
    %v3811 = vunpack.c.h.b16 %v885
    %v3812 = vunpack.c.l.b16 %v886
    %v3813 = vunpack.c.l.b16 %v887
    %v3814 = vunpack.c.h.b16 %v887
    %v3815 = vunpack.c.l.b16 %v888
    %v3816 = vunpack.c.h.b16 %v888
    %v3817 = vunpack.c.l.b16 %v889
    %v3818 = vunpack.c.l.b16 %v890
    %v3819 = vunpack.c.h.b16 %v890
    %v3820 = vunpack.c.l.b16 %v891
    %v3821 = vunpack.c.h.b16 %v891
    %v3822 = vunpack.c.l.b16 %v892
    %v3823 = vunpack.c.l.b16 %v893
    %v3824 = vunpack.c.h.b16 %v893
    %v3825 = vunpack.c.l.b16 %v894
    %v3826 = vunpack.c.h.b16 %v894
    %v3827 = vunpack.c.l.b16 %v895
    %v3828 = vunpack.c.l.b16 %v896
    %v3829 = vunpack.c.h.b16 %v896
    %v3830 = vunpack.c.l.b16 %v897
    %v3831 = vunpack.c.h.b16 %v897
    %v3832 = vunpack.c.l.b16 %v898
    %v3833 = vunpack.c.l.b16 %v899
    %v3834 = vunpack.c.h.b16 %v899
    %v3835 = vunpack.c.l.b16 %v900
    %v3836 = vunpack.c.h.b16 %v900
    %v3837 = vunpack.c.l.b16 %v901
    %v3838 = vunpack.c.l.b16 %v902
    %v3839 = vunpack.c.h.b16 %v902
    %v3840 = vunpack.c.l.b16 %v903
    %v3841 = vunpack.c.h.b16 %v903
    %v3842 = vunpack.c.l.b16 %v904
    %v3843 = vunpack.c.l.b16 %v905
    %v3844 = vunpack.c.h.b16 %v905
    %v3845 = vunpack.c.l.b16 %v906
    %v3846 = vunpack.c.h.b16 %v906
    %v3847 = vunpack.c.l.b16 %v907
    %v3848 = vunpack.c.l.b16 %v908
    %v3849 = vunpack.c.h.b16 %v908
    %v3850 = vunpack.c.l.b16 %v909
    %v3851 = vunpack.c.h.b16 %v909
    %v3852 = vunpack.c.l.b16 %v910
    %v3853 = vunpack.c.l.b16 %v911
    %v3854 = vunpack.c.h.b16 %v911
    %v3855 = vunpack.c.l.b16 %v912
    %v3856 = vunpack.c.h.b16 %v912
    %v3857 = vunpack.c.l.b16 %v913
    %v3858 = vunpack.c.l.b16 %v914
    %v3859 = vunpack.c.h.b16 %v914
    %v3860 = vunpack.c.l.b16 %v915
    %v3861 = vunpack.c.h.b16 %v915
    %v3862 = vunpack.c.l.b16 %v916
    %v3863 = vunpack.c.l.b16 %v917
    %v3864 = vunpack.c.h.b16 %v917
    %v3865 = vunpack.c.l.b16 %v918
    %v3866 = vunpack.c.h.b16 %v918
    %v3867 = vunpack.c.l.b16 %v919
    %v3868 = vunpack.c.l.b16 %v920
    %v3869 = vunpack.c.h.b16 %v920
    %v3870 = vunpack.c.l.b16 %v921
    %v3871 = vunpack.c.h.b16 %v921
    %v3872 = vunpack.c.l.b16 %v922
    %v3873 = vunpack.c.l.b16 %v923
    %v3874 = vunpack.c.h.b16 %v923
    %v3875 = vunpack.c.l.b16 %v924
    %v3876 = vunpack.c.h.b16 %v924
    %v3877 = vunpack.c.l.b16 %v925
    %v3878 = vunpack.c.l.b16 %v926
    %v3879 = vunpack.c.h.b16 %v926
    %v3880 = vunpack.c.l.b16 %v927
    %v3881 = vunpack.c.h.b16 %v927
    %v3882 = vunpack.c.l.b16 %v928
    %v3883 = vunpack.c.l.b16 %v929
    %v3884 = vunpack.c.h.b16 %v929
    %v3885 = vunpack.c.l.b16 %v930
    %v3886 = vunpack.c.h.b16 %v930
    %v3887 = vunpack.c.l.b16 %v931
    %v3888 = vunpack.c.l.b16 %v932
    %v3889 = vunpack.c.h.b16 %v932
    %v3890 = vunpack.c.l.b16 %v933
    %v3891 = vunpack.c.h.b16 %v933
    %v3892 = vunpack.c.l.b16 %v934
    %v3893 = vunpack.c.l.b16 %v935
    %v3894 = vunpack.c.h.b16 %v935
    %v3895 = vunpack.c.l.b16 %v936
    %v3896 = vunpack.c.h.b16 %v936
    %v3897 = vunpack.c.l.b16 %v937
    %v3898 = vunpack.c.l.b16 %v938
    %v3899 = vunpack.c.h.b16 %v938
    %v3900 = vunpack.c.l.b16 %v939
    %v3901 = vunpack.c.h.b16 %v939
    %v3902 = vunpack.c.l.b16 %v940
    %v3903 = vunpack.c.l.b16 %v941
    %v3904 = vunpack.c.h.b16 %v941
    %v3905 = vunpack.c.l.b16 %v942
    %v3906 = vunpack.c.h.b16 %v942
    %v3907 = vunpack.c.l.b16 %v943
    %v3908 = vunpack.c.l.b16 %v944
    %v3909 = vunpack.c.h.b16 %v944
    %v3910 = vunpack.c.l.b16 %v945
    %v3911 = vunpack.c.h.b16 %v945
    %v3912 = vunpack.c.l.b16 %v946
    %v3913 = vunpack.c.l.b16 %v947
    %v3914 = vunpack.c.h.b16 %v947
    %v3915 = vunpack.c.l.b16 %v948
    %v3916 = vunpack.c.h.b16 %v948
    %v3917 = vunpack.c.l.b16 %v949
    %v3918 = vunpack.c.l.b16 %v950
    %v3919 = vunpack.c.h.b16 %v950
    %v3920 = vunpack.c.l.b16 %v951
    %v3921 = vunpack.c.h.b16 %v951
    %v3922 = vunpack.c.l.b16 %v952
    %v3923 = vunpack.c.l.b16 %v953
    %v3924 = vunpack.c.h.b16 %v953
    %v3925 = vunpack.c.l.b16 %v954
    %v3926 = vunpack.c.h.b16 %v954
    %v3927 = vunpack.c.l.b16 %v955
    %v3928 = vunpack.c.l.b16 %v956
    %v3929 = vunpack.c.h.b16 %v956
    %v3930 = vunpack.c.l.b16 %v957
    %v3931 = vunpack.c.h.b16 %v957
    %v3932 = vunpack.c.l.b16 %v958
    %v3933 = vunpack.c.l.b16 %v959
    %v3934 = vunpack.c.h.b16 %v959
    %v3935 = vunpack.c.l.b16 %v960
    %v3936 = vunpack.c.h.b16 %v960
    %v3937 = vunpack.c.l.b16 %v961
    %v3938 = vunpack.c.l.b16 %v962
    %v3939 = vunpack.c.h.b16 %v962
    %v3940 = vunpack.c.l.b16 %v963
    %v3941 = vunpack.c.h.b16 %v963
    %v3942 = vunpack.c.l.b16 %v964
    %v3943 = vunpack.c.l.b16 %v965
    %v3944 = vunpack.c.h.b16 %v965
    %v3945 = vunpack.c.l.b16 %v966
    %v3946 = vunpack.c.h.b16 %v966
    %v3947 = vunpack.c.l.b16 %v967
    %v3948 = vunpack.c.l.b16 %v968
    %v3949 = vunpack.c.h.b16 %v968
    %v3950 = vunpack.c.l.b16 %v969
    %v3951 = vunpack.c.h.b16 %v969
    %v3952 = vunpack.c.l.b16 %v970
    %v3953 = vunpack.c.l.b16 %v971
    %v3954 = vunpack.c.h.b16 %v971
    %v3955 = vunpack.c.l.b16 %v972
    %v3956 = vunpack.c.h.b16 %v972
    %v3957 = vunpack.c.l.b16 %v973
    %v3958 = vunpack.c.l.b16 %v974
    %v3959 = vunpack.c.h.b16 %v974
    %v3960 = vunpack.c.l.b16 %v975
    %v3961 = vunpack.c.h.b16 %v975
    %v3962 = vunpack.c.l.b16 %v976
    %v3963 = vunpack.c.l.b16 %v977
    %v3964 = vunpack.c.h.b16 %v977
    %v3965 = vunpack.c.l.b16 %v978
    %v3966 = vunpack.c.h.b16 %v978
    %v3967 = vunpack.c.l.b16 %v979
    %v3968 = vunpack.c.l.b16 %v980
    %v3969 = vunpack.c.h.b16 %v980
    %v3970 = vunpack.c.l.b16 %v981
    %v3971 = vunpack.c.h.b16 %v981
    %v3972 = vunpack.c.l.b16 %v982
    %v3973 = vunpack.c.l.b16 %v983
    %v3974 = vunpack.c.h.b16 %v983
    %v3975 = vunpack.c.l.b16 %v984
    %v3976 = vunpack.c.h.b16 %v984
    %v3977 = vunpack.c.l.b16 %v985
    %v3978 = vunpack.c.l.b16 %v986
    %v3979 = vunpack.c.h.b16 %v986
    %v3980 = vunpack.c.l.b16 %v987
    %v3981 = vunpack.c.h.b16 %v987
    %v3982 = vunpack.c.l.b16 %v988
    %v3983 = vunpack.c.l.b16 %v989
    %v3984 = vunpack.c.h.b16 %v989
    %v3985 = vunpack.c.l.b16 %v990
    %v3986 = vunpack.c.h.b16 %v990
    %v3987 = vunpack.c.l.b16 %v991
    %v3988 = vunpack.c.l.b16 %v992
    %v3989 = vunpack.c.h.b16 %v992
    %v3990 = vunpack.c.l.b16 %v993
    %v3991 = vunpack.c.h.b16 %v993
    %v3992 = vunpack.c.l.b16 %v994
    %v3993 = vunpack.c.l.b16 %v995
    %v3994 = vunpack.c.h.b16 %v995
    %v3995 = vunpack.c.l.b16 %v996
    %v3996 = vunpack.c.h.b16 %v996
    %v3997 = vunpack.c.l.b16 %v997
    %v3998 = vunpack.c.l.b16 %v998
    %v3999 = vunpack.c.h.b16 %v998
    %v4000 = vunpack.c.l.b16 %v999
    %v4001 = vunpack.c.h.b16 %v999
    %v4002 = vunpack.c.l.b16 %v1000
    %v4003 = vunpack.c.l.b16 %v1001
    %v4004 = vunpack.c.h.b16 %v1001
    %v4005 = vunpack.c.l.b16 %v1002
    %v4006 = vunpack.c.h.b16 %v1002
    %v4007 = vunpack.c.l.b16 %v1003
    %v4008 = vunpack.c.l.b16 %v1004
    %v4009 = vunpack.c.h.b16 %v1004
    %v4010 = vunpack.c.l.b16 %v1005
    %v4011 = vunpack.c.h.b16 %v1005
    %v4012 = vunpack.c.l.b16 %v1006
    %v4013 = vunpack.c.l.b16 %v1007
    %v4014 = vunpack.c.h.b16 %v1007
    %v4015 = vunpack.c.l.b16 %v1008
    %v4016 = vunpack.c.h.b16 %v1008
    %v4017 = vunpack.c.l.b16 %v1009
    %v4018 = vunpack.c.l.b16 %v1010
    %v4019 = vunpack.c.h.b16 %v1010
    %v4020 = vunpack.c.l.b16 %v1011
    %v4021 = vunpack.c.h.b16 %v1011
    %v4022 = vunpack.c.l.b16 %v1012
    %v4023 = vunpack.c.l.b16 %v1013
    %v4024 = vunpack.c.h.b16 %v1013
    %v4025 = vunpack.c.l.b16 %v1014
    %v4026 = vunpack.c.h.b16 %v1014
    %v4027 = vunpack.c.l.b16 %v1015
    %v4028 = vunpack.c.l.b16 %v1016
    %v4029 = vunpack.c.h.b16 %v1016
    %v4030 = vunpack.c.l.b16 %v1017
    %v4031 = vunpack.c.h.b16 %v1017
    %v4032 = vunpack.c.l.b16 %v1018
    %v4033 = vunpack.c.l.b16 %v1019
    %v4034 = vunpack.c.h.b16 %v1019
    %v4035 = vunpack.c.l.b16 %v1020
    %v4036 = vunpack.c.h.b16 %v1020
    %v4037 = vunpack.c.l.b16 %v1021
    %v4038 = vunpack.c.l.b16 %v1022
    %v4039 = vunpack.c.h.b16 %v1022
    %v4040 = vunpack.c.l.b16 %v1023
    %v4041 = vunpack.c.h.b16 %v1023
    %v4042 = vunpack.c.l.b16 %v1024
    %v4043 = vunpack.c.l.b16 %v1025
    %v4044 = vunpack.c.h.b16 %v1025
    %v4045 = vunpack.c.l.b16 %v1026
    %v4046 = vunpack.c.h.b16 %v1026
    %v4047 = vunpack.c.l.b16 %v1027
    %v4048 = vunpack.c.l.b16 %v1028
    %v4049 = vunpack.c.h.b16 %v1028
    %v4050 = vunpack.c.l.b16 %v1029
    %v4051 = vunpack.c.h.b16 %v1029
    %v4052 = vunpack.c.l.b16 %v1030
    %v4053 = vunpack.c.l.b16 %v1031
    %v4054 = vunpack.c.h.b16 %v1031
    %v4055 = vunpack.c.l.b16 %v1032
    %v4056 = vunpack.c.h.b16 %v1032
    %v4057 = vunpack.c.l.b16 %v1033
    %v4058 = vunpack.c.l.b16 %v1034
    %v4059 = vunpack.c.h.b16 %v1034
    %v4060 = vunpack.c.l.b16 %v1035
    %v4061 = vunpack.c.h.b16 %v1035
    %v4062 = vunpack.c.l.b16 %v1036
    %v4063 = vunpack.c.l.b16 %v1037
    %v4064 = vunpack.c.h.b16 %v1037
    %v4065 = vunpack.c.l.b16 %v1038
    %v4066 = vunpack.c.h.b16 %v1038
    %v4067 = vunpack.c.l.b16 %v1039
    %v4068 = vunpack.c.l.b16 %v1040
    %v4069 = vunpack.c.h.b16 %v1040
    %v4070 = vunpack.c.l.b16 %v1041
    %v4071 = vunpack.c.h.b16 %v1041
    %v4072 = vunpack.c.l.b16 %v1042
    %v4073 = vunpack.c.l.b16 %v1043
    %v4074 = vunpack.c.h.b16 %v1043
    %v4075 = vunpack.c.l.b16 %v1044
    %v4076 = vunpack.c.h.b16 %v1044
    %v4077 = vunpack.c.l.b16 %v1045
    %v4078 = vunpack.c.l.b16 %v1046
    %v4079 = vunpack.c.h.b16 %v1046
    %v4080 = vunpack.c.l.b16 %v1047
    %v4081 = vunpack.c.h.b16 %v1047
    %v4082 = vunpack.c.l.b16 %v1048
    %v4083 = vunpack.c.l.b16 %v1049
    %v4084 = vunpack.c.h.b16 %v1049
    %v4085 = vunpack.c.l.b16 %v1050
    %v4086 = vunpack.c.h.b16 %v1050
    %v4087 = vunpack.c.l.b16 %v1051
    %v4088 = vunpack.c.l.b16 %v1052
    %v4089 = vunpack.c.h.b16 %v1052
    %v4090 = vunpack.c.l.b16 %v1053
    %v4091 = vunpack.c.h.b16 %v1053
    %v4092 = vunpack.c.l.b16 %v1054
    %v4093 = vunpack.c.l.b16 %v1055
    %v4094 = vunpack.c.h.b16 %v1055
    %v4095 = vunpack.c.l.b16 %v1056
    %v4096 = vunpack.c.h.b16 %v1056
    %v4097 = vunpack.c.l.b16 %v1057
    %v4098 = vunpack.c.l.b16 %v1058
    %v4099 = vunpack.c.h.b16 %v1058
    %v4100 = vunpack.c.l.b16 %v1059
    %v4101 = vunpack.c.h.b16 %v1059
    %v4102 = vunpack.c.l.b16 %v1060
    %v4103 = vunpack.c.l.b16 %v1061
    %v4104 = vunpack.c.h.b16 %v1061
    %v4105 = vunpack.c.l.b16 %v1062
    %v4106 = vunpack.c.h.b16 %v1062
    %v4107 = vunpack.c.l.b16 %v1063
    %v4108 = vunpack.c.l.b16 %v1064
    %v4109 = vunpack.c.h.b16 %v1064
    %v4110 = vunpack.c.l.b16 %v1065
    %v4111 = vunpack.c.h.b16 %v1065
    %v4112 = vunpack.c.l.b16 %v1066
    %v4113 = vunpack.c.l.b16 %v1067
    %v4114 = vunpack.c.h.b16 %v1067
    %v4115 = vunpack.c.l.b16 %v1068
    %v4116 = vunpack.c.h.b16 %v1068
    %v4117 = vunpack.c.l.b16 %v1069
    %v4118 = vunpack.c.l.b16 %v1070
    %v4119 = vunpack.c.h.b16 %v1070
    %v4120 = vunpack.c.l.b16 %v1071
    %v4121 = vunpack.c.h.b16 %v1071
    %v4122 = vunpack.c.l.b16 %v1072
    %v4123 = vunpack.c.l.b16 %v1073
    %v4124 = vunpack.c.h.b16 %v1073
    %v4125 = vunpack.c.l.b16 %v1074
    %v4126 = vunpack.c.h.b16 %v1074
    %v4127 = vunpack.c.l.b16 %v1075
    %v4128 = vunpack.c.l.b16 %v1076
    %v4129 = vunpack.c.h.b16 %v1076
    %v4130 = vunpack.c.l.b16 %v1077
    %v4131 = vunpack.c.h.b16 %v1077
    %v4132 = vunpack.c.l.b16 %v1078
    %v4133 = vunpack.c.l.b16 %v1079
    %v4134 = vunpack.c.h.b16 %v1079
    %v4135 = vunpack.c.l.b16 %v1080
    %v4136 = vunpack.c.h.b16 %v1080
    %v4137 = vunpack.c.l.b16 %v1081
    %v4138 = vunpack.c.l.b16 %v1082
    %v4139 = vunpack.c.h.b16 %v1082
    %v4140 = vunpack.c.l.b16 %v1083
    %v4141 = vunpack.c.h.b16 %v1083
    %v4142 = vunpack.c.l.b16 %v1084
    %v4143 = vunpack.c.l.b16 %v1085
    %v4144 = vunpack.c.h.b16 %v1085
    %v4145 = vunpack.c.l.b16 %v1086
    %v4146 = vunpack.c.h.b16 %v1086
    %v4147 = vunpack.c.l.b16 %v1087
    %v4148 = vunpack.c.l.b16 %v1088
    %v4149 = vunpack.c.h.b16 %v1088
    %v4150 = vunpack.c.l.b16 %v1089
    %v4151 = vunpack.c.h.b16 %v1089
    %v4152 = vunpack.c.l.b16 %v1090
    %v4153 = vunpack.c.l.b16 %v1091
    %v4154 = vunpack.c.h.b16 %v1091
    %v4155 = vunpack.c.l.b16 %v1092
    %v4156 = vunpack.c.h.b16 %v1092
    %v4157 = vunpack.c.l.b16 %v1093
    %v4158 = vunpack.c.l.b16 %v1094
    %v4159 = vunpack.c.h.b16 %v1094
    %v4160 = vunpack.c.l.b16 %v1095
    %v4161 = vunpack.c.h.b16 %v1095
    %v4162 = vunpack.c.l.b16 %v1096
    %v4163 = vunpack.c.l.b16 %v1097
    %v4164 = vunpack.c.h.b16 %v1097
    %v4165 = vunpack.c.l.b16 %v1098
    %v4166 = vunpack.c.h.b16 %v1098
    %v4167 = vunpack.c.l.b16 %v1099
    %v4168 = vunpack.c.l.b16 %v1100
    %v4169 = vunpack.c.h.b16 %v1100
    %v4170 = vunpack.c.l.b16 %v1101
    %v4171 = vunpack.c.h.b16 %v1101
    %v4172 = vunpack.c.l.b16 %v1102
    %v4173 = vunpack.c.l.b16 %v1103
    %v4174 = vunpack.c.h.b16 %v1103
    %v4175 = vunpack.c.l.b16 %v1104
    %v4176 = vunpack.c.h.b16 %v1104
    %v4177 = vunpack.c.l.b16 %v1105
    %v4178 = vunpack.c.l.b16 %v1106
    %v4179 = vunpack.c.h.b16 %v1106
    %v4180 = vunpack.c.l.b16 %v1107
    %v4181 = vunpack.c.h.b16 %v1107
    %v4182 = vunpack.c.l.b16 %v1108
    %v4183 = vunpack.c.l.b16 %v1109
    %v4184 = vunpack.c.h.b16 %v1109
    %v4185 = vunpack.c.l.b16 %v1110
    %v4186 = vunpack.c.h.b16 %v1110
    %v4187 = vunpack.c.l.b16 %v1111
    %v4188 = vunpack.c.l.b16 %v1112
    %v4189 = vunpack.c.h.b16 %v1112
    %v4190 = vunpack.c.l.b16 %v1113
    %v4191 = vunpack.c.h.b16 %v1113
    %v4192 = vunpack.c.l.b16 %v1114
    %v4193 = vunpack.c.l.b16 %v1115
    %v4194 = vunpack.c.h.b16 %v1115
    %v4195 = vunpack.c.l.b16 %v1116
    %v4196 = vunpack.c.h.b16 %v1116
    %v4197 = vunpack.c.l.b16 %v1117
    %v4198 = vunpack.c.l.b16 %v1118
    %v4199 = vunpack.c.h.b16 %v1118
    %v4200 = vunpack.c.l.b16 %v1119
    %v4201 = vunpack.c.h.b16 %v1119
    %v4202 = vunpack.c.l.b16 %v1120
    %v4203 = vunpack.c.l.b16 %v1121
    %v4204 = vunpack.c.h.b16 %v1121
    %v4205 = vunpack.c.l.b16 %v1122
    %v4206 = vunpack.c.h.b16 %v1122
    %v4207 = vunpack.c.l.b16 %v1123
    %v4208 = vunpack.c.l.b16 %v1124
    %v4209 = vunpack.c.h.b16 %v1124
    %v4210 = vunpack.c.l.b16 %v1125
    %v4211 = vunpack.c.h.b16 %v1125
    %v4212 = vunpack.c.l.b16 %v1126
    %v4213 = vunpack.c.l.b16 %v1127
    %v4214 = vunpack.c.h.b16 %v1127
    %v4215 = vunpack.c.l.b16 %v1128
    %v4216 = vunpack.c.h.b16 %v1128
    %v4217 = vunpack.c.l.b16 %v1129
    %v4218 = vunpack.c.l.b16 %v1130
    %v4219 = vunpack.c.h.b16 %v1130
    %v4220 = vunpack.c.l.b16 %v1131
    %v4221 = vunpack.c.h.b16 %v1131
    %v4222 = vunpack.c.l.b16 %v1132
    %v4223 = vunpack.c.l.b16 %v1133
    %v4224 = vunpack.c.h.b16 %v1133
    %v4225 = vunpack.c.l.b16 %v1134
    %v4226 = vunpack.c.h.b16 %v1134
    %v4227 = vunpack.c.l.b16 %v1135
    %v4228 = vunpack.c.l.b16 %v1136
    %v4229 = vunpack.c.h.b16 %v1136
    %v4230 = vunpack.c.l.b16 %v1137
    %v4231 = vunpack.c.h.b16 %v1137
    %v4232 = vunpack.c.l.b16 %v1138
    %v4233 = vunpack.c.l.b16 %v1139
    %v4234 = vunpack.c.h.b16 %v1139
    %v4235 = vunpack.c.l.b16 %v1140
    %v4236 = vunpack.c.h.b16 %v1140
    %v4237 = vunpack.c.l.b16 %v1141
    %v4238 = vunpack.c.l.b16 %v1142
    %v4239 = vunpack.c.h.b16 %v1142
    %v4240 = vunpack.c.l.b16 %v1143
    %v4241 = vunpack.c.h.b16 %v1143
    %v4242 = vunpack.c.l.b16 %v1144
    %v4243 = vunpack.c.l.b16 %v1145
    %v4244 = vunpack.c.h.b16 %v1145
    %v4245 = vunpack.c.l.b16 %v1146
    %v4246 = vunpack.c.h.b16 %v1146
    %v4247 = vunpack.c.l.b16 %v1147
    %v4248 = vunpack.c.l.b16 %v1148
    %v4249 = vunpack.c.h.b16 %v1148
    %v4250 = vunpack.c.l.b16 %v1149
    %v4251 = vunpack.c.h.b16 %v1149
    %v4252 = vunpack.c.l.b16 %v1150
    %v4253 = vunpack.c.l.b16 %v1151
    %v4254 = vunpack.c.h.b16 %v1151
    %v4255 = vunpack.c.l.b16 %v1152
    %v4256 = vunpack.c.h.b16 %v1152
    %v4257 = vunpack.c.l.b16 %v1153
    %v4258 = vunpack.c.l.b16 %v1154
    %v4259 = vunpack.c.h.b16 %v1154
    %v4260 = vunpack.c.l.b16 %v1155
    %v4261 = vunpack.c.h.b16 %v1155
    %v4262 = vunpack.c.l.b16 %v1156
    %v4263 = vunpack.c.l.b16 %v1157
    %v4264 = vunpack.c.h.b16 %v1157
    %v4265 = vunpack.c.l.b16 %v1158
    %v4266 = vunpack.c.h.b16 %v1158
    %v4267 = vunpack.c.l.b16 %v1159
    %v4268 = vunpack.c.l.b16 %v1160
    %v4269 = vunpack.c.h.b16 %v1160
    %v4270 = vunpack.c.l.b16 %v1161
    %v4271 = vunpack.c.h.b16 %v1161
    %v4272 = vunpack.c.l.b16 %v1162
    %v4273 = vunpack.c.l.b16 %v1163
    %v4274 = vunpack.c.h.b16 %v1163
    %v4275 = vunpack.c.l.b16 %v1164
    %v4276 = vunpack.c.h.b16 %v1164
    %v4277 = vunpack.c.l.b16 %v1165
    %v4278 = vunpack.c.l.b16 %v1166
    %v4279 = vunpack.c.h.b16 %v1166
    %v4280 = vunpack.c.l.b16 %v1167
    %v4281 = vunpack.c.h.b16 %v1167
    %v4282 = vunpack.c.l.b16 %v1168
    %v4283 = vunpack.c.l.b16 %v1169
    %v4284 = vunpack.c.h.b16 %v1169
    %v4285 = vunpack.c.l.b16 %v1170
    %v4286 = vunpack.c.h.b16 %v1170
    %v4287 = vunpack.c.l.b16 %v1171
    %v4288 = vunpack.c.l.b16 %v1172
    %v4289 = vunpack.c.h.b16 %v1172
    %v4290 = vunpack.c.l.b16 %v1173
    %v4291 = vunpack.c.h.b16 %v1173
    %v4292 = vunpack.c.l.b16 %v1174
    %v4293 = vunpack.c.l.b16 %v1175
    %v4294 = vunpack.c.h.b16 %v1175
    %v4295 = vunpack.c.l.b16 %v1176
    %v4296 = vunpack.c.h.b16 %v1176
    %v4297 = vunpack.c.l.b16 %v1177
    %v4298 = vunpack.c.l.b16 %v1178
    %v4299 = vunpack.c.h.b16 %v1178
    %v4300 = vunpack.c.l.b16 %v1179
    %v4301 = vunpack.c.h.b16 %v1179
    %v4302 = vunpack.c.l.b16 %v1180
    %v4303 = vunpack.c.l.b16 %v1181
    %v4304 = vunpack.c.h.b16 %v1181
    %v4305 = vunpack.c.l.b16 %v1182
    %v4306 = vunpack.c.h.b16 %v1182
    %v4307 = vunpack.c.l.b16 %v1183
    %v4308 = vunpack.c.l.b16 %v1184
    %v4309 = vunpack.c.h.b16 %v1184
    %v4310 = vunpack.c.l.b16 %v1185
    %v4311 = vunpack.c.h.b16 %v1185
    %v4312 = vunpack.c.l.b16 %v1186
    %v4313 = vunpack.c.l.b16 %v1187
    %v4314 = vunpack.c.h.b16 %v1187
    %v4315 = vunpack.c.l.b16 %v1188
    %v4316 = vunpack.c.h.b16 %v1188
    %v4317 = vunpack.c.l.b16 %v1189
    %v4318 = vunpack.c.l.b16 %v1190
    %v4319 = vunpack.c.h.b16 %v1190
    %v4320 = vunpack.c.l.b16 %v1191
    %v4321 = vunpack.c.h.b16 %v1191
    %v4322 = vunpack.c.l.b16 %v1192
    %v4323 = vunpack.c.l.b16 %v1193
    %v4324 = vunpack.c.h.b16 %v1193
    %v4325 = vunpack.c.l.b16 %v1194
    %v4326 = vunpack.c.h.b16 %v1194
    %v4327 = vunpack.c.l.b16 %v1195
    %v4328 = vunpack.c.l.b16 %v1196
    %v4329 = vunpack.c.h.b16 %v1196
    %v4330 = vunpack.c.l.b16 %v1197
    %v4331 = vunpack.c.h.b16 %v1197
    %v4332 = vunpack.c.l.b16 %v1198
    %v4333 = vunpack.c.l.b16 %v1199
    %v4334 = vunpack.c.h.b16 %v1199
    %v4335 = vunpack.c.l.b16 %v1200
    %v4336 = vunpack.c.h.b16 %v1200
    %v4337 = vunpack.c.l.b16 %v1201
    %v4338 = vunpack.c.l.b16 %v1202
    %v4339 = vunpack.c.h.b16 %v1202
    %v4340 = vunpack.c.l.b16 %v1203
    %v4341 = vunpack.c.h.b16 %v1203
    %v4342 = vunpack.c.l.b16 %v1204
    %v4343 = vunpack.c.l.b16 %v1205
    %v4344 = vunpack.c.h.b16 %v1205
    %v4345 = vunpack.c.l.b16 %v1206
    %v4346 = vunpack.c.h.b16 %v1206
    %v4347 = vunpack.c.l.b16 %v1207
    %v4348 = vunpack.c.l.b16 %v1208
    %v4349 = vunpack.c.h.b16 %v1208
    %v4350 = vunpack.c.l.b16 %v1209
    %v4351 = vunpack.c.h.b16 %v1209
    %v4352 = vunpack.c.l.b16 %v1210
    %v4353 = vunpack.c.l.b16 %v1211
    %v4354 = vunpack.c.h.b16 %v1211
    %v4355 = vunpack.c.l.b16 %v1212
    %v4356 = vunpack.c.h.b16 %v1212
    %v4357 = vunpack.c.l.b16 %v1213
    %v4358 = vunpack.c.l.b16 %v1214
    %v4359 = vunpack.c.h.b16 %v1214
    %v4360 = vunpack.c.l.b16 %v1215
    %v4361 = vunpack.c.h.b16 %v1215
    %v4362 = vunpack.c.l.b16 %v1216
    %v4363 = vunpack.c.l.b16 %v1217
    %v4364 = vunpack.c.h.b16 %v1217
    %v4365 = vunpack.c.l.b16 %v1218
    %v4366 = vunpack.c.h.b16 %v1218
    %v4367 = vunpack.c.l.b16 %v1219
    %v4368 = vunpack.c.l.b16 %v1220
    %v4369 = vunpack.c.h.b16 %v1220
    %v4370 = vunpack.c.l.b16 %v1221
    %v4371 = vunpack.c.h.b16 %v1221
    %v4372 = vunpack.c.l.b16 %v1222
    %v4373 = vunpack.c.l.b16 %v1223
    %v4374 = vunpack.c.h.b16 %v1223
    %v4375 = vunpack.c.l.b16 %v1224
    %v4376 = vunpack.c.h.b16 %v1224
    %v4377 = vunpack.c.l.b16 %v1225
    %v4378 = vunpack.c.l.b16 %v1226
    %v4379 = vunpack.c.h.b16 %v1226
    %v4380 = vunpack.c.l.b16 %v1227
    %v4381 = vunpack.c.h.b16 %v1227
    %v4382 = vunpack.c.l.b16 %v1228
    %v4383 = vunpack.c.l.b16 %v1229
    %v4384 = vunpack.c.h.b16 %v1229
    %v4385 = vunpack.c.l.b16 %v1230
    %v4386 = vunpack.c.h.b16 %v1230
    %v4387 = vunpack.c.l.b16 %v1231
    %v4388 = vpack.c.b16 %v2473, %v2468
    %v4389 = vpack.c.b16 %v2474, %v2469
    %v4390 = vpack.c.b16 %v2475, %v2470
    %v4391 = vpack.c.b16 %v2476, %v2471
    %v4392 = vpack.c.b16 %v2477, %v2472
    %v4393 = vpack.c.b16 %v2483, %v2478
    %v4394 = vpack.c.b16 %v2484, %v2479
    %v4395 = vpack.c.b16 %v2485, %v2480
    %v4396 = vpack.c.b16 %v2486, %v2481
    %v4397 = vpack.c.b16 %v2487, %v2482
    %v4398 = vpack.c.b16 %v2493, %v2488
    %v4399 = vpack.c.b16 %v2494, %v2489
    %v4400 = vpack.c.b16 %v2495, %v2490
    %v4401 = vpack.c.b16 %v2496, %v2491
    %v4402 = vpack.c.b16 %v2497, %v2492
    %v4403 = vpack.c.b16 %v2503, %v2498
    %v4404 = vpack.c.b16 %v2504, %v2499
    %v4405 = vpack.c.b16 %v2505, %v2500
    %v4406 = vpack.c.b16 %v2506, %v2501
    %v4407 = vpack.c.b16 %v2507, %v2502
    %v4408 = vpack.c.b16 %v2513, %v2508
    %v4409 = vpack.c.b16 %v2514, %v2509
    %v4410 = vpack.c.b16 %v2515, %v2510
    %v4411 = vpack.c.b16 %v2516, %v2511
    %v4412 = vpack.c.b16 %v2517, %v2512
    %v4413 = vpack.c.b16 %v2523, %v2518
    %v4414 = vpack.c.b16 %v2524, %v2519
    %v4415 = vpack.c.b16 %v2525, %v2520
    %v4416 = vpack.c.b16 %v2526, %v2521
    %v4417 = vpack.c.b16 %v2527, %v2522
    %v4418 = vpack.c.b16 %v2533, %v2528
    %v4419 = vpack.c.b16 %v2534, %v2529
    %v4420 = vpack.c.b16 %v2535, %v2530
    %v4421 = vpack.c.b16 %v2536, %v2531
    %v4422 = vpack.c.b16 %v2537, %v2532
    %v4423 = vpack.c.b16 %v2543, %v2538
    %v4424 = vpack.c.b16 %v2544, %v2539
    %v4425 = vpack.c.b16 %v2545, %v2540
    %v4426 = vpack.c.b16 %v2546, %v2541
    %v4427 = vpack.c.b16 %v2547, %v2542
    %v4428 = vpack.c.b16 %v2553, %v2548
    %v4429 = vpack.c.b16 %v2554, %v2549
    %v4430 = vpack.c.b16 %v2555, %v2550
    %v4431 = vpack.c.b16 %v2556, %v2551
    %v4432 = vpack.c.b16 %v2557, %v2552
    %v4433 = vpack.c.b16 %v2563, %v2558
    %v4434 = vpack.c.b16 %v2564, %v2559
    %v4435 = vpack.c.b16 %v2565, %v2560
    %v4436 = vpack.c.b16 %v2566, %v2561
    %v4437 = vpack.c.b16 %v2567, %v2562
    %v4438 = vpack.c.b16 %v2573, %v2568
    %v4439 = vpack.c.b16 %v2574, %v2569
    %v4440 = vpack.c.b16 %v2575, %v2570
    %v4441 = vpack.c.b16 %v2576, %v2571
    %v4442 = vpack.c.b16 %v2577, %v2572
    %v4443 = vpack.c.b16 %v2583, %v2578
    %v4444 = vpack.c.b16 %v2584, %v2579
    %v4445 = vpack.c.b16 %v2585, %v2580
    %v4446 = vpack.c.b16 %v2586, %v2581
    %v4447 = vpack.c.b16 %v2587, %v2582
    %v4448 = vpack.c.b16 %v2593, %v2588
    %v4449 = vpack.c.b16 %v2594, %v2589
    %v4450 = vpack.c.b16 %v2595, %v2590
    %v4451 = vpack.c.b16 %v2596, %v2591
    %v4452 = vpack.c.b16 %v2597, %v2592
    %v4453 = vpack.c.b16 %v2603, %v2598
    %v4454 = vpack.c.b16 %v2604, %v2599
    %v4455 = vpack.c.b16 %v2605, %v2600
    %v4456 = vpack.c.b16 %v2606, %v2601
    %v4457 = vpack.c.b16 %v2607, %v2602
    %v4458 = vpack.c.b16 %v2613, %v2608
    %v4459 = vpack.c.b16 %v2614, %v2609
    %v4460 = vpack.c.b16 %v2615, %v2610
    %v4461 = vpack.c.b16 %v2616, %v2611
    %v4462 = vpack.c.b16 %v2617, %v2612
    %v4463 = vpack.c.b16 %v2623, %v2618
    %v4464 = vpack.c.b16 %v2624, %v2619
    %v4465 = vpack.c.b16 %v2625, %v2620
    %v4466 = vpack.c.b16 %v2626, %v2621
    %v4467 = vpack.c.b16 %v2627, %v2622
    %v4468 = vpack.c.b16 %v2633, %v2628
    %v4469 = vpack.c.b16 %v2634, %v2629
    %v4470 = vpack.c.b16 %v2635, %v2630
    %v4471 = vpack.c.b16 %v2636, %v2631
    %v4472 = vpack.c.b16 %v2637, %v2632
    %v4473 = vpack.c.b16 %v2643, %v2638
    %v4474 = vpack.c.b16 %v2644, %v2639
    %v4475 = vpack.c.b16 %v2645, %v2640
    %v4476 = vpack.c.b16 %v2646, %v2641
    %v4477 = vpack.c.b16 %v2647, %v2642
    %v4478 = vpack.c.b16 %v2653, %v2648
    %v4479 = vpack.c.b16 %v2654, %v2649
    %v4480 = vpack.c.b16 %v2655, %v2650
    %v4481 = vpack.c.b16 %v2656, %v2651
    %v4482 = vpack.c.b16 %v2657, %v2652
    %v4483 = vpack.c.b16 %v2663, %v2658
    %v4484 = vpack.c.b16 %v2664, %v2659
    %v4485 = vpack.c.b16 %v2665, %v2660
    %v4486 = vpack.c.b16 %v2666, %v2661
    %v4487 = vpack.c.b16 %v2667, %v2662
    %v4488 = vpack.c.b16 %v2673, %v2668
    %v4489 = vpack.c.b16 %v2674, %v2669
    %v4490 = vpack.c.b16 %v2675, %v2670
    %v4491 = vpack.c.b16 %v2676, %v2671
    %v4492 = vpack.c.b16 %v2677, %v2672
    %v4493 = vpack.c.b16 %v2683, %v2678
    %v4494 = vpack.c.b16 %v2684, %v2679
    %v4495 = vpack.c.b16 %v2685, %v2680
    %v4496 = vpack.c.b16 %v2686, %v2681
    %v4497 = vpack.c.b16 %v2687, %v2682
    %v4498 = vpack.c.b16 %v2693, %v2688
    %v4499 = vpack.c.b16 %v2694, %v2689
    %v4500 = vpack.c.b16 %v2695, %v2690
    %v4501 = vpack.c.b16 %v2696, %v2691
    %v4502 = vpack.c.b16 %v2697, %v2692
    %v4503 = vpack.c.b16 %v2703, %v2698
    %v4504 = vpack.c.b16 %v2704, %v2699
    %v4505 = vpack.c.b16 %v2705, %v2700
    %v4506 = vpack.c.b16 %v2706, %v2701
    %v4507 = vpack.c.b16 %v2707, %v2702
    %v4508 = vpack.c.b16 %v2713, %v2708
    %v4509 = vpack.c.b16 %v2714, %v2709
    %v4510 = vpack.c.b16 %v2715, %v2710
    %v4511 = vpack.c.b16 %v2716, %v2711
    %v4512 = vpack.c.b16 %v2717, %v2712
    %v4513 = vpack.c.b16 %v2723, %v2718
    %v4514 = vpack.c.b16 %v2724, %v2719
    %v4515 = vpack.c.b16 %v2725, %v2720
    %v4516 = vpack.c.b16 %v2726, %v2721
    %v4517 = vpack.c.b16 %v2727, %v2722
    %v4518 = vpack.c.b16 %v2733, %v2728
    %v4519 = vpack.c.b16 %v2734, %v2729
    %v4520 = vpack.c.b16 %v2735, %v2730
    %v4521 = vpack.c.b16 %v2736, %v2731
    %v4522 = vpack.c.b16 %v2737, %v2732
    %v4523 = vpack.c.b16 %v2743, %v2738
    %v4524 = vpack.c.b16 %v2744, %v2739
    %v4525 = vpack.c.b16 %v2745, %v2740
    %v4526 = vpack.c.b16 %v2746, %v2741
    %v4527 = vpack.c.b16 %v2747, %v2742
    %v4528 = vpack.c.b16 %v2753, %v2748
    %v4529 = vpack.c.b16 %v2754, %v2749
    %v4530 = vpack.c.b16 %v2755, %v2750
    %v4531 = vpack.c.b16 %v2756, %v2751
    %v4532 = vpack.c.b16 %v2757, %v2752
    %v4533 = vpack.c.b16 %v2763, %v2758
    %v4534 = vpack.c.b16 %v2764, %v2759
    %v4535 = vpack.c.b16 %v2765, %v2760
    %v4536 = vpack.c.b16 %v2766, %v2761
    %v4537 = vpack.c.b16 %v2767, %v2762
    %v4538 = vpack.c.b16 %v2773, %v2768
    %v4539 = vpack.c.b16 %v2774, %v2769
    %v4540 = vpack.c.b16 %v2775, %v2770
    %v4541 = vpack.c.b16 %v2776, %v2771
    %v4542 = vpack.c.b16 %v2777, %v2772
    %v4543 = vpack.c.b16 %v2783, %v2778
    %v4544 = vpack.c.b16 %v2784, %v2779
    %v4545 = vpack.c.b16 %v2785, %v2780
    %v4546 = vpack.c.b16 %v2786, %v2781
    %v4547 = vpack.c.b16 %v2787, %v2782
    %v4548 = vpack.c.b16 %v2793, %v2788
    %v4549 = vpack.c.b16 %v2794, %v2789
    %v4550 = vpack.c.b16 %v2795, %v2790
    %v4551 = vpack.c.b16 %v2796, %v2791
    %v4552 = vpack.c.b16 %v2797, %v2792
    %v4553 = vpack.c.b16 %v2803, %v2798
    %v4554 = vpack.c.b16 %v2804, %v2799
    %v4555 = vpack.c.b16 %v2805, %v2800
    %v4556 = vpack.c.b16 %v2806, %v2801
    %v4557 = vpack.c.b16 %v2807, %v2802
    %v4558 = vpack.c.b16 %v2813, %v2808
    %v4559 = vpack.c.b16 %v2814, %v2809
    %v4560 = vpack.c.b16 %v2815, %v2810
    %v4561 = vpack.c.b16 %v2816, %v2811
    %v4562 = vpack.c.b16 %v2817, %v2812
    %v4563 = vpack.c.b16 %v2823, %v2818
    %v4564 = vpack.c.b16 %v2824, %v2819
    %v4565 = vpack.c.b16 %v2825, %v2820
    %v4566 = vpack.c.b16 %v2826, %v2821
    %v4567 = vpack.c.b16 %v2827, %v2822
    %v4568 = vpack.c.b16 %v2833, %v2828
    %v4569 = vpack.c.b16 %v2834, %v2829
    %v4570 = vpack.c.b16 %v2835, %v2830
    %v4571 = vpack.c.b16 %v2836, %v2831
    %v4572 = vpack.c.b16 %v2837, %v2832
    %v4573 = vpack.c.b16 %v2843, %v2838
    %v4574 = vpack.c.b16 %v2844, %v2839
    %v4575 = vpack.c.b16 %v2845, %v2840
    %v4576 = vpack.c.b16 %v2846, %v2841
    %v4577 = vpack.c.b16 %v2847, %v2842
    %v4578 = vpack.c.b16 %v2853, %v2848
    %v4579 = vpack.c.b16 %v2854, %v2849
    %v4580 = vpack.c.b16 %v2855, %v2850
    %v4581 = vpack.c.b16 %v2856, %v2851
    %v4582 = vpack.c.b16 %v2857, %v2852
    %v4583 = vpack.c.b16 %v2863, %v2858
    %v4584 = vpack.c.b16 %v2864, %v2859
    %v4585 = vpack.c.b16 %v2865, %v2860
    %v4586 = vpack.c.b16 %v2866, %v2861
    %v4587 = vpack.c.b16 %v2867, %v2862
    %v4588 = vpack.c.b16 %v2873, %v2868
    %v4589 = vpack.c.b16 %v2874, %v2869
    %v4590 = vpack.c.b16 %v2875, %v2870
    %v4591 = vpack.c.b16 %v2876, %v2871
    %v4592 = vpack.c.b16 %v2877, %v2872
    %v4593 = vpack.c.b16 %v2883, %v2878
    %v4594 = vpack.c.b16 %v2884, %v2879
    %v4595 = vpack.c.b16 %v2885, %v2880
    %v4596 = vpack.c.b16 %v2886, %v2881
    %v4597 = vpack.c.b16 %v2887, %v2882
    %v4598 = vpack.c.b16 %v2893, %v2888
    %v4599 = vpack.c.b16 %v2894, %v2889
    %v4600 = vpack.c.b16 %v2895, %v2890
    %v4601 = vpack.c.b16 %v2896, %v2891
    %v4602 = vpack.c.b16 %v2897, %v2892
    %v4603 = vpack.c.b16 %v2903, %v2898
    %v4604 = vpack.c.b16 %v2904, %v2899
    %v4605 = vpack.c.b16 %v2905, %v2900
    %v4606 = vpack.c.b16 %v2906, %v2901
    %v4607 = vpack.c.b16 %v2907, %v2902
    %v4608 = vpack.c.b16 %v2913, %v2908
    %v4609 = vpack.c.b16 %v2914, %v2909
    %v4610 = vpack.c.b16 %v2915, %v2910
    %v4611 = vpack.c.b16 %v2916, %v2911
    %v4612 = vpack.c.b16 %v2917, %v2912
    %v4613 = vpack.c.b16 %v2923, %v2918
    %v4614 = vpack.c.b16 %v2924, %v2919
    %v4615 = vpack.c.b16 %v2925, %v2920
    %v4616 = vpack.c.b16 %v2926, %v2921
    %v4617 = vpack.c.b16 %v2927, %v2922
    %v4618 = vpack.c.b16 %v2933, %v2928
    %v4619 = vpack.c.b16 %v2934, %v2929
    %v4620 = vpack.c.b16 %v2935, %v2930
    %v4621 = vpack.c.b16 %v2936, %v2931
    %v4622 = vpack.c.b16 %v2937, %v2932
    %v4623 = vpack.c.b16 %v2943, %v2938
    %v4624 = vpack.c.b16 %v2944, %v2939
    %v4625 = vpack.c.b16 %v2945, %v2940
    %v4626 = vpack.c.b16 %v2946, %v2941
    %v4627 = vpack.c.b16 %v2947, %v2942
    %v4628 = vpack.c.b16 %v2953, %v2948
    %v4629 = vpack.c.b16 %v2954, %v2949
    %v4630 = vpack.c.b16 %v2955, %v2950
    %v4631 = vpack.c.b16 %v2956, %v2951
    %v4632 = vpack.c.b16 %v2957, %v2952
    %v4633 = vpack.c.b16 %v2963, %v2958
    %v4634 = vpack.c.b16 %v2964, %v2959
    %v4635 = vpack.c.b16 %v2965, %v2960
    %v4636 = vpack.c.b16 %v2966, %v2961
    %v4637 = vpack.c.b16 %v2967, %v2962
    %v4638 = vpack.c.b16 %v2973, %v2968
    %v4639 = vpack.c.b16 %v2974, %v2969
    %v4640 = vpack.c.b16 %v2975, %v2970
    %v4641 = vpack.c.b16 %v2976, %v2971
    %v4642 = vpack.c.b16 %v2977, %v2972
    %v4643 = vpack.c.b16 %v2983, %v2978
    %v4644 = vpack.c.b16 %v2984, %v2979
    %v4645 = vpack.c.b16 %v2985, %v2980
    %v4646 = vpack.c.b16 %v2986, %v2981
    %v4647 = vpack.c.b16 %v2987, %v2982
    %v4648 = vpack.c.b16 %v2993, %v2988
    %v4649 = vpack.c.b16 %v2994, %v2989
    %v4650 = vpack.c.b16 %v2995, %v2990
    %v4651 = vpack.c.b16 %v2996, %v2991
    %v4652 = vpack.c.b16 %v2997, %v2992
    %v4653 = vpack.c.b16 %v3003, %v2998
    %v4654 = vpack.c.b16 %v3004, %v2999
    %v4655 = vpack.c.b16 %v3005, %v3000
    %v4656 = vpack.c.b16 %v3006, %v3001
    %v4657 = vpack.c.b16 %v3007, %v3002
    %v4658 = vpack.c.b16 %v3013, %v3008
    %v4659 = vpack.c.b16 %v3014, %v3009
    %v4660 = vpack.c.b16 %v3015, %v3010
    %v4661 = vpack.c.b16 %v3016, %v3011
    %v4662 = vpack.c.b16 %v3017, %v3012
    %v4663 = vpack.c.b16 %v3023, %v3018
    %v4664 = vpack.c.b16 %v3024, %v3019
    %v4665 = vpack.c.b16 %v3025, %v3020
    %v4666 = vpack.c.b16 %v3026, %v3021
    %v4667 = vpack.c.b16 %v3027, %v3022
    %v4668 = vpack.c.b16 %v3033, %v3028
    %v4669 = vpack.c.b16 %v3034, %v3029
    %v4670 = vpack.c.b16 %v3035, %v3030
    %v4671 = vpack.c.b16 %v3036, %v3031
    %v4672 = vpack.c.b16 %v3037, %v3032
    %v4673 = vpack.c.b16 %v3043, %v3038
    %v4674 = vpack.c.b16 %v3044, %v3039
    %v4675 = vpack.c.b16 %v3045, %v3040
    %v4676 = vpack.c.b16 %v3046, %v3041
    %v4677 = vpack.c.b16 %v3047, %v3042
    %v4678 = vpack.c.b16 %v3053, %v3048
    %v4679 = vpack.c.b16 %v3054, %v3049
    %v4680 = vpack.c.b16 %v3055, %v3050
    %v4681 = vpack.c.b16 %v3056, %v3051
    %v4682 = vpack.c.b16 %v3057, %v3052
    %v4683 = vpack.c.b16 %v3063, %v3058
    %v4684 = vpack.c.b16 %v3064, %v3059
    %v4685 = vpack.c.b16 %v3065, %v3060
    %v4686 = vpack.c.b16 %v3066, %v3061
    %v4687 = vpack.c.b16 %v3067, %v3062
    %v4688 = vpack.c.b16 %v3073, %v3068
    %v4689 = vpack.c.b16 %v3074, %v3069
    %v4690 = vpack.c.b16 %v3075, %v3070
    %v4691 = vpack.c.b16 %v3076, %v3071
    %v4692 = vpack.c.b16 %v3077, %v3072
    %v4693 = vpack.c.b16 %v3083, %v3078
    %v4694 = vpack.c.b16 %v3084, %v3079
    %v4695 = vpack.c.b16 %v3085, %v3080
    %v4696 = vpack.c.b16 %v3086, %v3081
    %v4697 = vpack.c.b16 %v3087, %v3082
    %v4698 = vpack.c.b16 %v3093, %v3088
    %v4699 = vpack.c.b16 %v3094, %v3089
    %v4700 = vpack.c.b16 %v3095, %v3090
    %v4701 = vpack.c.b16 %v3096, %v3091
    %v4702 = vpack.c.b16 %v3097, %v3092
    %v4703 = vpack.c.b16 %v3103, %v3098
    %v4704 = vpack.c.b16 %v3104, %v3099
    %v4705 = vpack.c.b16 %v3105, %v3100
    %v4706 = vpack.c.b16 %v3106, %v3101
    %v4707 = vpack.c.b16 %v3107, %v3102
    %v4708 = vpack.c.b16 %v3113, %v3108
    %v4709 = vpack.c.b16 %v3114, %v3109
    %v4710 = vpack.c.b16 %v3115, %v3110
    %v4711 = vpack.c.b16 %v3116, %v3111
    %v4712 = vpack.c.b16 %v3117, %v3112
    %v4713 = vpack.c.b16 %v3123, %v3118
    %v4714 = vpack.c.b16 %v3124, %v3119
    %v4715 = vpack.c.b16 %v3125, %v3120
    %v4716 = vpack.c.b16 %v3126, %v3121
    %v4717 = vpack.c.b16 %v3127, %v3122
    %v4718 = vpack.c.b16 %v3133, %v3128
    %v4719 = vpack.c.b16 %v3134, %v3129
    %v4720 = vpack.c.b16 %v3135, %v3130
    %v4721 = vpack.c.b16 %v3136, %v3131
    %v4722 = vpack.c.b16 %v3137, %v3132
    %v4723 = vpack.c.b16 %v3143, %v3138
    %v4724 = vpack.c.b16 %v3144, %v3139
    %v4725 = vpack.c.b16 %v3145, %v3140
    %v4726 = vpack.c.b16 %v3146, %v3141
    %v4727 = vpack.c.b16 %v3147, %v3142
    %v4728 = vpack.c.b16 %v3153, %v3148
    %v4729 = vpack.c.b16 %v3154, %v3149
    %v4730 = vpack.c.b16 %v3155, %v3150
    %v4731 = vpack.c.b16 %v3156, %v3151
    %v4732 = vpack.c.b16 %v3157, %v3152
    %v4733 = vpack.c.b16 %v3163, %v3158
    %v4734 = vpack.c.b16 %v3164, %v3159
    %v4735 = vpack.c.b16 %v3165, %v3160
    %v4736 = vpack.c.b16 %v3166, %v3161
    %v4737 = vpack.c.b16 %v3167, %v3162
    %v4738 = vpack.c.b16 %v3173, %v3168
    %v4739 = vpack.c.b16 %v3174, %v3169
    %v4740 = vpack.c.b16 %v3175, %v3170
    %v4741 = vpack.c.b16 %v3176, %v3171
    %v4742 = vpack.c.b16 %v3177, %v3172
    %v4743 = vpack.c.b16 %v3183, %v3178
    %v4744 = vpack.c.b16 %v3184, %v3179
    %v4745 = vpack.c.b16 %v3185, %v3180
    %v4746 = vpack.c.b16 %v3186, %v3181
    %v4747 = vpack.c.b16 %v3187, %v3182
    %v4748 = vpack.c.b16 %v3193, %v3188
    %v4749 = vpack.c.b16 %v3194, %v3189
    %v4750 = vpack.c.b16 %v3195, %v3190
    %v4751 = vpack.c.b16 %v3196, %v3191
    %v4752 = vpack.c.b16 %v3197, %v3192
    %v4753 = vpack.c.b16 %v3203, %v3198
    %v4754 = vpack.c.b16 %v3204, %v3199
    %v4755 = vpack.c.b16 %v3205, %v3200
    %v4756 = vpack.c.b16 %v3206, %v3201
    %v4757 = vpack.c.b16 %v3207, %v3202
    %v4758 = vpack.c.b16 %v3213, %v3208
    %v4759 = vpack.c.b16 %v3214, %v3209
    %v4760 = vpack.c.b16 %v3215, %v3210
    %v4761 = vpack.c.b16 %v3216, %v3211
    %v4762 = vpack.c.b16 %v3217, %v3212
    %v4763 = vpack.c.b16 %v3223, %v3218
    %v4764 = vpack.c.b16 %v3224, %v3219
    %v4765 = vpack.c.b16 %v3225, %v3220
    %v4766 = vpack.c.b16 %v3226, %v3221
    %v4767 = vpack.c.b16 %v3227, %v3222
    %v4768 = vpack.c.b16 %v3233, %v3228
    %v4769 = vpack.c.b16 %v3234, %v3229
    %v4770 = vpack.c.b16 %v3235, %v3230
    %v4771 = vpack.c.b16 %v3236, %v3231
    %v4772 = vpack.c.b16 %v3237, %v3232
    %v4773 = vpack.c.b16 %v3243, %v3238
    %v4774 = vpack.c.b16 %v3244, %v3239
    %v4775 = vpack.c.b16 %v3245, %v3240
    %v4776 = vpack.c.b16 %v3246, %v3241
    %v4777 = vpack.c.b16 %v3247, %v3242
    %v4778 = vpack.c.b16 %v3253, %v3248
    %v4779 = vpack.c.b16 %v3254, %v3249
    %v4780 = vpack.c.b16 %v3255, %v3250
    %v4781 = vpack.c.b16 %v3256, %v3251
    %v4782 = vpack.c.b16 %v3257, %v3252
    %v4783 = vpack.c.b16 %v3263, %v3258
    %v4784 = vpack.c.b16 %v3264, %v3259
    %v4785 = vpack.c.b16 %v3265, %v3260
    %v4786 = vpack.c.b16 %v3266, %v3261
    %v4787 = vpack.c.b16 %v3267, %v3262
    %v4788 = vpack.c.b16 %v3273, %v3268
    %v4789 = vpack.c.b16 %v3274, %v3269
    %v4790 = vpack.c.b16 %v3275, %v3270
    %v4791 = vpack.c.b16 %v3276, %v3271
    %v4792 = vpack.c.b16 %v3277, %v3272
    %v4793 = vpack.c.b16 %v3283, %v3278
    %v4794 = vpack.c.b16 %v3284, %v3279
    %v4795 = vpack.c.b16 %v3285, %v3280
    %v4796 = vpack.c.b16 %v3286, %v3281
    %v4797 = vpack.c.b16 %v3287, %v3282
    %v4798 = vpack.c.b16 %v3293, %v3288
    %v4799 = vpack.c.b16 %v3294, %v3289
    %v4800 = vpack.c.b16 %v3295, %v3290
    %v4801 = vpack.c.b16 %v3296, %v3291
    %v4802 = vpack.c.b16 %v3297, %v3292
    %v4803 = vpack.c.b16 %v3303, %v3298
    %v4804 = vpack.c.b16 %v3304, %v3299
    %v4805 = vpack.c.b16 %v3305, %v3300
    %v4806 = vpack.c.b16 %v3306, %v3301
    %v4807 = vpack.c.b16 %v3307, %v3302
    %v4808 = vpack.c.b16 %v3313, %v3308
    %v4809 = vpack.c.b16 %v3314, %v3309
    %v4810 = vpack.c.b16 %v3315, %v3310
    %v4811 = vpack.c.b16 %v3316, %v3311
    %v4812 = vpack.c.b16 %v3317, %v3312
    %v4813 = vpack.c.b16 %v3323, %v3318
    %v4814 = vpack.c.b16 %v3324, %v3319
    %v4815 = vpack.c.b16 %v3325, %v3320
    %v4816 = vpack.c.b16 %v3326, %v3321
    %v4817 = vpack.c.b16 %v3327, %v3322
    %v4818 = vpack.c.b16 %v3333, %v3328
    %v4819 = vpack.c.b16 %v3334, %v3329
    %v4820 = vpack.c.b16 %v3335, %v3330
    %v4821 = vpack.c.b16 %v3336, %v3331
    %v4822 = vpack.c.b16 %v3337, %v3332
    %v4823 = vpack.c.b16 %v3343, %v3338
    %v4824 = vpack.c.b16 %v3344, %v3339
    %v4825 = vpack.c.b16 %v3345, %v3340
    %v4826 = vpack.c.b16 %v3346, %v3341
    %v4827 = vpack.c.b16 %v3347, %v3342
    %v4828 = vpack.c.b16 %v3353, %v3348
    %v4829 = vpack.c.b16 %v3354, %v3349
    %v4830 = vpack.c.b16 %v3355, %v3350
    %v4831 = vpack.c.b16 %v3356, %v3351
    %v4832 = vpack.c.b16 %v3357, %v3352
    %v4833 = vpack.c.b16 %v3363, %v3358
    %v4834 = vpack.c.b16 %v3364, %v3359
    %v4835 = vpack.c.b16 %v3365, %v3360
    %v4836 = vpack.c.b16 %v3366, %v3361
    %v4837 = vpack.c.b16 %v3367, %v3362
    %v4838 = vpack.c.b16 %v3373, %v3368
    %v4839 = vpack.c.b16 %v3374, %v3369
    %v4840 = vpack.c.b16 %v3375, %v3370
    %v4841 = vpack.c.b16 %v3376, %v3371
    %v4842 = vpack.c.b16 %v3377, %v3372
    %v4843 = vpack.c.b16 %v3383, %v3378
    %v4844 = vpack.c.b16 %v3384, %v3379
    %v4845 = vpack.c.b16 %v3385, %v3380
    %v4846 = vpack.c.b16 %v3386, %v3381
    %v4847 = vpack.c.b16 %v3387, %v3382
    %v4848 = vpack.c.b16 %v3393, %v3388
    %v4849 = vpack.c.b16 %v3394, %v3389
    %v4850 = vpack.c.b16 %v3395, %v3390
    %v4851 = vpack.c.b16 %v3396, %v3391
    %v4852 = vpack.c.b16 %v3397, %v3392
    %v4853 = vpack.c.b16 %v3403, %v3398
    %v4854 = vpack.c.b16 %v3404, %v3399
    %v4855 = vpack.c.b16 %v3405, %v3400
    %v4856 = vpack.c.b16 %v3406, %v3401
    %v4857 = vpack.c.b16 %v3407, %v3402
    %v4858 = vpack.c.b16 %v3413, %v3408
    %v4859 = vpack.c.b16 %v3414, %v3409
    %v4860 = vpack.c.b16 %v3415, %v3410
    %v4861 = vpack.c.b16 %v3416, %v3411
    %v4862 = vpack.c.b16 %v3417, %v3412
    %v4863 = vpack.c.b16 %v3423, %v3418
    %v4864 = vpack.c.b16 %v3424, %v3419
    %v4865 = vpack.c.b16 %v3425, %v3420
    %v4866 = vpack.c.b16 %v3426, %v3421
    %v4867 = vpack.c.b16 %v3427, %v3422
    %v4868 = vpack.c.b16 %v3433, %v3428
    %v4869 = vpack.c.b16 %v3434, %v3429
    %v4870 = vpack.c.b16 %v3435, %v3430
    %v4871 = vpack.c.b16 %v3436, %v3431
    %v4872 = vpack.c.b16 %v3437, %v3432
    %v4873 = vpack.c.b16 %v3443, %v3438
    %v4874 = vpack.c.b16 %v3444, %v3439
    %v4875 = vpack.c.b16 %v3445, %v3440
    %v4876 = vpack.c.b16 %v3446, %v3441
    %v4877 = vpack.c.b16 %v3447, %v3442
    %v4878 = vpack.c.b16 %v3453, %v3448
    %v4879 = vpack.c.b16 %v3454, %v3449
    %v4880 = vpack.c.b16 %v3455, %v3450
    %v4881 = vpack.c.b16 %v3456, %v3451
    %v4882 = vpack.c.b16 %v3457, %v3452
    %v4883 = vpack.c.b16 %v3463, %v3458
    %v4884 = vpack.c.b16 %v3464, %v3459
    %v4885 = vpack.c.b16 %v3465, %v3460
    %v4886 = vpack.c.b16 %v3466, %v3461
    %v4887 = vpack.c.b16 %v3467, %v3462
    %v4888 = vpack.c.b16 %v3473, %v3468
    %v4889 = vpack.c.b16 %v3474, %v3469
    %v4890 = vpack.c.b16 %v3475, %v3470
    %v4891 = vpack.c.b16 %v3476, %v3471
    %v4892 = vpack.c.b16 %v3477, %v3472
    %v4893 = vpack.c.b16 %v3483, %v3478
    %v4894 = vpack.c.b16 %v3484, %v3479
    %v4895 = vpack.c.b16 %v3485, %v3480
    %v4896 = vpack.c.b16 %v3486, %v3481
    %v4897 = vpack.c.b16 %v3487, %v3482
    %v4898 = vpack.c.b16 %v3493, %v3488
    %v4899 = vpack.c.b16 %v3494, %v3489
    %v4900 = vpack.c.b16 %v3495, %v3490
    %v4901 = vpack.c.b16 %v3496, %v3491
    %v4902 = vpack.c.b16 %v3497, %v3492
    %v4903 = vpack.c.b16 %v3503, %v3498
    %v4904 = vpack.c.b16 %v3504, %v3499
    %v4905 = vpack.c.b16 %v3505, %v3500
    %v4906 = vpack.c.b16 %v3506, %v3501
    %v4907 = vpack.c.b16 %v3507, %v3502
    %v4908 = vpack.c.b16 %v3513, %v3508
    %v4909 = vpack.c.b16 %v3514, %v3509
    %v4910 = vpack.c.b16 %v3515, %v3510
    %v4911 = vpack.c.b16 %v3516, %v3511
    %v4912 = vpack.c.b16 %v3517, %v3512
    %v4913 = vpack.c.b16 %v3523, %v3518
    %v4914 = vpack.c.b16 %v3524, %v3519
    %v4915 = vpack.c.b16 %v3525, %v3520
    %v4916 = vpack.c.b16 %v3526, %v3521
    %v4917 = vpack.c.b16 %v3527, %v3522
    %v4918 = vpack.c.b16 %v3533, %v3528
    %v4919 = vpack.c.b16 %v3534, %v3529
    %v4920 = vpack.c.b16 %v3535, %v3530
    %v4921 = vpack.c.b16 %v3536, %v3531
    %v4922 = vpack.c.b16 %v3537, %v3532
    %v4923 = vpack.c.b16 %v3543, %v3538
    %v4924 = vpack.c.b16 %v3544, %v3539
    %v4925 = vpack.c.b16 %v3545, %v3540
    %v4926 = vpack.c.b16 %v3546, %v3541
    %v4927 = vpack.c.b16 %v3547, %v3542
    %v4928 = vpack.c.b16 %v3553, %v3548
    %v4929 = vpack.c.b16 %v3554, %v3549
    %v4930 = vpack.c.b16 %v3555, %v3550
    %v4931 = vpack.c.b16 %v3556, %v3551
    %v4932 = vpack.c.b16 %v3557, %v3552
    %v4933 = vpack.c.b16 %v3563, %v3558
    %v4934 = vpack.c.b16 %v3564, %v3559
    %v4935 = vpack.c.b16 %v3565, %v3560
    %v4936 = vpack.c.b16 %v3566, %v3561
    %v4937 = vpack.c.b16 %v3567, %v3562
    %v4938 = vpack.c.b16 %v3573, %v3568
    %v4939 = vpack.c.b16 %v3574, %v3569
    %v4940 = vpack.c.b16 %v3575, %v3570
    %v4941 = vpack.c.b16 %v3576, %v3571
    %v4942 = vpack.c.b16 %v3577, %v3572
    %v4943 = vpack.c.b16 %v3583, %v3578
    %v4944 = vpack.c.b16 %v3584, %v3579
    %v4945 = vpack.c.b16 %v3585, %v3580
    %v4946 = vpack.c.b16 %v3586, %v3581
    %v4947 = vpack.c.b16 %v3587, %v3582
    %v4948 = vpack.c.b16 %v3593, %v3588
    %v4949 = vpack.c.b16 %v3594, %v3589
    %v4950 = vpack.c.b16 %v3595, %v3590
    %v4951 = vpack.c.b16 %v3596, %v3591
    %v4952 = vpack.c.b16 %v3597, %v3592
    %v4953 = vpack.c.b16 %v3603, %v3598
    %v4954 = vpack.c.b16 %v3604, %v3599
    %v4955 = vpack.c.b16 %v3605, %v3600
    %v4956 = vpack.c.b16 %v3606, %v3601
    %v4957 = vpack.c.b16 %v3607, %v3602
    %v4958 = vpack.c.b16 %v3613, %v3608
    %v4959 = vpack.c.b16 %v3614, %v3609
    %v4960 = vpack.c.b16 %v3615, %v3610
    %v4961 = vpack.c.b16 %v3616, %v3611
    %v4962 = vpack.c.b16 %v3617, %v3612
    %v4963 = vpack.c.b16 %v3623, %v3618
    %v4964 = vpack.c.b16 %v3624, %v3619
    %v4965 = vpack.c.b16 %v3625, %v3620
    %v4966 = vpack.c.b16 %v3626, %v3621
    %v4967 = vpack.c.b16 %v3627, %v3622
    %v4968 = vpack.c.b16 %v3633, %v3628
    %v4969 = vpack.c.b16 %v3634, %v3629
    %v4970 = vpack.c.b16 %v3635, %v3630
    %v4971 = vpack.c.b16 %v3636, %v3631
    %v4972 = vpack.c.b16 %v3637, %v3632
    %v4973 = vpack.c.b16 %v3643, %v3638
    %v4974 = vpack.c.b16 %v3644, %v3639
    %v4975 = vpack.c.b16 %v3645, %v3640
    %v4976 = vpack.c.b16 %v3646, %v3641
    %v4977 = vpack.c.b16 %v3647, %v3642
    %v4978 = vpack.c.b16 %v3653, %v3648
    %v4979 = vpack.c.b16 %v3654, %v3649
    %v4980 = vpack.c.b16 %v3655, %v3650
    %v4981 = vpack.c.b16 %v3656, %v3651
    %v4982 = vpack.c.b16 %v3657, %v3652
    %v4983 = vpack.c.b16 %v3663, %v3658
    %v4984 = vpack.c.b16 %v3664, %v3659
    %v4985 = vpack.c.b16 %v3665, %v3660
    %v4986 = vpack.c.b16 %v3666, %v3661
    %v4987 = vpack.c.b16 %v3667, %v3662
    %v4988 = vpack.c.b16 %v3673, %v3668
    %v4989 = vpack.c.b16 %v3674, %v3669
    %v4990 = vpack.c.b16 %v3675, %v3670
    %v4991 = vpack.c.b16 %v3676, %v3671
    %v4992 = vpack.c.b16 %v3677, %v3672
    %v4993 = vpack.c.b16 %v3683, %v3678
    %v4994 = vpack.c.b16 %v3684, %v3679
    %v4995 = vpack.c.b16 %v3685, %v3680
    %v4996 = vpack.c.b16 %v3686, %v3681
    %v4997 = vpack.c.b16 %v3687, %v3682
    %v4998 = vpack.c.b16 %v3693, %v3688
    %v4999 = vpack.c.b16 %v3694, %v3689
    %v5000 = vpack.c.b16 %v3695, %v3690
    %v5001 = vpack.c.b16 %v3696, %v3691
    %v5002 = vpack.c.b16 %v3697, %v3692
    %v5003 = vpack.c.b16 %v3703, %v3698
    %v5004 = vpack.c.b16 %v3704, %v3699
    %v5005 = vpack.c.b16 %v3705, %v3700
    %v5006 = vpack.c.b16 %v3706, %v3701
    %v5007 = vpack.c.b16 %v3707, %v3702
    %v5008 = vpack.c.b16 %v3713, %v3708
    %v5009 = vpack.c.b16 %v3714, %v3709
    %v5010 = vpack.c.b16 %v3715, %v3710
    %v5011 = vpack.c.b16 %v3716, %v3711
    %v5012 = vpack.c.b16 %v3717, %v3712
    %v5013 = vpack.c.b16 %v3723, %v3718
    %v5014 = vpack.c.b16 %v3724, %v3719
    %v5015 = vpack.c.b16 %v3725, %v3720
    %v5016 = vpack.c.b16 %v3726, %v3721
    %v5017 = vpack.c.b16 %v3727, %v3722
    %v5018 = vpack.c.b16 %v3733, %v3728
    %v5019 = vpack.c.b16 %v3734, %v3729
    %v5020 = vpack.c.b16 %v3735, %v3730
    %v5021 = vpack.c.b16 %v3736, %v3731
    %v5022 = vpack.c.b16 %v3737, %v3732
    %v5023 = vpack.c.b16 %v3743, %v3738
    %v5024 = vpack.c.b16 %v3744, %v3739
    %v5025 = vpack.c.b16 %v3745, %v3740
    %v5026 = vpack.c.b16 %v3746, %v3741
    %v5027 = vpack.c.b16 %v3747, %v3742
    %v5028 = vpack.c.b16 %v3753, %v3748
    %v5029 = vpack.c.b16 %v3754, %v3749
    %v5030 = vpack.c.b16 %v3755, %v3750
    %v5031 = vpack.c.b16 %v3756, %v3751
    %v5032 = vpack.c.b16 %v3757, %v3752
    %v5033 = vpack.c.b16 %v3763, %v3758
    %v5034 = vpack.c.b16 %v3764, %v3759
    %v5035 = vpack.c.b16 %v3765, %v3760
    %v5036 = vpack.c.b16 %v3766, %v3761
    %v5037 = vpack.c.b16 %v3767, %v3762
    %v5038 = vpack.c.b16 %v3773, %v3768
    %v5039 = vpack.c.b16 %v3774, %v3769
    %v5040 = vpack.c.b16 %v3775, %v3770
    %v5041 = vpack.c.b16 %v3776, %v3771
    %v5042 = vpack.c.b16 %v3777, %v3772
    %v5043 = vpack.c.b16 %v3783, %v3778
    %v5044 = vpack.c.b16 %v3784, %v3779
    %v5045 = vpack.c.b16 %v3785, %v3780
    %v5046 = vpack.c.b16 %v3786, %v3781
    %v5047 = vpack.c.b16 %v3787, %v3782
    %v5048 = vpack.c.b16 %v3793, %v3788
    %v5049 = vpack.c.b16 %v3794, %v3789
    %v5050 = vpack.c.b16 %v3795, %v3790
    %v5051 = vpack.c.b16 %v3796, %v3791
    %v5052 = vpack.c.b16 %v3797, %v3792
    %v5053 = vpack.c.b16 %v3803, %v3798
    %v5054 = vpack.c.b16 %v3804, %v3799
    %v5055 = vpack.c.b16 %v3805, %v3800
    %v5056 = vpack.c.b16 %v3806, %v3801
    %v5057 = vpack.c.b16 %v3807, %v3802
    %v5058 = vpack.c.b16 %v3813, %v3808
    %v5059 = vpack.c.b16 %v3814, %v3809
    %v5060 = vpack.c.b16 %v3815, %v3810
    %v5061 = vpack.c.b16 %v3816, %v3811
    %v5062 = vpack.c.b16 %v3817, %v3812
    %v5063 = vpack.c.b16 %v3823, %v3818
    %v5064 = vpack.c.b16 %v3824, %v3819
    %v5065 = vpack.c.b16 %v3825, %v3820
    %v5066 = vpack.c.b16 %v3826, %v3821
    %v5067 = vpack.c.b16 %v3827, %v3822
    %v5068 = vpack.c.b16 %v3833, %v3828
    %v5069 = vpack.c.b16 %v3834, %v3829
    %v5070 = vpack.c.b16 %v3835, %v3830
    %v5071 = vpack.c.b16 %v3836, %v3831
    %v5072 = vpack.c.b16 %v3837, %v3832
    %v5073 = vpack.c.b16 %v3843, %v3838
    %v5074 = vpack.c.b16 %v3844, %v3839
    %v5075 = vpack.c.b16 %v3845, %v3840
    %v5076 = vpack.c.b16 %v3846, %v3841
    %v5077 = vpack.c.b16 %v3847, %v3842
    %v5078 = vpack.c.b16 %v3853, %v3848
    %v5079 = vpack.c.b16 %v3854, %v3849
    %v5080 = vpack.c.b16 %v3855, %v3850
    %v5081 = vpack.c.b16 %v3856, %v3851
    %v5082 = vpack.c.b16 %v3857, %v3852
    %v5083 = vpack.c.b16 %v3863, %v3858
    %v5084 = vpack.c.b16 %v3864, %v3859
    %v5085 = vpack.c.b16 %v3865, %v3860
    %v5086 = vpack.c.b16 %v3866, %v3861
    %v5087 = vpack.c.b16 %v3867, %v3862
    %v5088 = vpack.c.b16 %v3873, %v3868
    %v5089 = vpack.c.b16 %v3874, %v3869
    %v5090 = vpack.c.b16 %v3875, %v3870
    %v5091 = vpack.c.b16 %v3876, %v3871
    %v5092 = vpack.c.b16 %v3877, %v3872
    %v5093 = vpack.c.b16 %v3883, %v3878
    %v5094 = vpack.c.b16 %v3884, %v3879
    %v5095 = vpack.c.b16 %v3885, %v3880
    %v5096 = vpack.c.b16 %v3886, %v3881
    %v5097 = vpack.c.b16 %v3887, %v3882
    %v5098 = vpack.c.b16 %v3893, %v3888
    %v5099 = vpack.c.b16 %v3894, %v3889
    %v5100 = vpack.c.b16 %v3895, %v3890
    %v5101 = vpack.c.b16 %v3896, %v3891
    %v5102 = vpack.c.b16 %v3897, %v3892
    %v5103 = vpack.c.b16 %v3903, %v3898
    %v5104 = vpack.c.b16 %v3904, %v3899
    %v5105 = vpack.c.b16 %v3905, %v3900
    %v5106 = vpack.c.b16 %v3906, %v3901
    %v5107 = vpack.c.b16 %v3907, %v3902
    %v5108 = vpack.c.b16 %v3913, %v3908
    %v5109 = vpack.c.b16 %v3914, %v3909
    %v5110 = vpack.c.b16 %v3915, %v3910
    %v5111 = vpack.c.b16 %v3916, %v3911
    %v5112 = vpack.c.b16 %v3917, %v3912
    %v5113 = vpack.c.b16 %v3923, %v3918
    %v5114 = vpack.c.b16 %v3924, %v3919
    %v5115 = vpack.c.b16 %v3925, %v3920
    %v5116 = vpack.c.b16 %v3926, %v3921
    %v5117 = vpack.c.b16 %v3927, %v3922
    %v5118 = vpack.c.b16 %v3933, %v3928
    %v5119 = vpack.c.b16 %v3934, %v3929
    %v5120 = vpack.c.b16 %v3935, %v3930
    %v5121 = vpack.c.b16 %v3936, %v3931
    %v5122 = vpack.c.b16 %v3937, %v3932
    %v5123 = vpack.c.b16 %v3943, %v3938
    %v5124 = vpack.c.b16 %v3944, %v3939
    %v5125 = vpack.c.b16 %v3945, %v3940
    %v5126 = vpack.c.b16 %v3946, %v3941
    %v5127 = vpack.c.b16 %v3947, %v3942
    %v5128 = vpack.c.b16 %v3953, %v3948
    %v5129 = vpack.c.b16 %v3954, %v3949
    %v5130 = vpack.c.b16 %v3955, %v3950
    %v5131 = vpack.c.b16 %v3956, %v3951
    %v5132 = vpack.c.b16 %v3957, %v3952
    %v5133 = vpack.c.b16 %v3963, %v3958
    %v5134 = vpack.c.b16 %v3964, %v3959
    %v5135 = vpack.c.b16 %v3965, %v3960
    %v5136 = vpack.c.b16 %v3966, %v3961
    %v5137 = vpack.c.b16 %v3967, %v3962
    %v5138 = vpack.c.b16 %v3973, %v3968
    %v5139 = vpack.c.b16 %v3974, %v3969
    %v5140 = vpack.c.b16 %v3975, %v3970
    %v5141 = vpack.c.b16 %v3976, %v3971
    %v5142 = vpack.c.b16 %v3977, %v3972
    %v5143 = vpack.c.b16 %v3983, %v3978
    %v5144 = vpack.c.b16 %v3984, %v3979
    %v5145 = vpack.c.b16 %v3985, %v3980
    %v5146 = vpack.c.b16 %v3986, %v3981
    %v5147 = vpack.c.b16 %v3987, %v3982
    %v5148 = vpack.c.b16 %v3993, %v3988
    %v5149 = vpack.c.b16 %v3994, %v3989
    %v5150 = vpack.c.b16 %v3995, %v3990
    %v5151 = vpack.c.b16 %v3996, %v3991
    %v5152 = vpack.c.b16 %v3997, %v3992
    %v5153 = vpack.c.b16 %v4003, %v3998
    %v5154 = vpack.c.b16 %v4004, %v3999
    %v5155 = vpack.c.b16 %v4005, %v4000
    %v5156 = vpack.c.b16 %v4006, %v4001
    %v5157 = vpack.c.b16 %v4007, %v4002
    %v5158 = vpack.c.b16 %v4013, %v4008
    %v5159 = vpack.c.b16 %v4014, %v4009
    %v5160 = vpack.c.b16 %v4015, %v4010
    %v5161 = vpack.c.b16 %v4016, %v4011
    %v5162 = vpack.c.b16 %v4017, %v4012
    %v5163 = vpack.c.b16 %v4023, %v4018
    %v5164 = vpack.c.b16 %v4024, %v4019
    %v5165 = vpack.c.b16 %v4025, %v4020
    %v5166 = vpack.c.b16 %v4026, %v4021
    %v5167 = vpack.c.b16 %v4027, %v4022
    %v5168 = vpack.c.b16 %v4033, %v4028
    %v5169 = vpack.c.b16 %v4034, %v4029
    %v5170 = vpack.c.b16 %v4035, %v4030
    %v5171 = vpack.c.b16 %v4036, %v4031
    %v5172 = vpack.c.b16 %v4037, %v4032
    %v5173 = vpack.c.b16 %v4043, %v4038
    %v5174 = vpack.c.b16 %v4044, %v4039
    %v5175 = vpack.c.b16 %v4045, %v4040
    %v5176 = vpack.c.b16 %v4046, %v4041
    %v5177 = vpack.c.b16 %v4047, %v4042
    %v5178 = vpack.c.b16 %v4053, %v4048
    %v5179 = vpack.c.b16 %v4054, %v4049
    %v5180 = vpack.c.b16 %v4055, %v4050
    %v5181 = vpack.c.b16 %v4056, %v4051
    %v5182 = vpack.c.b16 %v4057, %v4052
    %v5183 = vpack.c.b16 %v4063, %v4058
    %v5184 = vpack.c.b16 %v4064, %v4059
    %v5185 = vpack.c.b16 %v4065, %v4060
    %v5186 = vpack.c.b16 %v4066, %v4061
    %v5187 = vpack.c.b16 %v4067, %v4062
    %v5188 = vpack.c.b16 %v4073, %v4068
    %v5189 = vpack.c.b16 %v4074, %v4069
    %v5190 = vpack.c.b16 %v4075, %v4070
    %v5191 = vpack.c.b16 %v4076, %v4071
    %v5192 = vpack.c.b16 %v4077, %v4072
    %v5193 = vpack.c.b16 %v4083, %v4078
    %v5194 = vpack.c.b16 %v4084, %v4079
    %v5195 = vpack.c.b16 %v4085, %v4080
    %v5196 = vpack.c.b16 %v4086, %v4081
    %v5197 = vpack.c.b16 %v4087, %v4082
    %v5198 = vpack.c.b16 %v4093, %v4088
    %v5199 = vpack.c.b16 %v4094, %v4089
    %v5200 = vpack.c.b16 %v4095, %v4090
    %v5201 = vpack.c.b16 %v4096, %v4091
    %v5202 = vpack.c.b16 %v4097, %v4092
    %v5203 = vpack.c.b16 %v4103, %v4098
    %v5204 = vpack.c.b16 %v4104, %v4099
    %v5205 = vpack.c.b16 %v4105, %v4100
    %v5206 = vpack.c.b16 %v4106, %v4101
    %v5207 = vpack.c.b16 %v4107, %v4102
    %v5208 = vpack.c.b16 %v4113, %v4108
    %v5209 = vpack.c.b16 %v4114, %v4109
    %v5210 = vpack.c.b16 %v4115, %v4110
    %v5211 = vpack.c.b16 %v4116, %v4111
    %v5212 = vpack.c.b16 %v4117, %v4112
    %v5213 = vpack.c.b16 %v4123, %v4118
    %v5214 = vpack.c.b16 %v4124, %v4119
    %v5215 = vpack.c.b16 %v4125, %v4120
    %v5216 = vpack.c.b16 %v4126, %v4121
    %v5217 = vpack.c.b16 %v4127, %v4122
    %v5218 = vpack.c.b16 %v4133, %v4128
    %v5219 = vpack.c.b16 %v4134, %v4129
    %v5220 = vpack.c.b16 %v4135, %v4130
    %v5221 = vpack.c.b16 %v4136, %v4131
    %v5222 = vpack.c.b16 %v4137, %v4132
    %v5223 = vpack.c.b16 %v4143, %v4138
    %v5224 = vpack.c.b16 %v4144, %v4139
    %v5225 = vpack.c.b16 %v4145, %v4140
    %v5226 = vpack.c.b16 %v4146, %v4141
    %v5227 = vpack.c.b16 %v4147, %v4142
    %v5228 = vpack.c.b16 %v4153, %v4148
    %v5229 = vpack.c.b16 %v4154, %v4149
    %v5230 = vpack.c.b16 %v4155, %v4150
    %v5231 = vpack.c.b16 %v4156, %v4151
    %v5232 = vpack.c.b16 %v4157, %v4152
    %v5233 = vpack.c.b16 %v4163, %v4158
    %v5234 = vpack.c.b16 %v4164, %v4159
    %v5235 = vpack.c.b16 %v4165, %v4160
    %v5236 = vpack.c.b16 %v4166, %v4161
    %v5237 = vpack.c.b16 %v4167, %v4162
    %v5238 = vpack.c.b16 %v4173, %v4168
    %v5239 = vpack.c.b16 %v4174, %v4169
    %v5240 = vpack.c.b16 %v4175, %v4170
    %v5241 = vpack.c.b16 %v4176, %v4171
    %v5242 = vpack.c.b16 %v4177, %v4172
    %v5243 = vpack.c.b16 %v4183, %v4178
    %v5244 = vpack.c.b16 %v4184, %v4179
    %v5245 = vpack.c.b16 %v4185, %v4180
    %v5246 = vpack.c.b16 %v4186, %v4181
    %v5247 = vpack.c.b16 %v4187, %v4182
    %v5248 = vpack.c.b16 %v4193, %v4188
    %v5249 = vpack.c.b16 %v4194, %v4189
    %v5250 = vpack.c.b16 %v4195, %v4190
    %v5251 = vpack.c.b16 %v4196, %v4191
    %v5252 = vpack.c.b16 %v4197, %v4192
    %v5253 = vpack.c.b16 %v4203, %v4198
    %v5254 = vpack.c.b16 %v4204, %v4199
    %v5255 = vpack.c.b16 %v4205, %v4200
    %v5256 = vpack.c.b16 %v4206, %v4201
    %v5257 = vpack.c.b16 %v4207, %v4202
    %v5258 = vpack.c.b16 %v4213, %v4208
    %v5259 = vpack.c.b16 %v4214, %v4209
    %v5260 = vpack.c.b16 %v4215, %v4210
    %v5261 = vpack.c.b16 %v4216, %v4211
    %v5262 = vpack.c.b16 %v4217, %v4212
    %v5263 = vpack.c.b16 %v4223, %v4218
    %v5264 = vpack.c.b16 %v4224, %v4219
    %v5265 = vpack.c.b16 %v4225, %v4220
    %v5266 = vpack.c.b16 %v4226, %v4221
    %v5267 = vpack.c.b16 %v4227, %v4222
    %v5268 = vpack.c.b16 %v4233, %v4228
    %v5269 = vpack.c.b16 %v4234, %v4229
    %v5270 = vpack.c.b16 %v4235, %v4230
    %v5271 = vpack.c.b16 %v4236, %v4231
    %v5272 = vpack.c.b16 %v4237, %v4232
    %v5273 = vpack.c.b16 %v4243, %v4238
    %v5274 = vpack.c.b16 %v4244, %v4239
    %v5275 = vpack.c.b16 %v4245, %v4240
    %v5276 = vpack.c.b16 %v4246, %v4241
    %v5277 = vpack.c.b16 %v4247, %v4242
    %v5278 = vpack.c.b16 %v4253, %v4248
    %v5279 = vpack.c.b16 %v4254, %v4249
    %v5280 = vpack.c.b16 %v4255, %v4250
    %v5281 = vpack.c.b16 %v4256, %v4251
    %v5282 = vpack.c.b16 %v4257, %v4252
    %v5283 = vpack.c.b16 %v4263, %v4258
    %v5284 = vpack.c.b16 %v4264, %v4259
    %v5285 = vpack.c.b16 %v4265, %v4260
    %v5286 = vpack.c.b16 %v4266, %v4261
    %v5287 = vpack.c.b16 %v4267, %v4262
    %v5288 = vpack.c.b16 %v4273, %v4268
    %v5289 = vpack.c.b16 %v4274, %v4269
    %v5290 = vpack.c.b16 %v4275, %v4270
    %v5291 = vpack.c.b16 %v4276, %v4271
    %v5292 = vpack.c.b16 %v4277, %v4272
    %v5293 = vpack.c.b16 %v4283, %v4278
    %v5294 = vpack.c.b16 %v4284, %v4279
    %v5295 = vpack.c.b16 %v4285, %v4280
    %v5296 = vpack.c.b16 %v4286, %v4281
    %v5297 = vpack.c.b16 %v4287, %v4282
    %v5298 = vpack.c.b16 %v4293, %v4288
    %v5299 = vpack.c.b16 %v4294, %v4289
    %v5300 = vpack.c.b16 %v4295, %v4290
    %v5301 = vpack.c.b16 %v4296, %v4291
    %v5302 = vpack.c.b16 %v4297, %v4292
    %v5303 = vpack.c.b16 %v4303, %v4298
    %v5304 = vpack.c.b16 %v4304, %v4299
    %v5305 = vpack.c.b16 %v4305, %v4300
    %v5306 = vpack.c.b16 %v4306, %v4301
    %v5307 = vpack.c.b16 %v4307, %v4302
    %v5308 = vpack.c.b16 %v4313, %v4308
    %v5309 = vpack.c.b16 %v4314, %v4309
    %v5310 = vpack.c.b16 %v4315, %v4310
    %v5311 = vpack.c.b16 %v4316, %v4311
    %v5312 = vpack.c.b16 %v4317, %v4312
    %v5313 = vpack.c.b16 %v4323, %v4318
    %v5314 = vpack.c.b16 %v4324, %v4319
    %v5315 = vpack.c.b16 %v4325, %v4320
    %v5316 = vpack.c.b16 %v4326, %v4321
    %v5317 = vpack.c.b16 %v4327, %v4322
    %v5318 = vpack.c.b16 %v4333, %v4328
    %v5319 = vpack.c.b16 %v4334, %v4329
    %v5320 = vpack.c.b16 %v4335, %v4330
    %v5321 = vpack.c.b16 %v4336, %v4331
    %v5322 = vpack.c.b16 %v4337, %v4332
    %v5323 = vpack.c.b16 %v4343, %v4338
    %v5324 = vpack.c.b16 %v4344, %v4339
    %v5325 = vpack.c.b16 %v4345, %v4340
    %v5326 = vpack.c.b16 %v4346, %v4341
    %v5327 = vpack.c.b16 %v4347, %v4342
    %v5328 = vpack.c.b16 %v4353, %v4348
    %v5329 = vpack.c.b16 %v4354, %v4349
    %v5330 = vpack.c.b16 %v4355, %v4350
    %v5331 = vpack.c.b16 %v4356, %v4351
    %v5332 = vpack.c.b16 %v4357, %v4352
    %v5333 = vpack.c.b16 %v4363, %v4358
    %v5334 = vpack.c.b16 %v4364, %v4359
    %v5335 = vpack.c.b16 %v4365, %v4360
    %v5336 = vpack.c.b16 %v4366, %v4361
    %v5337 = vpack.c.b16 %v4367, %v4362
    %v5338 = vpack.c.b16 %v4373, %v4368
    %v5339 = vpack.c.b16 %v4374, %v4369
    %v5340 = vpack.c.b16 %v4375, %v4370
    %v5341 = vpack.c.b16 %v4376, %v4371
    %v5342 = vpack.c.b16 %v4377, %v4372
    %v5343 = vpack.c.b16 %v4383, %v4378
    %v5344 = vpack.c.b16 %v4384, %v4379
    %v5345 = vpack.c.b16 %v4385, %v4380
    %v5346 = vpack.c.b16 %v4386, %v4381
    %v5347 = vpack.c.b16 %v4387, %v4382
    %6308 = vmatprep.subr.bf16.mxu0 %v4389
    %6309 = vmatpush1.bf16.msra.mxu0 %v4388
    %6310 = vmatprep.subr.bf16.mxu0 %v4394
    %6311 = vmatpush1.bf16.msra.mxu0 %v4393
    %6312 = vmatprep.subr.bf16.mxu0 %v4399
    %6313 = vmatpush1.bf16.msra.mxu0 %v4398
    %6314 = vmatprep.subr.bf16.mxu0 %v4404
    %6315 = vmatpush1.bf16.msra.mxu0 %v4403
    %6316 = vmatprep.subr.bf16.mxu0 %v4409
    %6317 = vmatpush1.bf16.msra.mxu0 %v4408
    %6318 = vmatprep.subr.bf16.mxu0 %v4414
    %6319 = vmatpush1.bf16.msra.mxu0 %v4413
    %6320 = vmatprep.subr.bf16.mxu0 %v4419
    %6321 = vmatpush1.bf16.msra.mxu0 %v4418
    %6322 = vmatprep.subr.bf16.mxu0 %v4424
    %6323 = vmatpush1.bf16.msra.mxu0 %v4423
    %6324 = vmatprep.subr.bf16.mxu0 %v4429
    %6325 = vmatpush1.bf16.msra.mxu0 %v4428
    %6326 = vmatprep.subr.bf16.mxu0 %v4434
    %6327 = vmatpush1.bf16.msra.mxu0 %v4433
    %6328 = vmatprep.subr.bf16.mxu0 %v4439
    %6329 = vmatpush1.bf16.msra.mxu0 %v4438
    %6330 = vmatprep.subr.bf16.mxu0 %v4444
    %6331 = vmatpush1.bf16.msra.mxu0 %v4443
    %6332 = vmatprep.subr.bf16.mxu0 %v4449
    %6333 = vmatpush1.bf16.msra.mxu0 %v4448
    %6334 = vmatprep.subr.bf16.mxu0 %v4454
    %6335 = vmatpush1.bf16.msra.mxu0 %v4453
    %6336 = vmatprep.subr.bf16.mxu0 %v4459
    %6337 = vmatpush1.bf16.msra.mxu0 %v4458
    %6338 = vmatprep.subr.bf16.mxu0 %v4464
    %6339 = vmatpush1.bf16.msra.mxu0 %v4463
    %6340 = vmatprep.mubr.bf16.mxu0 %v1269
    %6341 = vmatmul.mubr.bf16.gmra.mrb[0].mxu0 %v1268
    %v6342 = vpop.f32.mrb[0].mxu0
    %v6343 = vadd.f32 0.0, %v6342
    %v6344 = vpop.f32.mrb[0].mxu0
    %v6345 = vadd.f32 0.0, %v6344
    %v6346 = vpop.f32.mrb[0].mxu0
    %v6347 = vpop.f32.mrb[0].mxu0
    %6348 = vdwg.mxu0
    %6349 = vmatprep.subr.bf16.mxu0 %v4469
    %6350 = vmatpush1.bf16.msra.mxu0 %v4468
    %6351 = vmatprep.subr.bf16.mxu0 %v4474
    %6352 = vmatpush1.bf16.msra.mxu0 %v4473
    %6353 = vmatprep.subr.bf16.mxu0 %v4479
    %6354 = vmatpush1.bf16.msra.mxu0 %v4478
    %6355 = vmatprep.subr.bf16.mxu0 %v4484
    %6356 = vmatpush1.bf16.msra.mxu0 %v4483
    %6357 = vmatprep.subr.bf16.mxu0 %v4489
    %6358 = vmatpush1.bf16.msra.mxu0 %v4488
    %6359 = vmatprep.subr.bf16.mxu0 %v4494
    %6360 = vmatpush1.bf16.msra.mxu0 %v4493
    %6361 = vmatprep.subr.bf16.mxu0 %v4499
    %6362 = vmatpush1.bf16.msra.mxu0 %v4498
    %6363 = vmatprep.subr.bf16.mxu0 %v4504
    %6364 = vmatpush1.bf16.msra.mxu0 %v4503
    %6365 = vmatprep.subr.bf16.mxu0 %v4509
    %6366 = vmatpush1.bf16.msra.mxu0 %v4508
    %6367 = vmatprep.subr.bf16.mxu0 %v4514
    %6368 = vmatpush1.bf16.msra.mxu0 %v4513
    %6369 = vmatprep.subr.bf16.mxu0 %v4519
    %6370 = vmatpush1.bf16.msra.mxu0 %v4518
    %6371 = vmatprep.subr.bf16.mxu0 %v4524
    %6372 = vmatpush1.bf16.msra.mxu0 %v4523
    %6373 = vmatprep.subr.bf16.mxu0 %v4529
    %6374 = vmatpush1.bf16.msra.mxu0 %v4528
    %6375 = vmatprep.subr.bf16.mxu0 %v4534
    %6376 = vmatpush1.bf16.msra.mxu0 %v4533
    %6377 = vmatprep.subr.bf16.mxu0 %v4539
    %6378 = vmatpush1.bf16.msra.mxu0 %v4538
    %6379 = vmatprep.subr.bf16.mxu0 %v4544
    %6380 = vmatpush1.bf16.msra.mxu0 %v4543
    %6381 = vmatprep.mubr.bf16.mxu0 %v1271
    %6382 = vmatmul.mubr.bf16.gmra.mrb[0].mxu0 %v1270
    %v6383 = vpop.f32.mrb[0].mxu0
    %v6384 = vadd.f32 %v6343, %v6383
    %v6385 = vpop.f32.mrb[0].mxu0
    %v6386 = vadd.f32 %v6345, %v6385
    %v6387 = vpop.f32.mrb[0].mxu0
    %v6388 = vpop.f32.mrb[0].mxu0
    %6389 = vdwg.mxu0
    %6390 = vmatprep.subr.bf16.mxu0 %v4549
    %6391 = vmatpush1.bf16.msra.mxu0 %v4548
    %6392 = vmatprep.subr.bf16.mxu0 %v4554
    %6393 = vmatpush1.bf16.msra.mxu0 %v4553
    %6394 = vmatprep.subr.bf16.mxu0 %v4559
    %6395 = vmatpush1.bf16.msra.mxu0 %v4558
    %6396 = vmatprep.subr.bf16.mxu0 %v4564
    %6397 = vmatpush1.bf16.msra.mxu0 %v4563
    %6398 = vmatprep.subr.bf16.mxu0 %v4569
    %6399 = vmatpush1.bf16.msra.mxu0 %v4568
    %6400 = vmatprep.subr.bf16.mxu0 %v4574
    %6401 = vmatpush1.bf16.msra.mxu0 %v4573
    %6402 = vmatprep.subr.bf16.mxu0 %v4579
    %6403 = vmatpush1.bf16.msra.mxu0 %v4578
    %6404 = vmatprep.subr.bf16.mxu0 %v4584
    %6405 = vmatpush1.bf16.msra.mxu0 %v4583
    %6406 = vmatprep.subr.bf16.mxu0 %v4589
    %6407 = vmatpush1.bf16.msra.mxu0 %v4588
    %6408 = vmatprep.subr.bf16.mxu0 %v4594
    %6409 = vmatpush1.bf16.msra.mxu0 %v4593
    %6410 = vmatprep.subr.bf16.mxu0 %v4599
    %6411 = vmatpush1.bf16.msra.mxu0 %v4598
    %6412 = vmatprep.subr.bf16.mxu0 %v4604
    %6413 = vmatpush1.bf16.msra.mxu0 %v4603
    %6414 = vmatprep.subr.bf16.mxu0 %v4609
    %6415 = vmatpush1.bf16.msra.mxu0 %v4608
    %6416 = vmatprep.subr.bf16.mxu0 %v4614
    %6417 = vmatpush1.bf16.msra.mxu0 %v4613
    %6418 = vmatprep.subr.bf16.mxu0 %v4619
    %6419 = vmatpush1.bf16.msra.mxu0 %v4618
    %6420 = vmatprep.subr.bf16.mxu0 %v4624
    %6421 = vmatpush1.bf16.msra.mxu0 %v4623
    %6422 = vmatprep.mubr.bf16.mxu0 %v1273
    %6423 = vmatmul.mubr.bf16.gmra.mrb[0].mxu0 %v1272
    %v6424 = vpop.f32.mrb[0].mxu0
    %v6425 = vadd.f32 %v6384, %v6424
    %v6426 = vpop.f32.mrb[0].mxu0
    %v6427 = vadd.f32 %v6386, %v6426
    %v6428 = vpop.f32.mrb[0].mxu0
    %v6429 = vpop.f32.mrb[0].mxu0
    %6430 = vdwg.mxu0
    %6431 = vmatprep.subr.bf16.mxu0 %v4629
    %6432 = vmatpush1.bf16.msra.mxu0 %v4628
    %6433 = vmatprep.subr.bf16.mxu0 %v4634
    %6434 = vmatpush1.bf16.msra.mxu0 %v4633
    %6435 = vmatprep.subr.bf16.mxu0 %v4639
    %6436 = vmatpush1.bf16.msra.mxu0 %v4638
    %6437 = vmatprep.subr.bf16.mxu0 %v4644
    %6438 = vmatpush1.bf16.msra.mxu0 %v4643
    %6439 = vmatprep.subr.bf16.mxu0 %v4649
    %6440 = vmatpush1.bf16.msra.mxu0 %v4648
    %6441 = vmatprep.subr.bf16.mxu0 %v4654
    %6442 = vmatpush1.bf16.msra.mxu0 %v4653
    %6443 = vmatprep.subr.bf16.mxu0 %v4659
    %6444 = vmatpush1.bf16.msra.mxu0 %v4658
    %6445 = vmatprep.subr.bf16.mxu0 %v4664
    %6446 = vmatpush1.bf16.msra.mxu0 %v4663
    %6447 = vmatprep.subr.bf16.mxu0 %v4669
    %6448 = vmatpush1.bf16.msra.mxu0 %v4668
    %6449 = vmatprep.subr.bf16.mxu0 %v4674
    %6450 = vmatpush1.bf16.msra.mxu0 %v4673
    %6451 = vmatprep.subr.bf16.mxu0 %v4679
    %6452 = vmatpush1.bf16.msra.mxu0 %v4678
    %6453 = vmatprep.subr.bf16.mxu0 %v4684
    %6454 = vmatpush1.bf16.msra.mxu0 %v4683
    %6455 = vmatprep.subr.bf16.mxu0 %v4689
    %6456 = vmatpush1.bf16.msra.mxu0 %v4688
    %6457 = vmatprep.subr.bf16.mxu0 %v4694
    %6458 = vmatpush1.bf16.msra.mxu0 %v4693
    %6459 = vmatprep.subr.bf16.mxu0 %v4699
    %6460 = vmatpush1.bf16.msra.mxu0 %v4698
    %6461 = vmatprep.subr.bf16.mxu0 %v4704
    %6462 = vmatpush1.bf16.msra.mxu0 %v4703
    %6463 = vmatprep.mubr.bf16.mxu0 %v1275
    %6464 = vmatmul.mubr.bf16.gmra.mrb[0].mxu0 %v1274
    %v6465 = vpop.f32.mrb[0].mxu0
    %v6466 = vadd.f32 %v6425, %v6465
    %v6467 = vpop.f32.mrb[0].mxu0
    %v6468 = vadd.f32 %v6427, %v6467
    %v6469 = vpop.f32.mrb[0].mxu0
    %v6470 = vpop.f32.mrb[0].mxu0
    %6471 = vdwg.mxu0
    %6472 = vmatprep.subr.bf16.mxu0 %v4709
    %6473 = vmatpush1.bf16.msra.mxu0 %v4708
    %6474 = vmatprep.subr.bf16.mxu0 %v4714
    %6475 = vmatpush1.bf16.msra.mxu0 %v4713
    %6476 = vmatprep.subr.bf16.mxu0 %v4719
    %6477 = vmatpush1.bf16.msra.mxu0 %v4718
    %6478 = vmatprep.subr.bf16.mxu0 %v4724
    %6479 = vmatpush1.bf16.msra.mxu0 %v4723
    %6480 = vmatprep.subr.bf16.mxu0 %v4729
    %6481 = vmatpush1.bf16.msra.mxu0 %v4728
    %6482 = vmatprep.subr.bf16.mxu0 %v4734
    %6483 = vmatpush1.bf16.msra.mxu0 %v4733
    %6484 = vmatprep.subr.bf16.mxu0 %v4739
    %6485 = vmatpush1.bf16.msra.mxu0 %v4738
    %6486 = vmatprep.subr.bf16.mxu0 %v4744
    %6487 = vmatpush1.bf16.msra.mxu0 %v4743
    %6488 = vmatprep.subr.bf16.mxu0 %v4749
    %6489 = vmatpush1.bf16.msra.mxu0 %v4748
    %6490 = vmatprep.subr.bf16.mxu0 %v4754
    %6491 = vmatpush1.bf16.msra.mxu0 %v4753
    %6492 = vmatprep.subr.bf16.mxu0 %v4759
    %6493 = vmatpush1.bf16.msra.mxu0 %v4758
    %6494 = vmatprep.subr.bf16.mxu0 %v4764
    %6495 = vmatpush1.bf16.msra.mxu0 %v4763
    %6496 = vmatprep.subr.bf16.mxu0 %v4769
    %6497 = vmatpush1.bf16.msra.mxu0 %v4768
    %6498 = vmatprep.subr.bf16.mxu0 %v4774
    %6499 = vmatpush1.bf16.msra.mxu0 %v4773
    %6500 = vmatprep.subr.bf16.mxu0 %v4779
    %6501 = vmatpush1.bf16.msra.mxu0 %v4778
    %6502 = vmatprep.subr.bf16.mxu0 %v4784
    %6503 = vmatpush1.bf16.msra.mxu0 %v4783
    %6504 = vmatprep.mubr.bf16.mxu0 %v1277
    %6505 = vmatmul.mubr.bf16.gmra.mrb[0].mxu0 %v1276
    %v6506 = vpop.f32.mrb[0].mxu0
    %v6507 = vadd.f32 %v6466, %v6506
    %v6508 = vpop.f32.mrb[0].mxu0
    %v6509 = vadd.f32 %v6468, %v6508
    %v6510 = vpop.f32.mrb[0].mxu0
    %v6511 = vpop.f32.mrb[0].mxu0
    %6512 = vdwg.mxu0
    %6513 = vmatprep.subr.bf16.mxu0 %v4789
    %6514 = vmatpush1.bf16.msra.mxu0 %v4788
    %6515 = vmatprep.subr.bf16.mxu0 %v4794
    %6516 = vmatpush1.bf16.msra.mxu0 %v4793
    %6517 = vmatprep.subr.bf16.mxu0 %v4799
    %6518 = vmatpush1.bf16.msra.mxu0 %v4798
    %6519 = vmatprep.subr.bf16.mxu0 %v4804
    %6520 = vmatpush1.bf16.msra.mxu0 %v4803
    %6521 = vmatprep.subr.bf16.mxu0 %v4809
    %6522 = vmatpush1.bf16.msra.mxu0 %v4808
    %6523 = vmatprep.subr.bf16.mxu0 %v4814
    %6524 = vmatpush1.bf16.msra.mxu0 %v4813
    %6525 = vmatprep.subr.bf16.mxu0 %v4819
    %6526 = vmatpush1.bf16.msra.mxu0 %v4818
    %6527 = vmatprep.subr.bf16.mxu0 %v4824
    %6528 = vmatpush1.bf16.msra.mxu0 %v4823
    %6529 = vmatprep.subr.bf16.mxu0 %v4829
    %6530 = vmatpush1.bf16.msra.mxu0 %v4828
    %6531 = vmatprep.subr.bf16.mxu0 %v4834
    %6532 = vmatpush1.bf16.msra.mxu0 %v4833
    %6533 = vmatprep.subr.bf16.mxu0 %v4839
    %6534 = vmatpush1.bf16.msra.mxu0 %v4838
    %6535 = vmatprep.subr.bf16.mxu0 %v4844
    %6536 = vmatpush1.bf16.msra.mxu0 %v4843
    %6537 = vmatprep.subr.bf16.mxu0 %v4849
    %6538 = vmatpush1.bf16.msra.mxu0 %v4848
    %6539 = vmatprep.subr.bf16.mxu0 %v4854
    %6540 = vmatpush1.bf16.msra.mxu0 %v4853
    %6541 = vmatprep.subr.bf16.mxu0 %v4859
    %6542 = vmatpush1.bf16.msra.mxu0 %v4858
    %6543 = vmatprep.subr.bf16.mxu0 %v4864
    %6544 = vmatpush1.bf16.msra.mxu0 %v4863
    %6545 = vmatprep.mubr.bf16.mxu0 %v1279
    %6546 = vmatmul.mubr.bf16.gmra.mrb[0].mxu0 %v1278
    %v6547 = vpop.f32.mrb[0].mxu0
    %v6548 = vadd.f32 %v6507, %v6547
    %v6549 = vpop.f32.mrb[0].mxu0
    %v6550 = vadd.f32 %v6509, %v6549
    %v6551 = vpop.f32.mrb[0].mxu0
    %v6552 = vpop.f32.mrb[0].mxu0
    %6553 = vdwg.mxu0
    %6554 = vmatprep.subr.bf16.mxu0 %v4869
    %6555 = vmatpush1.bf16.msra.mxu0 %v4868
    %6556 = vmatprep.subr.bf16.mxu0 %v4874
    %6557 = vmatpush1.bf16.msra.mxu0 %v4873
    %6558 = vmatprep.subr.bf16.mxu0 %v4879
    %6559 = vmatpush1.bf16.msra.mxu0 %v4878
    %6560 = vmatprep.subr.bf16.mxu0 %v4884
    %6561 = vmatpush1.bf16.msra.mxu0 %v4883
    %6562 = vmatprep.subr.bf16.mxu0 %v4889
    %6563 = vmatpush1.bf16.msra.mxu0 %v4888
    %6564 = vmatprep.subr.bf16.mxu0 %v4894
    %6565 = vmatpush1.bf16.msra.mxu0 %v4893
    %6566 = vmatprep.subr.bf16.mxu0 %v4899
    %6567 = vmatpush1.bf16.msra.mxu0 %v4898
    %6568 = vmatprep.subr.bf16.mxu0 %v4904
    %6569 = vmatpush1.bf16.msra.mxu0 %v4903
    %6570 = vmatprep.subr.bf16.mxu0 %v4909
    %6571 = vmatpush1.bf16.msra.mxu0 %v4908
    %6572 = vmatprep.subr.bf16.mxu0 %v4914
    %6573 = vmatpush1.bf16.msra.mxu0 %v4913
    %6574 = vmatprep.subr.bf16.mxu0 %v4919
    %6575 = vmatpush1.bf16.msra.mxu0 %v4918
    %6576 = vmatprep.subr.bf16.mxu0 %v4924
    %6577 = vmatpush1.bf16.msra.mxu0 %v4923
    %6578 = vmatprep.subr.bf16.mxu0 %v4929
    %6579 = vmatpush1.bf16.msra.mxu0 %v4928
    %6580 = vmatprep.subr.bf16.mxu0 %v4934
    %6581 = vmatpush1.bf16.msra.mxu0 %v4933
    %6582 = vmatprep.subr.bf16.mxu0 %v4939
    %6583 = vmatpush1.bf16.msra.mxu0 %v4938
    %6584 = vmatprep.subr.bf16.mxu0 %v4944
    %6585 = vmatpush1.bf16.msra.mxu0 %v4943
    %6586 = vmatprep.mubr.bf16.mxu0 %v1281
    %6587 = vmatmul.mubr.bf16.gmra.mrb[0].mxu0 %v1280
    %v6588 = vpop.f32.mrb[0].mxu0
    %v6589 = vadd.f32 %v6548, %v6588
    %v6590 = vpop.f32.mrb[0].mxu0
    %v6591 = vadd.f32 %v6550, %v6590
    %v6592 = vpop.f32.mrb[0].mxu0
    %v6593 = vpop.f32.mrb[0].mxu0
    %6594 = vdwg.mxu0
    %6595 = vmatprep.subr.bf16.mxu0 %v4949
    %6596 = vmatpush1.bf16.msra.mxu0 %v4948
    %6597 = vmatprep.subr.bf16.mxu0 %v4954
    %6598 = vmatpush1.bf16.msra.mxu0 %v4953
    %6599 = vmatprep.subr.bf16.mxu0 %v4959
    %6600 = vmatpush1.bf16.msra.mxu0 %v4958
    %6601 = vmatprep.subr.bf16.mxu0 %v4964
    %6602 = vmatpush1.bf16.msra.mxu0 %v4963
    %6603 = vmatprep.subr.bf16.mxu0 %v4969
    %6604 = vmatpush1.bf16.msra.mxu0 %v4968
    %6605 = vmatprep.subr.bf16.mxu0 %v4974
    %6606 = vmatpush1.bf16.msra.mxu0 %v4973
    %6607 = vmatprep.subr.bf16.mxu0 %v4979
    %6608 = vmatpush1.bf16.msra.mxu0 %v4978
    %6609 = vmatprep.subr.bf16.mxu0 %v4984
    %6610 = vmatpush1.bf16.msra.mxu0 %v4983
    %6611 = vmatprep.subr.bf16.mxu0 %v4989
    %6612 = vmatpush1.bf16.msra.mxu0 %v4988
    %6613 = vmatprep.subr.bf16.mxu0 %v4994
    %6614 = vmatpush1.bf16.msra.mxu0 %v4993
    %6615 = vmatprep.subr.bf16.mxu0 %v4999
    %6616 = vmatpush1.bf16.msra.mxu0 %v4998
    %6617 = vmatprep.subr.bf16.mxu0 %v5004
    %6618 = vmatpush1.bf16.msra.mxu0 %v5003
    %6619 = vmatprep.subr.bf16.mxu0 %v5009
    %6620 = vmatpush1.bf16.msra.mxu0 %v5008
    %6621 = vmatprep.subr.bf16.mxu0 %v5014
    %6622 = vmatpush1.bf16.msra.mxu0 %v5013
    %6623 = vmatprep.subr.bf16.mxu0 %v5019
    %6624 = vmatpush1.bf16.msra.mxu0 %v5018
    %6625 = vmatprep.subr.bf16.mxu0 %v5024
    %6626 = vmatpush1.bf16.msra.mxu0 %v5023
    %6627 = vmatprep.mubr.bf16.mxu0 %v1283
    %6628 = vmatmul.mubr.bf16.gmra.mrb[0].mxu0 %v1282
    %v6629 = vpop.f32.mrb[0].mxu0
    %v6630 = vadd.f32 %v6589, %v6629
    %v6631 = vpop.f32.mrb[0].mxu0
    %v6632 = vadd.f32 %v6591, %v6631
    %v6633 = vpop.f32.mrb[0].mxu0
    %v6634 = vpop.f32.mrb[0].mxu0
    %6635 = vdwg.mxu0
    %6636 = vmatprep.subr.bf16.mxu0 %v5029
    %6637 = vmatpush1.bf16.msra.mxu0 %v5028
    %6638 = vmatprep.subr.bf16.mxu0 %v5034
    %6639 = vmatpush1.bf16.msra.mxu0 %v5033
    %6640 = vmatprep.subr.bf16.mxu0 %v5039
    %6641 = vmatpush1.bf16.msra.mxu0 %v5038
    %6642 = vmatprep.subr.bf16.mxu0 %v5044
    %6643 = vmatpush1.bf16.msra.mxu0 %v5043
    %6644 = vmatprep.subr.bf16.mxu0 %v5049
    %6645 = vmatpush1.bf16.msra.mxu0 %v5048
    %6646 = vmatprep.subr.bf16.mxu0 %v5054
    %6647 = vmatpush1.bf16.msra.mxu0 %v5053
    %6648 = vmatprep.subr.bf16.mxu0 %v5059
    %6649 = vmatpush1.bf16.msra.mxu0 %v5058
    %6650 = vmatprep.subr.bf16.mxu0 %v5064
    %6651 = vmatpush1.bf16.msra.mxu0 %v5063
    %6652 = vmatprep.subr.bf16.mxu0 %v5069
    %6653 = vmatpush1.bf16.msra.mxu0 %v5068
    %6654 = vmatprep.subr.bf16.mxu0 %v5074
    %6655 = vmatpush1.bf16.msra.mxu0 %v5073
    %6656 = vmatprep.subr.bf16.mxu0 %v5079
    %6657 = vmatpush1.bf16.msra.mxu0 %v5078
    %6658 = vmatprep.subr.bf16.mxu0 %v5084
    %6659 = vmatpush1.bf16.msra.mxu0 %v5083
    %6660 = vmatprep.subr.bf16.mxu0 %v5089
    %6661 = vmatpush1.bf16.msra.mxu0 %v5088
    %6662 = vmatprep.subr.bf16.mxu0 %v5094
    %6663 = vmatpush1.bf16.msra.mxu0 %v5093
    %6664 = vmatprep.subr.bf16.mxu0 %v5099
    %6665 = vmatpush1.bf16.msra.mxu0 %v5098
    %6666 = vmatprep.subr.bf16.mxu0 %v5104
    %6667 = vmatpush1.bf16.msra.mxu0 %v5103
    %6668 = vmatprep.mubr.bf16.mxu0 %v1285
    %6669 = vmatmul.mubr.bf16.gmra.mrb[0].mxu0 %v1284
    %v6670 = vpop.f32.mrb[0].mxu0
    %v6671 = vadd.f32 %v6630, %v6670
    %v6672 = vpop.f32.mrb[0].mxu0
    %v6673 = vadd.f32 %v6632, %v6672
    %v6674 = vpop.f32.mrb[0].mxu0
    %v6675 = vpop.f32.mrb[0].mxu0
    %6676 = vdwg.mxu0
    %6677 = vmatprep.subr.bf16.mxu0 %v5109
    %6678 = vmatpush1.bf16.msra.mxu0 %v5108
    %6679 = vmatprep.subr.bf16.mxu0 %v5114
    %6680 = vmatpush1.bf16.msra.mxu0 %v5113
    %6681 = vmatprep.subr.bf16.mxu0 %v5119
    %6682 = vmatpush1.bf16.msra.mxu0 %v5118
    %6683 = vmatprep.subr.bf16.mxu0 %v5124
    %6684 = vmatpush1.bf16.msra.mxu0 %v5123
    %6685 = vmatprep.subr.bf16.mxu0 %v5129
    %6686 = vmatpush1.bf16.msra.mxu0 %v5128
    %6687 = vmatprep.subr.bf16.mxu0 %v5134
    %6688 = vmatpush1.bf16.msra.mxu0 %v5133
    %6689 = vmatprep.subr.bf16.mxu0 %v5139
    %6690 = vmatpush1.bf16.msra.mxu0 %v5138
    %6691 = vmatprep.subr.bf16.mxu0 %v5144
    %6692 = vmatpush1.bf16.msra.mxu0 %v5143
    %6693 = vmatprep.subr.bf16.mxu0 %v5149
    %6694 = vmatpush1.bf16.msra.mxu0 %v5148
    %6695 = vmatprep.subr.bf16.mxu0 %v5154
    %6696 = vmatpush1.bf16.msra.mxu0 %v5153
    %6697 = vmatprep.subr.bf16.mxu0 %v5159
    %6698 = vmatpush1.bf16.msra.mxu0 %v5158
    %6699 = vmatprep.subr.bf16.mxu0 %v5164
    %6700 = vmatpush1.bf16.msra.mxu0 %v5163
    %6701 = vmatprep.subr.bf16.mxu0 %v5169
    %6702 = vmatpush1.bf16.msra.mxu0 %v5168
    %6703 = vmatprep.subr.bf16.mxu0 %v5174
    %6704 = vmatpush1.bf16.msra.mxu0 %v5173
    %6705 = vmatprep.subr.bf16.mxu0 %v5179
    %6706 = vmatpush1.bf16.msra.mxu0 %v5178
    %6707 = vmatprep.subr.bf16.mxu0 %v5184
    %6708 = vmatpush1.bf16.msra.mxu0 %v5183
    %6709 = vmatprep.mubr.bf16.mxu0 %v1287
    %6710 = vmatmul.mubr.bf16.gmra.mrb[0].mxu0 %v1286
    %v6711 = vpop.f32.mrb[0].mxu0
    %v6712 = vadd.f32 %v6671, %v6711
    %v6713 = vpop.f32.mrb[0].mxu0
    %v6714 = vadd.f32 %v6673, %v6713
    %v6715 = vpop.f32.mrb[0].mxu0
    %v6716 = vpop.f32.mrb[0].mxu0
    %6717 = vdwg.mxu0
    %6718 = vmatprep.subr.bf16.mxu0 %v5189
    %6719 = vmatpush1.bf16.msra.mxu0 %v5188
    %6720 = vmatprep.subr.bf16.mxu0 %v5194
    %6721 = vmatpush1.bf16.msra.mxu0 %v5193
    %6722 = vmatprep.subr.bf16.mxu0 %v5199
    %6723 = vmatpush1.bf16.msra.mxu0 %v5198
    %6724 = vmatprep.subr.bf16.mxu0 %v5204
    %6725 = vmatpush1.bf16.msra.mxu0 %v5203
    %6726 = vmatprep.subr.bf16.mxu0 %v5209
    %6727 = vmatpush1.bf16.msra.mxu0 %v5208
    %6728 = vmatprep.subr.bf16.mxu0 %v5214
    %6729 = vmatpush1.bf16.msra.mxu0 %v5213
    %6730 = vmatprep.subr.bf16.mxu0 %v5219
    %6731 = vmatpush1.bf16.msra.mxu0 %v5218
    %6732 = vmatprep.subr.bf16.mxu0 %v5224
    %6733 = vmatpush1.bf16.msra.mxu0 %v5223
    %6734 = vmatprep.subr.bf16.mxu0 %v5229
    %6735 = vmatpush1.bf16.msra.mxu0 %v5228
    %6736 = vmatprep.subr.bf16.mxu0 %v5234
    %6737 = vmatpush1.bf16.msra.mxu0 %v5233
    %6738 = vmatprep.subr.bf16.mxu0 %v5239
    %6739 = vmatpush1.bf16.msra.mxu0 %v5238
    %6740 = vmatprep.subr.bf16.mxu0 %v5244
    %6741 = vmatpush1.bf16.msra.mxu0 %v5243
    %6742 = vmatprep.subr.bf16.mxu0 %v5249
    %6743 = vmatpush1.bf16.msra.mxu0 %v5248
    %6744 = vmatprep.subr.bf16.mxu0 %v5254
    %6745 = vmatpush1.bf16.msra.mxu0 %v5253
    %6746 = vmatprep.subr.bf16.mxu0 %v5259
    %6747 = vmatpush1.bf16.msra.mxu0 %v5258
    %6748 = vmatprep.subr.bf16.mxu0 %v5264
    %6749 = vmatpush1.bf16.msra.mxu0 %v5263
    %6750 = vmatprep.mubr.bf16.mxu0 %v1289
    %6751 = vmatmul.mubr.bf16.gmra.mrb[0].mxu0 %v1288
    %v6752 = vpop.f32.mrb[0].mxu0
    %v6753 = vadd.f32 %v6712, %v6752
    %v6754 = vpop.f32.mrb[0].mxu0
    %v6755 = vadd.f32 %v6714, %v6754
    %v6756 = vpop.f32.mrb[0].mxu0
    %v6757 = vpop.f32.mrb[0].mxu0
    %6758 = vdwg.mxu0
    %6759 = vmatprep.subr.bf16.mxu0 %v5269
    %6760 = vmatpush1.bf16.msra.mxu0 %v5268
    %6761 = vmatprep.subr.bf16.mxu0 %v5274
    %6762 = vmatpush1.bf16.msra.mxu0 %v5273
    %6763 = vmatprep.subr.bf16.mxu0 %v5279
    %6764 = vmatpush1.bf16.msra.mxu0 %v5278
    %6765 = vmatprep.subr.bf16.mxu0 %v5284
    %6766 = vmatpush1.bf16.msra.mxu0 %v5283
    %6767 = vmatprep.subr.bf16.mxu0 %v5289
    %6768 = vmatpush1.bf16.msra.mxu0 %v5288
    %6769 = vmatprep.subr.bf16.mxu0 %v5294
    %6770 = vmatpush1.bf16.msra.mxu0 %v5293
    %6771 = vmatprep.subr.bf16.mxu0 %v5299
    %6772 = vmatpush1.bf16.msra.mxu0 %v5298
    %6773 = vmatprep.subr.bf16.mxu0 %v5304
    %6774 = vmatpush1.bf16.msra.mxu0 %v5303
    %6775 = vmatprep.subr.bf16.mxu0 %v5309
    %6776 = vmatpush1.bf16.msra.mxu0 %v5308
    %6777 = vmatprep.subr.bf16.mxu0 %v5314
    %6778 = vmatpush1.bf16.msra.mxu0 %v5313
    %6779 = vmatprep.subr.bf16.mxu0 %v5319
    %6780 = vmatpush1.bf16.msra.mxu0 %v5318
    %6781 = vmatprep.subr.bf16.mxu0 %v5324
    %6782 = vmatpush1.bf16.msra.mxu0 %v5323
    %6783 = vmatprep.subr.bf16.mxu0 %v5329
    %6784 = vmatpush1.bf16.msra.mxu0 %v5328
    %6785 = vmatprep.subr.bf16.mxu0 %v5334
    %6786 = vmatpush1.bf16.msra.mxu0 %v5333
    %6787 = vmatprep.subr.bf16.mxu0 %v5339
    %6788 = vmatpush1.bf16.msra.mxu0 %v5338
    %6789 = vmatprep.subr.bf16.mxu0 %v5344
    %6790 = vmatpush1.bf16.msra.mxu0 %v5343
    %6791 = vmatprep.mubr.bf16.mxu0 %v1291
    %6792 = vmatmul.mubr.bf16.gmra.mrb[0].mxu0 %v1290
    %v6793 = vpop.f32.mrb[0].mxu0
    %v6794 = vadd.f32 %v6753, %v6793
    %v6795 = vpop.f32.mrb[0].mxu0
    %v6796 = vadd.f32 %v6755, %v6795
    %v6797 = vpop.f32.mrb[0].mxu0
    %v6798 = vpop.f32.mrb[0].mxu0
    %6799 = vdwg.mxu0
    %6800 = vmatprep.subr.bf16.mxu0 %v4391
    %6801 = vmatpush1.bf16.msra.mxu0 %v4390
    %6802 = vmatprep.subr.bf16.mxu0 %v4396
    %6803 = vmatpush1.bf16.msra.mxu0 %v4395
    %6804 = vmatprep.subr.bf16.mxu0 %v4401
    %6805 = vmatpush1.bf16.msra.mxu0 %v4400
    %6806 = vmatprep.subr.bf16.mxu0 %v4406
    %6807 = vmatpush1.bf16.msra.mxu0 %v4405
    %6808 = vmatprep.subr.bf16.mxu0 %v4411
    %6809 = vmatpush1.bf16.msra.mxu0 %v4410
    %6810 = vmatprep.subr.bf16.mxu0 %v4416
    %6811 = vmatpush1.bf16.msra.mxu0 %v4415
    %6812 = vmatprep.subr.bf16.mxu0 %v4421
    %6813 = vmatpush1.bf16.msra.mxu0 %v4420
    %6814 = vmatprep.subr.bf16.mxu0 %v4426
    %6815 = vmatpush1.bf16.msra.mxu0 %v4425
    %6816 = vmatprep.subr.bf16.mxu0 %v4431
    %6817 = vmatpush1.bf16.msra.mxu0 %v4430
    %6818 = vmatprep.subr.bf16.mxu0 %v4436
    %6819 = vmatpush1.bf16.msra.mxu0 %v4435
    %6820 = vmatprep.subr.bf16.mxu0 %v4441
    %6821 = vmatpush1.bf16.msra.mxu0 %v4440
    %6822 = vmatprep.subr.bf16.mxu0 %v4446
    %6823 = vmatpush1.bf16.msra.mxu0 %v4445
    %6824 = vmatprep.subr.bf16.mxu0 %v4451
    %6825 = vmatpush1.bf16.msra.mxu0 %v4450
    %6826 = vmatprep.subr.bf16.mxu0 %v4456
    %6827 = vmatpush1.bf16.msra.mxu0 %v4455
    %6828 = vmatprep.subr.bf16.mxu0 %v4461
    %6829 = vmatpush1.bf16.msra.mxu0 %v4460
    %6830 = vmatprep.subr.bf16.mxu0 %v4466
    %6831 = vmatpush1.bf16.msra.mxu0 %v4465
    %6832 = vmatprep.mubr.bf16.mxu0 %v1269
    %6833 = vmatmul.mubr.bf16.gmra.mrb[0].mxu0 %v1268
    %v6834 = vpop.f32.mrb[0].mxu0
    %v6835 = vadd.f32 0.0, %v6834
    %v6836 = vpop.f32.mrb[0].mxu0
    %v6837 = vadd.f32 0.0, %v6836
    %v6838 = vpop.f32.mrb[0].mxu0
    %v6839 = vpop.f32.mrb[0].mxu0
    %6840 = vdwg.mxu0
    %6841 = vmatprep.subr.bf16.mxu0 %v4471
    %6842 = vmatpush1.bf16.msra.mxu0 %v4470
    %6843 = vmatprep.subr.bf16.mxu0 %v4476
    %6844 = vmatpush1.bf16.msra.mxu0 %v4475
    %6845 = vmatprep.subr.bf16.mxu0 %v4481
    %6846 = vmatpush1.bf16.msra.mxu0 %v4480
    %6847 = vmatprep.subr.bf16.mxu0 %v4486
    %6848 = vmatpush1.bf16.msra.mxu0 %v4485
    %6849 = vmatprep.subr.bf16.mxu0 %v4491
    %6850 = vmatpush1.bf16.msra.mxu0 %v4490
    %6851 = vmatprep.subr.bf16.mxu0 %v4496
    %6852 = vmatpush1.bf16.msra.mxu0 %v4495
    %6853 = vmatprep.subr.bf16.mxu0 %v4501
    %6854 = vmatpush1.bf16.msra.mxu0 %v4500
    %6855 = vmatprep.subr.bf16.mxu0 %v4506
    %6856 = vmatpush1.bf16.msra.mxu0 %v4505
    %6857 = vmatprep.subr.bf16.mxu0 %v4511
    %6858 = vmatpush1.bf16.msra.mxu0 %v4510
    %6859 = vmatprep.subr.bf16.mxu0 %v4516
    %6860 = vmatpush1.bf16.msra.mxu0 %v4515
    %6861 = vmatprep.subr.bf16.mxu0 %v4521
    %6862 = vmatpush1.bf16.msra.mxu0 %v4520
    %6863 = vmatprep.subr.bf16.mxu0 %v4526
    %6864 = vmatpush1.bf16.msra.mxu0 %v4525
    %6865 = vmatprep.subr.bf16.mxu0 %v4531
    %6866 = vmatpush1.bf16.msra.mxu0 %v4530
    %6867 = vmatprep.subr.bf16.mxu0 %v4536
    %6868 = vmatpush1.bf16.msra.mxu0 %v4535
    %6869 = vmatprep.subr.bf16.mxu0 %v4541
    %6870 = vmatpush1.bf16.msra.mxu0 %v4540
    %6871 = vmatprep.subr.bf16.mxu0 %v4546
    %6872 = vmatpush1.bf16.msra.mxu0 %v4545
    %6873 = vmatprep.mubr.bf16.mxu0 %v1271
    %6874 = vmatmul.mubr.bf16.gmra.mrb[0].mxu0 %v1270
    %v6875 = vpop.f32.mrb[0].mxu0
    %v6876 = vadd.f32 %v6835, %v6875
    %v6877 = vpop.f32.mrb[0].mxu0
    %v6878 = vadd.f32 %v6837, %v6877
    %v6879 = vpop.f32.mrb[0].mxu0
    %v6880 = vpop.f32.mrb[0].mxu0
    %6881 = vdwg.mxu0
    %6882 = vmatprep.subr.bf16.mxu0 %v4551
    %6883 = vmatpush1.bf16.msra.mxu0 %v4550
    %6884 = vmatprep.subr.bf16.mxu0 %v4556
    %6885 = vmatpush1.bf16.msra.mxu0 %v4555
    %6886 = vmatprep.subr.bf16.mxu0 %v4561
    %6887 = vmatpush1.bf16.msra.mxu0 %v4560
    %6888 = vmatprep.subr.bf16.mxu0 %v4566
    %6889 = vmatpush1.bf16.msra.mxu0 %v4565
    %6890 = vmatprep.subr.bf16.mxu0 %v4571
    %6891 = vmatpush1.bf16.msra.mxu0 %v4570
    %6892 = vmatprep.subr.bf16.mxu0 %v4576
    %6893 = vmatpush1.bf16.msra.mxu0 %v4575
    %6894 = vmatprep.subr.bf16.mxu0 %v4581
    %6895 = vmatpush1.bf16.msra.mxu0 %v4580
    %6896 = vmatprep.subr.bf16.mxu0 %v4586
    %6897 = vmatpush1.bf16.msra.mxu0 %v4585
    %6898 = vmatprep.subr.bf16.mxu0 %v4591
    %6899 = vmatpush1.bf16.msra.mxu0 %v4590
    %6900 = vmatprep.subr.bf16.mxu0 %v4596
    %6901 = vmatpush1.bf16.msra.mxu0 %v4595
    %6902 = vmatprep.subr.bf16.mxu0 %v4601
    %6903 = vmatpush1.bf16.msra.mxu0 %v4600
    %6904 = vmatprep.subr.bf16.mxu0 %v4606
    %6905 = vmatpush1.bf16.msra.mxu0 %v4605
    %6906 = vmatprep.subr.bf16.mxu0 %v4611
    %6907 = vmatpush1.bf16.msra.mxu0 %v4610
    %6908 = vmatprep.subr.bf16.mxu0 %v4616
    %6909 = vmatpush1.bf16.msra.mxu0 %v4615
    %6910 = vmatprep.subr.bf16.mxu0 %v4621
    %6911 = vmatpush1.bf16.msra.mxu0 %v4620
    %6912 = vmatprep.subr.bf16.mxu0 %v4626
    %6913 = vmatpush1.bf16.msra.mxu0 %v4625
    %6914 = vmatprep.mubr.bf16.mxu0 %v1273
    %6915 = vmatmul.mubr.bf16.gmra.mrb[0].mxu0 %v1272
    %v6916 = vpop.f32.mrb[0].mxu0
    %v6917 = vadd.f32 %v6876, %v6916
    %v6918 = vpop.f32.mrb[0].mxu0
    %v6919 = vadd.f32 %v6878, %v6918
    %v6920 = vpop.f32.mrb[0].mxu0
    %v6921 = vpop.f32.mrb[0].mxu0
    %6922 = vdwg.mxu0
    %6923 = vmatprep.subr.bf16.mxu0 %v4631
    %6924 = vmatpush1.bf16.msra.mxu0 %v4630
    %6925 = vmatprep.subr.bf16.mxu0 %v4636
    %6926 = vmatpush1.bf16.msra.mxu0 %v4635
    %6927 = vmatprep.subr.bf16.mxu0 %v4641
    %6928 = vmatpush1.bf16.msra.mxu0 %v4640
    %6929 = vmatprep.subr.bf16.mxu0 %v4646
    %6930 = vmatpush1.bf16.msra.mxu0 %v4645
    %6931 = vmatprep.subr.bf16.mxu0 %v4651
    %6932 = vmatpush1.bf16.msra.mxu0 %v4650
    %6933 = vmatprep.subr.bf16.mxu0 %v4656
    %6934 = vmatpush1.bf16.msra.mxu0 %v4655
    %6935 = vmatprep.subr.bf16.mxu0 %v4661
    %6936 = vmatpush1.bf16.msra.mxu0 %v4660
    %6937 = vmatprep.subr.bf16.mxu0 %v4666
    %6938 = vmatpush1.bf16.msra.mxu0 %v4665
    %6939 = vmatprep.subr.bf16.mxu0 %v4671
    %6940 = vmatpush1.bf16.msra.mxu0 %v4670
    %6941 = vmatprep.subr.bf16.mxu0 %v4676
    %6942 = vmatpush1.bf16.msra.mxu0 %v4675
    %6943 = vmatprep.subr.bf16.mxu0 %v4681
    %6944 = vmatpush1.bf16.msra.mxu0 %v4680
    %6945 = vmatprep.subr.bf16.mxu0 %v4686
    %6946 = vmatpush1.bf16.msra.mxu0 %v4685
    %6947 = vmatprep.subr.bf16.mxu0 %v4691
    %6948 = vmatpush1.bf16.msra.mxu0 %v4690
    %6949 = vmatprep.subr.bf16.mxu0 %v4696
    %6950 = vmatpush1.bf16.msra.mxu0 %v4695
    %6951 = vmatprep.subr.bf16.mxu0 %v4701
    %6952 = vmatpush1.bf16.msra.mxu0 %v4700
    %6953 = vmatprep.subr.bf16.mxu0 %v4706
    %6954 = vmatpush1.bf16.msra.mxu0 %v4705
    %6955 = vmatprep.mubr.bf16.mxu0 %v1275
    %6956 = vmatmul.mubr.bf16.gmra.mrb[0].mxu0 %v1274
    %v6957 = vpop.f32.mrb[0].mxu0
    %v6958 = vadd.f32 %v6917, %v6957
    %v6959 = vpop.f32.mrb[0].mxu0
    %v6960 = vadd.f32 %v6919, %v6959
    %v6961 = vpop.f32.mrb[0].mxu0
    %v6962 = vpop.f32.mrb[0].mxu0
    %6963 = vdwg.mxu0
    %6964 = vmatprep.subr.bf16.mxu0 %v4711
    %6965 = vmatpush1.bf16.msra.mxu0 %v4710
    %6966 = vmatprep.subr.bf16.mxu0 %v4716
    %6967 = vmatpush1.bf16.msra.mxu0 %v4715
    %6968 = vmatprep.subr.bf16.mxu0 %v4721
    %6969 = vmatpush1.bf16.msra.mxu0 %v4720
    %6970 = vmatprep.subr.bf16.mxu0 %v4726
    %6971 = vmatpush1.bf16.msra.mxu0 %v4725
    %6972 = vmatprep.subr.bf16.mxu0 %v4731
    %6973 = vmatpush1.bf16.msra.mxu0 %v4730
    %6974 = vmatprep.subr.bf16.mxu0 %v4736
    %6975 = vmatpush1.bf16.msra.mxu0 %v4735
    %6976 = vmatprep.subr.bf16.mxu0 %v4741
    %6977 = vmatpush1.bf16.msra.mxu0 %v4740
    %6978 = vmatprep.subr.bf16.mxu0 %v4746
    %6979 = vmatpush1.bf16.msra.mxu0 %v4745
    %6980 = vmatprep.subr.bf16.mxu0 %v4751
    %6981 = vmatpush1.bf16.msra.mxu0 %v4750
    %6982 = vmatprep.subr.bf16.mxu0 %v4756
    %6983 = vmatpush1.bf16.msra.mxu0 %v4755
    %6984 = vmatprep.subr.bf16.mxu0 %v4761
    %6985 = vmatpush1.bf16.msra.mxu0 %v4760
    %6986 = vmatprep.subr.bf16.mxu0 %v4766
    %6987 = vmatpush1.bf16.msra.mxu0 %v4765
    %6988 = vmatprep.subr.bf16.mxu0 %v4771
    %6989 = vmatpush1.bf16.msra.mxu0 %v4770
    %6990 = vmatprep.subr.bf16.mxu0 %v4776
    %6991 = vmatpush1.bf16.msra.mxu0 %v4775
    %6992 = vmatprep.subr.bf16.mxu0 %v4781
    %6993 = vmatpush1.bf16.msra.mxu0 %v4780
    %6994 = vmatprep.subr.bf16.mxu0 %v4786
    %6995 = vmatpush1.bf16.msra.mxu0 %v4785
    %6996 = vmatprep.mubr.bf16.mxu0 %v1277
    %6997 = vmatmul.mubr.bf16.gmra.mrb[0].mxu0 %v1276
    %v6998 = vpop.f32.mrb[0].mxu0
    %v6999 = vadd.f32 %v6958, %v6998
    %v7000 = vpop.f32.mrb[0].mxu0
    %v7001 = vadd.f32 %v6960, %v7000
    %v7002 = vpop.f32.mrb[0].mxu0
    %v7003 = vpop.f32.mrb[0].mxu0
    %7004 = vdwg.mxu0
    %7005 = vmatprep.subr.bf16.mxu0 %v4791
    %7006 = vmatpush1.bf16.msra.mxu0 %v4790
    %7007 = vmatprep.subr.bf16.mxu0 %v4796
    %7008 = vmatpush1.bf16.msra.mxu0 %v4795
    %7009 = vmatprep.subr.bf16.mxu0 %v4801
    %7010 = vmatpush1.bf16.msra.mxu0 %v4800
    %7011 = vmatprep.subr.bf16.mxu0 %v4806
    %7012 = vmatpush1.bf16.msra.mxu0 %v4805
    %7013 = vmatprep.subr.bf16.mxu0 %v4811
    %7014 = vmatpush1.bf16.msra.mxu0 %v4810
    %7015 = vmatprep.subr.bf16.mxu0 %v4816
    %7016 = vmatpush1.bf16.msra.mxu0 %v4815
    %7017 = vmatprep.subr.bf16.mxu0 %v4821
    %7018 = vmatpush1.bf16.msra.mxu0 %v4820
    %7019 = vmatprep.subr.bf16.mxu0 %v4826
    %7020 = vmatpush1.bf16.msra.mxu0 %v4825
    %7021 = vmatprep.subr.bf16.mxu0 %v4831
    %7022 = vmatpush1.bf16.msra.mxu0 %v4830
    %7023 = vmatprep.subr.bf16.mxu0 %v4836
    %7024 = vmatpush1.bf16.msra.mxu0 %v4835
    %7025 = vmatprep.subr.bf16.mxu0 %v4841
    %7026 = vmatpush1.bf16.msra.mxu0 %v4840
    %7027 = vmatprep.subr.bf16.mxu0 %v4846
    %7028 = vmatpush1.bf16.msra.mxu0 %v4845
    %7029 = vmatprep.subr.bf16.mxu0 %v4851
    %7030 = vmatpush1.bf16.msra.mxu0 %v4850
    %7031 = vmatprep.subr.bf16.mxu0 %v4856
    %7032 = vmatpush1.bf16.msra.mxu0 %v4855
    %7033 = vmatprep.subr.bf16.mxu0 %v4861
    %7034 = vmatpush1.bf16.msra.mxu0 %v4860
    %7035 = vmatprep.subr.bf16.mxu0 %v4866
    %7036 = vmatpush1.bf16.msra.mxu0 %v4865
    %7037 = vmatprep.mubr.bf16.mxu0 %v1279
    %7038 = vmatmul.mubr.bf16.gmra.mrb[0].mxu0 %v1278
    %v7039 = vpop.f32.mrb[0].mxu0
    %v7040 = vadd.f32 %v6999, %v7039
    %v7041 = vpop.f32.mrb[0].mxu0
    %v7042 = vadd.f32 %v7001, %v7041
    %v7043 = vpop.f32.mrb[0].mxu0
    %v7044 = vpop.f32.mrb[0].mxu0
    %7045 = vdwg.mxu0
    %7046 = vmatprep.subr.bf16.mxu0 %v4871
    %7047 = vmatpush1.bf16.msra.mxu0 %v4870
    %7048 = vmatprep.subr.bf16.mxu0 %v4876
    %7049 = vmatpush1.bf16.msra.mxu0 %v4875
    %7050 = vmatprep.subr.bf16.mxu0 %v4881
    %7051 = vmatpush1.bf16.msra.mxu0 %v4880
    %7052 = vmatprep.subr.bf16.mxu0 %v4886
    %7053 = vmatpush1.bf16.msra.mxu0 %v4885
    %7054 = vmatprep.subr.bf16.mxu0 %v4891
    %7055 = vmatpush1.bf16.msra.mxu0 %v4890
    %7056 = vmatprep.subr.bf16.mxu0 %v4896
    %7057 = vmatpush1.bf16.msra.mxu0 %v4895
    %7058 = vmatprep.subr.bf16.mxu0 %v4901
    %7059 = vmatpush1.bf16.msra.mxu0 %v4900
    %7060 = vmatprep.subr.bf16.mxu0 %v4906
    %7061 = vmatpush1.bf16.msra.mxu0 %v4905
    %7062 = vmatprep.subr.bf16.mxu0 %v4911
    %7063 = vmatpush1.bf16.msra.mxu0 %v4910
    %7064 = vmatprep.subr.bf16.mxu0 %v4916
    %7065 = vmatpush1.bf16.msra.mxu0 %v4915
    %7066 = vmatprep.subr.bf16.mxu0 %v4921
    %7067 = vmatpush1.bf16.msra.mxu0 %v4920
    %7068 = vmatprep.subr.bf16.mxu0 %v4926
    %7069 = vmatpush1.bf16.msra.mxu0 %v4925
    %7070 = vmatprep.subr.bf16.mxu0 %v4931
    %7071 = vmatpush1.bf16.msra.mxu0 %v4930
    %7072 = vmatprep.subr.bf16.mxu0 %v4936
    %7073 = vmatpush1.bf16.msra.mxu0 %v4935
    %7074 = vmatprep.subr.bf16.mxu0 %v4941
    %7075 = vmatpush1.bf16.msra.mxu0 %v4940
    %7076 = vmatprep.subr.bf16.mxu0 %v4946
    %7077 = vmatpush1.bf16.msra.mxu0 %v4945
    %7078 = vmatprep.mubr.bf16.mxu0 %v1281
    %7079 = vmatmul.mubr.bf16.gmra.mrb[0].mxu0 %v1280
    %v7080 = vpop.f32.mrb[0].mxu0
    %v7081 = vadd.f32 %v7040, %v7080
    %v7082 = vpop.f32.mrb[0].mxu0
    %v7083 = vadd.f32 %v7042, %v7082
    %v7084 = vpop.f32.mrb[0].mxu0
    %v7085 = vpop.f32.mrb[0].mxu0
    %7086 = vdwg.mxu0
    %7087 = vmatprep.subr.bf16.mxu0 %v4951
    %7088 = vmatpush1.bf16.msra.mxu0 %v4950
    %7089 = vmatprep.subr.bf16.mxu0 %v4956
    %7090 = vmatpush1.bf16.msra.mxu0 %v4955
    %7091 = vmatprep.subr.bf16.mxu0 %v4961
    %7092 = vmatpush1.bf16.msra.mxu0 %v4960
    %7093 = vmatprep.subr.bf16.mxu0 %v4966
    %7094 = vmatpush1.bf16.msra.mxu0 %v4965
    %7095 = vmatprep.subr.bf16.mxu0 %v4971
    %7096 = vmatpush1.bf16.msra.mxu0 %v4970
    %7097 = vmatprep.subr.bf16.mxu0 %v4976
    %7098 = vmatpush1.bf16.msra.mxu0 %v4975
    %7099 = vmatprep.subr.bf16.mxu0 %v4981
    %7100 = vmatpush1.bf16.msra.mxu0 %v4980
    %7101 = vmatprep.subr.bf16.mxu0 %v4986
    %7102 = vmatpush1.bf16.msra.mxu0 %v4985
    %7103 = vmatprep.subr.bf16.mxu0 %v4991
    %7104 = vmatpush1.bf16.msra.mxu0 %v4990
    %7105 = vmatprep.subr.bf16.mxu0 %v4996
    %7106 = vmatpush1.bf16.msra.mxu0 %v4995
    %7107 = vmatprep.subr.bf16.mxu0 %v5001
    %7108 = vmatpush1.bf16.msra.mxu0 %v5000
    %7109 = vmatprep.subr.bf16.mxu0 %v5006
    %7110 = vmatpush1.bf16.msra.mxu0 %v5005
    %7111 = vmatprep.subr.bf16.mxu0 %v5011
    %7112 = vmatpush1.bf16.msra.mxu0 %v5010
    %7113 = vmatprep.subr.bf16.mxu0 %v5016
    %7114 = vmatpush1.bf16.msra.mxu0 %v5015
    %7115 = vmatprep.subr.bf16.mxu0 %v5021
    %7116 = vmatpush1.bf16.msra.mxu0 %v5020
    %7117 = vmatprep.subr.bf16.mxu0 %v5026
    %7118 = vmatpush1.bf16.msra.mxu0 %v5025
    %7119 = vmatprep.mubr.bf16.mxu0 %v1283
    %7120 = vmatmul.mubr.bf16.gmra.mrb[0].mxu0 %v1282
    %v7121 = vpop.f32.mrb[0].mxu0
    %v7122 = vadd.f32 %v7081, %v7121
    %v7123 = vpop.f32.mrb[0].mxu0
    %v7124 = vadd.f32 %v7083, %v7123
    %v7125 = vpop.f32.mrb[0].mxu0
    %v7126 = vpop.f32.mrb[0].mxu0
    %7127 = vdwg.mxu0
    %7128 = vmatprep.subr.bf16.mxu0 %v5031
    %7129 = vmatpush1.bf16.msra.mxu0 %v5030
    %7130 = vmatprep.subr.bf16.mxu0 %v5036
    %7131 = vmatpush1.bf16.msra.mxu0 %v5035
    %7132 = vmatprep.subr.bf16.mxu0 %v5041
    %7133 = vmatpush1.bf16.msra.mxu0 %v5040
    %7134 = vmatprep.subr.bf16.mxu0 %v5046
    %7135 = vmatpush1.bf16.msra.mxu0 %v5045
    %7136 = vmatprep.subr.bf16.mxu0 %v5051
    %7137 = vmatpush1.bf16.msra.mxu0 %v5050
    %7138 = vmatprep.subr.bf16.mxu0 %v5056
    %7139 = vmatpush1.bf16.msra.mxu0 %v5055
    %7140 = vmatprep.subr.bf16.mxu0 %v5061
    %7141 = vmatpush1.bf16.msra.mxu0 %v5060
    %7142 = vmatprep.subr.bf16.mxu0 %v5066
    %7143 = vmatpush1.bf16.msra.mxu0 %v5065
    %7144 = vmatprep.subr.bf16.mxu0 %v5071
    %7145 = vmatpush1.bf16.msra.mxu0 %v5070
    %7146 = vmatprep.subr.bf16.mxu0 %v5076
    %7147 = vmatpush1.bf16.msra.mxu0 %v5075
    %7148 = vmatprep.subr.bf16.mxu0 %v5081
    %7149 = vmatpush1.bf16.msra.mxu0 %v5080
    %7150 = vmatprep.subr.bf16.mxu0 %v5086
    %7151 = vmatpush1.bf16.msra.mxu0 %v5085
    %7152 = vmatprep.subr.bf16.mxu0 %v5091
    %7153 = vmatpush1.bf16.msra.mxu0 %v5090
    %7154 = vmatprep.subr.bf16.mxu0 %v5096
    %7155 = vmatpush1.bf16.msra.mxu0 %v5095
    %7156 = vmatprep.subr.bf16.mxu0 %v5101
    %7157 = vmatpush1.bf16.msra.mxu0 %v5100
    %7158 = vmatprep.subr.bf16.mxu0 %v5106
    %7159 = vmatpush1.bf16.msra.mxu0 %v5105
    %7160 = vmatprep.mubr.bf16.mxu0 %v1285
    %7161 = vmatmul.mubr.bf16.gmra.mrb[0].mxu0 %v1284
    %v7162 = vpop.f32.mrb[0].mxu0
    %v7163 = vadd.f32 %v7122, %v7162
    %v7164 = vpop.f32.mrb[0].mxu0
    %v7165 = vadd.f32 %v7124, %v7164
    %v7166 = vpop.f32.mrb[0].mxu0
    %v7167 = vpop.f32.mrb[0].mxu0
    %7168 = vdwg.mxu0
    %7169 = vmatprep.subr.bf16.mxu0 %v5111
    %7170 = vmatpush1.bf16.msra.mxu0 %v5110
    %7171 = vmatprep.subr.bf16.mxu0 %v5116
    %7172 = vmatpush1.bf16.msra.mxu0 %v5115
    %7173 = vmatprep.subr.bf16.mxu0 %v5121
    %7174 = vmatpush1.bf16.msra.mxu0 %v5120
    %7175 = vmatprep.subr.bf16.mxu0 %v5126
    %7176 = vmatpush1.bf16.msra.mxu0 %v5125
    %7177 = vmatprep.subr.bf16.mxu0 %v5131
    %7178 = vmatpush1.bf16.msra.mxu0 %v5130
    %7179 = vmatprep.subr.bf16.mxu0 %v5136
    %7180 = vmatpush1.bf16.msra.mxu0 %v5135
    %7181 = vmatprep.subr.bf16.mxu0 %v5141
    %7182 = vmatpush1.bf16.msra.mxu0 %v5140
    %7183 = vmatprep.subr.bf16.mxu0 %v5146
    %7184 = vmatpush1.bf16.msra.mxu0 %v5145
    %7185 = vmatprep.subr.bf16.mxu0 %v5151
    %7186 = vmatpush1.bf16.msra.mxu0 %v5150
    %7187 = vmatprep.subr.bf16.mxu0 %v5156
    %7188 = vmatpush1.bf16.msra.mxu0 %v5155
    %7189 = vmatprep.subr.bf16.mxu0 %v5161
    %7190 = vmatpush1.bf16.msra.mxu0 %v5160
    %7191 = vmatprep.subr.bf16.mxu0 %v5166
    %7192 = vmatpush1.bf16.msra.mxu0 %v5165
    %7193 = vmatprep.subr.bf16.mxu0 %v5171
    %7194 = vmatpush1.bf16.msra.mxu0 %v5170
    %7195 = vmatprep.subr.bf16.mxu0 %v5176
    %7196 = vmatpush1.bf16.msra.mxu0 %v5175
    %7197 = vmatprep.subr.bf16.mxu0 %v5181
    %7198 = vmatpush1.bf16.msra.mxu0 %v5180
    %7199 = vmatprep.subr.bf16.mxu0 %v5186
    %7200 = vmatpush1.bf16.msra.mxu0 %v5185
    %7201 = vmatprep.mubr.bf16.mxu0 %v1287
    %7202 = vmatmul.mubr.bf16.gmra.mrb[0].mxu0 %v1286
    %v7203 = vpop.f32.mrb[0].mxu0
    %v7204 = vadd.f32 %v7163, %v7203
    %v7205 = vpop.f32.mrb[0].mxu0
    %v7206 = vadd.f32 %v7165, %v7205
    %v7207 = vpop.f32.mrb[0].mxu0
    %v7208 = vpop.f32.mrb[0].mxu0
    %7209 = vdwg.mxu0
    %7210 = vmatprep.subr.bf16.mxu0 %v5191
    %7211 = vmatpush1.bf16.msra.mxu0 %v5190
    %7212 = vmatprep.subr.bf16.mxu0 %v5196
    %7213 = vmatpush1.bf16.msra.mxu0 %v5195
    %7214 = vmatprep.subr.bf16.mxu0 %v5201
    %7215 = vmatpush1.bf16.msra.mxu0 %v5200
    %7216 = vmatprep.subr.bf16.mxu0 %v5206
    %7217 = vmatpush1.bf16.msra.mxu0 %v5205
    %7218 = vmatprep.subr.bf16.mxu0 %v5211
    %7219 = vmatpush1.bf16.msra.mxu0 %v5210
    %7220 = vmatprep.subr.bf16.mxu0 %v5216
    %7221 = vmatpush1.bf16.msra.mxu0 %v5215
    %7222 = vmatprep.subr.bf16.mxu0 %v5221
    %7223 = vmatpush1.bf16.msra.mxu0 %v5220
    %7224 = vmatprep.subr.bf16.mxu0 %v5226
    %7225 = vmatpush1.bf16.msra.mxu0 %v5225
    %7226 = vmatprep.subr.bf16.mxu0 %v5231
    %7227 = vmatpush1.bf16.msra.mxu0 %v5230
    %7228 = vmatprep.subr.bf16.mxu0 %v5236
    %7229 = vmatpush1.bf16.msra.mxu0 %v5235
    %7230 = vmatprep.subr.bf16.mxu0 %v5241
    %7231 = vmatpush1.bf16.msra.mxu0 %v5240
    %7232 = vmatprep.subr.bf16.mxu0 %v5246
    %7233 = vmatpush1.bf16.msra.mxu0 %v5245
    %7234 = vmatprep.subr.bf16.mxu0 %v5251
    %7235 = vmatpush1.bf16.msra.mxu0 %v5250
    %7236 = vmatprep.subr.bf16.mxu0 %v5256
    %7237 = vmatpush1.bf16.msra.mxu0 %v5255
    %7238 = vmatprep.subr.bf16.mxu0 %v5261
    %7239 = vmatpush1.bf16.msra.mxu0 %v5260
    %7240 = vmatprep.subr.bf16.mxu0 %v5266
    %7241 = vmatpush1.bf16.msra.mxu0 %v5265
    %7242 = vmatprep.mubr.bf16.mxu0 %v1289
    %7243 = vmatmul.mubr.bf16.gmra.mrb[0].mxu0 %v1288
    %v7244 = vpop.f32.mrb[0].mxu0
    %v7245 = vadd.f32 %v7204, %v7244
    %v7246 = vpop.f32.mrb[0].mxu0
    %v7247 = vadd.f32 %v7206, %v7246
    %v7248 = vpop.f32.mrb[0].mxu0
    %v7249 = vpop.f32.mrb[0].mxu0
    %7250 = vdwg.mxu0
    %7251 = vmatprep.subr.bf16.mxu0 %v5271
    %7252 = vmatpush1.bf16.msra.mxu0 %v5270
    %7253 = vmatprep.subr.bf16.mxu0 %v5276
    %7254 = vmatpush1.bf16.msra.mxu0 %v5275
    %7255 = vmatprep.subr.bf16.mxu0 %v5281
    %7256 = vmatpush1.bf16.msra.mxu0 %v5280
    %7257 = vmatprep.subr.bf16.mxu0 %v5286
    %7258 = vmatpush1.bf16.msra.mxu0 %v5285
    %7259 = vmatprep.subr.bf16.mxu0 %v5291
    %7260 = vmatpush1.bf16.msra.mxu0 %v5290
    %7261 = vmatprep.subr.bf16.mxu0 %v5296
    %7262 = vmatpush1.bf16.msra.mxu0 %v5295
    %7263 = vmatprep.subr.bf16.mxu0 %v5301
    %7264 = vmatpush1.bf16.msra.mxu0 %v5300
    %7265 = vmatprep.subr.bf16.mxu0 %v5306
    %7266 = vmatpush1.bf16.msra.mxu0 %v5305
    %7267 = vmatprep.subr.bf16.mxu0 %v5311
    %7268 = vmatpush1.bf16.msra.mxu0 %v5310
    %7269 = vmatprep.subr.bf16.mxu0 %v5316
    %7270 = vmatpush1.bf16.msra.mxu0 %v5315
    %7271 = vmatprep.subr.bf16.mxu0 %v5321
    %7272 = vmatpush1.bf16.msra.mxu0 %v5320
    %7273 = vmatprep.subr.bf16.mxu0 %v5326
    %7274 = vmatpush1.bf16.msra.mxu0 %v5325
    %7275 = vmatprep.subr.bf16.mxu0 %v5331
    %7276 = vmatpush1.bf16.msra.mxu0 %v5330
    %7277 = vmatprep.subr.bf16.mxu0 %v5336
    %7278 = vmatpush1.bf16.msra.mxu0 %v5335
    %7279 = vmatprep.subr.bf16.mxu0 %v5341
    %7280 = vmatpush1.bf16.msra.mxu0 %v5340
    %7281 = vmatprep.subr.bf16.mxu0 %v5346
    %7282 = vmatpush1.bf16.msra.mxu0 %v5345
    %7283 = vmatprep.mubr.bf16.mxu0 %v1291
    %7284 = vmatmul.mubr.bf16.gmra.mrb[0].mxu0 %v1290
    %v7285 = vpop.f32.mrb[0].mxu0
    %v7286 = vadd.f32 %v7245, %v7285
    %v7287 = vpop.f32.mrb[0].mxu0
    %v7288 = vadd.f32 %v7247, %v7287
    %v7289 = vpop.f32.mrb[0].mxu0
    %v7290 = vpop.f32.mrb[0].mxu0
    %7291 = vdwg.mxu0
    %7292 = vmatprep.subr.bf16.mxu0 0
    %7293 = vmatpush1.bf16.msra.mxu0 %v4392
    %7294 = vmatprep.subr.bf16.mxu0 0
    %7295 = vmatpush1.bf16.msra.mxu0 %v4397
    %7296 = vmatprep.subr.bf16.mxu0 0
    %7297 = vmatpush1.bf16.msra.mxu0 %v4402
    %7298 = vmatprep.subr.bf16.mxu0 0
    %7299 = vmatpush1.bf16.msra.mxu0 %v4407
    %7300 = vmatprep.subr.bf16.mxu0 0
    %7301 = vmatpush1.bf16.msra.mxu0 %v4412
    %7302 = vmatprep.subr.bf16.mxu0 0
    %7303 = vmatpush1.bf16.msra.mxu0 %v4417
    %7304 = vmatprep.subr.bf16.mxu0 0
    %7305 = vmatpush1.bf16.msra.mxu0 %v4422
    %7306 = vmatprep.subr.bf16.mxu0 0
    %7307 = vmatpush1.bf16.msra.mxu0 %v4427
    %7308 = vmatprep.subr.bf16.mxu0 0
    %7309 = vmatpush1.bf16.msra.mxu0 %v4432
    %7310 = vmatprep.subr.bf16.mxu0 0
    %7311 = vmatpush1.bf16.msra.mxu0 %v4437
    %7312 = vmatprep.subr.bf16.mxu0 0
    %7313 = vmatpush1.bf16.msra.mxu0 %v4442
    %7314 = vmatprep.subr.bf16.mxu0 0
    %7315 = vmatpush1.bf16.msra.mxu0 %v4447
    %7316 = vmatprep.subr.bf16.mxu0 0
    %7317 = vmatpush1.bf16.msra.mxu0 %v4452
    %7318 = vmatprep.subr.bf16.mxu0 0
    %7319 = vmatpush1.bf16.msra.mxu0 %v4457
    %7320 = vmatprep.subr.bf16.mxu0 0
    %7321 = vmatpush1.bf16.msra.mxu0 %v4462
    %7322 = vmatprep.subr.bf16.mxu0 0
    %7323 = vmatpush1.bf16.msra.mxu0 %v4467
    %7324 = vmatprep.mubr.bf16.mxu0 %v1269
    %7325 = vmatmul.mubr.bf16.gmra.mrb[0].mxu0 %v1268
    %v7326 = vpop.f32.mrb[0].mxu0
    %v7327 = vadd.f32 0.0, %v7326
    %v7328 = vpop.f32.mrb[0].mxu0
    %v7329 = vpop.f32.mrb[0].mxu0
    %v7330 = vpop.f32.mrb[0].mxu0
    %7331 = vdwg.mxu0
    %7332 = vmatprep.subr.bf16.mxu0 0
    %7333 = vmatpush1.bf16.msra.mxu0 %v4472
    %7334 = vmatprep.subr.bf16.mxu0 0
    %7335 = vmatpush1.bf16.msra.mxu0 %v4477
    %7336 = vmatprep.subr.bf16.mxu0 0
    %7337 = vmatpush1.bf16.msra.mxu0 %v4482
    %7338 = vmatprep.subr.bf16.mxu0 0
    %7339 = vmatpush1.bf16.msra.mxu0 %v4487
    %7340 = vmatprep.subr.bf16.mxu0 0
    %7341 = vmatpush1.bf16.msra.mxu0 %v4492
    %7342 = vmatprep.subr.bf16.mxu0 0
    %7343 = vmatpush1.bf16.msra.mxu0 %v4497
    %7344 = vmatprep.subr.bf16.mxu0 0
    %7345 = vmatpush1.bf16.msra.mxu0 %v4502
    %7346 = vmatprep.subr.bf16.mxu0 0
    %7347 = vmatpush1.bf16.msra.mxu0 %v4507
    %7348 = vmatprep.subr.bf16.mxu0 0
    %7349 = vmatpush1.bf16.msra.mxu0 %v4512
    %7350 = vmatprep.subr.bf16.mxu0 0
    %7351 = vmatpush1.bf16.msra.mxu0 %v4517
    %7352 = vmatprep.subr.bf16.mxu0 0
    %7353 = vmatpush1.bf16.msra.mxu0 %v4522
    %7354 = vmatprep.subr.bf16.mxu0 0
    %7355 = vmatpush1.bf16.msra.mxu0 %v4527
    %7356 = vmatprep.subr.bf16.mxu0 0
    %7357 = vmatpush1.bf16.msra.mxu0 %v4532
    %7358 = vmatprep.subr.bf16.mxu0 0
    %7359 = vmatpush1.bf16.msra.mxu0 %v4537
    %7360 = vmatprep.subr.bf16.mxu0 0
    %7361 = vmatpush1.bf16.msra.mxu0 %v4542
    %7362 = vmatprep.subr.bf16.mxu0 0
    %7363 = vmatpush1.bf16.msra.mxu0 %v4547
    %7364 = vmatprep.mubr.bf16.mxu0 %v1271
    %7365 = vmatmul.mubr.bf16.gmra.mrb[0].mxu0 %v1270
    %v7366 = vpop.f32.mrb[0].mxu0
    %v7367 = vadd.f32 %v7327, %v7366
    %v7368 = vpop.f32.mrb[0].mxu0
    %v7369 = vpop.f32.mrb[0].mxu0
    %v7370 = vpop.f32.mrb[0].mxu0
    %7371 = vdwg.mxu0
    %7372 = vmatprep.subr.bf16.mxu0 0
    %7373 = vmatpush1.bf16.msra.mxu0 %v4552
    %7374 = vmatprep.subr.bf16.mxu0 0
    %7375 = vmatpush1.bf16.msra.mxu0 %v4557
    %7376 = vmatprep.subr.bf16.mxu0 0
    %7377 = vmatpush1.bf16.msra.mxu0 %v4562
    %7378 = vmatprep.subr.bf16.mxu0 0
    %7379 = vmatpush1.bf16.msra.mxu0 %v4567
    %7380 = vmatprep.subr.bf16.mxu0 0
    %7381 = vmatpush1.bf16.msra.mxu0 %v4572
    %7382 = vmatprep.subr.bf16.mxu0 0
    %7383 = vmatpush1.bf16.msra.mxu0 %v4577
    %7384 = vmatprep.subr.bf16.mxu0 0
    %7385 = vmatpush1.bf16.msra.mxu0 %v4582
    %7386 = vmatprep.subr.bf16.mxu0 0
    %7387 = vmatpush1.bf16.msra.mxu0 %v4587
    %7388 = vmatprep.subr.bf16.mxu0 0
    %7389 = vmatpush1.bf16.msra.mxu0 %v4592
    %7390 = vmatprep.subr.bf16.mxu0 0
    %7391 = vmatpush1.bf16.msra.mxu0 %v4597
    %7392 = vmatprep.subr.bf16.mxu0 0
    %7393 = vmatpush1.bf16.msra.mxu0 %v4602
    %7394 = vmatprep.subr.bf16.mxu0 0
    %7395 = vmatpush1.bf16.msra.mxu0 %v4607
    %7396 = vmatprep.subr.bf16.mxu0 0
    %7397 = vmatpush1.bf16.msra.mxu0 %v4612
    %7398 = vmatprep.subr.bf16.mxu0 0
    %7399 = vmatpush1.bf16.msra.mxu0 %v4617
    %7400 = vmatprep.subr.bf16.mxu0 0
    %7401 = vmatpush1.bf16.msra.mxu0 %v4622
    %7402 = vmatprep.subr.bf16.mxu0 0
    %7403 = vmatpush1.bf16.msra.mxu0 %v4627
    %7404 = vmatprep.mubr.bf16.mxu0 %v1273
    %7405 = vmatmul.mubr.bf16.gmra.mrb[0].mxu0 %v1272
    %v7406 = vpop.f32.mrb[0].mxu0
    %v7407 = vadd.f32 %v7367, %v7406
    %v7408 = vpop.f32.mrb[0].mxu0
    %v7409 = vpop.f32.mrb[0].mxu0
    %v7410 = vpop.f32.mrb[0].mxu0
    %7411 = vdwg.mxu0
    %7412 = vmatprep.subr.bf16.mxu0 0
    %7413 = vmatpush1.bf16.msra.mxu0 %v4632
    %7414 = vmatprep.subr.bf16.mxu0 0
    %7415 = vmatpush1.bf16.msra.mxu0 %v4637
    %7416 = vmatprep.subr.bf16.mxu0 0
    %7417 = vmatpush1.bf16.msra.mxu0 %v4642
    %7418 = vmatprep.subr.bf16.mxu0 0
    %7419 = vmatpush1.bf16.msra.mxu0 %v4647
    %7420 = vmatprep.subr.bf16.mxu0 0
    %7421 = vmatpush1.bf16.msra.mxu0 %v4652
    %7422 = vmatprep.subr.bf16.mxu0 0
    %7423 = vmatpush1.bf16.msra.mxu0 %v4657
    %7424 = vmatprep.subr.bf16.mxu0 0
    %7425 = vmatpush1.bf16.msra.mxu0 %v4662
    %7426 = vmatprep.subr.bf16.mxu0 0
    %7427 = vmatpush1.bf16.msra.mxu0 %v4667
    %7428 = vmatprep.subr.bf16.mxu0 0
    %7429 = vmatpush1.bf16.msra.mxu0 %v4672
    %7430 = vmatprep.subr.bf16.mxu0 0
    %7431 = vmatpush1.bf16.msra.mxu0 %v4677
    %7432 = vmatprep.subr.bf16.mxu0 0
    %7433 = vmatpush1.bf16.msra.mxu0 %v4682
    %7434 = vmatprep.subr.bf16.mxu0 0
    %7435 = vmatpush1.bf16.msra.mxu0 %v4687
    %7436 = vmatprep.subr.bf16.mxu0 0
    %7437 = vmatpush1.bf16.msra.mxu0 %v4692
    %7438 = vmatprep.subr.bf16.mxu0 0
    %7439 = vmatpush1.bf16.msra.mxu0 %v4697
    %7440 = vmatprep.subr.bf16.mxu0 0
    %7441 = vmatpush1.bf16.msra.mxu0 %v4702
    %7442 = vmatprep.subr.bf16.mxu0 0
    %7443 = vmatpush1.bf16.msra.mxu0 %v4707
    %7444 = vmatprep.mubr.bf16.mxu0 %v1275
    %7445 = vmatmul.mubr.bf16.gmra.mrb[0].mxu0 %v1274
    %v7446 = vpop.f32.mrb[0].mxu0
    %v7447 = vadd.f32 %v7407, %v7446
    %v7448 = vpop.f32.mrb[0].mxu0
    %v7449 = vpop.f32.mrb[0].mxu0
    %v7450 = vpop.f32.mrb[0].mxu0
    %7451 = vdwg.mxu0
    %7452 = vmatprep.subr.bf16.mxu0 0
    %7453 = vmatpush1.bf16.msra.mxu0 %v4712
    %7454 = vmatprep.subr.bf16.mxu0 0
    %7455 = vmatpush1.bf16.msra.mxu0 %v4717
    %7456 = vmatprep.subr.bf16.mxu0 0
    %7457 = vmatpush1.bf16.msra.mxu0 %v4722
    %7458 = vmatprep.subr.bf16.mxu0 0
    %7459 = vmatpush1.bf16.msra.mxu0 %v4727
    %7460 = vmatprep.subr.bf16.mxu0 0
    %7461 = vmatpush1.bf16.msra.mxu0 %v4732
    %7462 = vmatprep.subr.bf16.mxu0 0
    %7463 = vmatpush1.bf16.msra.mxu0 %v4737
    %7464 = vmatprep.subr.bf16.mxu0 0
    %7465 = vmatpush1.bf16.msra.mxu0 %v4742
    %7466 = vmatprep.subr.bf16.mxu0 0
    %7467 = vmatpush1.bf16.msra.mxu0 %v4747
    %7468 = vmatprep.subr.bf16.mxu0 0
    %7469 = vmatpush1.bf16.msra.mxu0 %v4752
    %7470 = vmatprep.subr.bf16.mxu0 0
    %7471 = vmatpush1.bf16.msra.mxu0 %v4757
    %7472 = vmatprep.subr.bf16.mxu0 0
    %7473 = vmatpush1.bf16.msra.mxu0 %v4762
    %7474 = vmatprep.subr.bf16.mxu0 0
    %7475 = vmatpush1.bf16.msra.mxu0 %v4767
    %7476 = vmatprep.subr.bf16.mxu0 0
    %7477 = vmatpush1.bf16.msra.mxu0 %v4772
    %7478 = vmatprep.subr.bf16.mxu0 0
    %7479 = vmatpush1.bf16.msra.mxu0 %v4777
    %7480 = vmatprep.subr.bf16.mxu0 0
    %7481 = vmatpush1.bf16.msra.mxu0 %v4782
    %7482 = vmatprep.subr.bf16.mxu0 0
    %7483 = vmatpush1.bf16.msra.mxu0 %v4787
    %7484 = vmatprep.mubr.bf16.mxu0 %v1277
    %7485 = vmatmul.mubr.bf16.gmra.mrb[0].mxu0 %v1276
    %v7486 = vpop.f32.mrb[0].mxu0
    %v7487 = vadd.f32 %v7447, %v7486
    %v7488 = vpop.f32.mrb[0].mxu0
    %v7489 = vpop.f32.mrb[0].mxu0
    %v7490 = vpop.f32.mrb[0].mxu0
    %7491 = vdwg.mxu0
    %7492 = vmatprep.subr.bf16.mxu0 0
    %7493 = vmatpush1.bf16.msra.mxu0 %v4792
    %7494 = vmatprep.subr.bf16.mxu0 0
    %7495 = vmatpush1.bf16.msra.mxu0 %v4797
    %7496 = vmatprep.subr.bf16.mxu0 0
    %7497 = vmatpush1.bf16.msra.mxu0 %v4802
    %7498 = vmatprep.subr.bf16.mxu0 0
    %7499 = vmatpush1.bf16.msra.mxu0 %v4807
    %7500 = vmatprep.subr.bf16.mxu0 0
    %7501 = vmatpush1.bf16.msra.mxu0 %v4812
    %7502 = vmatprep.subr.bf16.mxu0 0
    %7503 = vmatpush1.bf16.msra.mxu0 %v4817
    %7504 = vmatprep.subr.bf16.mxu0 0
    %7505 = vmatpush1.bf16.msra.mxu0 %v4822
    %7506 = vmatprep.subr.bf16.mxu0 0
    %7507 = vmatpush1.bf16.msra.mxu0 %v4827
    %7508 = vmatprep.subr.bf16.mxu0 0
    %7509 = vmatpush1.bf16.msra.mxu0 %v4832
    %7510 = vmatprep.subr.bf16.mxu0 0
    %7511 = vmatpush1.bf16.msra.mxu0 %v4837
    %7512 = vmatprep.subr.bf16.mxu0 0
    %7513 = vmatpush1.bf16.msra.mxu0 %v4842
    %7514 = vmatprep.subr.bf16.mxu0 0
    %7515 = vmatpush1.bf16.msra.mxu0 %v4847
    %7516 = vmatprep.subr.bf16.mxu0 0
    %7517 = vmatpush1.bf16.msra.mxu0 %v4852
    %7518 = vmatprep.subr.bf16.mxu0 0
    %7519 = vmatpush1.bf16.msra.mxu0 %v4857
    %7520 = vmatprep.subr.bf16.mxu0 0
    %7521 = vmatpush1.bf16.msra.mxu0 %v4862
    %7522 = vmatprep.subr.bf16.mxu0 0
    %7523 = vmatpush1.bf16.msra.mxu0 %v4867
    %7524 = vmatprep.mubr.bf16.mxu0 %v1279
    %7525 = vmatmul.mubr.bf16.gmra.mrb[0].mxu0 %v1278
    %v7526 = vpop.f32.mrb[0].mxu0
    %v7527 = vadd.f32 %v7487, %v7526
    %v7528 = vpop.f32.mrb[0].mxu0
    %v7529 = vpop.f32.mrb[0].mxu0
    %v7530 = vpop.f32.mrb[0].mxu0
    %7531 = vdwg.mxu0
    %7532 = vmatprep.subr.bf16.mxu0 0
    %7533 = vmatpush1.bf16.msra.mxu0 %v4872
    %7534 = vmatprep.subr.bf16.mxu0 0
    %7535 = vmatpush1.bf16.msra.mxu0 %v4877
    %7536 = vmatprep.subr.bf16.mxu0 0
    %7537 = vmatpush1.bf16.msra.mxu0 %v4882
    %7538 = vmatprep.subr.bf16.mxu0 0
    %7539 = vmatpush1.bf16.msra.mxu0 %v4887
    %7540 = vmatprep.subr.bf16.mxu0 0
    %7541 = vmatpush1.bf16.msra.mxu0 %v4892
    %7542 = vmatprep.subr.bf16.mxu0 0
    %7543 = vmatpush1.bf16.msra.mxu0 %v4897
    %7544 = vmatprep.subr.bf16.mxu0 0
    %7545 = vmatpush1.bf16.msra.mxu0 %v4902
    %7546 = vmatprep.subr.bf16.mxu0 0
    %7547 = vmatpush1.bf16.msra.mxu0 %v4907
    %7548 = vmatprep.subr.bf16.mxu0 0
    %7549 = vmatpush1.bf16.msra.mxu0 %v4912
    %7550 = vmatprep.subr.bf16.mxu0 0
    %7551 = vmatpush1.bf16.msra.mxu0 %v4917
    %7552 = vmatprep.subr.bf16.mxu0 0
    %7553 = vmatpush1.bf16.msra.mxu0 %v4922
    %7554 = vmatprep.subr.bf16.mxu0 0
    %7555 = vmatpush1.bf16.msra.mxu0 %v4927
    %7556 = vmatprep.subr.bf16.mxu0 0
    %7557 = vmatpush1.bf16.msra.mxu0 %v4932
    %7558 = vmatprep.subr.bf16.mxu0 0
    %7559 = vmatpush1.bf16.msra.mxu0 %v4937
    %7560 = vmatprep.subr.bf16.mxu0 0
    %7561 = vmatpush1.bf16.msra.mxu0 %v4942
    %7562 = vmatprep.subr.bf16.mxu0 0
    %7563 = vmatpush1.bf16.msra.mxu0 %v4947
    %7564 = vmatprep.mubr.bf16.mxu0 %v1281
    %7565 = vmatmul.mubr.bf16.gmra.mrb[0].mxu0 %v1280
    %v7566 = vpop.f32.mrb[0].mxu0
    %v7567 = vadd.f32 %v7527, %v7566
    %v7568 = vpop.f32.mrb[0].mxu0
    %v7569 = vpop.f32.mrb[0].mxu0
    %v7570 = vpop.f32.mrb[0].mxu0
    %7571 = vdwg.mxu0
    %7572 = vmatprep.subr.bf16.mxu0 0
    %7573 = vmatpush1.bf16.msra.mxu0 %v4952
    %7574 = vmatprep.subr.bf16.mxu0 0
    %7575 = vmatpush1.bf16.msra.mxu0 %v4957
    %7576 = vmatprep.subr.bf16.mxu0 0
    %7577 = vmatpush1.bf16.msra.mxu0 %v4962
    %7578 = vmatprep.subr.bf16.mxu0 0
    %7579 = vmatpush1.bf16.msra.mxu0 %v4967
    %7580 = vmatprep.subr.bf16.mxu0 0
    %7581 = vmatpush1.bf16.msra.mxu0 %v4972
    %7582 = vmatprep.subr.bf16.mxu0 0
    %7583 = vmatpush1.bf16.msra.mxu0 %v4977
    %7584 = vmatprep.subr.bf16.mxu0 0
    %7585 = vmatpush1.bf16.msra.mxu0 %v4982
    %7586 = vmatprep.subr.bf16.mxu0 0
    %7587 = vmatpush1.bf16.msra.mxu0 %v4987
    %7588 = vmatprep.subr.bf16.mxu0 0
    %7589 = vmatpush1.bf16.msra.mxu0 %v4992
    %7590 = vmatprep.subr.bf16.mxu0 0
    %7591 = vmatpush1.bf16.msra.mxu0 %v4997
    %7592 = vmatprep.subr.bf16.mxu0 0
    %7593 = vmatpush1.bf16.msra.mxu0 %v5002
    %7594 = vmatprep.subr.bf16.mxu0 0
    %7595 = vmatpush1.bf16.msra.mxu0 %v5007
    %7596 = vmatprep.subr.bf16.mxu0 0
    %7597 = vmatpush1.bf16.msra.mxu0 %v5012
    %7598 = vmatprep.subr.bf16.mxu0 0
    %7599 = vmatpush1.bf16.msra.mxu0 %v5017
    %7600 = vmatprep.subr.bf16.mxu0 0
    %7601 = vmatpush1.bf16.msra.mxu0 %v5022
    %7602 = vmatprep.subr.bf16.mxu0 0
    %7603 = vmatpush1.bf16.msra.mxu0 %v5027
    %7604 = vmatprep.mubr.bf16.mxu0 %v1283
    %7605 = vmatmul.mubr.bf16.gmra.mrb[0].mxu0 %v1282
    %v7606 = vpop.f32.mrb[0].mxu0
    %v7607 = vadd.f32 %v7567, %v7606
    %v7608 = vpop.f32.mrb[0].mxu0
    %v7609 = vpop.f32.mrb[0].mxu0
    %v7610 = vpop.f32.mrb[0].mxu0
    %7611 = vdwg.mxu0
    %7612 = vmatprep.subr.bf16.mxu0 0
    %7613 = vmatpush1.bf16.msra.mxu0 %v5032
    %7614 = vmatprep.subr.bf16.mxu0 0
    %7615 = vmatpush1.bf16.msra.mxu0 %v5037
    %7616 = vmatprep.subr.bf16.mxu0 0
    %7617 = vmatpush1.bf16.msra.mxu0 %v5042
    %7618 = vmatprep.subr.bf16.mxu0 0
    %7619 = vmatpush1.bf16.msra.mxu0 %v5047
    %7620 = vmatprep.subr.bf16.mxu0 0
    %7621 = vmatpush1.bf16.msra.mxu0 %v5052
    %7622 = vmatprep.subr.bf16.mxu0 0
    %7623 = vmatpush1.bf16.msra.mxu0 %v5057
    %7624 = vmatprep.subr.bf16.mxu0 0
    %7625 = vmatpush1.bf16.msra.mxu0 %v5062
    %7626 = vmatprep.subr.bf16.mxu0 0
    %7627 = vmatpush1.bf16.msra.mxu0 %v5067
    %7628 = vmatprep.subr.bf16.mxu0 0
    %7629 = vmatpush1.bf16.msra.mxu0 %v5072
    %7630 = vmatprep.subr.bf16.mxu0 0
    %7631 = vmatpush1.bf16.msra.mxu0 %v5077
    %7632 = vmatprep.subr.bf16.mxu0 0
    %7633 = vmatpush1.bf16.msra.mxu0 %v5082
    %7634 = vmatprep.subr.bf16.mxu0 0
    %7635 = vmatpush1.bf16.msra.mxu0 %v5087
    %7636 = vmatprep.subr.bf16.mxu0 0
    %7637 = vmatpush1.bf16.msra.mxu0 %v5092
    %7638 = vmatprep.subr.bf16.mxu0 0
    %7639 = vmatpush1.bf16.msra.mxu0 %v5097
    %7640 = vmatprep.subr.bf16.mxu0 0
    %7641 = vmatpush1.bf16.msra.mxu0 %v5102
    %7642 = vmatprep.subr.bf16.mxu0 0
    %7643 = vmatpush1.bf16.msra.mxu0 %v5107
    %7644 = vmatprep.mubr.bf16.mxu0 %v1285
    %7645 = vmatmul.mubr.bf16.gmra.mrb[0].mxu0 %v1284
    %v7646 = vpop.f32.mrb[0].mxu0
    %v7647 = vadd.f32 %v7607, %v7646
    %v7648 = vpop.f32.mrb[0].mxu0
    %v7649 = vpop.f32.mrb[0].mxu0
    %v7650 = vpop.f32.mrb[0].mxu0
    %7651 = vdwg.mxu0
    %7652 = vmatprep.subr.bf16.mxu0 0
    %7653 = vmatpush1.bf16.msra.mxu0 %v5112
    %7654 = vmatprep.subr.bf16.mxu0 0
    %7655 = vmatpush1.bf16.msra.mxu0 %v5117
    %7656 = vmatprep.subr.bf16.mxu0 0
    %7657 = vmatpush1.bf16.msra.mxu0 %v5122
    %7658 = vmatprep.subr.bf16.mxu0 0
    %7659 = vmatpush1.bf16.msra.mxu0 %v5127
    %7660 = vmatprep.subr.bf16.mxu0 0
    %7661 = vmatpush1.bf16.msra.mxu0 %v5132
    %7662 = vmatprep.subr.bf16.mxu0 0
    %7663 = vmatpush1.bf16.msra.mxu0 %v5137
    %7664 = vmatprep.subr.bf16.mxu0 0
    %7665 = vmatpush1.bf16.msra.mxu0 %v5142
    %7666 = vmatprep.subr.bf16.mxu0 0
    %7667 = vmatpush1.bf16.msra.mxu0 %v5147
    %7668 = vmatprep.subr.bf16.mxu0 0
    %7669 = vmatpush1.bf16.msra.mxu0 %v5152
    %7670 = vmatprep.subr.bf16.mxu0 0
    %7671 = vmatpush1.bf16.msra.mxu0 %v5157
    %7672 = vmatprep.subr.bf16.mxu0 0
    %7673 = vmatpush1.bf16.msra.mxu0 %v5162
    %7674 = vmatprep.subr.bf16.mxu0 0
    %7675 = vmatpush1.bf16.msra.mxu0 %v5167
    %7676 = vmatprep.subr.bf16.mxu0 0
    %7677 = vmatpush1.bf16.msra.mxu0 %v5172
    %7678 = vmatprep.subr.bf16.mxu0 0
    %7679 = vmatpush1.bf16.msra.mxu0 %v5177
    %7680 = vmatprep.subr.bf16.mxu0 0
    %7681 = vmatpush1.bf16.msra.mxu0 %v5182
    %7682 = vmatprep.subr.bf16.mxu0 0
    %7683 = vmatpush1.bf16.msra.mxu0 %v5187
    %7684 = vmatprep.mubr.bf16.mxu0 %v1287
    %7685 = vmatmul.mubr.bf16.gmra.mrb[0].mxu0 %v1286
    %v7686 = vpop.f32.mrb[0].mxu0
    %v7687 = vadd.f32 %v7647, %v7686
    %v7688 = vpop.f32.mrb[0].mxu0
    %v7689 = vpop.f32.mrb[0].mxu0
    %v7690 = vpop.f32.mrb[0].mxu0
    %7691 = vdwg.mxu0
    %7692 = vmatprep.subr.bf16.mxu0 0
    %7693 = vmatpush1.bf16.msra.mxu0 %v5192
    %7694 = vmatprep.subr.bf16.mxu0 0
    %7695 = vmatpush1.bf16.msra.mxu0 %v5197
    %7696 = vmatprep.subr.bf16.mxu0 0
    %7697 = vmatpush1.bf16.msra.mxu0 %v5202
    %7698 = vmatprep.subr.bf16.mxu0 0
    %7699 = vmatpush1.bf16.msra.mxu0 %v5207
    %7700 = vmatprep.subr.bf16.mxu0 0
    %7701 = vmatpush1.bf16.msra.mxu0 %v5212
    %7702 = vmatprep.subr.bf16.mxu0 0
    %7703 = vmatpush1.bf16.msra.mxu0 %v5217
    %7704 = vmatprep.subr.bf16.mxu0 0
    %7705 = vmatpush1.bf16.msra.mxu0 %v5222
    %7706 = vmatprep.subr.bf16.mxu0 0
    %7707 = vmatpush1.bf16.msra.mxu0 %v5227
    %7708 = vmatprep.subr.bf16.mxu0 0
    %7709 = vmatpush1.bf16.msra.mxu0 %v5232
    %7710 = vmatprep.subr.bf16.mxu0 0
    %7711 = vmatpush1.bf16.msra.mxu0 %v5237
    %7712 = vmatprep.subr.bf16.mxu0 0
    %7713 = vmatpush1.bf16.msra.mxu0 %v5242
    %7714 = vmatprep.subr.bf16.mxu0 0
    %7715 = vmatpush1.bf16.msra.mxu0 %v5247
    %7716 = vmatprep.subr.bf16.mxu0 0
    %7717 = vmatpush1.bf16.msra.mxu0 %v5252
    %7718 = vmatprep.subr.bf16.mxu0 0
    %7719 = vmatpush1.bf16.msra.mxu0 %v5257
    %7720 = vmatprep.subr.bf16.mxu0 0
    %7721 = vmatpush1.bf16.msra.mxu0 %v5262
    %7722 = vmatprep.subr.bf16.mxu0 0
    %7723 = vmatpush1.bf16.msra.mxu0 %v5267
    %7724 = vmatprep.mubr.bf16.mxu0 %v1289
    %7725 = vmatmul.mubr.bf16.gmra.mrb[0].mxu0 %v1288
    %v7726 = vpop.f32.mrb[0].mxu0
    %v7727 = vadd.f32 %v7687, %v7726
    %v7728 = vpop.f32.mrb[0].mxu0
    %v7729 = vpop.f32.mrb[0].mxu0
    %v7730 = vpop.f32.mrb[0].mxu0
    %7731 = vdwg.mxu0
    %7732 = vmatprep.subr.bf16.mxu0 0
    %7733 = vmatpush1.bf16.msra.mxu0 %v5272
    %7734 = vmatprep.subr.bf16.mxu0 0
    %7735 = vmatpush1.bf16.msra.mxu0 %v5277
    %7736 = vmatprep.subr.bf16.mxu0 0
    %7737 = vmatpush1.bf16.msra.mxu0 %v5282
    %7738 = vmatprep.subr.bf16.mxu0 0
    %7739 = vmatpush1.bf16.msra.mxu0 %v5287
    %7740 = vmatprep.subr.bf16.mxu0 0
    %7741 = vmatpush1.bf16.msra.mxu0 %v5292
    %7742 = vmatprep.subr.bf16.mxu0 0
    %7743 = vmatpush1.bf16.msra.mxu0 %v5297
    %7744 = vmatprep.subr.bf16.mxu0 0
    %7745 = vmatpush1.bf16.msra.mxu0 %v5302
    %7746 = vmatprep.subr.bf16.mxu0 0
    %7747 = vmatpush1.bf16.msra.mxu0 %v5307
    %7748 = vmatprep.subr.bf16.mxu0 0
    %7749 = vmatpush1.bf16.msra.mxu0 %v5312
    %7750 = vmatprep.subr.bf16.mxu0 0
    %7751 = vmatpush1.bf16.msra.mxu0 %v5317
    %7752 = vmatprep.subr.bf16.mxu0 0
    %7753 = vmatpush1.bf16.msra.mxu0 %v5322
    %7754 = vmatprep.subr.bf16.mxu0 0
    %7755 = vmatpush1.bf16.msra.mxu0 %v5327
    %7756 = vmatprep.subr.bf16.mxu0 0
    %7757 = vmatpush1.bf16.msra.mxu0 %v5332
    %7758 = vmatprep.subr.bf16.mxu0 0
    %7759 = vmatpush1.bf16.msra.mxu0 %v5337
    %7760 = vmatprep.subr.bf16.mxu0 0
    %7761 = vmatpush1.bf16.msra.mxu0 %v5342
    %7762 = vmatprep.subr.bf16.mxu0 0
    %7763 = vmatpush1.bf16.msra.mxu0 %v5347
    %7764 = vmatprep.mubr.bf16.mxu0 %v1291
    %7765 = vmatmul.mubr.bf16.gmra.mrb[0].mxu0 %v1290
    %v7766 = vpop.f32.mrb[0].mxu0
    %v7767 = vadd.f32 %v7727, %v7766
    %v7768 = vpop.f32.mrb[0].mxu0
    %v7769 = vpop.f32.mrb[0].mxu0
    %v7770 = vpop.f32.mrb[0].mxu0
    %7771 = vdwg.mxu0
    %v7772 = vld [vmem:[#allocation7] sm:$0x1f]
    %v7774 = vlaneseq
    %v7775 = vshrl.u32 %v7774, 7
    %v7776 = vsub.s32 0, %v7775
    %v7777 = vrot.slane %v7772, %v7776
    %v7778 = vlaneseq
    %v7779 = vshrl.u32 %v7778, 7
    %v7780 = vsub.s32 1, %v7779
    %v7781 = vrot.slane %v7772, %v7780
    %v7782 = vlaneseq
    %v7783 = vshrl.u32 %v7782, 7
    %v7784 = vsub.s32 2, %v7783
    %v7785 = vrot.slane %v7772, %v7784
    %v7786 = vlaneseq
    %v7787 = vshrl.u32 %v7786, 7
    %v7788 = vsub.s32 3, %v7787
    %v7789 = vrot.slane %v7772, %v7788
    %v7790 = vlaneseq
    %v7791 = vshrl.u32 %v7790, 7
    %v7792 = vsub.s32 4, %v7791
    %v7793 = vrot.slane %v7772, %v7792
    %v7799 = vmul.f32 %v6794, %v7777
    %v7800 = vmul.f32 %v6796, %v7781
    %v7801 = vmul.f32 %v7286, %v7785
    %v7802 = vmul.f32 %v7288, %v7789
    %v7803 = vmul.f32 %v7767, %v7793
    %v7804 = vld [vmem:[#allocation8] sm:$0x1f]
    %v7806 = vlaneseq
    %v7807 = vshrl.u32 %v7806, 7
    %v7808 = vsub.s32 0, %v7807
    %v7809 = vrot.slane %v7804, %v7808
    %v7810 = vlaneseq
    %v7811 = vshrl.u32 %v7810, 7
    %v7812 = vsub.s32 1, %v7811
    %v7813 = vrot.slane %v7804, %v7812
    %v7814 = vlaneseq
    %v7815 = vshrl.u32 %v7814, 7
    %v7816 = vsub.s32 2, %v7815
    %v7817 = vrot.slane %v7804, %v7816
    %v7818 = vlaneseq
    %v7819 = vshrl.u32 %v7818, 7
    %v7820 = vsub.s32 3, %v7819
    %v7821 = vrot.slane %v7804, %v7820
    %v7822 = vlaneseq
    %v7823 = vshrl.u32 %v7822, 7
    %v7824 = vsub.s32 4, %v7823
    %v7825 = vrot.slane %v7804, %v7824
    %v7831 = vadd.f32 %v7799, %v7809
    %v7832 = vadd.f32 %v7800, %v7813
    %v7833 = vadd.f32 %v7801, %v7817
    %v7834 = vadd.f32 %v7802, %v7821
    %v7835 = vadd.f32 %v7803, %v7825
    %v7836 = vmax.f32 %v7831, 0.0
    %v7837 = vmax.f32 %v7832, 0.0
    %v7838 = vmax.f32 %v7833, 0.0
    %v7839 = vmax.f32 %v7834, 0.0
    %v7840 = vmax.f32 %v7835, 0.0
    %v7841 = vpack.c.bf16 %v7836, %v7836
    %v7842 = vpack.c.bf16 %v7837, %v7837
    %v7843 = vpack.c.bf16 %v7838, %v7838
    %v7844 = vpack.c.bf16 %v7839, %v7839
    %v7845 = vpack.c.bf16 %v7840, %v7840
    %v7851 = vunpack.c.l.b16 %v7841
    %v7852 = vunpack.c.l.b16 %v7842
    %v7853 = vunpack.c.l.b16 %v7843
    %v7854 = vunpack.c.l.b16 %v7844
    %v7855 = vunpack.c.l.b16 %v7845
    %v7856 = vpack.c.b16 %v7852, %v7851
    %v7857 = vpack.c.b16 %v7854, %v7853
    %v7858 = vpack.c.b16 %v7855, %v7855
    %7862 = vst [vmem:[#allocation10] sm:$0xff] %v7856
    %7863 = vst [vmem:[#allocation10 + $0x8] sm:$0xff] %v7857
    %vm7864 = vcmask 519168
    %7865 = vst.msk [vmem:[#allocation10 + $0x10] sm:$0xf] %vm7864, %v7858
    // Predicated region
    $region34: #{context_branch_forward.4} parent=1 // pred_check
      _
    $region35: #{context_branch_forward.4} parent=1 // pred_check_branch
      %7867 = sbr.rel (0) target = $region37
    $region36: #{context_branch_forward.4} parent=1 // pred_region
      %s7869 = ssub.s32 320, 320
      %7870 = vsyncadd [#allocation4], %s7869
      %s7872 = sshll.u32 [#allocation10], 4
      %s7873 = int_to_ptr.vmem [resolvable:$true] %s7872
      %7875 = dma.vmem_to_hbm [thread:$0]  %s7873, 320, %s4, [#allocation4]
    $region37: #{context_branch_forward.4} parent=1 // pred_fallthru
      _
    // Predicated region
    $region38: #{context_branch_forward.4} parent=1 // pred_check
      _
    $region39: #{context_branch_forward.4} parent=1 // pred_check_branch
      %7877 = sbr.rel (0) target = $region41
    $region40: #{context_branch_forward.4} parent=1 // pred_region
      %7878 = dma.done [#allocation4], 320
    $region41: #{context_branch_forward.4} parent=1 // pred_fallthru
      _
    %7879 = vsyncpa [#allocation3], 1
    %7880 = vsyncpa [#allocation6], 1
    %7881 = vsyncpa [#allocation9], 1
    %7882 = vsyncpa [#allocation4], 1

// kernel: context_branch_forward.6
$region0: #{context_branch_forward.6}
  #allocation0 [shape = 'u32[]', space=smem, size = 0x4, offset = 0x4, fixed_abs, tag = 'smem constant byte address 0x4 - core index']
  #allocation1 [shape = 'u32[144,128]{1,0:T(1,128)}', space=vmem, size = 0x12000, scoped, tag = 'internal scratch']
  #allocation2 [shape = 'f32[2,2,384]{2,1,0:T(2,128)}', space=vmem, size = 0x1800, scoped, tag = 'scratch operand']
  %s0 = inlined_call_operand.hbm [shape: bf16[2,2,2,384], index: 0, kind: input, shape index: {}]
  %s1 = inlined_call_operand.hbm [shape: f32[9,384], index: 1, kind: input, shape index: {}]
  %s2 = inlined_call_operand.hbm [shape: f32[1,384], index: 2, kind: input, shape index: {}]
  %s3 = inlined_call_operand.hbm [shape: f32[1,384], index: 3, kind: input, shape index: {}]
  %s4 = inlined_call_operand.hbm [shape: bf16[128,4], index: 4, kind: input, shape index: {}]
  %s5 = inlined_call_operand.hbm [shape: bf16[2,128,128], index: 5, kind: output, shape index: {0}]
  %s6 = inlined_call_operand.hbm [shape: bf16[2,128,576], index: 6, kind: output, shape index: {1}]
  %7 = xla_tuple %s5, %s6
  %s8 = sld [smem:[#allocation0]]
  $region81: #{context_branch_forward.6} parent=0
    _
  %s10 = ssub.s32 1, %s8
  %s11 = scalar_select 0, %s10, %s8
  $region1: #{context_branch_forward.6} parent=0
    #allocation3 [shape = 'u8[6144]{0}', space=vmem, size = 0x1800, scoped, tag = 'input window, operand 0']
    #allocation4 [shape = 's32[2]{0}', space=sflag, size = 0x8, scoped, tag = 'scoped memory for context_branch_forward.6']
    #allocation5 [shape = 's32[2]{0}', space=sflag, size = 0x8, scoped, tag = 'scoped memory for context_branch_forward.6']
    #allocation6 [shape = 'u8[24576]{0}', space=vmem, size = 0x6000, scoped, tag = 'input window, operand 1, single buffered']
    #allocation7 [shape = 's32[1]{0}', space=sflag, size = 0x4, scoped, tag = 'scoped memory for context_branch_forward.6']
    #allocation8 [shape = 'u8[1536]{0}', space=vmem, size = 0x800, scoped, tag = 'input window, operand 2, single buffered']
    #allocation9 [shape = 'u8[1536]{0}', space=vmem, size = 0x800, scoped, tag = 'input window, operand 3, single buffered']
    #allocation10 [shape = 's32[1]{0}', space=sflag, size = 0x4, scoped, tag = 'scoped memory for context_branch_forward.6']
    #allocation11 [shape = 'u8[32768]{0}', space=vmem, size = 0x8000, scoped, tag = 'input window, operand 4, single buffered']
    #allocation12 [shape = 'u8[65536]{0}', space=vmem, size = 0x10000, scoped, tag = 'output window, operand 0']
    #allocation13 [shape = 'u8[327680]{0}', space=vmem, size = 0x50000, scoped, tag = 'output window, operand 1']
    #allocation14 [shape = 's32[2]{0}', space=sflag, size = 0x8, scoped, tag = 'scoped memory for context_branch_forward.6']
    %12 = vsyncpa [#allocation4], 0
    %s13 = scalar_lea.sflag [#allocation4], 1
    %14 = vsyncpa %s13, 0
    %15 = vsyncpa [#allocation7], 0
    %16 = vsyncpa [#allocation10], 0
    %17 = vsyncpa [#allocation5], 0
    %s18 = scalar_lea.sflag [#allocation5], 1
    %19 = vsyncpa %s18, 0
    %20 = vsyncpa [#allocation14], 0
    %s21 = scalar_lea.sflag [#allocation14], 1
    %22 = vsyncpa %s21, 0
    loop: start=0, step=1, limit=4
    $region2: #{context_branch_forward.6} parent=1 // loop_pre_header
      _
    $region3: #{context_branch_forward.6} parent=1 // loop_header
      %s24 = sphi 0, %s28
      %p25 = scmp.ge.s32.totalorder %s24, 4
      %s34 = sphi 0, %s36
      %s37 = sphi 0, %s34
      %s38 = sphi 0, %s37
      %s54 = sphi 0, %s38
      %s58 = sphi 0, %s58
      %s60 = sphi 0, %s58
      %s61 = sphi 0, %s60
      %s75 = sphi 0, %s61
      %s79 = sphi 0, %s79
      %s81 = sphi 0, %s79
      %s82 = sphi 0, %s81
      %s96 = sphi 0, %s82
      %s100 = sphi 0, %s100
      %s102 = sphi 0, %s100
      %s103 = sphi 0, %s102
      %s117 = sphi 0, %s103
      %s121 = sphi 0, %s121
      %s123 = sphi 0, %s121
      %s124 = sphi 0, %s123
      %s138 = sphi 0, %s124
      %s144 = sphi 0, %s146
      %s147 = sphi 0, %s144
      %s148 = sphi 0, %s147
      %s164 = sphi 0, %s148
      %s170 = sphi 0, %s172
      %s173 = sphi 0, %s170
      %s174 = sphi 0, %s173
      %s190 = sphi 0, %s174
    $region4: #{context_branch_forward.6} parent=1 // loop_header_branch
      %27 = sbr.rel (%p25) target = $region8
    $region5: #{context_branch_forward.6} parent=1 // loop_body
      %s29 = ssub.s32 %s24, 1
      %s30 = ssub.s32 %s24, 2
      %s31 = sadd.s32 %s24, 1
      %s32 = ssub.s32 %s24, %s31
      %p33 = scmp.eq.s32.totalorder %s32, 0
      %s35 = sadd.s32 %s34, 1
      %s36 = scalar_select %p33, %s34, %s35
      %p39 = pneg %p33
      %p40 = scmp.eq.s32.totalorder %s24, 1
      %p41 = por %p39, %p40
      %p42 = scmp.ne.s32.totalorder %s34, %s37
      %p43 = scmp.eq.s32.totalorder %s24, 0
      %p44 = por %p42, %p43
      %p45 = scmp.ne.s32.totalorder %s34, %s37
      %p46 = scmp.eq.s32.totalorder %s29, 1
      %p47 = por %p45, %p46
      %p48 = scmp.ne.s32.totalorder %s37, %s38
      %p49 = scmp.eq.s32.totalorder %s29, 0
      %p50 = por %p48, %p49
      %p51 = scmp.ne.s32.totalorder %s37, %s38
      %p52 = scmp.eq.s32.totalorder %s30, 1
      %p53 = por %p51, %p52
      %p55 = scmp.ne.s32.totalorder %s38, %s54
      %p56 = scmp.eq.s32.totalorder %s30, 0
      %p57 = por %p55, %p56
      %s59 = sadd.s32 %s58, 1
      %p62 = scmp.eq.s32.totalorder %s24, 1
      %p63 = scmp.ne.s32.totalorder %s58, %s60
      %p64 = scmp.eq.s32.totalorder %s24, 0
      %p65 = por %p63, %p64
      %p66 = scmp.ne.s32.totalorder %s58, %s60
      %p67 = scmp.eq.s32.totalorder %s29, 1
      %p68 = por %p66, %p67
      %p69 = scmp.ne.s32.totalorder %s60, %s61
      %p70 = scmp.eq.s32.totalorder %s29, 0
      %p71 = por %p69, %p70
      %p72 = scmp.ne.s32.totalorder %s60, %s61
      %p73 = scmp.eq.s32.totalorder %s30, 1
      %p74 = por %p72, %p73
      %p76 = scmp.ne.s32.totalorder %s61, %s75
      %p77 = scmp.eq.s32.totalorder %s30, 0
      %p78 = por %p76, %p77
      %s80 = sadd.s32 %s79, 1
      %p83 = scmp.eq.s32.totalorder %s24, 1
      %p84 = scmp.ne.s32.totalorder %s79, %s81
      %p85 = scmp.eq.s32.totalorder %s24, 0
      %p86 = por %p84, %p85
      %p87 = scmp.ne.s32.totalorder %s79, %s81
      %p88 = scmp.eq.s32.totalorder %s29, 1
      %p89 = por %p87, %p88
      %p90 = scmp.ne.s32.totalorder %s81, %s82
      %p91 = scmp.eq.s32.totalorder %s29, 0
      %p92 = por %p90, %p91
      %p93 = scmp.ne.s32.totalorder %s81, %s82
      %p94 = scmp.eq.s32.totalorder %s30, 1
      %p95 = por %p93, %p94
      %p97 = scmp.ne.s32.totalorder %s82, %s96
      %p98 = scmp.eq.s32.totalorder %s30, 0
      %p99 = por %p97, %p98
      %s101 = sadd.s32 %s100, 1
      %p104 = scmp.eq.s32.totalorder %s24, 1
      %p105 = scmp.ne.s32.totalorder %s100, %s102
      %p106 = scmp.eq.s32.totalorder %s24, 0
      %p107 = por %p105, %p106
      %p108 = scmp.ne.s32.totalorder %s100, %s102
      %p109 = scmp.eq.s32.totalorder %s29, 1
      %p110 = por %p108, %p109
      %p111 = scmp.ne.s32.totalorder %s102, %s103
      %p112 = scmp.eq.s32.totalorder %s29, 0
      %p113 = por %p111, %p112
      %p114 = scmp.ne.s32.totalorder %s102, %s103
      %p115 = scmp.eq.s32.totalorder %s30, 1
      %p116 = por %p114, %p115
      %p118 = scmp.ne.s32.totalorder %s103, %s117
      %p119 = scmp.eq.s32.totalorder %s30, 0
      %p120 = por %p118, %p119
      %s122 = sadd.s32 %s121, 1
      %p125 = scmp.eq.s32.totalorder %s24, 1
      %p126 = scmp.ne.s32.totalorder %s121, %s123
      %p127 = scmp.eq.s32.totalorder %s24, 0
      %p128 = por %p126, %p127
      %p129 = scmp.ne.s32.totalorder %s121, %s123
      %p130 = scmp.eq.s32.totalorder %s29, 1
      %p131 = por %p129, %p130
      %p132 = scmp.ne.s32.totalorder %s123, %s124
      %p133 = scmp.eq.s32.totalorder %s29, 0
      %p134 = por %p132, %p133
      %p135 = scmp.ne.s32.totalorder %s123, %s124
      %p136 = scmp.eq.s32.totalorder %s30, 1
      %p137 = por %p135, %p136
      %p139 = scmp.ne.s32.totalorder %s124, %s138
      %p140 = scmp.eq.s32.totalorder %s30, 0
      %p141 = por %p139, %p140
      %s142 = ssub.s32 %s24, %s31
      %p143 = scmp.eq.s32.totalorder %s142, 0
      %s145 = sadd.s32 %s144, 1
      %s146 = scalar_select %p143, %s144, %s145
      %p149 = pneg %p143
      %p150 = scmp.eq.s32.totalorder %s24, 1
      %p151 = por %p149, %p150
      %p152 = scmp.ne.s32.totalorder %s144, %s147
      %p153 = scmp.eq.s32.totalorder %s24, 0
      %p154 = por %p152, %p153
      %p155 = scmp.ne.s32.totalorder %s144, %s147
      %p156 = scmp.eq.s32.totalorder %s29, 1
      %p157 = por %p155, %p156
      %p158 = scmp.ne.s32.totalorder %s147, %s148
      %p159 = scmp.eq.s32.totalorder %s29, 0
      %p160 = por %p158, %p159
      %p161 = scmp.ne.s32.totalorder %s147, %s148
      %p162 = scmp.eq.s32.totalorder %s30, 1
      %p163 = por %p161, %p162
      %p165 = scmp.ne.s32.totalorder %s148, %s164
      %p166 = scmp.eq.s32.totalorder %s30, 0
      %p167 = por %p165, %p166
      %s168 = ssub.s32 %s24, %s31
      %p169 = scmp.eq.s32.totalorder %s168, 0
      %s171 = sadd.s32 %s170, 1
      %s172 = scalar_select %p169, %s170, %s171
      %p175 = pneg %p169
      %p176 = scmp.eq.s32.totalorder %s24, 1
      %p177 = por %p175, %p176
      %p178 = scmp.ne.s32.totalorder %s170, %s173
      %p179 = scmp.eq.s32.totalorder %s24, 0
      %p180 = por %p178, %p179
      %p181 = scmp.ne.s32.totalorder %s170, %s173
      %p182 = scmp.eq.s32.totalorder %s29, 1
      %p183 = por %p181, %p182
      %p184 = scmp.ne.s32.totalorder %s173, %s174
      %p185 = scmp.eq.s32.totalorder %s29, 0
      %p186 = por %p184, %p185
      %p187 = scmp.ne.s32.totalorder %s173, %s174
      %p188 = scmp.eq.s32.totalorder %s30, 1
      %p189 = por %p187, %p188
      %p191 = scmp.ne.s32.totalorder %s174, %s190
      %p192 = scmp.eq.s32.totalorder %s30, 0
      %p193 = por %p191, %p192
      %p194 = scmp.le.s32.totalorder 1, %s24
      %p195 = scmp.lt.s32.totalorder %s24, 3
      %p196 = pnand %p194, %p195
      %p197 = pneg %p196
      // Predicated region
      $region9: #{context_branch_forward.6} parent=5 // pred_check
        _
      $region10: #{context_branch_forward.6} parent=5 // pred_check_branch
        %199 = sbr.rel (%p196) target = $region12
      $region11: #{context_branch_forward.6} parent=5 // pred_region
        %s200 = ssub.s32 %s24, 1
        // Predicated region
        $region13: #{context_branch_forward.6} parent=11 // pred_check
          %p201 = pneg %p71
        $region14: #{context_branch_forward.6} parent=11 // pred_check_branch
          %203 = sbr.rel (%p201) target = $region16
        $region15: #{context_branch_forward.6} parent=11 // pred_region
          %s205 = ssub.s32 768, 768
          %206 = vsyncadd [#allocation7], %s205
          %s207 = sshll.u32 [#allocation6], 4
          %s208 = int_to_ptr.vmem [resolvable:$true] %s207
          %213 = dma.hbm_to_vmem [thread:$0]  %s1, 768, %s208, [#allocation7], 384, 384, 24
        $region16: #{context_branch_forward.6} parent=11 // pred_fallthru
          _
        // Predicated region
        $region17: #{context_branch_forward.6} parent=11 // pred_check
          %p214 = pneg %p92
        $region18: #{context_branch_forward.6} parent=11 // pred_check_branch
          %216 = sbr.rel (%p214) target = $region20
        $region19: #{context_branch_forward.6} parent=11 // pred_region
          %s218 = ssub.s32 48, 48
          %219 = vsyncadd [#allocation7], %s218
          %s221 = sshll.u32 [#allocation8], 4
          %s222 = int_to_ptr.vmem [resolvable:$true] %s221
          %224 = dma.hbm_to_vmem [thread:$0]  %s2, 48, %s222, [#allocation7]
        $region20: #{context_branch_forward.6} parent=11 // pred_fallthru
          _
        // Predicated region
        $region21: #{context_branch_forward.6} parent=11 // pred_check
          %p225 = pneg %p113
        $region22: #{context_branch_forward.6} parent=11 // pred_check_branch
          %227 = sbr.rel (%p225) target = $region24
        $region23: #{context_branch_forward.6} parent=11 // pred_region
          %s229 = ssub.s32 48, 48
          %230 = vsyncadd [#allocation10], %s229
          %s232 = sshll.u32 [#allocation9], 4
          %s233 = int_to_ptr.vmem [resolvable:$true] %s232
          %235 = dma.hbm_to_vmem [thread:$0]  %s3, 48, %s233, [#allocation10]
        $region24: #{context_branch_forward.6} parent=11 // pred_fallthru
          _
        // Predicated region
        $region25: #{context_branch_forward.6} parent=11 // pred_check
          %p236 = pneg %p134
        $region26: #{context_branch_forward.6} parent=11 // pred_check_branch
          %238 = sbr.rel (%p236) target = $region28
        $region27: #{context_branch_forward.6} parent=11 // pred_region
          %s240 = ssub.s32 1024, 1024
          %241 = vsyncadd [#allocation10], %s240
          %s242 = sshll.u32 [#allocation11], 4
          %s243 = int_to_ptr.vmem [resolvable:$true] %s242
          %248 = dma.hbm_to_vmem [thread:$0]  %s4, 1024, %s243, [#allocation10], 64, 64, 4
        $region28: #{context_branch_forward.6} parent=11 // pred_fallthru
          _
      $region12: #{context_branch_forward.6} parent=5 // pred_fallthru
        _
      %p249 = scmp.lt.s32.totalorder %s24, 2
      // Predicated region
      $region29: #{context_branch_forward.6} parent=5 // pred_check
        %p250 = pneg %p249
      $region30: #{context_branch_forward.6} parent=5 // pred_check_branch
        %252 = sbr.rel (%p250) target = $region32
      $region31: #{context_branch_forward.6} parent=5 // pred_region
        // Predicated region
        $region33: #{context_branch_forward.6} parent=31 // pred_check
          %p253 = pneg %p44
        $region34: #{context_branch_forward.6} parent=31 // pred_check_branch
          %255 = sbr.rel (%p253) target = $region36
        $region35: #{context_branch_forward.6} parent=31 // pred_region
          %s256 = sand.u32 %s34, 1
          %s257 = scalar_lea.sflag [#allocation4], %s256
          %s258 = sand.u32 %s34, 1
          %s259 = smul.addr %s258, 6
          %s260 = scalar_lea.vmem [#allocation3], %s259
          %s262 = ssub.s32 96, 96
          %263 = vsyncadd %s257, %s262
          %s264 = smul.addr %s24, 6
          %s265 = smul.addr %s264, 16
          %s266 = scalar_lea.hbm %s0, %s265
          %s267 = sshll.u32 %s260, 4
          %s268 = int_to_ptr.vmem [resolvable:$true] %s267
          %273 = dma.hbm_to_vmem [thread:$0]  %s266, 96, %s268, %s257, 48, 48, 3
        $region36: #{context_branch_forward.6} parent=31 // pred_fallthru
          _
      $region32: #{context_branch_forward.6} parent=5 // pred_fallthru
        _
      %p274 = scmp.le.s32.totalorder 1, %s24
      %p275 = scmp.lt.s32.totalorder %s24, 3
      %p276 = pnand %p274, %p275
      %p277 = pneg %p276
      // Predicated region
      $region37: #{context_branch_forward.6} parent=5 // pred_check
        _
      $region38: #{context_branch_forward.6} parent=5 // pred_check_branch
        %279 = sbr.rel (%p276) target = $region40
      $region39: #{context_branch_forward.6} parent=5 // pred_region
        %s280 = ssub.s32 %s24, 1
        %s281 = sand.u32 %s37, 1
        %s282 = scalar_lea.sflag [#allocation4], %s281
        %s283 = sand.u32 %s37, 1
        %s284 = smul.addr %s283, 6
        %s285 = scalar_lea.vmem [#allocation3], %s284
        // Predicated region
        $region41: #{context_branch_forward.6} parent=39 // pred_check
          %p286 = pneg %p50
        $region42: #{context_branch_forward.6} parent=39 // pred_check_branch
          %288 = sbr.rel (%p286) target = $region44
        $region43: #{context_branch_forward.6} parent=39 // pred_region
          %289 = dma.done %s282, 96
        $region44: #{context_branch_forward.6} parent=39 // pred_fallthru
          _
        // Predicated region
        $region45: #{context_branch_forward.6} parent=39 // pred_check
          %p290 = pneg %p71
        $region46: #{context_branch_forward.6} parent=39 // pred_check_branch
          %292 = sbr.rel (%p290) target = $region48
        $region47: #{context_branch_forward.6} parent=39 // pred_region
          %293 = dma.done [#allocation7], 768
        $region48: #{context_branch_forward.6} parent=39 // pred_fallthru
          _
        // Predicated region
        $region49: #{context_branch_forward.6} parent=39 // pred_check
          %p294 = pneg %p92
        $region50: #{context_branch_forward.6} parent=39 // pred_check_branch
          %296 = sbr.rel (%p294) target = $region52
        $region51: #{context_branch_forward.6} parent=39 // pred_region
          %297 = dma.done [#allocation7], 48
        $region52: #{context_branch_forward.6} parent=39 // pred_fallthru
          _
        // Predicated region
        $region53: #{context_branch_forward.6} parent=39 // pred_check
          %p298 = pneg %p113
        $region54: #{context_branch_forward.6} parent=39 // pred_check_branch
          %300 = sbr.rel (%p298) target = $region56
        $region55: #{context_branch_forward.6} parent=39 // pred_region
          %301 = dma.done [#allocation10], 48
        $region56: #{context_branch_forward.6} parent=39 // pred_fallthru
          _
        // Predicated region
        $region57: #{context_branch_forward.6} parent=39 // pred_check
          %p302 = pneg %p134
        $region58: #{context_branch_forward.6} parent=39 // pred_check_branch
          %304 = sbr.rel (%p302) target = $region60
        $region59: #{context_branch_forward.6} parent=39 // pred_region
          %305 = dma.done [#allocation10], 1024
        $region60: #{context_branch_forward.6} parent=39 // pred_fallthru
          _
        %s306 = sand.u32 %s37, 1
        %s307 = scalar_lea.sflag [#allocation4], %s306
        %s308 = sand.u32 %s37, 1
        %s309 = smul.addr %s308, 6
        %s310 = scalar_lea.vmem [#allocation3], %s309
        %p311 = pneg %p50
        %p312 = pneg %p47
        %p313 = pneg %p71
        %p314 = pneg %p68
        %p315 = pneg %p92
        %p316 = pneg %p89
        %p317 = pneg %p113
        %p318 = pneg %p110
        %p319 = pneg %p134
        %p320 = pneg %p131
        %p321 = pneg %p160
        %p322 = pneg %p157
        %s323 = sand.u32 %s147, 1
        %s324 = scalar_lea.sflag [#allocation5], %s323
        %s325 = sand.u32 %s147, 1
        %s326 = smul.addr %s325, 64
        %s327 = scalar_lea.vmem [#allocation12], %s326
        %p328 = pneg %p186
        %p329 = pneg %p183
        %s330 = sand.u32 %s173, 1
        %s331 = scalar_lea.sflag [#allocation14], %s330
        %s332 = sand.u32 %s173, 1
        %s333 = smul.addr %s332, 320
        %s334 = scalar_lea.vmem [#allocation13], %s333
        %v336 = vld [vmem:[%s285] sm:$0x7]
        %v337 = vld [vmem:[%s285 + $0x3] sm:$0x7]
        %v338 = vld [vmem:[#allocation6] sm:$0xff]
        %v339 = vld [vmem:[#allocation6 + $0x8] sm:$0xff]
        %v340 = vld [vmem:[#allocation6 + $0x10] sm:$0xff]
        %v341 = vld [vmem:[#allocation6 + $0x18] sm:$0x1]
        %v342 = vld [vmem:[#allocation6 + $0x20] sm:$0x1]
        %v343 = vld [vmem:[#allocation6 + $0x28] sm:$0x1]
        %344 = vst [vmem:[#allocation2] sm:$0x3f] 0.0
        %345 = vst [vmem:[#allocation2 + $0x6] sm:$0x3f] 0.0
        %s346 = scalar_lea.vmem [#allocation2], 6
        %s347 = scalar_lea.vmem %s346, 1 [#allocation2]
        %v348 = vld [vmem:[%s347] ss:$2 sm:$0x7]
        %v349 = vunpack.c.l.bf16 %v336
        %v353 = vcombine.low %v338, %v339
        %v355 = vunpack.c.l.s4 1983009808
        %v356 = vunpack.c.0.s8 %v355
        %v357 = vlaneseq
        %v358 = vshrl.u32 %v357, 7
        %v359 = vsub.s32 %v356, %v358
        %v360 = vrot.slane %v353, %v359
        %v362 = vunpack.c.l.s4 1983009808
        %v363 = vunpack.c.0.s8 %v362
        %v364 = vlaneseq
        %v365 = vshrl.u32 %v364, 7
        %v366 = vsub.s32 %v363, %v365
        %v367 = vrot.slane %v340, %v366
        %v368 = vcombine.low %v360, %v367
        %v370 = vmul.f32 %v349, %v368
        %v373 = vunpack.c.l.s4 1966171168
        %v374 = vunpack.c.0.s8 %v373
        %v375 = vlaneseq
        %v376 = vshrl.u32 %v375, 7
        %v377 = vsub.s32 %v374, %v376
        %v378 = vrot.slane %v370, %v377
        %v380 = vadd.f32 %v348, %v378
        %v381 = vlaneseq
        %vm382 = vcmp.ge.s32.totalorder %v381, 0
        %vm383 = vcmp.lt.s32.totalorder %v381, 384
        %vm384 = vmand %vm382, %vm383
        %385 = vst.msk [vmem:[%s347] ss:$2 sm:$0x7] %vm384, %v380
        %v386 = vld [vmem:[%s346] sm:$0x3f]
        %v387 = vlaneseq
        %v388 = vshrl.u32 %v387, 7
        %v389 = vsub.s32 1, %v388
        %v390 = vrot.slane %v338, %v389
        %v391 = vlaneseq
        %v392 = vshrl.u32 %v391, 7
        %v393 = vsub.s32 1, %v392
        %v394 = vrot.slane %v339, %v393
        %v395 = vlaneseq
        %v396 = vshrl.u32 %v395, 7
        %v397 = vsub.s32 1, %v396
        %v398 = vrot.slane %v340, %v397
        %v402 = vcombine.low %v390, %v394
        %v404 = vunpack.c.l.s4 1983009808
        %v405 = vunpack.c.0.s8 %v404
        %v406 = vlaneseq
        %v407 = vshrl.u32 %v406, 7
        %v408 = vsub.s32 %v405, %v407
        %v409 = vrot.slane %v402, %v408
        %v411 = vunpack.c.l.s4 1983009808
        %v412 = vunpack.c.0.s8 %v411
        %v413 = vlaneseq
        %v414 = vshrl.u32 %v413, 7
        %v415 = vsub.s32 %v412, %v414
        %v416 = vrot.slane %v398, %v415
        %v417 = vcombine.low %v409, %v416
        %v419 = vmul.f32 %v349, %v417
        %v420 = vadd.f32 %v386, %v419
        %421 = vst [vmem:[%s346] sm:$0x3f] %v420
        %v422 = vld [vmem:[%s346] ss:$2 sm:$0x7]
        %v423 = vcombine.high %v360, %v367
        %v424 = vrot.slane %v423, 7
        %v426 = vmul.f32 %v349, %v424
        %v429 = vunpack.c.l.s4 1966171168
        %v430 = vunpack.c.0.s8 %v429
        %v431 = vlaneseq
        %v432 = vshrl.u32 %v431, 7
        %v433 = vsub.s32 %v430, %v432
        %v434 = vrot.slane %v426, %v433
        %v435 = vcombine.high %v434, %v434
        %v437 = vadd.f32 %v422, %v435
        %438 = vst.msk [vmem:[%s346] ss:$2 sm:$0x7] %vm384, %v437
        %s439 = scalar_lea.vmem [#allocation2], 1
        %v440 = vld [vmem:[%s439] ss:$2 sm:$0x7]
        %s441 = scalar_lea.vmem [#allocation2], 7
        %v442 = vld [vmem:[%s441] ss:$2 sm:$0x7]
        %v443 = vunpack.c.l.bf16 %v337
        %v444 = vrot.slane %v424, 2
        %v446 = vmul.f32 %v349, %v444
        %v447 = vmul.f32 %v443, %v444
        %v451 = vunpack.c.l.s4 1966171168
        %v452 = vunpack.c.0.s8 %v451
        %v453 = vlaneseq
        %v454 = vshrl.u32 %v453, 7
        %v455 = vsub.s32 %v452, %v454
        %v456 = vrot.slane %v446, %v455
        %v458 = vunpack.c.l.s4 1966171168
        %v459 = vunpack.c.0.s8 %v458
        %v460 = vlaneseq
        %v461 = vshrl.u32 %v460, 7
        %v462 = vsub.s32 %v459, %v461
        %v463 = vrot.slane %v447, %v462
        %v466 = vadd.f32 %v440, %v456
        %v467 = vadd.f32 %v442, %v463
        %468 = vst.msk [vmem:[%s439] ss:$2 sm:$0x7] %vm384, %v466
        %469 = vst.msk [vmem:[%s441] ss:$2 sm:$0x7] %vm384, %v467
        %v470 = vld [vmem:[#allocation2] sm:$0x3f]
        %v471 = vld [vmem:[#allocation2 + $0x6] sm:$0x3f]
        %v472 = vlaneseq
        %v473 = vshrl.u32 %v472, 7
        %v474 = vsub.s32 4, %v473
        %v475 = vrot.slane %v338, %v474
        %v476 = vlaneseq
        %v477 = vshrl.u32 %v476, 7
        %v478 = vsub.s32 4, %v477
        %v479 = vrot.slane %v339, %v478
        %v480 = vlaneseq
        %v481 = vshrl.u32 %v480, 7
        %v482 = vsub.s32 4, %v481
        %v483 = vrot.slane %v340, %v482
        %v487 = vcombine.low %v475, %v479
        %v489 = vunpack.c.l.s4 1983009808
        %v490 = vunpack.c.0.s8 %v489
        %v491 = vlaneseq
        %v492 = vshrl.u32 %v491, 7
        %v493 = vsub.s32 %v490, %v492
        %v494 = vrot.slane %v487, %v493
        %v496 = vunpack.c.l.s4 1983009808
        %v497 = vunpack.c.0.s8 %v496
        %v498 = vlaneseq
        %v499 = vshrl.u32 %v498, 7
        %v500 = vsub.s32 %v497, %v499
        %v501 = vrot.slane %v483, %v500
        %v502 = vcombine.low %v494, %v501
        %v504 = vmul.f32 %v349, %v502
        %v505 = vmul.f32 %v443, %v502
        %v506 = vadd.f32 %v470, %v504
        %v507 = vadd.f32 %v471, %v505
        %508 = vst [vmem:[#allocation2] sm:$0x3f] %v506
        %509 = vst [vmem:[#allocation2 + $0x6] sm:$0x3f] %v507
        %v510 = vld [vmem:[#allocation2] ss:$2 sm:$0x7]
        %s511 = scalar_lea.vmem [#allocation2], 6
        %v512 = vld [vmem:[%s511] ss:$2 sm:$0x7]
        %v513 = vcombine.high %v338, %v339
        %v514 = vcombine.high %v340, %v340
        %v516 = vunpack.c.l.s4 1983009808
        %v517 = vunpack.c.0.s8 %v516
        %v518 = vlaneseq
        %v519 = vshrl.u32 %v518, 7
        %v520 = vsub.s32 %v517, %v519
        %v521 = vrot.slane %v513, %v520
        %v523 = vunpack.c.l.s4 1983009808
        %v524 = vunpack.c.0.s8 %v523
        %v525 = vlaneseq
        %v526 = vshrl.u32 %v525, 7
        %v527 = vsub.s32 %v524, %v526
        %v528 = vrot.slane %v514, %v527
        %v529 = vcombine.low %v521, %v528
        %v531 = vmul.f32 %v349, %v529
        %v532 = vmul.f32 %v443, %v529
        %v536 = vunpack.c.l.s4 1966171168
        %v537 = vunpack.c.0.s8 %v536
        %v538 = vlaneseq
        %v539 = vshrl.u32 %v538, 7
        %v540 = vsub.s32 %v537, %v539
        %v541 = vrot.slane %v531, %v540
        %v542 = vcombine.high %v541, %v541
        %v544 = vunpack.c.l.s4 1966171168
        %v545 = vunpack.c.0.s8 %v544
        %v546 = vlaneseq
        %v547 = vshrl.u32 %v546, 7
        %v548 = vsub.s32 %v545, %v547
        %v549 = vrot.slane %v532, %v548
        %v550 = vcombine.high %v549, %v549
        %v553 = vadd.f32 %v510, %v542
        %v554 = vadd.f32 %v512, %v550
        %555 = vst.msk [vmem:[#allocation2] ss:$2 sm:$0x7] %vm384, %v553
        %556 = vst.msk [vmem:[%s511] ss:$2 sm:$0x7] %vm384, %v554
        %s557 = scalar_lea.vmem [#allocation2], 1
        %v558 = vld [vmem:[%s557] ss:$2 sm:$0x7]
        %v559 = vcombine.high %v521, %v528
        %v561 = vmul.f32 %v443, %v559
        %v564 = vunpack.c.l.s4 1966171168
        %v565 = vunpack.c.0.s8 %v564
        %v566 = vlaneseq
        %v567 = vshrl.u32 %v566, 7
        %v568 = vsub.s32 %v565, %v567
        %v569 = vrot.slane %v561, %v568
        %v571 = vadd.f32 %v558, %v569
        %572 = vst.msk [vmem:[%s557] ss:$2 sm:$0x7] %vm384, %v571
        %v573 = vld [vmem:[#allocation2] sm:$0x3f]
        %v574 = vlaneseq
        %v575 = vshrl.u32 %v574, 7
        %v576 = vsub.s32 7, %v575
        %v577 = vrot.slane %v338, %v576
        %v578 = vlaneseq
        %v579 = vshrl.u32 %v578, 7
        %v580 = vsub.s32 7, %v579
        %v581 = vrot.slane %v339, %v580
        %v582 = vlaneseq
        %v583 = vshrl.u32 %v582, 7
        %v584 = vsub.s32 7, %v583
        %v585 = vrot.slane %v340, %v584
        %v589 = vcombine.low %v577, %v581
        %v591 = vunpack.c.l.s4 1983009808
        %v592 = vunpack.c.0.s8 %v591
        %v593 = vlaneseq
        %v594 = vshrl.u32 %v593, 7
        %v595 = vsub.s32 %v592, %v594
        %v596 = vrot.slane %v589, %v595
        %v598 = vunpack.c.l.s4 1983009808
        %v599 = vunpack.c.0.s8 %v598
        %v600 = vlaneseq
        %v601 = vshrl.u32 %v600, 7
        %v602 = vsub.s32 %v599, %v601
        %v603 = vrot.slane %v585, %v602
        %v604 = vcombine.low %v596, %v603
        %v606 = vmul.f32 %v443, %v604
        %v607 = vadd.f32 %v573, %v606
        %608 = vst [vmem:[#allocation2] sm:$0x3f] %v607
        %v609 = vld [vmem:[#allocation2] ss:$2 sm:$0x7]
        %v613 = vcombine.low %v341, %v342
        %v615 = vunpack.c.l.s4 1983009808
        %v616 = vunpack.c.0.s8 %v615
        %v617 = vlaneseq
        %v618 = vshrl.u32 %v617, 7
        %v619 = vsub.s32 %v616, %v618
        %v620 = vrot.slane %v613, %v619
        %v622 = vunpack.c.l.s4 1983009808
        %v623 = vunpack.c.0.s8 %v622
        %v624 = vlaneseq
        %v625 = vshrl.u32 %v624, 7
        %v626 = vsub.s32 %v623, %v625
        %v627 = vrot.slane %v343, %v626
        %v628 = vcombine.low %v620, %v627
        %v629 = vrot.slane %v628, 7
        %v631 = vmul.f32 %v443, %v629
        %v634 = vunpack.c.l.s4 1966171168
        %v635 = vunpack.c.0.s8 %v634
        %v636 = vlaneseq
        %v637 = vshrl.u32 %v636, 7
        %v638 = vsub.s32 %v635, %v637
        %v639 = vrot.slane %v631, %v638
        %v640 = vcombine.high %v639, %v639
        %v642 = vadd.f32 %v609, %v640
        %643 = vst.msk [vmem:[#allocation2] ss:$2 sm:$0x7] %vm384, %v642
        %v644 = vld [vmem:[#allocation2] sm:$0x3f]
        %v645 = vld [vmem:[#allocation2 + $0x6] sm:$0x3f]
        %v646 = vld [vmem:[#allocation8] sm:$0x7]
        %v648 = vlaneseq
        %v649 = vshrl.u32 %v648, 7
        %v650 = vsub.s32 0, %v649
        %v651 = vrot.slane %v646, %v650
        %v652 = vlaneseq
        %v653 = vshrl.u32 %v652, 7
        %v654 = vsub.s32 1, %v653
        %v655 = vrot.slane %v646, %v654
        %v656 = vlaneseq
        %v657 = vshrl.u32 %v656, 7
        %v658 = vsub.s32 2, %v657
        %v659 = vrot.slane %v646, %v658
        %v660 = vcombine.low %v651, %v655
        %v662 = vunpack.c.l.s4 1983009808
        %v663 = vunpack.c.0.s8 %v662
        %v664 = vlaneseq
        %v665 = vshrl.u32 %v664, 7
        %v666 = vsub.s32 %v663, %v665
        %v667 = vrot.slane %v660, %v666
        %v669 = vunpack.c.l.s4 1983009808
        %v670 = vunpack.c.0.s8 %v669
        %v671 = vlaneseq
        %v672 = vshrl.u32 %v671, 7
        %v673 = vsub.s32 %v670, %v672
        %v674 = vrot.slane %v659, %v673
        %v675 = vcombine.low %v667, %v674
        %v677 = vmul.f32 %v644, %v675
        %v678 = vmul.f32 %v645, %v675
        %v679 = vld [vmem:[#allocation9] sm:$0x7]
        %v681 = vlaneseq
        %v682 = vshrl.u32 %v681, 7
        %v683 = vsub.s32 0, %v682
        %v684 = vrot.slane %v679, %v683
        %v685 = vlaneseq
        %v686 = vshrl.u32 %v685, 7
        %v687 = vsub.s32 1, %v686
        %v688 = vrot.slane %v679, %v687
        %v689 = vlaneseq
        %v690 = vshrl.u32 %v689, 7
        %v691 = vsub.s32 2, %v690
        %v692 = vrot.slane %v679, %v691
        %v693 = vcombine.low %v684, %v688
        %v695 = vunpack.c.l.s4 1983009808
        %v696 = vunpack.c.0.s8 %v695
        %v697 = vlaneseq
        %v698 = vshrl.u32 %v697, 7
        %v699 = vsub.s32 %v696, %v698
        %v700 = vrot.slane %v693, %v699
        %v702 = vunpack.c.l.s4 1983009808
        %v703 = vunpack.c.0.s8 %v702
        %v704 = vlaneseq
        %v705 = vshrl.u32 %v704, 7
        %v706 = vsub.s32 %v703, %v705
        %v707 = vrot.slane %v692, %v706
        %v708 = vcombine.low %v700, %v707
        %v710 = vadd.f32 %v677, %v708
        %v711 = vadd.f32 %v678, %v708
        %v712 = vmax.f32 %v710, 0.0
        %v713 = vmax.f32 %v711, 0.0
        %v716 = vcombine.high %v712, %v712
        %v718 = vunpack.c.l.s4 1983009808
        %v719 = vunpack.c.0.s8 %v718
        %v720 = vlaneseq
        %v721 = vshrl.u32 %v720, 7
        %v722 = vsub.s32 %v719, %v721
        %v723 = vrot.slane %v712, %v722
        %v725 = vunpack.c.l.s4 1983009808
        %v726 = vunpack.c.0.s8 %v725
        %v727 = vlaneseq
        %v728 = vshrl.u32 %v727, 7
        %v729 = vsub.s32 %v726, %v728
        %v730 = vrot.slane %v716, %v729
        %v731 = vcombine.high %v723, %v723
        %v732 = vcombine.high %v713, %v713
        %v734 = vunpack.c.l.s4 1983009808
        %v735 = vunpack.c.0.s8 %v734
        %v736 = vlaneseq
        %v737 = vshrl.u32 %v736, 7
        %v738 = vsub.s32 %v735, %v737
        %v739 = vrot.slane %v713, %v738
        %v741 = vunpack.c.l.s4 1983009808
        %v742 = vunpack.c.0.s8 %v741
        %v743 = vlaneseq
        %v744 = vshrl.u32 %v743, 7
        %v745 = vsub.s32 %v742, %v744
        %v746 = vrot.slane %v732, %v745
        %v747 = vcombine.high %v739, %v739
        %v754 = vpack.c.bf16 %v723, %v723
        %v755 = vpack.c.bf16 %v731, %v731
        %v756 = vpack.c.bf16 %v730, %v730
        %v757 = vpack.c.bf16 %v739, %v739
        %v758 = vpack.c.bf16 %v747, %v747
        %v759 = vpack.c.bf16 %v746, %v746
        %v760 = vld [vmem:[#allocation11] sm:$0xf]
        %v761 = vld [vmem:[#allocation11 + $0x4] sm:$0xf]
        %v762 = vld [vmem:[#allocation11 + $0x8] sm:$0xf]
        %v763 = vld [vmem:[#allocation11 + $0xc] sm:$0xf]
        %v764 = vld [vmem:[#allocation11 + $0x10] sm:$0xf]
        %v765 = vld [vmem:[#allocation11 + $0x14] sm:$0xf]
        %v766 = vld [vmem:[#allocation11 + $0x18] sm:$0xf]
        %v767 = vld [vmem:[#allocation11 + $0x1c] sm:$0xf]
        %v768 = vld [vmem:[#allocation11 + $0x20] sm:$0xf]
        %v769 = vld [vmem:[#allocation11 + $0x24] sm:$0xf]
        %v770 = vld [vmem:[#allocation11 + $0x28] sm:$0xf]
        %v771 = vld [vmem:[#allocation11 + $0x2c] sm:$0xf]
        %v772 = vld [vmem:[#allocation11 + $0x30] sm:$0xf]
        %v773 = vld [vmem:[#allocation11 + $0x34] sm:$0xf]
        %v774 = vld [vmem:[#allocation11 + $0x38] sm:$0xf]
        %v775 = vld [vmem:[#allocation11 + $0x3c] sm:$0xf]
        %v792 = vunpack.c.l.b16 %v760
        %v793 = vunpack.c.l.b16 %v761
        %v794 = vunpack.c.l.b16 %v762
        %v795 = vunpack.c.l.b16 %v763
        %v796 = vunpack.c.l.b16 %v764
        %v797 = vunpack.c.l.b16 %v765
        %v798 = vunpack.c.l.b16 %v766
        %v799 = vunpack.c.l.b16 %v767
        %v800 = vunpack.c.l.b16 %v768
        %v801 = vunpack.c.l.b16 %v769
        %v802 = vunpack.c.l.b16 %v770
        %v803 = vunpack.c.l.b16 %v771
        %v804 = vunpack.c.l.b16 %v772
        %v805 = vunpack.c.l.b16 %v773
        %v806 = vunpack.c.l.b16 %v774
        %v807 = vunpack.c.l.b16 %v775
        %v808 = vpack.c.b16 %v793, %v792
        %v809 = vpack.c.b16 %v795, %v794
        %v810 = vpack.c.b16 %v797, %v796
        %v811 = vpack.c.b16 %v799, %v798
        %v812 = vpack.c.b16 %v801, %v800
        %v813 = vpack.c.b16 %v803, %v802
        %v814 = vpack.c.b16 %v805, %v804
        %v815 = vpack.c.b16 %v807, %v806
        %v818 = vcombine.low %v336, %v337
        %v820 = vunpack.c.l.s4 1966171168
        %v821 = vunpack.c.0.s8 %v820
        %v822 = vlaneseq
        %v823 = vshrl.u32 %v822, 7
        %v824 = vsub.s32 %v821, %v823
        %v825 = vrot.slane %v818, %v824
        %v826 = vcombine.high %v825, %v825
        %v828 = vunpack.c.l.s4 1966171168
        %v829 = vunpack.c.0.s8 %v828
        %v830 = vlaneseq
        %v831 = vshrl.u32 %v830, 7
        %v832 = vsub.s32 %v829, %v831
        %v833 = vrot.slane %v825, %v832
        %v835 = vunpack.c.l.s4 1966171168
        %v836 = vunpack.c.0.s8 %v835
        %v837 = vlaneseq
        %v838 = vshrl.u32 %v837, 7
        %v839 = vsub.s32 %v836, %v838
        %v840 = vrot.slane %v826, %v839
        %v841 = vcombine.high %v833, %v833
        %vm842 = vcmask 31744
        %v844 = vsel %vm842, %v808, 0
        %v847 = vsel %vm842, %v809, 0
        %v850 = vsel %vm842, %v810, 0
        %v853 = vsel %vm842, %v811, 0
        %v856 = vsel %vm842, %v812, 0
        %v859 = vsel %vm842, %v813, 0
        %v862 = vsel %vm842, %v814, 0
        %v865 = vsel %vm842, %v815, 0
        %vm867 = vcmask 1041408
        %v869 = vsel %vm867, %v833, 0
        %v872 = vsel %vm867, %v840, 0
        %v875 = vsel %vm867, %v841, 0
        %877 = vmatprep.subr.bf16.mxu0 %v872
        %878 = vmatpush1.bf16.msra.mxu0 %v869
        %879 = vmatprep.subr.bf16.mxu0 0
        %880 = vmatpush1.bf16.msra.mxu0 0
        %881 = vmatprep.subr.bf16.mxu0 0
        %882 = vmatpush1.bf16.msra.mxu0 0
        %883 = vmatprep.subr.bf16.mxu0 0
        %884 = vmatpush1.bf16.msra.mxu0 0
        %885 = vmatprep.subr.bf16.mxu0 0
        %886 = vmatpush1.bf16.msra.mxu0 0
        %887 = vmatprep.subr.bf16.mxu0 0
        %888 = vmatpush1.bf16.msra.mxu0 0
        %889 = vmatprep.subr.bf16.mxu0 0
        %890 = vmatpush1.bf16.msra.mxu0 0
        %891 = vmatprep.subr.bf16.mxu0 0
        %892 = vmatpush1.bf16.msra.mxu0 0
        %893 = vmatprep.subr.bf16.mxu0 0
        %894 = vmatpush1.bf16.msra.mxu0 0
        %895 = vmatprep.subr.bf16.mxu0 0
        %896 = vmatpush1.bf16.msra.mxu0 0
        %897 = vmatprep.subr.bf16.mxu0 0
        %898 = vmatpush1.bf16.msra.mxu0 0
        %899 = vmatprep.subr.bf16.mxu0 0
        %900 = vmatpush1.bf16.msra.mxu0 0
        %901 = vmatprep.subr.bf16.mxu0 0
        %902 = vmatpush1.bf16.msra.mxu0 0
        %903 = vmatprep.subr.bf16.mxu0 0
        %904 = vmatpush1.bf16.msra.mxu0 0
        %905 = vmatprep.subr.bf16.mxu0 0
        %906 = vmatpush1.bf16.msra.mxu0 0
        %907 = vmatprep.subr.bf16.mxu0 0
        %908 = vmatpush1.bf16.msra.mxu0 0
        %909 = vmatprep.mubr.bf16.mxu0 0
        %910 = vmatmul.mubr.bf16.gmra.mrb[0].mxu0 %v844
        %v911 = vpop.f32.mrb[0].mxu0
        %v912 = vadd.f32 0.0, %v911
        %v913 = vpop.f32.mrb[0].mxu0
        %v914 = vadd.f32 0.0, %v913
        %v915 = vpop.f32.mrb[0].mxu0
        %v916 = vadd.f32 0.0, %v915
        %v917 = vpop.f32.mrb[0].mxu0
        %v918 = vadd.f32 0.0, %v917
        %919 = vmatprep.mubr.bf16.mxu0 0
        %920 = vmatmul.mubr.bf16.gmra.mrb[0].mxu0 %v847
        %v921 = vpop.f32.mrb[0].mxu0
        %v922 = vadd.f32 0.0, %v921
        %v923 = vpop.f32.mrb[0].mxu0
        %v924 = vadd.f32 0.0, %v923
        %v925 = vpop.f32.mrb[0].mxu0
        %v926 = vadd.f32 0.0, %v925
        %v927 = vpop.f32.mrb[0].mxu0
        %v928 = vadd.f32 0.0, %v927
        %929 = vmatprep.mubr.bf16.mxu0 0
        %930 = vmatmul.mubr.bf16.gmra.mrb[0].mxu0 %v850
        %v931 = vpop.f32.mrb[0].mxu0
        %v932 = vadd.f32 0.0, %v931
        %v933 = vpop.f32.mrb[0].mxu0
        %v934 = vadd.f32 0.0, %v933
        %v935 = vpop.f32.mrb[0].mxu0
        %v936 = vadd.f32 0.0, %v935
        %v937 = vpop.f32.mrb[0].mxu0
        %v938 = vadd.f32 0.0, %v937
        %939 = vmatprep.mubr.bf16.mxu0 0
        %940 = vmatmul.mubr.bf16.gmra.mrb[0].mxu0 %v853
        %v941 = vpop.f32.mrb[0].mxu0
        %v942 = vadd.f32 0.0, %v941
        %v943 = vpop.f32.mrb[0].mxu0
        %v944 = vadd.f32 0.0, %v943
        %v945 = vpop.f32.mrb[0].mxu0
        %v946 = vadd.f32 0.0, %v945
        %v947 = vpop.f32.mrb[0].mxu0
        %v948 = vadd.f32 0.0, %v947
        %949 = vmatprep.mubr.bf16.mxu0 0
        %950 = vmatmul.mubr.bf16.gmra.mrb[0].mxu0 %v856
        %v951 = vpop.f32.mrb[0].mxu0
        %v952 = vadd.f32 0.0, %v951
        %v953 = vpop.f32.mrb[0].mxu0
        %v954 = vadd.f32 0.0, %v953
        %v955 = vpop.f32.mrb[0].mxu0
        %v956 = vadd.f32 0.0, %v955
        %v957 = vpop.f32.mrb[0].mxu0
        %v958 = vadd.f32 0.0, %v957
        %959 = vmatprep.mubr.bf16.mxu0 0
        %960 = vmatmul.mubr.bf16.gmra.mrb[0].mxu0 %v859
        %v961 = vpop.f32.mrb[0].mxu0
        %v962 = vadd.f32 0.0, %v961
        %v963 = vpop.f32.mrb[0].mxu0
        %v964 = vadd.f32 0.0, %v963
        %v965 = vpop.f32.mrb[0].mxu0
        %v966 = vadd.f32 0.0, %v965
        %v967 = vpop.f32.mrb[0].mxu0
        %v968 = vadd.f32 0.0, %v967
        %969 = vmatprep.mubr.bf16.mxu0 0
        %970 = vmatmul.mubr.bf16.gmra.mrb[0].mxu0 %v862
        %v971 = vpop.f32.mrb[0].mxu0
        %v972 = vadd.f32 0.0, %v971
        %v973 = vpop.f32.mrb[0].mxu0
        %v974 = vadd.f32 0.0, %v973
        %v975 = vpop.f32.mrb[0].mxu0
        %v976 = vadd.f32 0.0, %v975
        %v977 = vpop.f32.mrb[0].mxu0
        %v978 = vadd.f32 0.0, %v977
        %979 = vmatprep.mubr.bf16.mxu0 0
        %980 = vmatmul.mubr.bf16.gmra.mrb[0].mxu0 %v865
        %v981 = vpop.f32.mrb[0].mxu0
        %v982 = vadd.f32 0.0, %v981
        %v983 = vpop.f32.mrb[0].mxu0
        %v984 = vadd.f32 0.0, %v983
        %v985 = vpop.f32.mrb[0].mxu0
        %v986 = vadd.f32 0.0, %v985
        %v987 = vpop.f32.mrb[0].mxu0
        %v988 = vadd.f32 0.0, %v987
        %989 = vdwg.mxu0
        %990 = vmatprep.subr.bf16.mxu0 0
        %991 = vmatpush1.bf16.msra.mxu0 %v875
        %992 = vmatprep.subr.bf16.mxu0 0
        %993 = vmatpush1.bf16.msra.mxu0 0
        %994 = vmatprep.subr.bf16.mxu0 0
        %995 = vmatpush1.bf16.msra.mxu0 0
        %996 = vmatprep.subr.bf16.mxu0 0
        %997 = vmatpush1.bf16.msra.mxu0 0
        %998 = vmatprep.subr.bf16.mxu0 0
        %999 = vmatpush1.bf16.msra.mxu0 0
        %1000 = vmatprep.subr.bf16.mxu0 0
        %1001 = vmatpush1.bf16.msra.mxu0 0
        %1002 = vmatprep.subr.bf16.mxu0 0
        %1003 = vmatpush1.bf16.msra.mxu0 0
        %1004 = vmatprep.subr.bf16.mxu0 0
        %1005 = vmatpush1.bf16.msra.mxu0 0
        %1006 = vmatprep.subr.bf16.mxu0 0
        %1007 = vmatpush1.bf16.msra.mxu0 0
        %1008 = vmatprep.subr.bf16.mxu0 0
        %1009 = vmatpush1.bf16.msra.mxu0 0
        %1010 = vmatprep.subr.bf16.mxu0 0
        %1011 = vmatpush1.bf16.msra.mxu0 0
        %1012 = vmatprep.subr.bf16.mxu0 0
        %1013 = vmatpush1.bf16.msra.mxu0 0
        %1014 = vmatprep.subr.bf16.mxu0 0
        %1015 = vmatpush1.bf16.msra.mxu0 0
        %1016 = vmatprep.subr.bf16.mxu0 0
        %1017 = vmatpush1.bf16.msra.mxu0 0
        %1018 = vmatprep.subr.bf16.mxu0 0
        %1019 = vmatpush1.bf16.msra.mxu0 0
        %1020 = vmatprep.subr.bf16.mxu0 0
        %1021 = vmatpush1.bf16.msra.mxu0 0
        %1022 = vmatprep.mubr.bf16.mxu0 0
        %1023 = vmatmul.mubr.bf16.gmra.mrb[0].mxu0 %v844
        %v1024 = vpop.f32.mrb[0].mxu0
        %v1025 = vadd.f32 0.0, %v1024
        %v1026 = vpop.f32.mrb[0].mxu0
        %v1027 = vpop.f32.mrb[0].mxu0
        %v1028 = vadd.f32 0.0, %v1027
        %v1029 = vpop.f32.mrb[0].mxu0
        %1030 = vmatprep.mubr.bf16.mxu0 0
        %1031 = vmatmul.mubr.bf16.gmra.mrb[0].mxu0 %v847
        %v1032 = vpop.f32.mrb[0].mxu0
        %v1033 = vadd.f32 0.0, %v1032
        %v1034 = vpop.f32.mrb[0].mxu0
        %v1035 = vpop.f32.mrb[0].mxu0
        %v1036 = vadd.f32 0.0, %v1035
        %v1037 = vpop.f32.mrb[0].mxu0
        %1038 = vmatprep.mubr.bf16.mxu0 0
        %1039 = vmatmul.mubr.bf16.gmra.mrb[0].mxu0 %v850
        %v1040 = vpop.f32.mrb[0].mxu0
        %v1041 = vadd.f32 0.0, %v1040
        %v1042 = vpop.f32.mrb[0].mxu0
        %v1043 = vpop.f32.mrb[0].mxu0
        %v1044 = vadd.f32 0.0, %v1043
        %v1045 = vpop.f32.mrb[0].mxu0
        %1046 = vmatprep.mubr.bf16.mxu0 0
        %1047 = vmatmul.mubr.bf16.gmra.mrb[0].mxu0 %v853
        %v1048 = vpop.f32.mrb[0].mxu0
        %v1049 = vadd.f32 0.0, %v1048
        %v1050 = vpop.f32.mrb[0].mxu0
        %v1051 = vpop.f32.mrb[0].mxu0
        %v1052 = vadd.f32 0.0, %v1051
        %v1053 = vpop.f32.mrb[0].mxu0
        %1054 = vmatprep.mubr.bf16.mxu0 0
        %1055 = vmatmul.mubr.bf16.gmra.mrb[0].mxu0 %v856
        %v1056 = vpop.f32.mrb[0].mxu0
        %v1057 = vadd.f32 0.0, %v1056
        %v1058 = vpop.f32.mrb[0].mxu0
        %v1059 = vpop.f32.mrb[0].mxu0
        %v1060 = vadd.f32 0.0, %v1059
        %v1061 = vpop.f32.mrb[0].mxu0
        %1062 = vmatprep.mubr.bf16.mxu0 0
        %1063 = vmatmul.mubr.bf16.gmra.mrb[0].mxu0 %v859
        %v1064 = vpop.f32.mrb[0].mxu0
        %v1065 = vadd.f32 0.0, %v1064
        %v1066 = vpop.f32.mrb[0].mxu0
        %v1067 = vpop.f32.mrb[0].mxu0
        %v1068 = vadd.f32 0.0, %v1067
        %v1069 = vpop.f32.mrb[0].mxu0
        %1070 = vmatprep.mubr.bf16.mxu0 0
        %1071 = vmatmul.mubr.bf16.gmra.mrb[0].mxu0 %v862
        %v1072 = vpop.f32.mrb[0].mxu0
        %v1073 = vadd.f32 0.0, %v1072
        %v1074 = vpop.f32.mrb[0].mxu0
        %v1075 = vpop.f32.mrb[0].mxu0
        %v1076 = vadd.f32 0.0, %v1075
        %v1077 = vpop.f32.mrb[0].mxu0
        %1078 = vmatprep.mubr.bf16.mxu0 0
        %1079 = vmatmul.mubr.bf16.gmra.mrb[0].mxu0 %v865
        %v1080 = vpop.f32.mrb[0].mxu0
        %v1081 = vadd.f32 0.0, %v1080
        %v1082 = vpop.f32.mrb[0].mxu0
        %v1083 = vpop.f32.mrb[0].mxu0
        %v1084 = vadd.f32 0.0, %v1083
        %v1085 = vpop.f32.mrb[0].mxu0
        %1086 = vdwg.mxu0
        %v1093 = vcombine.low %v754, %v755
        %v1095 = vunpack.c.l.s4 1966171168
        %v1096 = vunpack.c.0.s8 %v1095
        %v1097 = vlaneseq
        %v1098 = vshrl.u32 %v1097, 7
        %v1099 = vsub.s32 %v1096, %v1098
        %v1100 = vrot.slane %v1093, %v1099
        %v1102 = vunpack.c.l.s4 1966171168
        %v1103 = vunpack.c.0.s8 %v1102
        %v1104 = vlaneseq
        %v1105 = vshrl.u32 %v1104, 7
        %v1106 = vsub.s32 %v1103, %v1105
        %v1107 = vrot.slane %v756, %v1106
        %v1108 = vcombine.low %v1100, %v1107
        %v1110 = vunpack.c.l.s4 1966171168
        %v1111 = vunpack.c.0.s8 %v1110
        %v1112 = vlaneseq
        %v1113 = vshrl.u32 %v1112, 7
        %v1114 = vsub.s32 %v1111, %v1113
        %v1115 = vrot.slane %v1108, %v1114
        %v1116 = vcombine.low %v757, %v758
        %v1118 = vunpack.c.l.s4 1966171168
        %v1119 = vunpack.c.0.s8 %v1118
        %v1120 = vlaneseq
        %v1121 = vshrl.u32 %v1120, 7
        %v1122 = vsub.s32 %v1119, %v1121
        %v1123 = vrot.slane %v1116, %v1122
        %v1125 = vunpack.c.l.s4 1966171168
        %v1126 = vunpack.c.0.s8 %v1125
        %v1127 = vlaneseq
        %v1128 = vshrl.u32 %v1127, 7
        %v1129 = vsub.s32 %v1126, %v1128
        %v1130 = vrot.slane %v759, %v1129
        %v1131 = vcombine.low %v1123, %v1130
        %v1133 = vunpack.c.l.s4 1966171168
        %v1134 = vunpack.c.0.s8 %v1133
        %v1135 = vlaneseq
        %v1136 = vshrl.u32 %v1135, 7
        %v1137 = vsub.s32 %v1134, %v1136
        %v1138 = vrot.slane %v1131, %v1137
        %v1139 = vcombine.low %v1115, %v1138
        %v1141 = vunpack.c.l.s4 1966171168
        %v1142 = vunpack.c.0.s8 %v1141
        %v1143 = vlaneseq
        %v1144 = vshrl.u32 %v1143, 7
        %v1145 = vsub.s32 %v1142, %v1144
        %v1146 = vrot.slane %v1139, %v1145
        %v1147 = vcombine.high %v1146, %v1146
        %v1149 = vunpack.c.l.s4 1966171168
        %v1150 = vunpack.c.0.s8 %v1149
        %v1151 = vlaneseq
        %v1152 = vshrl.u32 %v1151, 7
        %v1153 = vsub.s32 %v1150, %v1152
        %v1154 = vrot.slane %v1146, %v1153
        %v1156 = vunpack.c.l.s4 1966171168
        %v1157 = vunpack.c.0.s8 %v1156
        %v1158 = vlaneseq
        %v1159 = vshrl.u32 %v1158, 7
        %v1160 = vsub.s32 %v1157, %v1159
        %v1161 = vrot.slane %v1147, %v1160
        %v1162 = vcombine.high %v1154, %v1154
        %v1164 = vsel %vm867, %v1154, 0
        %v1167 = vsel %vm867, %v1161, 0
        %v1170 = vsel %vm867, %v1162, 0
        %1172 = vmatprep.subr.bf16.mxu0 %v1167
        %1173 = vmatpush1.bf16.msra.mxu0 %v1164
        %1174 = vmatprep.subr.bf16.mxu0 0
        %1175 = vmatpush1.bf16.msra.mxu0 0
        %1176 = vmatprep.subr.bf16.mxu0 0
        %1177 = vmatpush1.bf16.msra.mxu0 0
        %1178 = vmatprep.subr.bf16.mxu0 0
        %1179 = vmatpush1.bf16.msra.mxu0 0
        %1180 = vmatprep.subr.bf16.mxu0 0
        %1181 = vmatpush1.bf16.msra.mxu0 0
        %1182 = vmatprep.subr.bf16.mxu0 0
        %1183 = vmatpush1.bf16.msra.mxu0 0
        %1184 = vmatprep.subr.bf16.mxu0 0
        %1185 = vmatpush1.bf16.msra.mxu0 0
        %1186 = vmatprep.subr.bf16.mxu0 0
        %1187 = vmatpush1.bf16.msra.mxu0 0
        %1188 = vmatprep.subr.bf16.mxu0 0
        %1189 = vmatpush1.bf16.msra.mxu0 0
        %1190 = vmatprep.subr.bf16.mxu0 0
        %1191 = vmatpush1.bf16.msra.mxu0 0
        %1192 = vmatprep.subr.bf16.mxu0 0
        %1193 = vmatpush1.bf16.msra.mxu0 0
        %1194 = vmatprep.subr.bf16.mxu0 0
        %1195 = vmatpush1.bf16.msra.mxu0 0
        %1196 = vmatprep.subr.bf16.mxu0 0
        %1197 = vmatpush1.bf16.msra.mxu0 0
        %1198 = vmatprep.subr.bf16.mxu0 0
        %1199 = vmatpush1.bf16.msra.mxu0 0
        %1200 = vmatprep.subr.bf16.mxu0 0
        %1201 = vmatpush1.bf16.msra.mxu0 0
        %1202 = vmatprep.subr.bf16.mxu0 0
        %1203 = vmatpush1.bf16.msra.mxu0 0
        %1204 = vmatprep.mubr.bf16.mxu0 0
        %1205 = vmatmul.mubr.bf16.gmra.mrb[0].mxu0 %v844
        %v1206 = vpop.f32.mrb[0].mxu0
        %v1207 = vadd.f32 0.0, %v1206
        %v1208 = vpop.f32.mrb[0].mxu0
        %v1209 = vadd.f32 0.0, %v1208
        %v1210 = vpop.f32.mrb[0].mxu0
        %v1211 = vadd.f32 0.0, %v1210
        %v1212 = vpop.f32.mrb[0].mxu0
        %v1213 = vadd.f32 0.0, %v1212
        %1214 = vmatprep.mubr.bf16.mxu0 0
        %1215 = vmatmul.mubr.bf16.gmra.mrb[0].mxu0 %v847
        %v1216 = vpop.f32.mrb[0].mxu0
        %v1217 = vadd.f32 0.0, %v1216
        %v1218 = vpop.f32.mrb[0].mxu0
        %v1219 = vadd.f32 0.0, %v1218
        %v1220 = vpop.f32.mrb[0].mxu0
        %v1221 = vadd.f32 0.0, %v1220
        %v1222 = vpop.f32.mrb[0].mxu0
        %v1223 = vadd.f32 0.0, %v1222
        %1224 = vmatprep.mubr.bf16.mxu0 0
        %1225 = vmatmul.mubr.bf16.gmra.mrb[0].mxu0 %v850
        %v1226 = vpop.f32.mrb[0].mxu0
        %v1227 = vadd.f32 0.0, %v1226
        %v1228 = vpop.f32.mrb[0].mxu0
        %v1229 = vadd.f32 0.0, %v1228
        %v1230 = vpop.f32.mrb[0].mxu0
        %v1231 = vadd.f32 0.0, %v1230
        %v1232 = vpop.f32.mrb[0].mxu0
        %v1233 = vadd.f32 0.0, %v1232
        %1234 = vmatprep.mubr.bf16.mxu0 0
        %1235 = vmatmul.mubr.bf16.gmra.mrb[0].mxu0 %v853
        %v1236 = vpop.f32.mrb[0].mxu0
        %v1237 = vadd.f32 0.0, %v1236
        %v1238 = vpop.f32.mrb[0].mxu0
        %v1239 = vadd.f32 0.0, %v1238
        %v1240 = vpop.f32.mrb[0].mxu0
        %v1241 = vadd.f32 0.0, %v1240
        %v1242 = vpop.f32.mrb[0].mxu0
        %v1243 = vadd.f32 0.0, %v1242
        %1244 = vmatprep.mubr.bf16.mxu0 0
        %1245 = vmatmul.mubr.bf16.gmra.mrb[0].mxu0 %v856
        %v1246 = vpop.f32.mrb[0].mxu0
        %v1247 = vadd.f32 0.0, %v1246
        %v1248 = vpop.f32.mrb[0].mxu0
        %v1249 = vadd.f32 0.0, %v1248
        %v1250 = vpop.f32.mrb[0].mxu0
        %v1251 = vadd.f32 0.0, %v1250
        %v1252 = vpop.f32.mrb[0].mxu0
        %v1253 = vadd.f32 0.0, %v1252
        %1254 = vmatprep.mubr.bf16.mxu0 0
        %1255 = vmatmul.mubr.bf16.gmra.mrb[0].mxu0 %v859
        %v1256 = vpop.f32.mrb[0].mxu0
        %v1257 = vadd.f32 0.0, %v1256
        %v1258 = vpop.f32.mrb[0].mxu0
        %v1259 = vadd.f32 0.0, %v1258
        %v1260 = vpop.f32.mrb[0].mxu0
        %v1261 = vadd.f32 0.0, %v1260
        %v1262 = vpop.f32.mrb[0].mxu0
        %v1263 = vadd.f32 0.0, %v1262
        %1264 = vmatprep.mubr.bf16.mxu0 0
        %1265 = vmatmul.mubr.bf16.gmra.mrb[0].mxu0 %v862
        %v1266 = vpop.f32.mrb[0].mxu0
        %v1267 = vadd.f32 0.0, %v1266
        %v1268 = vpop.f32.mrb[0].mxu0
        %v1269 = vadd.f32 0.0, %v1268
        %v1270 = vpop.f32.mrb[0].mxu0
        %v1271 = vadd.f32 0.0, %v1270
        %v1272 = vpop.f32.mrb[0].mxu0
        %v1273 = vadd.f32 0.0, %v1272
        %1274 = vmatprep.mubr.bf16.mxu0 0
        %1275 = vmatmul.mubr.bf16.gmra.mrb[0].mxu0 %v865
        %v1276 = vpop.f32.mrb[0].mxu0
        %v1277 = vadd.f32 0.0, %v1276
        %v1278 = vpop.f32.mrb[0].mxu0
        %v1279 = vadd.f32 0.0, %v1278
        %v1280 = vpop.f32.mrb[0].mxu0
        %v1281 = vadd.f32 0.0, %v1280
        %v1282 = vpop.f32.mrb[0].mxu0
        %v1283 = vadd.f32 0.0, %v1282
        %1284 = vdwg.mxu0
        %1285 = vmatprep.subr.bf16.mxu0 0
        %1286 = vmatpush1.bf16.msra.mxu0 %v1170
        %1287 = vmatprep.subr.bf16.mxu0 0
        %1288 = vmatpush1.bf16.msra.mxu0 0
        %1289 = vmatprep.subr.bf16.mxu0 0
        %1290 = vmatpush1.bf16.msra.mxu0 0
        %1291 = vmatprep.subr.bf16.mxu0 0
        %1292 = vmatpush1.bf16.msra.mxu0 0
        %1293 = vmatprep.subr.bf16.mxu0 0
        %1294 = vmatpush1.bf16.msra.mxu0 0
        %1295 = vmatprep.subr.bf16.mxu0 0
        %1296 = vmatpush1.bf16.msra.mxu0 0
        %1297 = vmatprep.subr.bf16.mxu0 0
        %1298 = vmatpush1.bf16.msra.mxu0 0
        %1299 = vmatprep.subr.bf16.mxu0 0
        %1300 = vmatpush1.bf16.msra.mxu0 0
        %1301 = vmatprep.subr.bf16.mxu0 0
        %1302 = vmatpush1.bf16.msra.mxu0 0
        %1303 = vmatprep.subr.bf16.mxu0 0
        %1304 = vmatpush1.bf16.msra.mxu0 0
        %1305 = vmatprep.subr.bf16.mxu0 0
        %1306 = vmatpush1.bf16.msra.mxu0 0
        %1307 = vmatprep.subr.bf16.mxu0 0
        %1308 = vmatpush1.bf16.msra.mxu0 0
        %1309 = vmatprep.subr.bf16.mxu0 0
        %1310 = vmatpush1.bf16.msra.mxu0 0
        %1311 = vmatprep.subr.bf16.mxu0 0
        %1312 = vmatpush1.bf16.msra.mxu0 0
        %1313 = vmatprep.subr.bf16.mxu0 0
        %1314 = vmatpush1.bf16.msra.mxu0 0
        %1315 = vmatprep.subr.bf16.mxu0 0
        %1316 = vmatpush1.bf16.msra.mxu0 0
        %1317 = vmatprep.mubr.bf16.mxu0 0
        %1318 = vmatmul.mubr.bf16.gmra.mrb[0].mxu0 %v844
        %v1319 = vpop.f32.mrb[0].mxu0
        %v1320 = vadd.f32 0.0, %v1319
        %v1321 = vpop.f32.mrb[0].mxu0
        %v1322 = vpop.f32.mrb[0].mxu0
        %v1323 = vadd.f32 0.0, %v1322
        %v1324 = vpop.f32.mrb[0].mxu0
        %1325 = vmatprep.mubr.bf16.mxu0 0
        %1326 = vmatmul.mubr.bf16.gmra.mrb[0].mxu0 %v847
        %v1327 = vpop.f32.mrb[0].mxu0
        %v1328 = vadd.f32 0.0, %v1327
        %v1329 = vpop.f32.mrb[0].mxu0
        %v1330 = vpop.f32.mrb[0].mxu0
        %v1331 = vadd.f32 0.0, %v1330
        %v1332 = vpop.f32.mrb[0].mxu0
        %1333 = vmatprep.mubr.bf16.mxu0 0
        %1334 = vmatmul.mubr.bf16.gmra.mrb[0].mxu0 %v850
        %v1335 = vpop.f32.mrb[0].mxu0
        %v1336 = vadd.f32 0.0, %v1335
        %v1337 = vpop.f32.mrb[0].mxu0
        %v1338 = vpop.f32.mrb[0].mxu0
        %v1339 = vadd.f32 0.0, %v1338
        %v1340 = vpop.f32.mrb[0].mxu0
        %1341 = vmatprep.mubr.bf16.mxu0 0
        %1342 = vmatmul.mubr.bf16.gmra.mrb[0].mxu0 %v853
        %v1343 = vpop.f32.mrb[0].mxu0
        %v1344 = vadd.f32 0.0, %v1343
        %v1345 = vpop.f32.mrb[0].mxu0
        %v1346 = vpop.f32.mrb[0].mxu0
        %v1347 = vadd.f32 0.0, %v1346
        %v1348 = vpop.f32.mrb[0].mxu0
        %1349 = vmatprep.mubr.bf16.mxu0 0
        %1350 = vmatmul.mubr.bf16.gmra.mrb[0].mxu0 %v856
        %v1351 = vpop.f32.mrb[0].mxu0
        %v1352 = vadd.f32 0.0, %v1351
        %v1353 = vpop.f32.mrb[0].mxu0
        %v1354 = vpop.f32.mrb[0].mxu0
        %v1355 = vadd.f32 0.0, %v1354
        %v1356 = vpop.f32.mrb[0].mxu0
        %1357 = vmatprep.mubr.bf16.mxu0 0
        %1358 = vmatmul.mubr.bf16.gmra.mrb[0].mxu0 %v859
        %v1359 = vpop.f32.mrb[0].mxu0
        %v1360 = vadd.f32 0.0, %v1359
        %v1361 = vpop.f32.mrb[0].mxu0
        %v1362 = vpop.f32.mrb[0].mxu0
        %v1363 = vadd.f32 0.0, %v1362
        %v1364 = vpop.f32.mrb[0].mxu0
        %1365 = vmatprep.mubr.bf16.mxu0 0
        %1366 = vmatmul.mubr.bf16.gmra.mrb[0].mxu0 %v862
        %v1367 = vpop.f32.mrb[0].mxu0
        %v1368 = vadd.f32 0.0, %v1367
        %v1369 = vpop.f32.mrb[0].mxu0
        %v1370 = vpop.f32.mrb[0].mxu0
        %v1371 = vadd.f32 0.0, %v1370
        %v1372 = vpop.f32.mrb[0].mxu0
        %1373 = vmatprep.mubr.bf16.mxu0 0
        %1374 = vmatmul.mubr.bf16.gmra.mrb[0].mxu0 %v865
        %v1375 = vpop.f32.mrb[0].mxu0
        %v1376 = vadd.f32 0.0, %v1375
        %v1377 = vpop.f32.mrb[0].mxu0
        %v1378 = vpop.f32.mrb[0].mxu0
        %v1379 = vadd.f32 0.0, %v1378
        %v1380 = vpop.f32.mrb[0].mxu0
        %1381 = vdwg.mxu0
        %1398 = vrot.lane.b32.xlu0 %v1207, 64
        %v1399 = vpop.permute.xlu0 %1398
        %1400 = vrot.lane.b32.xlu0 %v1211, 64
        %v1401 = vpop.permute.xlu0 %1400
        %1402 = vrot.lane.b32.xlu0 %v1217, 64
        %v1403 = vpop.permute.xlu0 %1402
        %1404 = vrot.lane.b32.xlu0 %v1221, 64
        %v1405 = vpop.permute.xlu0 %1404
        %1406 = vrot.lane.b32.xlu0 %v1227, 64
        %v1407 = vpop.permute.xlu0 %1406
        %1408 = vrot.lane.b32.xlu0 %v1231, 64
        %v1409 = vpop.permute.xlu0 %1408
        %1410 = vrot.lane.b32.xlu0 %v1237, 64
        %v1411 = vpop.permute.xlu0 %1410
        %1412 = vrot.lane.b32.xlu0 %v1241, 64
        %v1413 = vpop.permute.xlu0 %1412
        %1414 = vrot.lane.b32.xlu0 %v1247, 64
        %v1415 = vpop.permute.xlu0 %1414
        %1416 = vrot.lane.b32.xlu0 %v1251, 64
        %v1417 = vpop.permute.xlu0 %1416
        %1418 = vrot.lane.b32.xlu0 %v1257, 64
        %v1419 = vpop.permute.xlu0 %1418
        %1420 = vrot.lane.b32.xlu0 %v1261, 64
        %v1421 = vpop.permute.xlu0 %1420
        %1422 = vrot.lane.b32.xlu0 %v1267, 64
        %v1423 = vpop.permute.xlu0 %1422
        %1424 = vrot.lane.b32.xlu0 %v1271, 64
        %v1425 = vpop.permute.xlu0 %1424
        %1426 = vrot.lane.b32.xlu0 %v1277, 64
        %v1427 = vpop.permute.xlu0 %1426
        %1428 = vrot.lane.b32.xlu0 %v1281, 64
        %v1429 = vpop.permute.xlu0 %1428
        %vm1446 = vcmask 523264
        %v1447 = vsel %vm1446, %v912, %v1399
        %v1448 = vsel %vm1446, %v916, %v1401
        %v1449 = vsel %vm1446, %v922, %v1403
        %v1450 = vsel %vm1446, %v926, %v1405
        %v1451 = vsel %vm1446, %v932, %v1407
        %v1452 = vsel %vm1446, %v936, %v1409
        %v1453 = vsel %vm1446, %v942, %v1411
        %v1454 = vsel %vm1446, %v946, %v1413
        %v1455 = vsel %vm1446, %v952, %v1415
        %v1456 = vsel %vm1446, %v956, %v1417
        %v1457 = vsel %vm1446, %v962, %v1419
        %v1458 = vsel %vm1446, %v966, %v1421
        %v1459 = vsel %vm1446, %v972, %v1423
        %v1460 = vsel %vm1446, %v976, %v1425
        %v1461 = vsel %vm1446, %v982, %v1427
        %v1462 = vsel %vm1446, %v986, %v1429
        %v1463 = vpack.c.bf16 %v1448, %v1447
        %v1464 = vpack.c.bf16 %v1450, %v1449
        %v1465 = vpack.c.bf16 %v1452, %v1451
        %v1466 = vpack.c.bf16 %v1454, %v1453
        %v1467 = vpack.c.bf16 %v1456, %v1455
        %v1468 = vpack.c.bf16 %v1458, %v1457
        %v1469 = vpack.c.bf16 %v1460, %v1459
        %v1470 = vpack.c.bf16 %v1462, %v1461
        %v1479 = vunpack.c.l.b16 %v1463
        %v1480 = vunpack.c.h.b16 %v1463
        %v1481 = vunpack.c.l.b16 %v1464
        %v1482 = vunpack.c.h.b16 %v1464
        %v1483 = vunpack.c.l.b16 %v1465
        %v1484 = vunpack.c.h.b16 %v1465
        %v1485 = vunpack.c.l.b16 %v1466
        %v1486 = vunpack.c.h.b16 %v1466
        %v1487 = vunpack.c.l.b16 %v1467
        %v1488 = vunpack.c.h.b16 %v1467
        %v1489 = vunpack.c.l.b16 %v1468
        %v1490 = vunpack.c.h.b16 %v1468
        %v1491 = vunpack.c.l.b16 %v1469
        %v1492 = vunpack.c.h.b16 %v1469
        %v1493 = vunpack.c.l.b16 %v1470
        %v1494 = vunpack.c.h.b16 %v1470
        %v1495 = vpack.c.b16 %v1479, %v1479
        %v1496 = vpack.c.b16 %v1480, %v1480
        %v1497 = vpack.c.b16 %v1481, %v1481
        %v1498 = vpack.c.b16 %v1482, %v1482
        %v1499 = vpack.c.b16 %v1483, %v1483
        %v1500 = vpack.c.b16 %v1484, %v1484
        %v1501 = vpack.c.b16 %v1485, %v1485
        %v1502 = vpack.c.b16 %v1486, %v1486
        %v1503 = vpack.c.b16 %v1487, %v1487
        %v1504 = vpack.c.b16 %v1488, %v1488
        %v1505 = vpack.c.b16 %v1489, %v1489
        %v1506 = vpack.c.b16 %v1490, %v1490
        %v1507 = vpack.c.b16 %v1491, %v1491
        %v1508 = vpack.c.b16 %v1492, %v1492
        %v1509 = vpack.c.b16 %v1493, %v1493
        %v1510 = vpack.c.b16 %v1494, %v1494
        %1527 = vst [vmem:[%s327] sm:$0xf] %v1495
        %1528 = vst [vmem:[%s327 + $0x4] sm:$0xf] %v1496
        %1529 = vst [vmem:[%s327 + $0x8] sm:$0xf] %v1497
        %1530 = vst [vmem:[%s327 + $0xc] sm:$0xf] %v1498
        %1531 = vst [vmem:[%s327 + $0x10] sm:$0xf] %v1499
        %1532 = vst [vmem:[%s327 + $0x14] sm:$0xf] %v1500
        %1533 = vst [vmem:[%s327 + $0x18] sm:$0xf] %v1501
        %1534 = vst [vmem:[%s327 + $0x1c] sm:$0xf] %v1502
        %1535 = vst [vmem:[%s327 + $0x20] sm:$0xf] %v1503
        %1536 = vst [vmem:[%s327 + $0x24] sm:$0xf] %v1504
        %1537 = vst [vmem:[%s327 + $0x28] sm:$0xf] %v1505
        %1538 = vst [vmem:[%s327 + $0x2c] sm:$0xf] %v1506
        %1539 = vst [vmem:[%s327 + $0x30] sm:$0xf] %v1507
        %1540 = vst [vmem:[%s327 + $0x34] sm:$0xf] %v1508
        %1541 = vst [vmem:[%s327 + $0x38] sm:$0xf] %v1509
        %1542 = vst [vmem:[%s327 + $0x3c] sm:$0xf] %v1510
        %1591 = vrot.lane.b32.xlu0 %v912, 64
        %v1592 = vpop.permute.xlu0 %1591
        %1593 = vrot.lane.b32.xlu0 %v914, 64
        %v1594 = vpop.permute.xlu0 %1593
        %1595 = vrot.lane.b32.xlu0 %v1025, 64
        %v1596 = vpop.permute.xlu0 %1595
        %1597 = vrot.lane.b32.xlu0 %v916, 64
        %v1598 = vpop.permute.xlu0 %1597
        %1599 = vrot.lane.b32.xlu0 %v918, 64
        %v1600 = vpop.permute.xlu0 %1599
        %1601 = vrot.lane.b32.xlu0 %v1028, 64
        %v1602 = vpop.permute.xlu0 %1601
        %1603 = vrot.lane.b32.xlu0 %v922, 64
        %v1604 = vpop.permute.xlu0 %1603
        %1605 = vrot.lane.b32.xlu0 %v924, 64
        %v1606 = vpop.permute.xlu0 %1605
        %1607 = vrot.lane.b32.xlu0 %v1033, 64
        %v1608 = vpop.permute.xlu0 %1607
        %1609 = vrot.lane.b32.xlu0 %v926, 64
        %v1610 = vpop.permute.xlu0 %1609
        %1611 = vrot.lane.b32.xlu0 %v928, 64
        %v1612 = vpop.permute.xlu0 %1611
        %1613 = vrot.lane.b32.xlu0 %v1036, 64
        %v1614 = vpop.permute.xlu0 %1613
        %1615 = vrot.lane.b32.xlu0 %v932, 64
        %v1616 = vpop.permute.xlu0 %1615
        %1617 = vrot.lane.b32.xlu0 %v934, 64
        %v1618 = vpop.permute.xlu0 %1617
        %1619 = vrot.lane.b32.xlu0 %v1041, 64
        %v1620 = vpop.permute.xlu0 %1619
        %1621 = vrot.lane.b32.xlu0 %v936, 64
        %v1622 = vpop.permute.xlu0 %1621
        %1623 = vrot.lane.b32.xlu0 %v938, 64
        %v1624 = vpop.permute.xlu0 %1623
        %1625 = vrot.lane.b32.xlu0 %v1044, 64
        %v1626 = vpop.permute.xlu0 %1625
        %1627 = vrot.lane.b32.xlu0 %v942, 64
        %v1628 = vpop.permute.xlu0 %1627
        %1629 = vrot.lane.b32.xlu0 %v944, 64
        %v1630 = vpop.permute.xlu0 %1629
        %1631 = vrot.lane.b32.xlu0 %v1049, 64
        %v1632 = vpop.permute.xlu0 %1631
        %1633 = vrot.lane.b32.xlu0 %v946, 64
        %v1634 = vpop.permute.xlu0 %1633
        %1635 = vrot.lane.b32.xlu0 %v948, 64
        %v1636 = vpop.permute.xlu0 %1635
        %1637 = vrot.lane.b32.xlu0 %v1052, 64
        %v1638 = vpop.permute.xlu0 %1637
        %1639 = vrot.lane.b32.xlu0 %v952, 64
        %v1640 = vpop.permute.xlu0 %1639
        %1641 = vrot.lane.b32.xlu0 %v954, 64
        %v1642 = vpop.permute.xlu0 %1641
        %1643 = vrot.lane.b32.xlu0 %v1057, 64
        %v1644 = vpop.permute.xlu0 %1643
        %1645 = vrot.lane.b32.xlu0 %v956, 64
        %v1646 = vpop.permute.xlu0 %1645
        %1647 = vrot.lane.b32.xlu0 %v958, 64
        %v1648 = vpop.permute.xlu0 %1647
        %1649 = vrot.lane.b32.xlu0 %v1060, 64
        %v1650 = vpop.permute.xlu0 %1649
        %1651 = vrot.lane.b32.xlu0 %v962, 64
        %v1652 = vpop.permute.xlu0 %1651
        %1653 = vrot.lane.b32.xlu0 %v964, 64
        %v1654 = vpop.permute.xlu0 %1653
        %1655 = vrot.lane.b32.xlu0 %v1065, 64
        %v1656 = vpop.permute.xlu0 %1655
        %1657 = vrot.lane.b32.xlu0 %v966, 64
        %v1658 = vpop.permute.xlu0 %1657
        %1659 = vrot.lane.b32.xlu0 %v968, 64
        %v1660 = vpop.permute.xlu0 %1659
        %1661 = vrot.lane.b32.xlu0 %v1068, 64
        %v1662 = vpop.permute.xlu0 %1661
        %1663 = vrot.lane.b32.xlu0 %v972, 64
        %v1664 = vpop.permute.xlu0 %1663
        %1665 = vrot.lane.b32.xlu0 %v974, 64
        %v1666 = vpop.permute.xlu0 %1665
        %1667 = vrot.lane.b32.xlu0 %v1073, 64
        %v1668 = vpop.permute.xlu0 %1667
        %1669 = vrot.lane.b32.xlu0 %v976, 64
        %v1670 = vpop.permute.xlu0 %1669
        %1671 = vrot.lane.b32.xlu0 %v978, 64
        %v1672 = vpop.permute.xlu0 %1671
        %1673 = vrot.lane.b32.xlu0 %v1076, 64
        %v1674 = vpop.permute.xlu0 %1673
        %1675 = vrot.lane.b32.xlu0 %v982, 64
        %v1676 = vpop.permute.xlu0 %1675
        %1677 = vrot.lane.b32.xlu0 %v984, 64
        %v1678 = vpop.permute.xlu0 %1677
        %1679 = vrot.lane.b32.xlu0 %v1081, 64
        %v1680 = vpop.permute.xlu0 %1679
        %1681 = vrot.lane.b32.xlu0 %v986, 64
        %v1682 = vpop.permute.xlu0 %1681
        %1683 = vrot.lane.b32.xlu0 %v988, 64
        %v1684 = vpop.permute.xlu0 %1683
        %1685 = vrot.lane.b32.xlu0 %v1084, 64
        %v1686 = vpop.permute.xlu0 %1685
        %v1687 = vsel %vm1446, %v1592, %v1594
        %v1688 = vsel %vm1446, %v1594, %v1596
        %v1689 = vsel %vm1446, %v1598, %v1600
        %v1690 = vsel %vm1446, %v1600, %v1602
        %v1691 = vsel %vm1446, %v1604, %v1606
        %v1692 = vsel %vm1446, %v1606, %v1608
        %v1693 = vsel %vm1446, %v1610, %v1612
        %v1694 = vsel %vm1446, %v1612, %v1614
        %v1695 = vsel %vm1446, %v1616, %v1618
        %v1696 = vsel %vm1446, %v1618, %v1620
        %v1697 = vsel %vm1446, %v1622, %v1624
        %v1698 = vsel %vm1446, %v1624, %v1626
        %v1699 = vsel %vm1446, %v1628, %v1630
        %v1700 = vsel %vm1446, %v1630, %v1632
        %v1701 = vsel %vm1446, %v1634, %v1636
        %v1702 = vsel %vm1446, %v1636, %v1638
        %v1703 = vsel %vm1446, %v1640, %v1642
        %v1704 = vsel %vm1446, %v1642, %v1644
        %v1705 = vsel %vm1446, %v1646, %v1648
        %v1706 = vsel %vm1446, %v1648, %v1650
        %v1707 = vsel %vm1446, %v1652, %v1654
        %v1708 = vsel %vm1446, %v1654, %v1656
        %v1709 = vsel %vm1446, %v1658, %v1660
        %v1710 = vsel %vm1446, %v1660, %v1662
        %v1711 = vsel %vm1446, %v1664, %v1666
        %v1712 = vsel %vm1446, %v1666, %v1668
        %v1713 = vsel %vm1446, %v1670, %v1672
        %v1714 = vsel %vm1446, %v1672, %v1674
        %v1715 = vsel %vm1446, %v1676, %v1678
        %v1716 = vsel %vm1446, %v1678, %v1680
        %v1717 = vsel %vm1446, %v1682, %v1684
        %v1718 = vsel %vm1446, %v1684, %v1686
        %1799 = vrot.lane.b32.xlu0 %v1207, 96
        %v1800 = vpop.permute.xlu0 %1799
        %1801 = vrot.lane.b32.xlu0 %v1209, 96
        %v1802 = vpop.permute.xlu0 %1801
        %1803 = vrot.lane.b32.xlu0 %v1320, 96
        %v1804 = vpop.permute.xlu0 %1803
        %1805 = vrot.lane.b32.xlu0 %v1211, 96
        %v1806 = vpop.permute.xlu0 %1805
        %1807 = vrot.lane.b32.xlu0 %v1213, 96
        %v1808 = vpop.permute.xlu0 %1807
        %1809 = vrot.lane.b32.xlu0 %v1323, 96
        %v1810 = vpop.permute.xlu0 %1809
        %1811 = vrot.lane.b32.xlu0 %v1217, 96
        %v1812 = vpop.permute.xlu0 %1811
        %1813 = vrot.lane.b32.xlu0 %v1219, 96
        %v1814 = vpop.permute.xlu0 %1813
        %1815 = vrot.lane.b32.xlu0 %v1328, 96
        %v1816 = vpop.permute.xlu0 %1815
        %1817 = vrot.lane.b32.xlu0 %v1221, 96
        %v1818 = vpop.permute.xlu0 %1817
        %1819 = vrot.lane.b32.xlu0 %v1223, 96
        %v1820 = vpop.permute.xlu0 %1819
        %1821 = vrot.lane.b32.xlu0 %v1331, 96
        %v1822 = vpop.permute.xlu0 %1821
        %1823 = vrot.lane.b32.xlu0 %v1227, 96
        %v1824 = vpop.permute.xlu0 %1823
        %1825 = vrot.lane.b32.xlu0 %v1229, 96
        %v1826 = vpop.permute.xlu0 %1825
        %1827 = vrot.lane.b32.xlu0 %v1336, 96
        %v1828 = vpop.permute.xlu0 %1827
        %1829 = vrot.lane.b32.xlu0 %v1231, 96
        %v1830 = vpop.permute.xlu0 %1829
        %1831 = vrot.lane.b32.xlu0 %v1233, 96
        %v1832 = vpop.permute.xlu0 %1831
        %1833 = vrot.lane.b32.xlu0 %v1339, 96
        %v1834 = vpop.permute.xlu0 %1833
        %1835 = vrot.lane.b32.xlu0 %v1237, 96
        %v1836 = vpop.permute.xlu0 %1835
        %1837 = vrot.lane.b32.xlu0 %v1239, 96
        %v1838 = vpop.permute.xlu0 %1837
        %1839 = vrot.lane.b32.xlu0 %v1344, 96
        %v1840 = vpop.permute.xlu0 %1839
        %1841 = vrot.lane.b32.xlu0 %v1241, 96
        %v1842 = vpop.permute.xlu0 %1841
        %1843 = vrot.lane.b32.xlu0 %v1243, 96
        %v1844 = vpop.permute.xlu0 %1843
        %1845 = vrot.lane.b32.xlu0 %v1347, 96
        %v1846 = vpop.permute.xlu0 %1845
        %1847 = vrot.lane.b32.xlu0 %v1247, 96
        %v1848 = vpop.permute.xlu0 %1847
        %1849 = vrot.lane.b32.xlu0 %v1249, 96
        %v1850 = vpop.permute.xlu0 %1849
        %1851 = vrot.lane.b32.xlu0 %v1352, 96
        %v1852 = vpop.permute.xlu0 %1851
        %1853 = vrot.lane.b32.xlu0 %v1251, 96
        %v1854 = vpop.permute.xlu0 %1853
        %1855 = vrot.lane.b32.xlu0 %v1253, 96
        %v1856 = vpop.permute.xlu0 %1855
        %1857 = vrot.lane.b32.xlu0 %v1355, 96
        %v1858 = vpop.permute.xlu0 %1857
        %1859 = vrot.lane.b32.xlu0 %v1257, 96
        %v1860 = vpop.permute.xlu0 %1859
        %1861 = vrot.lane.b32.xlu0 %v1259, 96
        %v1862 = vpop.permute.xlu0 %1861
        %1863 = vrot.lane.b32.xlu0 %v1360, 96
        %v1864 = vpop.permute.xlu0 %1863
        %1865 = vrot.lane.b32.xlu0 %v1261, 96
        %v1866 = vpop.permute.xlu0 %1865
        %1867 = vrot.lane.b32.xlu0 %v1263, 96
        %v1868 = vpop.permute.xlu0 %1867
        %1869 = vrot.lane.b32.xlu0 %v1363, 96
        %v1870 = vpop.permute.xlu0 %1869
        %1871 = vrot.lane.b32.xlu0 %v1267, 96
        %v1872 = vpop.permute.xlu0 %1871
        %1873 = vrot.lane.b32.xlu0 %v1269, 96
        %v1874 = vpop.permute.xlu0 %1873
        %1875 = vrot.lane.b32.xlu0 %v1368, 96
        %v1876 = vpop.permute.xlu0 %1875
        %1877 = vrot.lane.b32.xlu0 %v1271, 96
        %v1878 = vpop.permute.xlu0 %1877
        %1879 = vrot.lane.b32.xlu0 %v1273, 96
        %v1880 = vpop.permute.xlu0 %1879
        %1881 = vrot.lane.b32.xlu0 %v1371, 96
        %v1882 = vpop.permute.xlu0 %1881
        %1883 = vrot.lane.b32.xlu0 %v1277, 96
        %v1884 = vpop.permute.xlu0 %1883
        %1885 = vrot.lane.b32.xlu0 %v1279, 96
        %v1886 = vpop.permute.xlu0 %1885
        %1887 = vrot.lane.b32.xlu0 %v1376, 96
        %v1888 = vpop.permute.xlu0 %1887
        %1889 = vrot.lane.b32.xlu0 %v1281, 96
        %v1890 = vpop.permute.xlu0 %1889
        %1891 = vrot.lane.b32.xlu0 %v1283, 96
        %v1892 = vpop.permute.xlu0 %1891
        %1893 = vrot.lane.b32.xlu0 %v1379, 96
        %v1894 = vpop.permute.xlu0 %1893
        %vm1895 = vcmask 785408
        %v1896 = vsel %vm1895, %v1800, %v1802
        %v1897 = vsel %vm1895, %v1802, %v1804
        %v1898 = vsel %vm1895, %v1806, %v1808
        %v1899 = vsel %vm1895, %v1808, %v1810
        %v1900 = vsel %vm1895, %v1812, %v1814
        %v1901 = vsel %vm1895, %v1814, %v1816
        %v1902 = vsel %vm1895, %v1818, %v1820
        %v1903 = vsel %vm1895, %v1820, %v1822
        %v1904 = vsel %vm1895, %v1824, %v1826
        %v1905 = vsel %vm1895, %v1826, %v1828
        %v1906 = vsel %vm1895, %v1830, %v1832
        %v1907 = vsel %vm1895, %v1832, %v1834
        %v1908 = vsel %vm1895, %v1836, %v1838
        %v1909 = vsel %vm1895, %v1838, %v1840
        %v1910 = vsel %vm1895, %v1842, %v1844
        %v1911 = vsel %vm1895, %v1844, %v1846
        %v1912 = vsel %vm1895, %v1848, %v1850
        %v1913 = vsel %vm1895, %v1850, %v1852
        %v1914 = vsel %vm1895, %v1854, %v1856
        %v1915 = vsel %vm1895, %v1856, %v1858
        %v1916 = vsel %vm1895, %v1860, %v1862
        %v1917 = vsel %vm1895, %v1862, %v1864
        %v1918 = vsel %vm1895, %v1866, %v1868
        %v1919 = vsel %vm1895, %v1868, %v1870
        %v1920 = vsel %vm1895, %v1872, %v1874
        %v1921 = vsel %vm1895, %v1874, %v1876
        %v1922 = vsel %vm1895, %v1878, %v1880
        %v1923 = vsel %vm1895, %v1880, %v1882
        %v1924 = vsel %vm1895, %v1884, %v1886
        %v1925 = vsel %vm1895, %v1886, %v1888
        %v1926 = vsel %vm1895, %v1890, %v1892
        %v1927 = vsel %vm1895, %v1892, %v1894
        %vm1976 = vcmask 261120
        %v1977 = vsel %vm1976, %v1596, %v1896
        %v1978 = vsel %vm1976, %v1602, %v1898
        %v1979 = vsel %vm1976, %v1608, %v1900
        %v1980 = vsel %vm1976, %v1614, %v1902
        %v1981 = vsel %vm1976, %v1620, %v1904
        %v1982 = vsel %vm1976, %v1626, %v1906
        %v1983 = vsel %vm1976, %v1632, %v1908
        %v1984 = vsel %vm1976, %v1638, %v1910
        %v1985 = vsel %vm1976, %v1644, %v1912
        %v1986 = vsel %vm1976, %v1650, %v1914
        %v1987 = vsel %vm1976, %v1656, %v1916
        %v1988 = vsel %vm1976, %v1662, %v1918
        %v1989 = vsel %vm1976, %v1668, %v1920
        %v1990 = vsel %vm1976, %v1674, %v1922
        %v1991 = vsel %vm1976, %v1680, %v1924
        %v1992 = vsel %vm1976, %v1686, %v1926
        %v1993 = vpack.c.bf16 %v1689, %v1687
        %v1994 = vpack.c.bf16 %v1690, %v1688
        %v1995 = vpack.c.bf16 %v1978, %v1977
        %v1996 = vpack.c.bf16 %v1899, %v1897
        %v1997 = vpack.c.bf16 %v1810, %v1804
        %v1998 = vpack.c.bf16 %v1693, %v1691
        %v1999 = vpack.c.bf16 %v1694, %v1692
        %v2000 = vpack.c.bf16 %v1980, %v1979
        %v2001 = vpack.c.bf16 %v1903, %v1901
        %v2002 = vpack.c.bf16 %v1822, %v1816
        %v2003 = vpack.c.bf16 %v1697, %v1695
        %v2004 = vpack.c.bf16 %v1698, %v1696
        %v2005 = vpack.c.bf16 %v1982, %v1981
        %v2006 = vpack.c.bf16 %v1907, %v1905
        %v2007 = vpack.c.bf16 %v1834, %v1828
        %v2008 = vpack.c.bf16 %v1701, %v1699
        %v2009 = vpack.c.bf16 %v1702, %v1700
        %v2010 = vpack.c.bf16 %v1984, %v1983
        %v2011 = vpack.c.bf16 %v1911, %v1909
        %v2012 = vpack.c.bf16 %v1846, %v1840
        %v2013 = vpack.c.bf16 %v1705, %v1703
        %v2014 = vpack.c.bf16 %v1706, %v1704
        %v2015 = vpack.c.bf16 %v1986, %v1985
        %v2016 = vpack.c.bf16 %v1915, %v1913
        %v2017 = vpack.c.bf16 %v1858, %v1852
        %v2018 = vpack.c.bf16 %v1709, %v1707
        %v2019 = vpack.c.bf16 %v1710, %v1708
        %v2020 = vpack.c.bf16 %v1988, %v1987
        %v2021 = vpack.c.bf16 %v1919, %v1917
        %v2022 = vpack.c.bf16 %v1870, %v1864
        %v2023 = vpack.c.bf16 %v1713, %v1711
        %v2024 = vpack.c.bf16 %v1714, %v1712
        %v2025 = vpack.c.bf16 %v1990, %v1989
        %v2026 = vpack.c.bf16 %v1923, %v1921
        %v2027 = vpack.c.bf16 %v1882, %v1876
        %v2028 = vpack.c.bf16 %v1717, %v1715
        %v2029 = vpack.c.bf16 %v1718, %v1716
        %v2030 = vpack.c.bf16 %v1992, %v1991
        %v2031 = vpack.c.bf16 %v1927, %v1925
        %v2032 = vpack.c.bf16 %v1894, %v1888
        %v2073 = vunpack.c.l.b16 %v1993
        %v2074 = vunpack.c.l.b16 %v1994
        %v2075 = vunpack.c.l.b16 %v1995
        %v2076 = vunpack.c.l.b16 %v1996
        %v2077 = vunpack.c.l.b16 %v1997
        %v2078 = vunpack.c.h.b16 %v1993
        %v2079 = vunpack.c.h.b16 %v1994
        %v2080 = vunpack.c.h.b16 %v1995
        %v2081 = vunpack.c.h.b16 %v1996
        %v2082 = vunpack.c.h.b16 %v1997
        %v2083 = vunpack.c.l.b16 %v1998
        %v2084 = vunpack.c.l.b16 %v1999
        %v2085 = vunpack.c.l.b16 %v2000
        %v2086 = vunpack.c.l.b16 %v2001
        %v2087 = vunpack.c.l.b16 %v2002
        %v2088 = vunpack.c.h.b16 %v1998
        %v2089 = vunpack.c.h.b16 %v1999
        %v2090 = vunpack.c.h.b16 %v2000
        %v2091 = vunpack.c.h.b16 %v2001
        %v2092 = vunpack.c.h.b16 %v2002
        %v2093 = vunpack.c.l.b16 %v2003
        %v2094 = vunpack.c.l.b16 %v2004
        %v2095 = vunpack.c.l.b16 %v2005
        %v2096 = vunpack.c.l.b16 %v2006
        %v2097 = vunpack.c.l.b16 %v2007
        %v2098 = vunpack.c.h.b16 %v2003
        %v2099 = vunpack.c.h.b16 %v2004
        %v2100 = vunpack.c.h.b16 %v2005
        %v2101 = vunpack.c.h.b16 %v2006
        %v2102 = vunpack.c.h.b16 %v2007
        %v2103 = vunpack.c.l.b16 %v2008
        %v2104 = vunpack.c.l.b16 %v2009
        %v2105 = vunpack.c.l.b16 %v2010
        %v2106 = vunpack.c.l.b16 %v2011
        %v2107 = vunpack.c.l.b16 %v2012
        %v2108 = vunpack.c.h.b16 %v2008
        %v2109 = vunpack.c.h.b16 %v2009
        %v2110 = vunpack.c.h.b16 %v2010
        %v2111 = vunpack.c.h.b16 %v2011
        %v2112 = vunpack.c.h.b16 %v2012
        %v2113 = vunpack.c.l.b16 %v2013
        %v2114 = vunpack.c.l.b16 %v2014
        %v2115 = vunpack.c.l.b16 %v2015
        %v2116 = vunpack.c.l.b16 %v2016
        %v2117 = vunpack.c.l.b16 %v2017
        %v2118 = vunpack.c.h.b16 %v2013
        %v2119 = vunpack.c.h.b16 %v2014
        %v2120 = vunpack.c.h.b16 %v2015
        %v2121 = vunpack.c.h.b16 %v2016
        %v2122 = vunpack.c.h.b16 %v2017
        %v2123 = vunpack.c.l.b16 %v2018
        %v2124 = vunpack.c.l.b16 %v2019
        %v2125 = vunpack.c.l.b16 %v2020
        %v2126 = vunpack.c.l.b16 %v2021
        %v2127 = vunpack.c.l.b16 %v2022
        %v2128 = vunpack.c.h.b16 %v2018
        %v2129 = vunpack.c.h.b16 %v2019
        %v2130 = vunpack.c.h.b16 %v2020
        %v2131 = vunpack.c.h.b16 %v2021
        %v2132 = vunpack.c.h.b16 %v2022
        %v2133 = vunpack.c.l.b16 %v2023
        %v2134 = vunpack.c.l.b16 %v2024
        %v2135 = vunpack.c.l.b16 %v2025
        %v2136 = vunpack.c.l.b16 %v2026
        %v2137 = vunpack.c.l.b16 %v2027
        %v2138 = vunpack.c.h.b16 %v2023
        %v2139 = vunpack.c.h.b16 %v2024
        %v2140 = vunpack.c.h.b16 %v2025
        %v2141 = vunpack.c.h.b16 %v2026
        %v2142 = vunpack.c.h.b16 %v2027
        %v2143 = vunpack.c.l.b16 %v2028
        %v2144 = vunpack.c.l.b16 %v2029
        %v2145 = vunpack.c.l.b16 %v2030
        %v2146 = vunpack.c.l.b16 %v2031
        %v2147 = vunpack.c.l.b16 %v2032
        %v2148 = vunpack.c.h.b16 %v2028
        %v2149 = vunpack.c.h.b16 %v2029
        %v2150 = vunpack.c.h.b16 %v2030
        %v2151 = vunpack.c.h.b16 %v2031
        %v2152 = vunpack.c.h.b16 %v2032
        %v2153 = vpack.c.b16 %v2074, %v2073
        %v2154 = vpack.c.b16 %v2076, %v2075
        %v2155 = vpack.c.b16 %v2077, %v2077
        %v2156 = vpack.c.b16 %v2079, %v2078
        %v2157 = vpack.c.b16 %v2081, %v2080
        %v2158 = vpack.c.b16 %v2082, %v2082
        %v2159 = vpack.c.b16 %v2084, %v2083
        %v2160 = vpack.c.b16 %v2086, %v2085
        %v2161 = vpack.c.b16 %v2087, %v2087
        %v2162 = vpack.c.b16 %v2089, %v2088
        %v2163 = vpack.c.b16 %v2091, %v2090
        %v2164 = vpack.c.b16 %v2092, %v2092
        %v2165 = vpack.c.b16 %v2094, %v2093
        %v2166 = vpack.c.b16 %v2096, %v2095
        %v2167 = vpack.c.b16 %v2097, %v2097
        %v2168 = vpack.c.b16 %v2099, %v2098
        %v2169 = vpack.c.b16 %v2101, %v2100
        %v2170 = vpack.c.b16 %v2102, %v2102
        %v2171 = vpack.c.b16 %v2104, %v2103
        %v2172 = vpack.c.b16 %v2106, %v2105
        %v2173 = vpack.c.b16 %v2107, %v2107
        %v2174 = vpack.c.b16 %v2109, %v2108
        %v2175 = vpack.c.b16 %v2111, %v2110
        %v2176 = vpack.c.b16 %v2112, %v2112
        %v2177 = vpack.c.b16 %v2114, %v2113
        %v2178 = vpack.c.b16 %v2116, %v2115
        %v2179 = vpack.c.b16 %v2117, %v2117
        %v2180 = vpack.c.b16 %v2119, %v2118
        %v2181 = vpack.c.b16 %v2121, %v2120
        %v2182 = vpack.c.b16 %v2122, %v2122
        %v2183 = vpack.c.b16 %v2124, %v2123
        %v2184 = vpack.c.b16 %v2126, %v2125
        %v2185 = vpack.c.b16 %v2127, %v2127
        %v2186 = vpack.c.b16 %v2129, %v2128
        %v2187 = vpack.c.b16 %v2131, %v2130
        %v2188 = vpack.c.b16 %v2132, %v2132
        %v2189 = vpack.c.b16 %v2134, %v2133
        %v2190 = vpack.c.b16 %v2136, %v2135
        %v2191 = vpack.c.b16 %v2137, %v2137
        %v2192 = vpack.c.b16 %v2139, %v2138
        %v2193 = vpack.c.b16 %v2141, %v2140
        %v2194 = vpack.c.b16 %v2142, %v2142
        %v2195 = vpack.c.b16 %v2144, %v2143
        %v2196 = vpack.c.b16 %v2146, %v2145
        %v2197 = vpack.c.b16 %v2147, %v2147
        %v2198 = vpack.c.b16 %v2149, %v2148
        %v2199 = vpack.c.b16 %v2151, %v2150
        %v2200 = vpack.c.b16 %v2152, %v2152
        %2249 = vst [vmem:[%s334] sm:$0xff] %v2153
        %2250 = vst [vmem:[%s334 + $0x8] sm:$0xff] %v2154
        %vm2251 = vcmask 519168
        %2252 = vst.msk [vmem:[%s334 + $0x10] sm:$0xf] %vm2251, %v2155
        %2253 = vst [vmem:[%s334 + $0x14] sm:$0xff] %v2156
        %2254 = vst [vmem:[%s334 + $0x1c] sm:$0xff] %v2157
        %2255 = vst.msk [vmem:[%s334 + $0x24] sm:$0xf] %vm2251, %v2158
        %2256 = vst [vmem:[%s334 + $0x28] sm:$0xff] %v2159
        %2257 = vst [vmem:[%s334 + $0x30] sm:$0xff] %v2160
        %2258 = vst.msk [vmem:[%s334 + $0x38] sm:$0xf] %vm2251, %v2161
        %2259 = vst [vmem:[%s334 + $0x3c] sm:$0xff] %v2162
        %2260 = vst [vmem:[%s334 + $0x44] sm:$0xff] %v2163
        %2261 = vst.msk [vmem:[%s334 + $0x4c] sm:$0xf] %vm2251, %v2164
        %2262 = vst [vmem:[%s334 + $0x50] sm:$0xff] %v2165
        %2263 = vst [vmem:[%s334 + $0x58] sm:$0xff] %v2166
        %2264 = vst.msk [vmem:[%s334 + $0x60] sm:$0xf] %vm2251, %v2167
        %2265 = vst [vmem:[%s334 + $0x64] sm:$0xff] %v2168
        %2266 = vst [vmem:[%s334 + $0x6c] sm:$0xff] %v2169
        %2267 = vst.msk [vmem:[%s334 + $0x74] sm:$0xf] %vm2251, %v2170
        %2268 = vst [vmem:[%s334 + $0x78] sm:$0xff] %v2171
        %2269 = vst [vmem:[%s334 + $0x80] sm:$0xff] %v2172
        %2270 = vst.msk [vmem:[%s334 + $0x88] sm:$0xf] %vm2251, %v2173
        %2271 = vst [vmem:[%s334 + $0x8c] sm:$0xff] %v2174
        %2272 = vst [vmem:[%s334 + $0x94] sm:$0xff] %v2175
        %2273 = vst.msk [vmem:[%s334 + $0x9c] sm:$0xf] %vm2251, %v2176
        %2274 = vst [vmem:[%s334 + $0xa0] sm:$0xff] %v2177
        %2275 = vst [vmem:[%s334 + $0xa8] sm:$0xff] %v2178
        %2276 = vst.msk [vmem:[%s334 + $0xb0] sm:$0xf] %vm2251, %v2179
        %2277 = vst [vmem:[%s334 + $0xb4] sm:$0xff] %v2180
        %2278 = vst [vmem:[%s334 + $0xbc] sm:$0xff] %v2181
        %2279 = vst.msk [vmem:[%s334 + $0xc4] sm:$0xf] %vm2251, %v2182
        %2280 = vst [vmem:[%s334 + $0xc8] sm:$0xff] %v2183
        %2281 = vst [vmem:[%s334 + $0xd0] sm:$0xff] %v2184
        %2282 = vst.msk [vmem:[%s334 + $0xd8] sm:$0xf] %vm2251, %v2185
        %2283 = vst [vmem:[%s334 + $0xdc] sm:$0xff] %v2186
        %2284 = vst [vmem:[%s334 + $0xe4] sm:$0xff] %v2187
        %2285 = vst.msk [vmem:[%s334 + $0xec] sm:$0xf] %vm2251, %v2188
        %2286 = vst [vmem:[%s334 + $0xf0] sm:$0xff] %v2189
        %2287 = vst [vmem:[%s334 + $0xf8] sm:$0xff] %v2190
        %2288 = vst.msk [vmem:[%s334 + $0x100] sm:$0xf] %vm2251, %v2191
        %2289 = vst [vmem:[%s334 + $0x104] sm:$0xff] %v2192
        %2290 = vst [vmem:[%s334 + $0x10c] sm:$0xff] %v2193
        %2291 = vst.msk [vmem:[%s334 + $0x114] sm:$0xf] %vm2251, %v2194
        %2292 = vst [vmem:[%s334 + $0x118] sm:$0xff] %v2195
        %2293 = vst [vmem:[%s334 + $0x120] sm:$0xff] %v2196
        %2294 = vst.msk [vmem:[%s334 + $0x128] sm:$0xf] %vm2251, %v2197
        %2295 = vst [vmem:[%s334 + $0x12c] sm:$0xff] %v2198
        %2296 = vst [vmem:[%s334 + $0x134] sm:$0xff] %v2199
        %2297 = vst.msk [vmem:[%s334 + $0x13c] sm:$0xf] %vm2251, %v2200
        %s2298 = sand.u32 %s147, 1
        %s2299 = scalar_lea.sflag [#allocation5], %s2298
        %s2300 = sand.u32 %s147, 1
        %s2301 = smul.addr %s2300, 64
        %s2302 = scalar_lea.vmem [#allocation12], %s2301
        %s2303 = sand.u32 %s173, 1
        %s2304 = scalar_lea.sflag [#allocation14], %s2303
        %s2305 = sand.u32 %s173, 1
        %s2306 = smul.addr %s2305, 320
        %s2307 = scalar_lea.vmem [#allocation13], %s2306
        // Predicated region
        $region61: #{context_branch_forward.6} parent=39 // pred_check
          %p2308 = pneg %p157
        $region62: #{context_branch_forward.6} parent=39 // pred_check_branch
          %2310 = sbr.rel (%p2308) target = $region64
        $region63: #{context_branch_forward.6} parent=39 // pred_region
          %s2312 = ssub.s32 1024, 1024
          %2313 = vsyncadd %s2299, %s2312
          %s2314 = smul.addr %s29, 16
          %s2315 = smul.addr %s2314, 64
          %s2316 = scalar_lea.hbm %s5, %s2315
          %s2317 = sshll.u32 %s2302, 4
          %s2318 = int_to_ptr.vmem [resolvable:$true] %s2317
          %2323 = dma.vmem_to_hbm [thread:$0]  %s2318, 1024, %s2316, %s2299, 64, 64, 4
        $region64: #{context_branch_forward.6} parent=39 // pred_fallthru
          _
        // Predicated region
        $region65: #{context_branch_forward.6} parent=39 // pred_check
          %p2324 = pneg %p183
        $region66: #{context_branch_forward.6} parent=39 // pred_check_branch
          %2326 = sbr.rel (%p2324) target = $region68
        $region67: #{context_branch_forward.6} parent=39 // pred_region
          %s2328 = ssub.s32 5120, 5120
          %2329 = vsyncadd %s2304, %s2328
          %s2330 = smul.addr %s29, 80
          %s2331 = smul.addr %s2330, 64
          %s2332 = scalar_lea.hbm %s6, %s2331
          %s2333 = sshll.u32 %s2307, 4
          %s2334 = int_to_ptr.vmem [resolvable:$true] %s2333
          %2339 = dma.vmem_to_hbm [thread:$0]  %s2334, 5120, %s2332, %s2304, 320, 320, 20
        $region68: #{context_branch_forward.6} parent=39 // pred_fallthru
          _
      $region40: #{context_branch_forward.6} parent=5 // pred_fallthru
        _
      %p2340 = scmp.le.s32.totalorder 2, %s24
      // Predicated region
      $region69: #{context_branch_forward.6} parent=5 // pred_check
        %p2341 = pneg %p2340
      $region70: #{context_branch_forward.6} parent=5 // pred_check_branch
        %2343 = sbr.rel (%p2341) target = $region72
      $region71: #{context_branch_forward.6} parent=5 // pred_region
        %s2344 = ssub.s32 %s24, 2
        // Predicated region
        $region73: #{context_branch_forward.6} parent=71 // pred_check
          %p2345 = pneg %p163
        $region74: #{context_branch_forward.6} parent=71 // pred_check_branch
          %2347 = sbr.rel (%p2345) target = $region76
        $region75: #{context_branch_forward.6} parent=71 // pred_region
          %s2348 = sand.u32 %s148, 1
          %s2349 = scalar_lea.sflag [#allocation5], %s2348
          %s2350 = sand.u32 %s148, 1
          %s2351 = smul.addr %s2350, 64
          %s2352 = scalar_lea.vmem [#allocation12], %s2351
          %2353 = dma.done %s2349, 1024
        $region76: #{context_branch_forward.6} parent=71 // pred_fallthru
          _
        // Predicated region
        $region77: #{context_branch_forward.6} parent=71 // pred_check
          %p2354 = pneg %p189
        $region78: #{context_branch_forward.6} parent=71 // pred_check_branch
          %2356 = sbr.rel (%p2354) target = $region80
        $region79: #{context_branch_forward.6} parent=71 // pred_region
          %s2357 = sand.u32 %s174, 1
          %s2358 = scalar_lea.sflag [#allocation14], %s2357
          %s2359 = sand.u32 %s174, 1
          %s2360 = smul.addr %s2359, 320
          %s2361 = scalar_lea.vmem [#allocation13], %s2360
          %2362 = dma.done %s2358, 5120
        $region80: #{context_branch_forward.6} parent=71 // pred_fallthru
          _
      $region72: #{context_branch_forward.6} parent=5 // pred_fallthru
        _
    $region6: #{context_branch_forward.6} parent=1 // loop_footer
      %s28 = sadd.s32 1, %s24
    $region7: #{context_branch_forward.6} parent=1 // loop_footer_branch
      %23 = sbr.rel target = $region3
    $region8: #{context_branch_forward.6} parent=1 // loop_exit
      _
    %2363 = vsyncpa [#allocation4], 1
    %s2364 = scalar_lea.sflag [#allocation4], 1
    %2365 = vsyncpa %s2364, 1
    %2366 = vsyncpa [#allocation7], 1
    %2367 = vsyncpa [#allocation10], 1
    %2368 = vsyncpa [#allocation5], 1
    %s2369 = scalar_lea.sflag [#allocation5], 1
    %2370 = vsyncpa %s2369, 1
    %2371 = vsyncpa [#allocation14], 1
    %s2372 = scalar_lea.sflag [#allocation14], 1
    %2373 = vsyncpa %s2372, 1

// kernel: context_branch_forward.7
$region0: #{context_branch_forward.7}
  #allocation0 [shape = 'u32[]', space=smem, size = 0x4, offset = 0x4, fixed_abs, tag = 'smem constant byte address 0x4 - core index']
  #allocation1 [shape = 'u32[144,128]{1,0:T(1,128)}', space=vmem, size = 0x12000, scoped, tag = 'internal scratch']
  %s0 = inlined_call_operand.hbm [shape: bf16[2,8,128], index: 0, kind: input, shape index: {}]
  %s1 = inlined_call_operand.hbm [shape: bf16[2,128,128], index: 1, kind: input, shape index: {}]
  %s2 = inlined_call_operand.hbm [shape: bf16[2,128,576], index: 2, kind: input, shape index: {}]
  %s3 = inlined_call_operand.hbm [shape: bf16[2,8,576], index: 3, kind: input, shape index: {}]
  %s4 = inlined_call_operand.hbm [shape: f32[1,128], index: 4, kind: input, shape index: {}]
  %s5 = inlined_call_operand.hbm [shape: bf16[576,128], index: 5, kind: input, shape index: {}]
  %s6 = inlined_call_operand.hbm [shape: f32[1,128], index: 6, kind: input, shape index: {}]
  %s7 = inlined_call_operand.hbm [shape: f32[1,128], index: 7, kind: input, shape index: {}]
  %s8 = inlined_call_operand.hbm [shape: f32[2,8,128], index: 8, kind: output, shape index: {}]
  %s9 = sld [smem:[#allocation0]]
  $region97: #{context_branch_forward.7} parent=0
    _
  %s11 = ssub.s32 1, %s9
  %s12 = scalar_select 0, %s11, %s9
  $region1: #{context_branch_forward.7} parent=0
    #allocation2 [shape = 'u8[4096]{0}', space=vmem, size = 0x1000, scoped, tag = 'input window, operand 0']
    #allocation3 [shape = 's32[2]{0}', space=sflag, size = 0x8, scoped, tag = 'scoped memory for context_branch_forward.7']
    #allocation4 [shape = 's32[2]{0}', space=sflag, size = 0x8, scoped, tag = 'scoped memory for context_branch_forward.7']
    #allocation5 [shape = 'u8[65536]{0}', space=vmem, size = 0x10000, scoped, tag = 'input window, operand 1']
    #allocation6 [shape = 's32[2]{0}', space=sflag, size = 0x8, scoped, tag = 'scoped memory for context_branch_forward.7']
    #allocation7 [shape = 'u8[327680]{0}', space=vmem, size = 0x50000, scoped, tag = 'input window, operand 2']
    #allocation8 [shape = 'u8[20480]{0}', space=vmem, size = 0x5000, scoped, tag = 'input window, operand 3']
    #allocation9 [shape = 's32[2]{0}', space=sflag, size = 0x8, scoped, tag = 'scoped memory for context_branch_forward.7']
    #allocation10 [shape = 'u8[512]{0}', space=vmem, size = 0x400, scoped, tag = 'input window, operand 4, single buffered']
    #allocation11 [shape = 'u8[147456]{0}', space=vmem, size = 0x24000, scoped, tag = 'input window, operand 5, single buffered']
    #allocation12 [shape = 's32[1]{0}', space=sflag, size = 0x4, scoped, tag = 'scoped memory for context_branch_forward.7']
    #allocation13 [shape = 'u8[512]{0}', space=vmem, size = 0x400, scoped, tag = 'input window, operand 6, single buffered']
    #allocation14 [shape = 'u8[512]{0}', space=vmem, size = 0x400, scoped, tag = 'input window, operand 7, single buffered']
    #allocation15 [shape = 's32[1]{0}', space=sflag, size = 0x4, scoped, tag = 'scoped memory for context_branch_forward.7']
    #allocation16 [shape = 'u8[8192]{0}', space=vmem, size = 0x2000, scoped, tag = 'output window, operand 0']
    %13 = vsyncpa [#allocation3], 0
    %s14 = scalar_lea.sflag [#allocation3], 1
    %15 = vsyncpa %s14, 0
    %16 = vsyncpa [#allocation6], 0
    %s17 = scalar_lea.sflag [#allocation6], 1
    %18 = vsyncpa %s17, 0
    %19 = vsyncpa [#allocation9], 0
    %s20 = scalar_lea.sflag [#allocation9], 1
    %21 = vsyncpa %s20, 0
    %22 = vsyncpa [#allocation12], 0
    %23 = vsyncpa [#allocation15], 0
    %24 = vsyncpa [#allocation4], 0
    %s25 = scalar_lea.sflag [#allocation4], 1
    %26 = vsyncpa %s25, 0
    loop: start=0, step=1, limit=4
    $region2: #{context_branch_forward.7} parent=1 // loop_pre_header
      _
    $region3: #{context_branch_forward.7} parent=1 // loop_header
      %s28 = sphi 0, %s32
      %p29 = scmp.ge.s32.totalorder %s28, 4
      %s35 = sphi 0, %s47
      %s36 = sphi 0, %s43
      %s37 = sphi 0, %s35
      %s38 = sphi 0, %s36
      %s39 = sphi 0, %s37
      %s40 = sphi 0, %s38
      %s52 = sphi 0, %s54
      %s55 = sphi 0, %s52
      %s56 = sphi 0, %s55
      %s72 = sphi 0, %s56
      %s78 = sphi 0, %s80
      %s81 = sphi 0, %s78
      %s82 = sphi 0, %s81
      %s98 = sphi 0, %s82
      %s104 = sphi 0, %s106
      %s107 = sphi 0, %s104
      %s108 = sphi 0, %s107
      %s124 = sphi 0, %s108
      %s132 = sphi 0, %s134
      %s135 = sphi 0, %s132
      %s136 = sphi 0, %s135
      %s152 = sphi 0, %s136
      %s156 = sphi 0, %s156
      %s158 = sphi 0, %s156
      %s159 = sphi 0, %s158
      %s173 = sphi 0, %s159
      %s177 = sphi 0, %s177
      %s179 = sphi 0, %s177
      %s180 = sphi 0, %s179
      %s194 = sphi 0, %s180
      %s198 = sphi 0, %s198
      %s200 = sphi 0, %s198
      %s201 = sphi 0, %s200
      %s215 = sphi 0, %s201
      %s219 = sphi 0, %s219
      %s221 = sphi 0, %s219
      %s222 = sphi 0, %s221
      %s236 = sphi 0, %s222
      %s244 = sphi 0, %s246
      %s247 = sphi 0, %s244
      %s248 = sphi 0, %s247
      %s264 = sphi 0, %s248
    $region4: #{context_branch_forward.7} parent=1 // loop_header_branch
      %31 = sbr.rel (%p29) target = $region8
    $region5: #{context_branch_forward.7} parent=1 // loop_body
      %s33 = ssub.s32 %s28, 1
      %s34 = ssub.s32 %s28, 2
      %s41 = sadd.s32 1, %s36
      %p42 = scmp.ge.s32.totalorder %s41, 1
      %s43 = scalar_select %p42, 0, %s41
      %s44 = sadd.s32 1, %s35
      %s45 = scalar_select %p42, %s44, %s35
      %p46 = scmp.ge.s32.totalorder %s45, 2
      %s47 = scalar_select %p46, 0, %s45
      %s48 = ssub.s32 %s35, %s47
      %s49 = ssub.s32 %s36, %s43
      %s50 = sor.u32 %s48, %s49
      %p51 = scmp.eq.s32.totalorder %s50, 0
      %s53 = sadd.s32 %s52, 1
      %s54 = scalar_select %p51, %s52, %s53
      %p57 = pneg %p51
      %p58 = scmp.eq.s32.totalorder %s28, 1
      %p59 = por %p57, %p58
      %p60 = scmp.ne.s32.totalorder %s52, %s55
      %p61 = scmp.eq.s32.totalorder %s28, 0
      %p62 = por %p60, %p61
      %p63 = scmp.ne.s32.totalorder %s52, %s55
      %p64 = scmp.eq.s32.totalorder %s33, 1
      %p65 = por %p63, %p64
      %p66 = scmp.ne.s32.totalorder %s55, %s56
      %p67 = scmp.eq.s32.totalorder %s33, 0
      %p68 = por %p66, %p67
      %p69 = scmp.ne.s32.totalorder %s55, %s56
      %p70 = scmp.eq.s32.totalorder %s34, 1
      %p71 = por %p69, %p70
      %p73 = scmp.ne.s32.totalorder %s56, %s72
      %p74 = scmp.eq.s32.totalorder %s34, 0
      %p75 = por %p73, %p74
      %s76 = ssub.s32 %s35, %s47
      %p77 = scmp.eq.s32.totalorder %s76, 0
      %s79 = sadd.s32 %s78, 1
      %s80 = scalar_select %p77, %s78, %s79
      %p83 = pneg %p77
      %p84 = scmp.eq.s32.totalorder %s28, 1
      %p85 = por %p83, %p84
      %p86 = scmp.ne.s32.totalorder %s78, %s81
      %p87 = scmp.eq.s32.totalorder %s28, 0
      %p88 = por %p86, %p87
      %p89 = scmp.ne.s32.totalorder %s78, %s81
      %p90 = scmp.eq.s32.totalorder %s33, 1
      %p91 = por %p89, %p90
      %p92 = scmp.ne.s32.totalorder %s81, %s82
      %p93 = scmp.eq.s32.totalorder %s33, 0
      %p94 = por %p92, %p93
      %p95 = scmp.ne.s32.totalorder %s81, %s82
      %p96 = scmp.eq.s32.totalorder %s34, 1
      %p97 = por %p95, %p96
      %p99 = scmp.ne.s32.totalorder %s82, %s98
      %p100 = scmp.eq.s32.totalorder %s34, 0
      %p101 = por %p99, %p100
      %s102 = ssub.s32 %s35, %s47
      %p103 = scmp.eq.s32.totalorder %s102, 0
      %s105 = sadd.s32 %s104, 1
      %s106 = scalar_select %p103, %s104, %s105
      %p109 = pneg %p103
      %p110 = scmp.eq.s32.totalorder %s28, 1
      %p111 = por %p109, %p110
      %p112 = scmp.ne.s32.totalorder %s104, %s107
      %p113 = scmp.eq.s32.totalorder %s28, 0
      %p114 = por %p112, %p113
      %p115 = scmp.ne.s32.totalorder %s104, %s107
      %p116 = scmp.eq.s32.totalorder %s33, 1
      %p117 = por %p115, %p116
      %p118 = scmp.ne.s32.totalorder %s107, %s108
      %p119 = scmp.eq.s32.totalorder %s33, 0
      %p120 = por %p118, %p119
      %p121 = scmp.ne.s32.totalorder %s107, %s108
      %p122 = scmp.eq.s32.totalorder %s34, 1
      %p123 = por %p121, %p122
      %p125 = scmp.ne.s32.totalorder %s108, %s124
      %p126 = scmp.eq.s32.totalorder %s34, 0
      %p127 = por %p125, %p126
      %s128 = ssub.s32 %s35, %s47
      %s129 = ssub.s32 %s36, %s43
      %s130 = sor.u32 %s128, %s129
      %p131 = scmp.eq.s32.totalorder %s130, 0
      %s133 = sadd.s32 %s132, 1
      %s134 = scalar_select %p131, %s132, %s133
      %p137 = pneg %p131
      %p138 = scmp.eq.s32.totalorder %s28, 1
      %p139 = por %p137, %p138
      %p140 = scmp.ne.s32.totalorder %s132, %s135
      %p141 = scmp.eq.s32.totalorder %s28, 0
      %p142 = por %p140, %p141
      %p143 = scmp.ne.s32.totalorder %s132, %s135
      %p144 = scmp.eq.s32.totalorder %s33, 1
      %p145 = por %p143, %p144
      %p146 = scmp.ne.s32.totalorder %s135, %s136
      %p147 = scmp.eq.s32.totalorder %s33, 0
      %p148 = por %p146, %p147
      %p149 = scmp.ne.s32.totalorder %s135, %s136
      %p150 = scmp.eq.s32.totalorder %s34, 1
      %p151 = por %p149, %p150
      %p153 = scmp.ne.s32.totalorder %s136, %s152
      %p154 = scmp.eq.s32.totalorder %s34, 0
      %p155 = por %p153, %p154
      %s157 = sadd.s32 %s156, 1
      %p160 = scmp.eq.s32.totalorder %s28, 1
      %p161 = scmp.ne.s32.totalorder %s156, %s158
      %p162 = scmp.eq.s32.totalorder %s28, 0
      %p163 = por %p161, %p162
      %p164 = scmp.ne.s32.totalorder %s156, %s158
      %p165 = scmp.eq.s32.totalorder %s33, 1
      %p166 = por %p164, %p165
      %p167 = scmp.ne.s32.totalorder %s158, %s159
      %p168 = scmp.eq.s32.totalorder %s33, 0
      %p169 = por %p167, %p168
      %p170 = scmp.ne.s32.totalorder %s158, %s159
      %p171 = scmp.eq.s32.totalorder %s34, 1
      %p172 = por %p170, %p171
      %p174 = scmp.ne.s32.totalorder %s159, %s173
      %p175 = scmp.eq.s32.totalorder %s34, 0
      %p176 = por %p174, %p175
      %s178 = sadd.s32 %s177, 1
      %p181 = scmp.eq.s32.totalorder %s28, 1
      %p182 = scmp.ne.s32.totalorder %s177, %s179
      %p183 = scmp.eq.s32.totalorder %s28, 0
      %p184 = por %p182, %p183
      %p185 = scmp.ne.s32.totalorder %s177, %s179
      %p186 = scmp.eq.s32.totalorder %s33, 1
      %p187 = por %p185, %p186
      %p188 = scmp.ne.s32.totalorder %s179, %s180
      %p189 = scmp.eq.s32.totalorder %s33, 0
      %p190 = por %p188, %p189
      %p191 = scmp.ne.s32.totalorder %s179, %s180
      %p192 = scmp.eq.s32.totalorder %s34, 1
      %p193 = por %p191, %p192
      %p195 = scmp.ne.s32.totalorder %s180, %s194
      %p196 = scmp.eq.s32.totalorder %s34, 0
      %p197 = por %p195, %p196
      %s199 = sadd.s32 %s198, 1
      %p202 = scmp.eq.s32.totalorder %s28, 1
      %p203 = scmp.ne.s32.totalorder %s198, %s200
      %p204 = scmp.eq.s32.totalorder %s28, 0
      %p205 = por %p203, %p204
      %p206 = scmp.ne.s32.totalorder %s198, %s200
      %p207 = scmp.eq.s32.totalorder %s33, 1
      %p208 = por %p206, %p207
      %p209 = scmp.ne.s32.totalorder %s200, %s201
      %p210 = scmp.eq.s32.totalorder %s33, 0
      %p211 = por %p209, %p210
      %p212 = scmp.ne.s32.totalorder %s200, %s201
      %p213 = scmp.eq.s32.totalorder %s34, 1
      %p214 = por %p212, %p213
      %p216 = scmp.ne.s32.totalorder %s201, %s215
      %p217 = scmp.eq.s32.totalorder %s34, 0
      %p218 = por %p216, %p217
      %s220 = sadd.s32 %s219, 1
      %p223 = scmp.eq.s32.totalorder %s28, 1
      %p224 = scmp.ne.s32.totalorder %s219, %s221
      %p225 = scmp.eq.s32.totalorder %s28, 0
      %p226 = por %p224, %p225
      %p227 = scmp.ne.s32.totalorder %s219, %s221
      %p228 = scmp.eq.s32.totalorder %s33, 1
      %p229 = por %p227, %p228
      %p230 = scmp.ne.s32.totalorder %s221, %s222
      %p231 = scmp.eq.s32.totalorder %s33, 0
      %p232 = por %p230, %p231
      %p233 = scmp.ne.s32.totalorder %s221, %s222
      %p234 = scmp.eq.s32.totalorder %s34, 1
      %p235 = por %p233, %p234
      %p237 = scmp.ne.s32.totalorder %s222, %s236
      %p238 = scmp.eq.s32.totalorder %s34, 0
      %p239 = por %p237, %p238
      %s240 = ssub.s32 %s35, %s47
      %s241 = ssub.s32 %s36, %s43
      %s242 = sor.u32 %s240, %s241
      %p243 = scmp.eq.s32.totalorder %s242, 0
      %s245 = sadd.s32 %s244, 1
      %s246 = scalar_select %p243, %s244, %s245
      %p249 = pneg %p243
      %p250 = scmp.eq.s32.totalorder %s28, 1
      %p251 = por %p249, %p250
      %p252 = scmp.ne.s32.totalorder %s244, %s247
      %p253 = scmp.eq.s32.totalorder %s28, 0
      %p254 = por %p252, %p253
      %p255 = scmp.ne.s32.totalorder %s244, %s247
      %p256 = scmp.eq.s32.totalorder %s33, 1
      %p257 = por %p255, %p256
      %p258 = scmp.ne.s32.totalorder %s247, %s248
      %p259 = scmp.eq.s32.totalorder %s33, 0
      %p260 = por %p258, %p259
      %p261 = scmp.ne.s32.totalorder %s247, %s248
      %p262 = scmp.eq.s32.totalorder %s34, 1
      %p263 = por %p261, %p262
      %p265 = scmp.ne.s32.totalorder %s248, %s264
      %p266 = scmp.eq.s32.totalorder %s34, 0
      %p267 = por %p265, %p266
      %p268 = scmp.le.s32.totalorder 1, %s28
      %p269 = scmp.lt.s32.totalorder %s28, 3
      %p270 = pnand %p268, %p269
      %p271 = pneg %p270
      // Predicated region
      $region9: #{context_branch_forward.7} parent=5 // pred_check
        _
      $region10: #{context_branch_forward.7} parent=5 // pred_check_branch
        %273 = sbr.rel (%p270) target = $region12
      $region11: #{context_branch_forward.7} parent=5 // pred_region
        %s274 = ssub.s32 %s28, 1
        // Predicated region
        $region13: #{context_branch_forward.7} parent=11 // pred_check
          %p275 = pneg %p169
        $region14: #{context_branch_forward.7} parent=11 // pred_check_branch
          %277 = sbr.rel (%p275) target = $region16
        $region15: #{context_branch_forward.7} parent=11 // pred_region
          %s279 = ssub.s32 16, 16
          %280 = vsyncadd [#allocation9], %s279
          %s282 = sshll.u32 [#allocation10], 4
          %s283 = int_to_ptr.vmem [resolvable:$true] %s282
          %285 = dma.hbm_to_vmem [thread:$0]  %s4, 16, %s283, [#allocation9]
        $region16: #{context_branch_forward.7} parent=11 // pred_fallthru
          _
        // Predicated region
        $region17: #{context_branch_forward.7} parent=11 // pred_check
          %p286 = pneg %p190
        $region18: #{context_branch_forward.7} parent=11 // pred_check_branch
          %288 = sbr.rel (%p286) target = $region20
        $region19: #{context_branch_forward.7} parent=11 // pred_region
          %s290 = ssub.s32 4608, 4608
          %291 = vsyncadd [#allocation12], %s290
          %s292 = sshll.u32 [#allocation11], 4
          %s293 = int_to_ptr.vmem [resolvable:$true] %s292
          %298 = dma.hbm_to_vmem [thread:$0]  %s5, 4608, %s293, [#allocation12], 64, 64, 4
        $region20: #{context_branch_forward.7} parent=11 // pred_fallthru
          _
        // Predicated region
        $region21: #{context_branch_forward.7} parent=11 // pred_check
          %p299 = pneg %p211
        $region22: #{context_branch_forward.7} parent=11 // pred_check_branch
          %301 = sbr.rel (%p299) target = $region24
        $region23: #{context_branch_forward.7} parent=11 // pred_region
          %s303 = ssub.s32 16, 16
          %304 = vsyncadd [#allocation12], %s303
          %s306 = sshll.u32 [#allocation13], 4
          %s307 = int_to_ptr.vmem [resolvable:$true] %s306
          %309 = dma.hbm_to_vmem [thread:$0]  %s6, 16, %s307, [#allocation12]
        $region24: #{context_branch_forward.7} parent=11 // pred_fallthru
          _
        // Predicated region
        $region25: #{context_branch_forward.7} parent=11 // pred_check
          %p310 = pneg %p232
        $region26: #{context_branch_forward.7} parent=11 // pred_check_branch
          %312 = sbr.rel (%p310) target = $region28
        $region27: #{context_branch_forward.7} parent=11 // pred_region
          %s314 = ssub.s32 16, 16
          %315 = vsyncadd [#allocation15], %s314
          %s317 = sshll.u32 [#allocation14], 4
          %s318 = int_to_ptr.vmem [resolvable:$true] %s317
          %320 = dma.hbm_to_vmem [thread:$0]  %s7, 16, %s318, [#allocation15]
        $region28: #{context_branch_forward.7} parent=11 // pred_fallthru
          _
      $region12: #{context_branch_forward.7} parent=5 // pred_fallthru
        _
      %p321 = scmp.lt.s32.totalorder %s28, 2
      // Predicated region
      $region29: #{context_branch_forward.7} parent=5 // pred_check
        %p322 = pneg %p321
      $region30: #{context_branch_forward.7} parent=5 // pred_check_branch
        %324 = sbr.rel (%p322) target = $region32
      $region31: #{context_branch_forward.7} parent=5 // pred_region
        // Predicated region
        $region33: #{context_branch_forward.7} parent=31 // pred_check
          %p325 = pneg %p62
        $region34: #{context_branch_forward.7} parent=31 // pred_check_branch
          %327 = sbr.rel (%p325) target = $region36
        $region35: #{context_branch_forward.7} parent=31 // pred_region
          %s328 = sand.u32 %s52, 1
          %s329 = scalar_lea.sflag [#allocation3], %s328
          %s330 = sand.u32 %s52, 1
          %s331 = smul.addr %s330, 4
          %s332 = scalar_lea.vmem [#allocation2], %s331
          %s334 = ssub.s32 64, 64
          %335 = vsyncadd %s329, %s334
          %s336 = sadd.s32 %s36, %s35
          %s337 = smul.addr %s336, 64
          %s338 = scalar_lea.hbm %s0, %s337
          %s340 = sshll.u32 %s332, 4
          %s341 = int_to_ptr.vmem [resolvable:$true] %s340
          %343 = dma.hbm_to_vmem [thread:$0]  %s338, 64, %s341, %s329
        $region36: #{context_branch_forward.7} parent=31 // pred_fallthru
          _
        // Predicated region
        $region37: #{context_branch_forward.7} parent=31 // pred_check
          %p344 = pneg %p88
        $region38: #{context_branch_forward.7} parent=31 // pred_check_branch
          %346 = sbr.rel (%p344) target = $region40
        $region39: #{context_branch_forward.7} parent=31 // pred_region
          %s347 = sand.u32 %s28, 1
          %s348 = scalar_lea.sflag [#allocation6], %s347
          %s349 = sand.u32 %s78, 1
          %s350 = smul.addr %s349, 64
          %s351 = scalar_lea.vmem [#allocation5], %s350
          %s353 = ssub.s32 1024, 1024
          %354 = vsyncadd %s348, %s353
          %s355 = smul.addr %s35, 16
          %s356 = smul.addr %s355, 64
          %s357 = scalar_lea.hbm %s1, %s356
          %s358 = sshll.u32 %s351, 4
          %s359 = int_to_ptr.vmem [resolvable:$true] %s358
          %364 = dma.hbm_to_vmem [thread:$0]  %s357, 1024, %s359, %s348, 64, 64, 4
        $region40: #{context_branch_forward.7} parent=31 // pred_fallthru
          _
        // Predicated region
        $region41: #{context_branch_forward.7} parent=31 // pred_check
          %p365 = pneg %p114
        $region42: #{context_branch_forward.7} parent=31 // pred_check_branch
          %367 = sbr.rel (%p365) target = $region44
        $region43: #{context_branch_forward.7} parent=31 // pred_region
          %s368 = sand.u32 %s28, 1
          %s369 = scalar_lea.sflag [#allocation6], %s368
          %s370 = sand.u32 %s104, 1
          %s371 = smul.addr %s370, 320
          %s372 = scalar_lea.vmem [#allocation7], %s371
          %s374 = ssub.s32 5120, 5120
          %375 = vsyncadd %s369, %s374
          %s376 = smul.addr %s35, 80
          %s377 = smul.addr %s376, 64
          %s378 = scalar_lea.hbm %s2, %s377
          %s379 = sshll.u32 %s372, 4
          %s380 = int_to_ptr.vmem [resolvable:$true] %s379
          %385 = dma.hbm_to_vmem [thread:$0]  %s378, 5120, %s380, %s369, 320, 320, 20
        $region44: #{context_branch_forward.7} parent=31 // pred_fallthru
          _
        // Predicated region
        $region45: #{context_branch_forward.7} parent=31 // pred_check
          %p386 = pneg %p142
        $region46: #{context_branch_forward.7} parent=31 // pred_check_branch
          %388 = sbr.rel (%p386) target = $region48
        $region47: #{context_branch_forward.7} parent=31 // pred_region
          %s389 = sand.u32 %s28, 1
          %s390 = scalar_lea.sflag [#allocation9], %s389
          %s391 = sand.u32 %s132, 1
          %s392 = smul.addr %s391, 20
          %s393 = scalar_lea.vmem [#allocation8], %s392
          %s395 = ssub.s32 320, 320
          %396 = vsyncadd %s390, %s395
          %s397 = smul.addr %s36, 5
          %s398 = smul.addr %s35, 5
          %s399 = sadd.s32 %s397, %s398
          %s400 = smul.addr %s399, 64
          %s401 = scalar_lea.hbm %s3, %s400
          %s403 = sshll.u32 %s393, 4
          %s404 = int_to_ptr.vmem [resolvable:$true] %s403
          %406 = dma.hbm_to_vmem [thread:$0]  %s401, 320, %s404, %s390
        $region48: #{context_branch_forward.7} parent=31 // pred_fallthru
          _
      $region32: #{context_branch_forward.7} parent=5 // pred_fallthru
        _
      %p407 = scmp.le.s32.totalorder 1, %s28
      %p408 = scmp.lt.s32.totalorder %s28, 3
      %p409 = pnand %p407, %p408
      %p410 = pneg %p409
      // Predicated region
      $region49: #{context_branch_forward.7} parent=5 // pred_check
        _
      $region50: #{context_branch_forward.7} parent=5 // pred_check_branch
        %412 = sbr.rel (%p409) target = $region52
      $region51: #{context_branch_forward.7} parent=5 // pred_region
        %s413 = ssub.s32 %s28, 1
        %s414 = sand.u32 %s55, 1
        %s415 = scalar_lea.sflag [#allocation3], %s414
        %s416 = sand.u32 %s55, 1
        %s417 = smul.addr %s416, 4
        %s418 = scalar_lea.vmem [#allocation2], %s417
        // Predicated region
        $region53: #{context_branch_forward.7} parent=51 // pred_check
          %p419 = pneg %p68
        $region54: #{context_branch_forward.7} parent=51 // pred_check_branch
          %421 = sbr.rel (%p419) target = $region56
        $region55: #{context_branch_forward.7} parent=51 // pred_region
          %422 = dma.done %s415, 64
        $region56: #{context_branch_forward.7} parent=51 // pred_fallthru
          _
        %s423 = sand.u32 %s33, 1
        %s424 = scalar_lea.sflag [#allocation6], %s423
        %s425 = sand.u32 %s81, 1
        %s426 = smul.addr %s425, 64
        %s427 = scalar_lea.vmem [#allocation5], %s426
        // Predicated region
        $region57: #{context_branch_forward.7} parent=51 // pred_check
          %p428 = pneg %p94
        $region58: #{context_branch_forward.7} parent=51 // pred_check_branch
          %430 = sbr.rel (%p428) target = $region60
        $region59: #{context_branch_forward.7} parent=51 // pred_region
          %431 = dma.done %s424, 1024
        $region60: #{context_branch_forward.7} parent=51 // pred_fallthru
          _
        %s432 = sand.u32 %s33, 1
        %s433 = scalar_lea.sflag [#allocation6], %s432
        %s434 = sand.u32 %s107, 1
        %s435 = smul.addr %s434, 320
        %s436 = scalar_lea.vmem [#allocation7], %s435
        // Predicated region
        $region61: #{context_branch_forward.7} parent=51 // pred_check
          %p437 = pneg %p120
        $region62: #{context_branch_forward.7} parent=51 // pred_check_branch
          %439 = sbr.rel (%p437) target = $region64
        $region63: #{context_branch_forward.7} parent=51 // pred_region
          %440 = dma.done %s433, 5120
        $region64: #{context_branch_forward.7} parent=51 // pred_fallthru
          _
        %s441 = sand.u32 %s33, 1
        %s442 = scalar_lea.sflag [#allocation9], %s441
        %s443 = sand.u32 %s135, 1
        %s444 = smul.addr %s443, 20
        %s445 = scalar_lea.vmem [#allocation8], %s444
        // Predicated region
        $region65: #{context_branch_forward.7} parent=51 // pred_check
          %p446 = pneg %p148
        $region66: #{context_branch_forward.7} parent=51 // pred_check_branch
          %448 = sbr.rel (%p446) target = $region68
        $region67: #{context_branch_forward.7} parent=51 // pred_region
          %449 = dma.done %s442, 320
        $region68: #{context_branch_forward.7} parent=51 // pred_fallthru
          _
        // Predicated region
        $region69: #{context_branch_forward.7} parent=51 // pred_check
          %p450 = pneg %p169
        $region70: #{context_branch_forward.7} parent=51 // pred_check_branch
          %452 = sbr.rel (%p450) target = $region72
        $region71: #{context_branch_forward.7} parent=51 // pred_region
          %453 = dma.done [#allocation9], 16
        $region72: #{context_branch_forward.7} parent=51 // pred_fallthru
          _
        // Predicated region
        $region73: #{context_branch_forward.7} parent=51 // pred_check
          %p454 = pneg %p190
        $region74: #{context_branch_forward.7} parent=51 // pred_check_branch
          %456 = sbr.rel (%p454) target = $region76
        $region75: #{context_branch_forward.7} parent=51 // pred_region
          %457 = dma.done [#allocation12], 4608
        $region76: #{context_branch_forward.7} parent=51 // pred_fallthru
          _
        // Predicated region
        $region77: #{context_branch_forward.7} parent=51 // pred_check
          %p458 = pneg %p211
        $region78: #{context_branch_forward.7} parent=51 // pred_check_branch
          %460 = sbr.rel (%p458) target = $region80
        $region79: #{context_branch_forward.7} parent=51 // pred_region
          %461 = dma.done [#allocation12], 16
        $region80: #{context_branch_forward.7} parent=51 // pred_fallthru
          _
        // Predicated region
        $region81: #{context_branch_forward.7} parent=51 // pred_check
          %p462 = pneg %p232
        $region82: #{context_branch_forward.7} parent=51 // pred_check_branch
          %464 = sbr.rel (%p462) target = $region84
        $region83: #{context_branch_forward.7} parent=51 // pred_region
          %465 = dma.done [#allocation15], 16
        $region84: #{context_branch_forward.7} parent=51 // pred_fallthru
          _
        %s466 = sand.u32 %s55, 1
        %s467 = scalar_lea.sflag [#allocation3], %s466
        %s468 = sand.u32 %s55, 1
        %s469 = smul.addr %s468, 4
        %s470 = scalar_lea.vmem [#allocation2], %s469
        %p471 = pneg %p68
        %p472 = pneg %p65
        %s473 = sand.u32 %s33, 1
        %s474 = scalar_lea.sflag [#allocation6], %s473
        %s475 = sand.u32 %s81, 1
        %s476 = smul.addr %s475, 64
        %s477 = scalar_lea.vmem [#allocation5], %s476
        %p478 = pneg %p94
        %p479 = pneg %p91
        %s480 = sand.u32 %s33, 1
        %s481 = scalar_lea.sflag [#allocation6], %s480
        %s482 = sand.u32 %s107, 1
        %s483 = smul.addr %s482, 320
        %s484 = scalar_lea.vmem [#allocation7], %s483
        %p485 = pneg %p120
        %p486 = pneg %p117
        %s487 = sand.u32 %s33, 1
        %s488 = scalar_lea.sflag [#allocation9], %s487
        %s489 = sand.u32 %s135, 1
        %s490 = smul.addr %s489, 20
        %s491 = scalar_lea.vmem [#allocation8], %s490
        %p492 = pneg %p148
        %p493 = pneg %p145
        %p494 = pneg %p169
        %p495 = pneg %p166
        %p496 = pneg %p190
        %p497 = pneg %p187
        %p498 = pneg %p211
        %p499 = pneg %p208
        %p500 = pneg %p232
        %p501 = pneg %p229
        %p502 = pneg %p260
        %p503 = pneg %p257
        %s504 = sand.u32 %s247, 1
        %s505 = scalar_lea.sflag [#allocation4], %s504
        %s506 = sand.u32 %s247, 1
        %s507 = smul.addr %s506, 8
        %s508 = scalar_lea.vmem [#allocation16], %s507
        %v510 = vld [vmem:[%s418] sm:$0xf]
        %v511 = vld [vmem:[%s427] sm:$0xf]
        %v512 = vld [vmem:[%s427 + $0x4] sm:$0xf]
        %v513 = vld [vmem:[%s427 + $0x8] sm:$0xf]
        %v514 = vld [vmem:[%s427 + $0xc] sm:$0xf]
        %v515 = vld [vmem:[%s427 + $0x10] sm:$0xf]
        %v516 = vld [vmem:[%s427 + $0x14] sm:$0xf]
        %v517 = vld [vmem:[%s427 + $0x18] sm:$0xf]
        %v518 = vld [vmem:[%s427 + $0x1c] sm:$0xf]
        %v519 = vld [vmem:[%s427 + $0x20] sm:$0xf]
        %v520 = vld [vmem:[%s427 + $0x24] sm:$0xf]
        %v521 = vld [vmem:[%s427 + $0x28] sm:$0xf]
        %v522 = vld [vmem:[%s427 + $0x2c] sm:$0xf]
        %v523 = vld [vmem:[%s427 + $0x30] sm:$0xf]
        %v524 = vld [vmem:[%s427 + $0x34] sm:$0xf]
        %v525 = vld [vmem:[%s427 + $0x38] sm:$0xf]
        %v526 = vld [vmem:[%s427 + $0x3c] sm:$0xf]
        %v527 = vld [vmem:[%s436] sm:$0xff]
        %v528 = vld [vmem:[%s436 + $0x8] sm:$0xff]
        %v529 = vld [vmem:[%s436 + $0x10] sm:$0xf]
        %v530 = vld [vmem:[%s436 + $0x14] sm:$0xff]
        %v531 = vld [vmem:[%s436 + $0x1c] sm:$0xff]
        %v532 = vld [vmem:[%s436 + $0x24] sm:$0xf]
        %v533 = vld [vmem:[%s436 + $0x28] sm:$0xff]
        %v534 = vld [vmem:[%s436 + $0x30] sm:$0xff]
        %v535 = vld [vmem:[%s436 + $0x38] sm:$0xf]
        %v536 = vld [vmem:[%s436 + $0x3c] sm:$0xff]
        %v537 = vld [vmem:[%s436 + $0x44] sm:$0xff]
        %v538 = vld [vmem:[%s436 + $0x4c] sm:$0xf]
        %v539 = vld [vmem:[%s436 + $0x50] sm:$0xff]
        %v540 = vld [vmem:[%s436 + $0x58] sm:$0xff]
        %v541 = vld [vmem:[%s436 + $0x60] sm:$0xf]
        %v542 = vld [vmem:[%s436 + $0x64] sm:$0xff]
        %v543 = vld [vmem:[%s436 + $0x6c] sm:$0xff]
        %v544 = vld [vmem:[%s436 + $0x74] sm:$0xf]
        %v545 = vld [vmem:[%s436 + $0x78] sm:$0xff]
        %v546 = vld [vmem:[%s436 + $0x80] sm:$0xff]
        %v547 = vld [vmem:[%s436 + $0x88] sm:$0xf]
        %v548 = vld [vmem:[%s436 + $0x8c] sm:$0xff]
        %v549 = vld [vmem:[%s436 + $0x94] sm:$0xff]
        %v550 = vld [vmem:[%s436 + $0x9c] sm:$0xf]
        %v551 = vld [vmem:[%s436 + $0xa0] sm:$0xff]
        %v552 = vld [vmem:[%s436 + $0xa8] sm:$0xff]
        %v553 = vld [vmem:[%s436 + $0xb0] sm:$0xf]
        %v554 = vld [vmem:[%s436 + $0xb4] sm:$0xff]
        %v555 = vld [vmem:[%s436 + $0xbc] sm:$0xff]
        %v556 = vld [vmem:[%s436 + $0xc4] sm:$0xf]
        %v557 = vld [vmem:[%s436 + $0xc8] sm:$0xff]
        %v558 = vld [vmem:[%s436 + $0xd0] sm:$0xff]
        %v559 = vld [vmem:[%s436 + $0xd8] sm:$0xf]
        %v560 = vld [vmem:[%s436 + $0xdc] sm:$0xff]
        %v561 = vld [vmem:[%s436 + $0xe4] sm:$0xff]
        %v562 = vld [vmem:[%s436 + $0xec] sm:$0xf]
        %v563 = vld [vmem:[%s436 + $0xf0] sm:$0xff]
        %v564 = vld [vmem:[%s436 + $0xf8] sm:$0xff]
        %v565 = vld [vmem:[%s436 + $0x100] sm:$0xf]
        %v566 = vld [vmem:[%s436 + $0x104] sm:$0xff]
        %v567 = vld [vmem:[%s436 + $0x10c] sm:$0xff]
        %v568 = vld [vmem:[%s436 + $0x114] sm:$0xf]
        %v569 = vld [vmem:[%s436 + $0x118] sm:$0xff]
        %v570 = vld [vmem:[%s436 + $0x120] sm:$0xff]
        %v571 = vld [vmem:[%s436 + $0x128] sm:$0xf]
        %v572 = vld [vmem:[%s436 + $0x12c] sm:$0xff]
        %v573 = vld [vmem:[%s436 + $0x134] sm:$0xff]
        %v574 = vld [vmem:[%s436 + $0x13c] sm:$0xf]
        %v575 = vld [vmem:[#allocation10] sm:$0x1]
        %v577 = vlaneseq
        %v578 = vshrl.u32 %v577, 7
        %v579 = vsub.s32 0, %v578
        %v580 = vrot.slane %v575, %v579
        %v598 = vunpack.c.l.b16 %v511
        %v599 = vunpack.c.l.b16 %v512
        %v600 = vunpack.c.l.b16 %v513
        %v601 = vunpack.c.l.b16 %v514
        %v602 = vunpack.c.l.b16 %v515
        %v603 = vunpack.c.l.b16 %v516
        %v604 = vunpack.c.l.b16 %v517
        %v605 = vunpack.c.l.b16 %v518
        %v606 = vunpack.c.l.b16 %v519
        %v607 = vunpack.c.l.b16 %v520
        %v608 = vunpack.c.l.b16 %v521
        %v609 = vunpack.c.l.b16 %v522
        %v610 = vunpack.c.l.b16 %v523
        %v611 = vunpack.c.l.b16 %v524
        %v612 = vunpack.c.l.b16 %v525
        %v613 = vunpack.c.l.b16 %v526
        %v614 = vpack.c.b16 %v599, %v598
        %v615 = vpack.c.b16 %v601, %v600
        %v616 = vpack.c.b16 %v603, %v602
        %v617 = vpack.c.b16 %v605, %v604
        %v618 = vpack.c.b16 %v607, %v606
        %v619 = vpack.c.b16 %v609, %v608
        %v620 = vpack.c.b16 %v611, %v610
        %v621 = vpack.c.b16 %v613, %v612
        %630 = vmatprep.subr.bf16.mxu0 0
        %631 = vmatpush1.bf16.xpose.msra.mxu0 %v614
        %632 = vmatprep.subr.bf16.mxu0 0
        %633 = vmatpush1.bf16.xpose.msra.mxu0 %v615
        %634 = vmatprep.subr.bf16.mxu0 0
        %635 = vmatpush1.bf16.xpose.msra.mxu0 %v616
        %636 = vmatprep.subr.bf16.mxu0 0
        %637 = vmatpush1.bf16.xpose.msra.mxu0 %v617
        %638 = vmatprep.subr.bf16.mxu0 0
        %639 = vmatpush1.bf16.xpose.msra.mxu0 %v618
        %640 = vmatprep.subr.bf16.mxu0 0
        %641 = vmatpush1.bf16.xpose.msra.mxu0 %v619
        %642 = vmatprep.subr.bf16.mxu0 0
        %643 = vmatpush1.bf16.xpose.msra.mxu0 %v620
        %644 = vmatprep.subr.bf16.mxu0 0
        %645 = vmatpush1.bf16.xpose.msra.mxu0 %v621
        %646 = vmatprep.subr.bf16.mxu0 0
        %647 = vmatpush1.bf16.xpose.msra.mxu0 0
        %648 = vmatprep.subr.bf16.mxu0 0
        %649 = vmatpush1.bf16.xpose.msra.mxu0 0
        %650 = vmatprep.subr.bf16.mxu0 0
        %651 = vmatpush1.bf16.xpose.msra.mxu0 0
        %652 = vmatprep.subr.bf16.mxu0 0
        %653 = vmatpush1.bf16.xpose.msra.mxu0 0
        %654 = vmatprep.subr.bf16.mxu0 0
        %655 = vmatpush1.bf16.xpose.msra.mxu0 0
        %656 = vmatprep.subr.bf16.mxu0 0
        %657 = vmatpush1.bf16.xpose.msra.mxu0 0
        %658 = vmatprep.subr.bf16.mxu0 0
        %659 = vmatpush1.bf16.xpose.msra.mxu0 0
        %660 = vmatprep.subr.bf16.mxu0 0
        %661 = vmatpush1.bf16.xpose.msra.mxu0 0
        %662 = vmatprep.mubr.bf16.mxu0 0
        %663 = vmatmul.mubr.bf16.gmra.mrb[0].mxu0 %v510
        %v664 = vpop.f32.mrb[0].mxu0
        %v665 = vadd.f32 %v580, %v664
        %v666 = vpop.f32.mrb[0].mxu0
        %v667 = vpop.f32.mrb[0].mxu0
        %v668 = vpop.f32.mrb[0].mxu0
        %669 = vdwg.mxu0
        %670 = vmax.xlane.f32.xlu0 %v665
        %v671 = vpop.xlane.xlu0 %670
        %v672 = vsub.f32 %v665, %v671
        %v673 = vmul.f32 %v672, 1.442695
        %v674 = vpow.pop %v673
        %675 = vadd.xlane.f32.xlu0 %v674
        %v676 = vpop.xlane.xlu0 %675
        %v677 = vrcp.pop %v676
        %v678 = vmul.f32 %v674, %v677
        %v679 = vpack.c.bf16 %v678, %v678
        %v728 = vunpack.c.l.b16 %v527
        %v729 = vunpack.c.h.b16 %v527
        %v730 = vunpack.c.l.b16 %v528
        %v731 = vunpack.c.h.b16 %v528
        %v732 = vunpack.c.l.b16 %v529
        %v733 = vunpack.c.l.b16 %v530
        %v734 = vunpack.c.h.b16 %v530
        %v735 = vunpack.c.l.b16 %v531
        %v736 = vunpack.c.h.b16 %v531
        %v737 = vunpack.c.l.b16 %v532
        %v738 = vunpack.c.l.b16 %v533
        %v739 = vunpack.c.h.b16 %v533
        %v740 = vunpack.c.l.b16 %v534
        %v741 = vunpack.c.h.b16 %v534
        %v742 = vunpack.c.l.b16 %v535
        %v743 = vunpack.c.l.b16 %v536
        %v744 = vunpack.c.h.b16 %v536
        %v745 = vunpack.c.l.b16 %v537
        %v746 = vunpack.c.h.b16 %v537
        %v747 = vunpack.c.l.b16 %v538
        %v748 = vunpack.c.l.b16 %v539
        %v749 = vunpack.c.h.b16 %v539
        %v750 = vunpack.c.l.b16 %v540
        %v751 = vunpack.c.h.b16 %v540
        %v752 = vunpack.c.l.b16 %v541
        %v753 = vunpack.c.l.b16 %v542
        %v754 = vunpack.c.h.b16 %v542
        %v755 = vunpack.c.l.b16 %v543
        %v756 = vunpack.c.h.b16 %v543
        %v757 = vunpack.c.l.b16 %v544
        %v758 = vunpack.c.l.b16 %v545
        %v759 = vunpack.c.h.b16 %v545
        %v760 = vunpack.c.l.b16 %v546
        %v761 = vunpack.c.h.b16 %v546
        %v762 = vunpack.c.l.b16 %v547
        %v763 = vunpack.c.l.b16 %v548
        %v764 = vunpack.c.h.b16 %v548
        %v765 = vunpack.c.l.b16 %v549
        %v766 = vunpack.c.h.b16 %v549
        %v767 = vunpack.c.l.b16 %v550
        %v768 = vunpack.c.l.b16 %v551
        %v769 = vunpack.c.h.b16 %v551
        %v770 = vunpack.c.l.b16 %v552
        %v771 = vunpack.c.h.b16 %v552
        %v772 = vunpack.c.l.b16 %v553
        %v773 = vunpack.c.l.b16 %v554
        %v774 = vunpack.c.h.b16 %v554
        %v775 = vunpack.c.l.b16 %v555
        %v776 = vunpack.c.h.b16 %v555
        %v777 = vunpack.c.l.b16 %v556
        %v778 = vunpack.c.l.b16 %v557
        %v779 = vunpack.c.h.b16 %v557
        %v780 = vunpack.c.l.b16 %v558
        %v781 = vunpack.c.h.b16 %v558
        %v782 = vunpack.c.l.b16 %v559
        %v783 = vunpack.c.l.b16 %v560
        %v784 = vunpack.c.h.b16 %v560
        %v785 = vunpack.c.l.b16 %v561
        %v786 = vunpack.c.h.b16 %v561
        %v787 = vunpack.c.l.b16 %v562
        %v788 = vunpack.c.l.b16 %v563
        %v789 = vunpack.c.h.b16 %v563
        %v790 = vunpack.c.l.b16 %v564
        %v791 = vunpack.c.h.b16 %v564
        %v792 = vunpack.c.l.b16 %v565
        %v793 = vunpack.c.l.b16 %v566
        %v794 = vunpack.c.h.b16 %v566
        %v795 = vunpack.c.l.b16 %v567
        %v796 = vunpack.c.h.b16 %v567
        %v797 = vunpack.c.l.b16 %v568
        %v798 = vunpack.c.l.b16 %v569
        %v799 = vunpack.c.h.b16 %v569
        %v800 = vunpack.c.l.b16 %v570
        %v801 = vunpack.c.h.b16 %v570
        %v802 = vunpack.c.l.b16 %v571
        %v803 = vunpack.c.l.b16 %v572
        %v804 = vunpack.c.h.b16 %v572
        %v805 = vunpack.c.l.b16 %v573
        %v806 = vunpack.c.h.b16 %v573
        %v807 = vunpack.c.l.b16 %v574
        %v808 = vpack.c.b16 %v733, %v728
        %v809 = vpack.c.b16 %v734, %v729
        %v810 = vpack.c.b16 %v735, %v730
        %v811 = vpack.c.b16 %v736, %v731
        %v812 = vpack.c.b16 %v737, %v732
        %v813 = vpack.c.b16 %v743, %v738
        %v814 = vpack.c.b16 %v744, %v739
        %v815 = vpack.c.b16 %v745, %v740
        %v816 = vpack.c.b16 %v746, %v741
        %v817 = vpack.c.b16 %v747, %v742
        %v818 = vpack.c.b16 %v753, %v748
        %v819 = vpack.c.b16 %v754, %v749
        %v820 = vpack.c.b16 %v755, %v750
        %v821 = vpack.c.b16 %v756, %v751
        %v822 = vpack.c.b16 %v757, %v752
        %v823 = vpack.c.b16 %v763, %v758
        %v824 = vpack.c.b16 %v764, %v759
        %v825 = vpack.c.b16 %v765, %v760
        %v826 = vpack.c.b16 %v766, %v761
        %v827 = vpack.c.b16 %v767, %v762
        %v828 = vpack.c.b16 %v773, %v768
        %v829 = vpack.c.b16 %v774, %v769
        %v830 = vpack.c.b16 %v775, %v770
        %v831 = vpack.c.b16 %v776, %v771
        %v832 = vpack.c.b16 %v777, %v772
        %v833 = vpack.c.b16 %v783, %v778
        %v834 = vpack.c.b16 %v784, %v779
        %v835 = vpack.c.b16 %v785, %v780
        %v836 = vpack.c.b16 %v786, %v781
        %v837 = vpack.c.b16 %v787, %v782
        %v838 = vpack.c.b16 %v793, %v788
        %v839 = vpack.c.b16 %v794, %v789
        %v840 = vpack.c.b16 %v795, %v790
        %v841 = vpack.c.b16 %v796, %v791
        %v842 = vpack.c.b16 %v797, %v792
        %v843 = vpack.c.b16 %v803, %v798
        %v844 = vpack.c.b16 %v804, %v799
        %v845 = vpack.c.b16 %v805, %v800
        %v846 = vpack.c.b16 %v806, %v801
        %v847 = vpack.c.b16 %v807, %v802
        %888 = vmatprep.subr.bf16.mxu0 %v809
        %889 = vmatpush1.bf16.msra.mxu0 %v808
        %890 = vmatprep.subr.bf16.mxu0 %v814
        %891 = vmatpush1.bf16.msra.mxu0 %v813
        %892 = vmatprep.subr.bf16.mxu0 %v819
        %893 = vmatpush1.bf16.msra.mxu0 %v818
        %894 = vmatprep.subr.bf16.mxu0 %v824
        %895 = vmatpush1.bf16.msra.mxu0 %v823
        %896 = vmatprep.subr.bf16.mxu0 %v829
        %897 = vmatpush1.bf16.msra.mxu0 %v828
        %898 = vmatprep.subr.bf16.mxu0 %v834
        %899 = vmatpush1.bf16.msra.mxu0 %v833
        %900 = vmatprep.subr.bf16.mxu0 %v839
        %901 = vmatpush1.bf16.msra.mxu0 %v838
        %902 = vmatprep.subr.bf16.mxu0 %v844
        %903 = vmatpush1.bf16.msra.mxu0 %v843
        %904 = vmatprep.subr.bf16.mxu0 0
        %905 = vmatpush1.bf16.msra.mxu0 0
        %906 = vmatprep.subr.bf16.mxu0 0
        %907 = vmatpush1.bf16.msra.mxu0 0
        %908 = vmatprep.subr.bf16.mxu0 0
        %909 = vmatpush1.bf16.msra.mxu0 0
        %910 = vmatprep.subr.bf16.mxu0 0
        %911 = vmatpush1.bf16.msra.mxu0 0
        %912 = vmatprep.subr.bf16.mxu0 0
        %913 = vmatpush1.bf16.msra.mxu0 0
        %914 = vmatprep.subr.bf16.mxu0 0
        %915 = vmatpush1.bf16.msra.mxu0 0
        %916 = vmatprep.subr.bf16.mxu0 0
        %917 = vmatpush1.bf16.msra.mxu0 0
        %918 = vmatprep.subr.bf16.mxu0 0
        %919 = vmatpush1.bf16.msra.mxu0 0
        %920 = vmatprep.mubr.bf16.mxu0 0
        %921 = vmatmul.mubr.bf16.gmra.mrb[0].mxu0 %v679
        %v922 = vpop.f32.mrb[0].mxu0
        %v923 = vadd.f32 0.0, %v922
        %v924 = vpop.f32.mrb[0].mxu0
        %v925 = vadd.f32 0.0, %v924
        %v926 = vpop.f32.mrb[0].mxu0
        %v927 = vpop.f32.mrb[0].mxu0
        %928 = vdwg.mxu0
        %929 = vmatprep.subr.bf16.mxu0 %v811
        %930 = vmatpush1.bf16.msra.mxu0 %v810
        %931 = vmatprep.subr.bf16.mxu0 %v816
        %932 = vmatpush1.bf16.msra.mxu0 %v815
        %933 = vmatprep.subr.bf16.mxu0 %v821
        %934 = vmatpush1.bf16.msra.mxu0 %v820
        %935 = vmatprep.subr.bf16.mxu0 %v826
        %936 = vmatpush1.bf16.msra.mxu0 %v825
        %937 = vmatprep.subr.bf16.mxu0 %v831
        %938 = vmatpush1.bf16.msra.mxu0 %v830
        %939 = vmatprep.subr.bf16.mxu0 %v836
        %940 = vmatpush1.bf16.msra.mxu0 %v835
        %941 = vmatprep.subr.bf16.mxu0 %v841
        %942 = vmatpush1.bf16.msra.mxu0 %v840
        %943 = vmatprep.subr.bf16.mxu0 %v846
        %944 = vmatpush1.bf16.msra.mxu0 %v845
        %945 = vmatprep.subr.bf16.mxu0 0
        %946 = vmatpush1.bf16.msra.mxu0 0
        %947 = vmatprep.subr.bf16.mxu0 0
        %948 = vmatpush1.bf16.msra.mxu0 0
        %949 = vmatprep.subr.bf16.mxu0 0
        %950 = vmatpush1.bf16.msra.mxu0 0
        %951 = vmatprep.subr.bf16.mxu0 0
        %952 = vmatpush1.bf16.msra.mxu0 0
        %953 = vmatprep.subr.bf16.mxu0 0
        %954 = vmatpush1.bf16.msra.mxu0 0
        %955 = vmatprep.subr.bf16.mxu0 0
        %956 = vmatpush1.bf16.msra.mxu0 0
        %957 = vmatprep.subr.bf16.mxu0 0
        %958 = vmatpush1.bf16.msra.mxu0 0
        %959 = vmatprep.subr.bf16.mxu0 0
        %960 = vmatpush1.bf16.msra.mxu0 0
        %961 = vmatprep.mubr.bf16.mxu0 0
        %962 = vmatmul.mubr.bf16.gmra.mrb[0].mxu0 %v679
        %v963 = vpop.f32.mrb[0].mxu0
        %v964 = vadd.f32 0.0, %v963
        %v965 = vpop.f32.mrb[0].mxu0
        %v966 = vadd.f32 0.0, %v965
        %v967 = vpop.f32.mrb[0].mxu0
        %v968 = vpop.f32.mrb[0].mxu0
        %969 = vdwg.mxu0
        %970 = vmatprep.subr.bf16.mxu0 0
        %971 = vmatpush1.bf16.msra.mxu0 %v812
        %972 = vmatprep.subr.bf16.mxu0 0
        %973 = vmatpush1.bf16.msra.mxu0 %v817
        %974 = vmatprep.subr.bf16.mxu0 0
        %975 = vmatpush1.bf16.msra.mxu0 %v822
        %976 = vmatprep.subr.bf16.mxu0 0
        %977 = vmatpush1.bf16.msra.mxu0 %v827
        %978 = vmatprep.subr.bf16.mxu0 0
        %979 = vmatpush1.bf16.msra.mxu0 %v832
        %980 = vmatprep.subr.bf16.mxu0 0
        %981 = vmatpush1.bf16.msra.mxu0 %v837
        %982 = vmatprep.subr.bf16.mxu0 0
        %983 = vmatpush1.bf16.msra.mxu0 %v842
        %984 = vmatprep.subr.bf16.mxu0 0
        %985 = vmatpush1.bf16.msra.mxu0 %v847
        %986 = vmatprep.subr.bf16.mxu0 0
        %987 = vmatpush1.bf16.msra.mxu0 0
        %988 = vmatprep.subr.bf16.mxu0 0
        %989 = vmatpush1.bf16.msra.mxu0 0
        %990 = vmatprep.subr.bf16.mxu0 0
        %991 = vmatpush1.bf16.msra.mxu0 0
        %992 = vmatprep.subr.bf16.mxu0 0
        %993 = vmatpush1.bf16.msra.mxu0 0
        %994 = vmatprep.subr.bf16.mxu0 0
        %995 = vmatpush1.bf16.msra.mxu0 0
        %996 = vmatprep.subr.bf16.mxu0 0
        %997 = vmatpush1.bf16.msra.mxu0 0
        %998 = vmatprep.subr.bf16.mxu0 0
        %999 = vmatpush1.bf16.msra.mxu0 0
        %1000 = vmatprep.subr.bf16.mxu0 0
        %1001 = vmatpush1.bf16.msra.mxu0 0
        %1002 = vmatprep.mubr.bf16.mxu0 0
        %1003 = vmatmul.mubr.bf16.gmra.mrb[0].mxu0 %v679
        %v1004 = vpop.f32.mrb[0].mxu0
        %v1005 = vadd.f32 0.0, %v1004
        %v1006 = vpop.f32.mrb[0].mxu0
        %v1007 = vpop.f32.mrb[0].mxu0
        %v1008 = vpop.f32.mrb[0].mxu0
        %1009 = vdwg.mxu0
        %v1010 = vld [vmem:[%s445] sm:$0xff]
        %v1011 = vld [vmem:[%s445 + $0x8] sm:$0xff]
        %v1012 = vld [vmem:[%s445 + $0x10] sm:$0xf]
        %v1013 = vunpack.c.l.bf16 %v1010
        %v1014 = vunpack.c.h.bf16 %v1010
        %v1015 = vunpack.c.l.bf16 %v1011
        %v1016 = vunpack.c.h.bf16 %v1011
        %v1017 = vunpack.c.l.bf16 %v1012
        %v1018 = vadd.f32 %v1013, %v923
        %v1019 = vadd.f32 %v1014, %v925
        %v1020 = vadd.f32 %v1015, %v964
        %v1021 = vadd.f32 %v1016, %v966
        %v1022 = vadd.f32 %v1017, %v1005
        %v1023 = vpack.c.bf16 %v1018, %v1018
        %v1024 = vpack.c.bf16 %v1019, %v1019
        %v1025 = vpack.c.bf16 %v1020, %v1020
        %v1026 = vpack.c.bf16 %v1021, %v1021
        %v1027 = vpack.c.bf16 %v1022, %v1022
        %v1028 = vld [vmem:[#allocation11] sm:$0xf]
        %v1029 = vld [vmem:[#allocation11 + $0x4] sm:$0xf]
        %v1030 = vld [vmem:[#allocation11 + $0x8] sm:$0xf]
        %v1031 = vld [vmem:[#allocation11 + $0xc] sm:$0xf]
        %v1032 = vld [vmem:[#allocation11 + $0x10] sm:$0xf]
        %v1033 = vld [vmem:[#allocation11 + $0x14] sm:$0xf]
        %v1034 = vld [vmem:[#allocation11 + $0x18] sm:$0xf]
        %v1035 = vld [vmem:[#allocation11 + $0x1c] sm:$0xf]
        %v1036 = vld [vmem:[#allocation11 + $0x20] sm:$0xf]
        %v1037 = vld [vmem:[#allocation11 + $0x24] sm:$0xf]
        %v1038 = vld [vmem:[#allocation11 + $0x28] sm:$0xf]
        %v1039 = vld [vmem:[#allocation11 + $0x2c] sm:$0xf]
        %v1040 = vld [vmem:[#allocation11 + $0x30] sm:$0xf]
        %v1041 = vld [vmem:[#allocation11 + $0x34] sm:$0xf]
        %v1042 = vld [vmem:[#allocation11 + $0x38] sm:$0xf]
        %v1043 = vld [vmem:[#allocation11 + $0x3c] sm:$0xf]
        %v1044 = vld [vmem:[#allocation11 + $0x40] sm:$0xf]
        %v1045 = vld [vmem:[#allocation11 + $0x44] sm:$0xf]
        %v1046 = vld [vmem:[#allocation11 + $0x48] sm:$0xf]
        %v1047 = vld [vmem:[#allocation11 + $0x4c] sm:$0xf]
        %v1048 = vld [vmem:[#allocation11 + $0x50] sm:$0xf]
        %v1049 = vld [vmem:[#allocation11 + $0x54] sm:$0xf]
        %v1050 = vld [vmem:[#allocation11 + $0x58] sm:$0xf]
        %v1051 = vld [vmem:[#allocation11 + $0x5c] sm:$0xf]
        %v1052 = vld [vmem:[#allocation11 + $0x60] sm:$0xf]
        %v1053 = vld [vmem:[#allocation11 + $0x64] sm:$0xf]
        %v1054 = vld [vmem:[#allocation11 + $0x68] sm:$0xf]
        %v1055 = vld [vmem:[#allocation11 + $0x6c] sm:$0xf]
        %v1056 = vld [vmem:[#allocation11 + $0x70] sm:$0xf]
        %v1057 = vld [vmem:[#allocation11 + $0x74] sm:$0xf]
        %v1058 = vld [vmem:[#allocation11 + $0x78] sm:$0xf]
        %v1059 = vld [vmem:[#allocation11 + $0x7c] sm:$0xf]
        %v1060 = vld [vmem:[#allocation11 + $0x80] sm:$0xf]
        %v1061 = vld [vmem:[#allocation11 + $0x84] sm:$0xf]
        %v1062 = vld [vmem:[#allocation11 + $0x88] sm:$0xf]
        %v1063 = vld [vmem:[#allocation11 + $0x8c] sm:$0xf]
        %v1064 = vld [vmem:[#allocation11 + $0x90] sm:$0xf]
        %v1065 = vld [vmem:[#allocation11 + $0x94] sm:$0xf]
        %v1066 = vld [vmem:[#allocation11 + $0x98] sm:$0xf]
        %v1067 = vld [vmem:[#allocation11 + $0x9c] sm:$0xf]
        %v1068 = vld [vmem:[#allocation11 + $0xa0] sm:$0xf]
        %v1069 = vld [vmem:[#allocation11 + $0xa4] sm:$0xf]
        %v1070 = vld [vmem:[#allocation11 + $0xa8] sm:$0xf]
        %v1071 = vld [vmem:[#allocation11 + $0xac] sm:$0xf]
        %v1072 = vld [vmem:[#allocation11 + $0xb0] sm:$0xf]
        %v1073 = vld [vmem:[#allocation11 + $0xb4] sm:$0xf]
        %v1074 = vld [vmem:[#allocation11 + $0xb8] sm:$0xf]
        %v1075 = vld [vmem:[#allocation11 + $0xbc] sm:$0xf]
        %v1076 = vld [vmem:[#allocation11 + $0xc0] sm:$0xf]
        %v1077 = vld [vmem:[#allocation11 + $0xc4] sm:$0xf]
        %v1078 = vld [vmem:[#allocation11 + $0xc8] sm:$0xf]
        %v1079 = vld [vmem:[#allocation11 + $0xcc] sm:$0xf]
        %v1080 = vld [vmem:[#allocation11 + $0xd0] sm:$0xf]
        %v1081 = vld [vmem:[#allocation11 + $0xd4] sm:$0xf]
        %v1082 = vld [vmem:[#allocation11 + $0xd8] sm:$0xf]
        %v1083 = vld [vmem:[#allocation11 + $0xdc] sm:$0xf]
        %v1084 = vld [vmem:[#allocation11 + $0xe0] sm:$0xf]
        %v1085 = vld [vmem:[#allocation11 + $0xe4] sm:$0xf]
        %v1086 = vld [vmem:[#allocation11 + $0xe8] sm:$0xf]
        %v1087 = vld [vmem:[#allocation11 + $0xec] sm:$0xf]
        %v1088 = vld [vmem:[#allocation11 + $0xf0] sm:$0xf]
        %v1089 = vld [vmem:[#allocation11 + $0xf4] sm:$0xf]
        %v1090 = vld [vmem:[#allocation11 + $0xf8] sm:$0xf]
        %v1091 = vld [vmem:[#allocation11 + $0xfc] sm:$0xf]
        %v1092 = vld [vmem:[#allocation11 + $0x100] sm:$0xf]
        %v1093 = vld [vmem:[#allocation11 + $0x104] sm:$0xf]
        %v1094 = vld [vmem:[#allocation11 + $0x108] sm:$0xf]
        %v1095 = vld [vmem:[#allocation11 + $0x10c] sm:$0xf]
        %v1096 = vld [vmem:[#allocation11 + $0x110] sm:$0xf]
        %v1097 = vld [vmem:[#allocation11 + $0x114] sm:$0xf]
        %v1098 = vld [vmem:[#allocation11 + $0x118] sm:$0xf]
        %v1099 = vld [vmem:[#allocation11 + $0x11c] sm:$0xf]
        %v1172 = vunpack.c.l.b16 %v1028
        %v1173 = vunpack.c.l.b16 %v1029
        %v1174 = vunpack.c.l.b16 %v1030
        %v1175 = vunpack.c.l.b16 %v1031
        %v1176 = vunpack.c.l.b16 %v1032
        %v1177 = vunpack.c.l.b16 %v1033
        %v1178 = vunpack.c.l.b16 %v1034
        %v1179 = vunpack.c.l.b16 %v1035
        %v1180 = vunpack.c.l.b16 %v1036
        %v1181 = vunpack.c.l.b16 %v1037
        %v1182 = vunpack.c.l.b16 %v1038
        %v1183 = vunpack.c.l.b16 %v1039
        %v1184 = vunpack.c.l.b16 %v1040
        %v1185 = vunpack.c.l.b16 %v1041
        %v1186 = vunpack.c.l.b16 %v1042
        %v1187 = vunpack.c.l.b16 %v1043
        %v1188 = vunpack.c.l.b16 %v1044
        %v1189 = vunpack.c.l.b16 %v1045
        %v1190 = vunpack.c.l.b16 %v1046
        %v1191 = vunpack.c.l.b16 %v1047
        %v1192 = vunpack.c.l.b16 %v1048
        %v1193 = vunpack.c.l.b16 %v1049
        %v1194 = vunpack.c.l.b16 %v1050
        %v1195 = vunpack.c.l.b16 %v1051
        %v1196 = vunpack.c.l.b16 %v1052
        %v1197 = vunpack.c.l.b16 %v1053
        %v1198 = vunpack.c.l.b16 %v1054
        %v1199 = vunpack.c.l.b16 %v1055
        %v1200 = vunpack.c.l.b16 %v1056
        %v1201 = vunpack.c.l.b16 %v1057
        %v1202 = vunpack.c.l.b16 %v1058
        %v1203 = vunpack.c.l.b16 %v1059
        %v1204 = vunpack.c.l.b16 %v1060
        %v1205 = vunpack.c.l.b16 %v1061
        %v1206 = vunpack.c.l.b16 %v1062
        %v1207 = vunpack.c.l.b16 %v1063
        %v1208 = vunpack.c.l.b16 %v1064
        %v1209 = vunpack.c.l.b16 %v1065
        %v1210 = vunpack.c.l.b16 %v1066
        %v1211 = vunpack.c.l.b16 %v1067
        %v1212 = vunpack.c.l.b16 %v1068
        %v1213 = vunpack.c.l.b16 %v1069
        %v1214 = vunpack.c.l.b16 %v1070
        %v1215 = vunpack.c.l.b16 %v1071
        %v1216 = vunpack.c.l.b16 %v1072
        %v1217 = vunpack.c.l.b16 %v1073
        %v1218 = vunpack.c.l.b16 %v1074
        %v1219 = vunpack.c.l.b16 %v1075
        %v1220 = vunpack.c.l.b16 %v1076
        %v1221 = vunpack.c.l.b16 %v1077
        %v1222 = vunpack.c.l.b16 %v1078
        %v1223 = vunpack.c.l.b16 %v1079
        %v1224 = vunpack.c.l.b16 %v1080
        %v1225 = vunpack.c.l.b16 %v1081
        %v1226 = vunpack.c.l.b16 %v1082
        %v1227 = vunpack.c.l.b16 %v1083
        %v1228 = vunpack.c.l.b16 %v1084
        %v1229 = vunpack.c.l.b16 %v1085
        %v1230 = vunpack.c.l.b16 %v1086
        %v1231 = vunpack.c.l.b16 %v1087
        %v1232 = vunpack.c.l.b16 %v1088
        %v1233 = vunpack.c.l.b16 %v1089
        %v1234 = vunpack.c.l.b16 %v1090
        %v1235 = vunpack.c.l.b16 %v1091
        %v1236 = vunpack.c.l.b16 %v1092
        %v1237 = vunpack.c.l.b16 %v1093
        %v1238 = vunpack.c.l.b16 %v1094
        %v1239 = vunpack.c.l.b16 %v1095
        %v1240 = vunpack.c.l.b16 %v1096
        %v1241 = vunpack.c.l.b16 %v1097
        %v1242 = vunpack.c.l.b16 %v1098
        %v1243 = vunpack.c.l.b16 %v1099
        %v1244 = vpack.c.b16 %v1173, %v1172
        %v1245 = vpack.c.b16 %v1175, %v1174
        %v1246 = vpack.c.b16 %v1177, %v1176
        %v1247 = vpack.c.b16 %v1179, %v1178
        %v1248 = vpack.c.b16 %v1181, %v1180
        %v1249 = vpack.c.b16 %v1183, %v1182
        %v1250 = vpack.c.b16 %v1185, %v1184
        %v1251 = vpack.c.b16 %v1187, %v1186
        %v1252 = vpack.c.b16 %v1189, %v1188
        %v1253 = vpack.c.b16 %v1191, %v1190
        %v1254 = vpack.c.b16 %v1193, %v1192
        %v1255 = vpack.c.b16 %v1195, %v1194
        %v1256 = vpack.c.b16 %v1197, %v1196
        %v1257 = vpack.c.b16 %v1199, %v1198
        %v1258 = vpack.c.b16 %v1201, %v1200
        %v1259 = vpack.c.b16 %v1203, %v1202
        %v1260 = vpack.c.b16 %v1205, %v1204
        %v1261 = vpack.c.b16 %v1207, %v1206
        %v1262 = vpack.c.b16 %v1209, %v1208
        %v1263 = vpack.c.b16 %v1211, %v1210
        %v1264 = vpack.c.b16 %v1213, %v1212
        %v1265 = vpack.c.b16 %v1215, %v1214
        %v1266 = vpack.c.b16 %v1217, %v1216
        %v1267 = vpack.c.b16 %v1219, %v1218
        %v1268 = vpack.c.b16 %v1221, %v1220
        %v1269 = vpack.c.b16 %v1223, %v1222
        %v1270 = vpack.c.b16 %v1225, %v1224
        %v1271 = vpack.c.b16 %v1227, %v1226
        %v1272 = vpack.c.b16 %v1229, %v1228
        %v1273 = vpack.c.b16 %v1231, %v1230
        %v1274 = vpack.c.b16 %v1233, %v1232
        %v1275 = vpack.c.b16 %v1235, %v1234
        %v1276 = vpack.c.b16 %v1237, %v1236
        %v1277 = vpack.c.b16 %v1239, %v1238
        %v1278 = vpack.c.b16 %v1241, %v1240
        %v1279 = vpack.c.b16 %v1243, %v1242
        %vm1316 = vcmask 523264
        %v1318 = vsel %vm1316, %v1027, 0
        %1320 = vmatprep.subr.bf16.mxu0 0
        %1321 = vmatpush1.bf16.msra.mxu0 %v1244
        %1322 = vmatprep.subr.bf16.mxu0 0
        %1323 = vmatpush1.bf16.msra.mxu0 %v1245
        %1324 = vmatprep.subr.bf16.mxu0 0
        %1325 = vmatpush1.bf16.msra.mxu0 %v1246
        %1326 = vmatprep.subr.bf16.mxu0 0
        %1327 = vmatpush1.bf16.msra.mxu0 %v1247
        %1328 = vmatprep.subr.bf16.mxu0 0
        %1329 = vmatpush1.bf16.msra.mxu0 %v1248
        %1330 = vmatprep.subr.bf16.mxu0 0
        %1331 = vmatpush1.bf16.msra.mxu0 %v1249
        %1332 = vmatprep.subr.bf16.mxu0 0
        %1333 = vmatpush1.bf16.msra.mxu0 %v1250
        %1334 = vmatprep.subr.bf16.mxu0 0
        %1335 = vmatpush1.bf16.msra.mxu0 %v1251
        %1336 = vmatprep.subr.bf16.mxu0 0
        %1337 = vmatpush1.bf16.msra.mxu0 %v1252
        %1338 = vmatprep.subr.bf16.mxu0 0
        %1339 = vmatpush1.bf16.msra.mxu0 %v1253
        %1340 = vmatprep.subr.bf16.mxu0 0
        %1341 = vmatpush1.bf16.msra.mxu0 %v1254
        %1342 = vmatprep.subr.bf16.mxu0 0
        %1343 = vmatpush1.bf16.msra.mxu0 %v1255
        %1344 = vmatprep.subr.bf16.mxu0 0
        %1345 = vmatpush1.bf16.msra.mxu0 %v1256
        %1346 = vmatprep.subr.bf16.mxu0 0
        %1347 = vmatpush1.bf16.msra.mxu0 %v1257
        %1348 = vmatprep.subr.bf16.mxu0 0
        %1349 = vmatpush1.bf16.msra.mxu0 %v1258
        %1350 = vmatprep.subr.bf16.mxu0 0
        %1351 = vmatpush1.bf16.msra.mxu0 %v1259
        %1352 = vmatprep.mubr.bf16.mxu0 %v1024
        %1353 = vmatmul.mubr.bf16.gmra.mrb[0].mxu0 %v1023
        %v1354 = vpop.f32.mrb[0].mxu0
        %v1355 = vadd.f32 0.0, %v1354
        %v1356 = vpop.f32.mrb[0].mxu0
        %v1357 = vpop.f32.mrb[0].mxu0
        %v1358 = vpop.f32.mrb[0].mxu0
        %1359 = vdwg.mxu0
        %1360 = vmatprep.subr.bf16.mxu0 0
        %1361 = vmatpush1.bf16.msra.mxu0 %v1260
        %1362 = vmatprep.subr.bf16.mxu0 0
        %1363 = vmatpush1.bf16.msra.mxu0 %v1261
        %1364 = vmatprep.subr.bf16.mxu0 0
        %1365 = vmatpush1.bf16.msra.mxu0 %v1262
        %1366 = vmatprep.subr.bf16.mxu0 0
        %1367 = vmatpush1.bf16.msra.mxu0 %v1263
        %1368 = vmatprep.subr.bf16.mxu0 0
        %1369 = vmatpush1.bf16.msra.mxu0 %v1264
        %1370 = vmatprep.subr.bf16.mxu0 0
        %1371 = vmatpush1.bf16.msra.mxu0 %v1265
        %1372 = vmatprep.subr.bf16.mxu0 0
        %1373 = vmatpush1.bf16.msra.mxu0 %v1266
        %1374 = vmatprep.subr.bf16.mxu0 0
        %1375 = vmatpush1.bf16.msra.mxu0 %v1267
        %1376 = vmatprep.subr.bf16.mxu0 0
        %1377 = vmatpush1.bf16.msra.mxu0 %v1268
        %1378 = vmatprep.subr.bf16.mxu0 0
        %1379 = vmatpush1.bf16.msra.mxu0 %v1269
        %1380 = vmatprep.subr.bf16.mxu0 0
        %1381 = vmatpush1.bf16.msra.mxu0 %v1270
        %1382 = vmatprep.subr.bf16.mxu0 0
        %1383 = vmatpush1.bf16.msra.mxu0 %v1271
        %1384 = vmatprep.subr.bf16.mxu0 0
        %1385 = vmatpush1.bf16.msra.mxu0 %v1272
        %1386 = vmatprep.subr.bf16.mxu0 0
        %1387 = vmatpush1.bf16.msra.mxu0 %v1273
        %1388 = vmatprep.subr.bf16.mxu0 0
        %1389 = vmatpush1.bf16.msra.mxu0 %v1274
        %1390 = vmatprep.subr.bf16.mxu0 0
        %1391 = vmatpush1.bf16.msra.mxu0 %v1275
        %1392 = vmatprep.mubr.bf16.mxu0 %v1026
        %1393 = vmatmul.mubr.bf16.gmra.mrb[0].mxu0 %v1025
        %v1394 = vpop.f32.mrb[0].mxu0
        %v1395 = vadd.f32 %v1355, %v1394
        %v1396 = vpop.f32.mrb[0].mxu0
        %v1397 = vpop.f32.mrb[0].mxu0
        %v1398 = vpop.f32.mrb[0].mxu0
        %1399 = vdwg.mxu0
        %1400 = vmatprep.subr.bf16.mxu0 0
        %1401 = vmatpush1.bf16.msra.mxu0 %v1276
        %1402 = vmatprep.subr.bf16.mxu0 0
        %1403 = vmatpush1.bf16.msra.mxu0 %v1277
        %1404 = vmatprep.subr.bf16.mxu0 0
        %1405 = vmatpush1.bf16.msra.mxu0 %v1278
        %1406 = vmatprep.subr.bf16.mxu0 0
        %1407 = vmatpush1.bf16.msra.mxu0 %v1279
        %1408 = vmatprep.subr.bf16.mxu0 0
        %1409 = vmatpush1.bf16.msra.mxu0 0
        %1410 = vmatprep.subr.bf16.mxu0 0
        %1411 = vmatpush1.bf16.msra.mxu0 0
        %1412 = vmatprep.subr.bf16.mxu0 0
        %1413 = vmatpush1.bf16.msra.mxu0 0
        %1414 = vmatprep.subr.bf16.mxu0 0
        %1415 = vmatpush1.bf16.msra.mxu0 0
        %1416 = vmatprep.subr.bf16.mxu0 0
        %1417 = vmatpush1.bf16.msra.mxu0 0
        %1418 = vmatprep.subr.bf16.mxu0 0
        %1419 = vmatpush1.bf16.msra.mxu0 0
        %1420 = vmatprep.subr.bf16.mxu0 0
        %1421 = vmatpush1.bf16.msra.mxu0 0
        %1422 = vmatprep.subr.bf16.mxu0 0
        %1423 = vmatpush1.bf16.msra.mxu0 0
        %1424 = vmatprep.subr.bf16.mxu0 0
        %1425 = vmatpush1.bf16.msra.mxu0 0
        %1426 = vmatprep.subr.bf16.mxu0 0
        %1427 = vmatpush1.bf16.msra.mxu0 0
        %1428 = vmatprep.subr.bf16.mxu0 0
        %1429 = vmatpush1.bf16.msra.mxu0 0
        %1430 = vmatprep.subr.bf16.mxu0 0
        %1431 = vmatpush1.bf16.msra.mxu0 0
        %1432 = vmatprep.mubr.bf16.mxu0 0
        %1433 = vmatmul.mubr.bf16.gmra.mrb[0].mxu0 %v1318
        %v1434 = vpop.f32.mrb[0].mxu0
        %v1435 = vadd.f32 %v1395, %v1434
        %v1436 = vpop.f32.mrb[0].mxu0
        %v1437 = vpop.f32.mrb[0].mxu0
        %v1438 = vpop.f32.mrb[0].mxu0
        %1439 = vdwg.mxu0
        %v1440 = vld [vmem:[#allocation13] sm:$0x1]
        %v1442 = vlaneseq
        %v1443 = vshrl.u32 %v1442, 7
        %v1444 = vsub.s32 0, %v1443
        %v1445 = vrot.slane %v1440, %v1444
        %v1447 = vmul.f32 %v1435, %v1445
        %v1448 = vld [vmem:[#allocation14] sm:$0x1]
        %v1450 = vlaneseq
        %v1451 = vshrl.u32 %v1450, 7
        %v1452 = vsub.s32 0, %v1451
        %v1453 = vrot.slane %v1448, %v1452
        %v1455 = vadd.f32 %v1447, %v1453
        %v1456 = vmax.f32 %v1455, 0.0
        %1457 = vst [vmem:[%s508] sm:$0xff] %v1456
        %s1458 = sand.u32 %s247, 1
        %s1459 = scalar_lea.sflag [#allocation4], %s1458
        %s1460 = sand.u32 %s247, 1
        %s1461 = smul.addr %s1460, 8
        %s1462 = scalar_lea.vmem [#allocation16], %s1461
        // Predicated region
        $region85: #{context_branch_forward.7} parent=51 // pred_check
          %p1463 = pneg %p257
        $region86: #{context_branch_forward.7} parent=51 // pred_check_branch
          %1465 = sbr.rel (%p1463) target = $region88
        $region87: #{context_branch_forward.7} parent=51 // pred_region
          %s1467 = ssub.s32 128, 128
          %1468 = vsyncadd %s1459, %s1467
          %s1469 = sadd.s32 %s38, %s37
          %s1470 = smul.addr %s1469, 128
          %s1471 = scalar_lea.hbm %s8, %s1470
          %s1473 = sshll.u32 %s1462, 4
          %s1474 = int_to_ptr.vmem [resolvable:$true] %s1473
          %1476 = dma.vmem_to_hbm [thread:$0]  %s1474, 128, %s1471, %s1459
        $region88: #{context_branch_forward.7} parent=51 // pred_fallthru
          _
      $region52: #{context_branch_forward.7} parent=5 // pred_fallthru
        _
      %p1477 = scmp.le.s32.totalorder 2, %s28
      // Predicated region
      $region89: #{context_branch_forward.7} parent=5 // pred_check
        %p1478 = pneg %p1477
      $region90: #{context_branch_forward.7} parent=5 // pred_check_branch
        %1480 = sbr.rel (%p1478) target = $region92
      $region91: #{context_branch_forward.7} parent=5 // pred_region
        %s1481 = ssub.s32 %s28, 2
        // Predicated region
        $region93: #{context_branch_forward.7} parent=91 // pred_check
          %p1482 = pneg %p263
        $region94: #{context_branch_forward.7} parent=91 // pred_check_branch
          %1484 = sbr.rel (%p1482) target = $region96
        $region95: #{context_branch_forward.7} parent=91 // pred_region
          %s1485 = sand.u32 %s248, 1
          %s1486 = scalar_lea.sflag [#allocation4], %s1485
          %s1487 = sand.u32 %s248, 1
          %s1488 = smul.addr %s1487, 8
          %s1489 = scalar_lea.vmem [#allocation16], %s1488
          %1490 = dma.done %s1486, 128
        $region96: #{context_branch_forward.7} parent=91 // pred_fallthru
          _
      $region92: #{context_branch_forward.7} parent=5 // pred_fallthru
        _
    $region6: #{context_branch_forward.7} parent=1 // loop_footer
      %s32 = sadd.s32 1, %s28
    $region7: #{context_branch_forward.7} parent=1 // loop_footer_branch
      %27 = sbr.rel target = $region3
    $region8: #{context_branch_forward.7} parent=1 // loop_exit
      _
    %1491 = vsyncpa [#allocation3], 1
    %s1492 = scalar_lea.sflag [#allocation3], 1
    %1493 = vsyncpa %s1492, 1
    %1494 = vsyncpa [#allocation6], 1
    %s1495 = scalar_lea.sflag [#allocation6], 1
    %1496 = vsyncpa %s1495, 1
    %1497 = vsyncpa [#allocation9], 1
    %s1498 = scalar_lea.sflag [#allocation9], 1
    %1499 = vsyncpa %s1498, 1
    %1500 = vsyncpa [#allocation12], 1
    %1501 = vsyncpa [#allocation15], 1
    %1502 = vsyncpa [#allocation4], 1
    %s1503 = scalar_lea.sflag [#allocation4], 1
    %1504 = vsyncpa %s1503, 1

</llo_original>
